<compile_context>
chip_gen: v5e
topology: v5e:2x2
jax: 0.10.0
libtpu: 0.0.40
codegen_flags: <defaults>
</compile_context>

<pallas_src>
import functools

import jax
import jax.numpy as jnp
from jax.experimental import pallas as pl
from jax.experimental.pallas import tpu as pltpu

EPS = 1e-5
NEG_SLOPE = 0.01            # default slope of nn.LeakyReLU / F.leaky_relu
MLP = (64, 128, 512, 1024)  # SimplePointNet channel progression (input k=3)
K_DEC = 5                   # number of decoder heads
C_IN = 3
C_PAD = 8                   # pad input channels 3 -> 8 for clean tiling
_LANE = 128                 # lane width of the decoder's per-head output block


def _leaky(x):
    return jnp.where(x > 0, x, NEG_SLOPE * x)


def _vmem_limit_bytes():
    # Never request the full physical VMEM (v7x only has 64 MiB/core); leave
    # headroom for compiler scratch and double buffers.
    cap = 64 * 1024 * 1024
    try:
        info_cap = int(pltpu.get_tpu_info().vmem_capacity_bytes)
        if info_cap > 0:
            cap = info_cap
    except Exception:
        pass
    return max(32 * 1024 * 1024, min(int(cap * 3 // 4), 96 * 1024 * 1024))


# --------------------------------------------------------------------------
# Kernel A: SimplePointNet backbone (4 fused 1x1-conv + BN + LeakyReLU layers)
#           + max-over-points reduction.
# --------------------------------------------------------------------------
def _pointnet_kernel(B, N,
                     pts_ref,
                     w1, g1, be1,
                     w2, g2, be2,
                     w3, g3, be3,
                     w4, g4, be4,
                     out_ref):
    inv_r = jnp.float32(1.0 / (B * 2 * N))

    def layer(h, w_ref, g_ref, be_ref):
        # 1x1 Conv2d == per-point linear layer.  The conv bias is intentionally
        # omitted: training-mode BN subtracts the batch mean, which contains the
        # bias exactly, so it cancels.
        z = jnp.dot(h, w_ref[...], preferred_element_type=jnp.float32)
        # Single-pass biased batch statistics over all (batch, H, W) rows.
        mean = jnp.sum(z, axis=0, keepdims=True) * inv_r
        ex2 = jnp.sum(z * z, axis=0, keepdims=True) * inv_r
        var = ex2 - mean * mean
        # BN folded into one scale + one shift (2 full-size VPU passes, not 4).
        a = g_ref[...] * jax.lax.rsqrt(var + EPS)
        c = be_ref[...] - a * mean
        return _leaky(a * z + c)

    h = pts_ref[...]                       # (B*2*N, C_PAD)
    h = layer(h, w1, g1, be1)
    h = layer(h, w2, g2, be2)
    h = layer(h, w3, g3, be3)
    h = layer(h, w4, g4, be4)              # (B*2*N, 1024)

    # torch.max(x, dim=2): max over the N points per (batch, w, channel).
    # N a multiple of 8 keeps the reshape on sublane-tile boundaries (pure
    # sublane max, no relayout copy); other N still give correct results.
    out_ref[...] = jnp.max(h.reshape(B * 2, N, MLP[-1]), axis=1)   # (B*2, 1024)


def pointnet_features(pts, pn_params, *, B, N):
    # TODO(synk): training-mode BN needs global per-layer stats, so this kernel is
    # monolithic (single block in VMEM).  For large B*N (>~10K rows on v7x) it
    # should be row-tiled with a two-phase stats/normalize pipeline per layer.
    kernel = functools.partial(_pointnet_kernel, B, N)
    args = [pts]
    for (w, g, be) in pn_params:
        args += [w, g, be]
    vmem_spec = pl.BlockSpec(memory_space=pltpu.MemorySpace.VMEM)
    return pl.pallas_call(
        kernel,
        out_shape=jax.ShapeDtypeStruct((B * 2, MLP[-1]), jnp.float32),
        in_specs=[vmem_spec] * len(args),
        out_specs=vmem_spec,
        compiler_params=pltpu.CompilerParams(vmem_limit_bytes=_vmem_limit_bytes()),
    )(*args)


# --------------------------------------------------------------------------
# Kernel B: the k decoder MLP heads on the shared 2048-d siamese feature.
#           Grid over heads -> per-head weight tiles are double-buffered
#           (DMA overlaps compute) and heads run "parallel" across cores.
# --------------------------------------------------------------------------
def _decoder_kernel(feat_ref, w1_ref, b1_ref, w2_ref, b2_ref, w3_ref, b3_ref,
                    out_ref):
    f = feat_ref[...]                                                  # (B, 2048)
    h = _leaky(jnp.dot(f, w1_ref[...],
                       preferred_element_type=jnp.float32) + b1_ref[...])   # (B, 512)
    h = _leaky(jnp.dot(h, w2_ref[...],
                       preferred_element_type=jnp.float32) + b2_ref[...])   # (B, 64)
    # fc3: (64 -> 1) as a lane reduction to avoid a width-1 matmul.
    y = jnp.sum(h * w3_ref[...], axis=-1, keepdims=True) + b3_ref[...]      # (B, 1)
    # Lane-dense write: this head's result broadcast across its own 128-wide block.
    out_ref[...] = jnp.broadcast_to(y, out_ref.shape)


def decoder_heads(feat, dec_params, *, K):
    B, D = feat.shape
    w1, b1, w2, b2, w3, b3 = dec_params
    out_wide = pl.pallas_call(
        _decoder_kernel,
        out_shape=jax.ShapeDtypeStruct((B, K * _LANE), jnp.float32),
        grid=(K,),
        in_specs=[
            pl.BlockSpec((B, D), lambda i: (0, 0)),              # shared feature (DMA'd once)
            pl.BlockSpec((None, D, 512), lambda i: (i, 0, 0)),   # w1 per head (~4 MiB tile)
            pl.BlockSpec((None, 1, 512), lambda i: (i, 0, 0)),   # b1
            pl.BlockSpec((None, 512, 64), lambda i: (i, 0, 0)),  # w2
            pl.BlockSpec((None, 1, 64), lambda i: (i, 0, 0)),    # b2
            pl.BlockSpec((None, 1, 64), lambda i: (i, 0, 0)),    # w3
            pl.BlockSpec((None, 1, 1), lambda i: (i, 0, 0)),     # b3
        ],
        out_specs=pl.BlockSpec((B, _LANE), lambda i: (0, i)),
        compiler_params=pltpu.CompilerParams(
            dimension_semantics=("parallel",),
            vmem_limit_bytes=_vmem_limit_bytes()),
    )(feat, w1, b1, w2, b2, w3, b3)
    # Head i's scalar lives (broadcast) in lanes [i*128, (i+1)*128); take lane 0.
    return out_wide.reshape(B, K, _LANE)[:, :, 0]                # (B, K)


# --------------------------------------------------------------------------
# Parameter construction (deterministic, synthetic).
# --------------------------------------------------------------------------
def init_params(key, k_dec=K_DEC):
    kit = iter(jax.random.split(key, 64))
    params = {}

    # SimplePointNet backbone: conv weights stored as (in, out) matmul matrices.
    # Conv biases are omitted entirely: training-mode BN cancels them exactly.
    pn = []
    in_d = C_PAD
    first = True
    for out_d in MLP:
        w = jax.random.normal(next(kit), (in_d, out_d), jnp.float32) / jnp.sqrt(
            jnp.float32(C_IN if first else in_d))
        if first:
            w = w.at[C_IN:, :].set(0.0)   # zero rows for the padded input channels
            first = False
        g = 1.0 + 0.1 * jax.random.normal(next(kit), (1, out_d), jnp.float32)  # BN gamma
        be = 0.1 * jax.random.normal(next(kit), (1, out_d), jnp.float32)       # BN beta
        pn.append((w, g, be))
        in_d = out_d
    params["pointnet"] = pn

    # k decoder heads, stacked along a leading axis (head axis = Pallas grid axis).
    # fc1 weight rows are stored in OUR feature order: j' = w*1024 + c (siamese-
    # major, channel-minor), so the wrapper never transposes the activations.
    # Importing real torch weights needs the one-time row permutation
    #   w1_jax[k][w*1024 + c, :] = fc1.weight[:, c*2 + w].T   (torch order j = c*2 + w).
    d_in = 2 * MLP[-1]   # 2048
    w1 = jax.random.normal(next(kit), (k_dec, d_in, 512), jnp.float32) / jnp.sqrt(float(d_in))
    b1 = 0.1 * jax.random.normal(next(kit), (k_dec, 1, 512), jnp.float32)
    w2 = jax.random.normal(next(kit), (k_dec, 512, 64), jnp.float32) / jnp.sqrt(512.0)
    b2 = 0.1 * jax.random.normal(next(kit), (k_dec, 1, 64), jnp.float32)
    w3 = jax.random.normal(next(kit), (k_dec, 1, 64), jnp.float32) / jnp.sqrt(64.0)
    b3 = 0.1 * jax.random.normal(next(kit), (k_dec, 1, 1), jnp.float32)
    params["decoders"] = (w1, b1, w2, b2, w3, b3)
    return params


# --------------------------------------------------------------------------
# Full forward pass (glue reshapes in plain JAX, hot paths in Pallas).
# --------------------------------------------------------------------------
@jax.jit
def siamese_multi_decoder(x1, x2, params):
    B, N, C = x1.shape
    # torch: cat(x1.unsqueeze(3), x2.unsqueeze(3), 3).permute(0,2,1,3) -> (B,3,N,2)
    # our layout: rows ordered (b, w, n), channels last (padded to C_PAD).
    pts = jnp.transpose(jnp.stack([x1, x2], axis=0), (1, 0, 2, 3))  # (B, 2, N, 3)
    pts = pts.reshape(B * 2 * N, C)
    pts = jnp.pad(pts, ((0, 0), (0, C_PAD - C)))

    feat_bw = pointnet_features(pts, params["pointnet"], B=B, N=N)  # (B*2, 1024)

    # torch's view(-1, 2048) interleaves channel-major with the siamese axis
    # innermost; that permutation is baked into the fc1 weight rows at init, so
    # this reshape is a free row-major view (no per-forward activation transpose).
    feat = feat_bw.reshape(B, 2 * MLP[-1])                            # (B, 2048)

    # TODO(synk): the Decoder's bn1/bn2/bn3 and the .to(device) calls are no-ops in
    # the reference forward and are intentionally omitted.
    return decoder_heads(feat, params["decoders"], K=K_DEC)          # (B, k)


if __name__ == "__main__":
    key = jax.random.PRNGKey(0)
    k1, k2, kp = jax.random.split(key, 3)
    B, N = 2, 16
    x1 = jax.random.normal(k1, (B, N, 3), jnp.float32)
    x2 = jax.random.normal(k2, (B, N, 3), jnp.float32)
    params = init_params(kp, K_DEC)

    y = siamese_multi_decoder(x1, x2, params)
    jax.block_until_ready(y)
    assert y.shape == (B, K_DEC) and y.dtype == jnp.float32
    print("KERNEL_OK")
</pallas_src>

<mosaic_0001>
module attributes {stable_mosaic.version = 11 : i64} {
  func.func @_pointnet_kernel(%arg0: memref<64x8xf32, #tpu.memory_space<vmem>>, %arg1: memref<8x64xf32, #tpu.memory_space<vmem>>, %arg2: memref<1x64xf32, #tpu.memory_space<vmem>>, %arg3: memref<1x64xf32, #tpu.memory_space<vmem>>, %arg4: memref<64x128xf32, #tpu.memory_space<vmem>>, %arg5: memref<1x128xf32, #tpu.memory_space<vmem>>, %arg6: memref<1x128xf32, #tpu.memory_space<vmem>>, %arg7: memref<128x512xf32, #tpu.memory_space<vmem>>, %arg8: memref<1x512xf32, #tpu.memory_space<vmem>>, %arg9: memref<1x512xf32, #tpu.memory_space<vmem>>, %arg10: memref<512x1024xf32, #tpu.memory_space<vmem>>, %arg11: memref<1x1024xf32, #tpu.memory_space<vmem>>, %arg12: memref<1x1024xf32, #tpu.memory_space<vmem>>, %arg13: memref<4x1024xf32, #tpu.memory_space<vmem>>) attributes {dimension_semantics = [], scalar_prefetch = 0 : i64, scratch_operands = 0 : i64, tpu.core_type = #tpu.core_type<tc>} {
    %c0 = arith.constant 0 : index
    %c0_0 = arith.constant 0 : index
    %0 = vector.load %arg0[%c0, %c0_0] : memref<64x8xf32, #tpu.memory_space<vmem>>, vector<64x8xf32>
    %c0_1 = arith.constant 0 : index
    %c0_2 = arith.constant 0 : index
    %1 = vector.load %arg1[%c0_1, %c0_2] : memref<8x64xf32, #tpu.memory_space<vmem>>, vector<8x64xf32>
    %cst = arith.constant dense<0.000000e+00> : vector<64x64xf32>
    %2 = tpu.matmul %0, %1, %cst {dimension_numbers = #tpu.dot_dimension_numbers<[1], [0], [0], [1], [0, 0, 1, 1], [], []>} : vector<64x8xf32>, vector<8x64xf32>, vector<64x64xf32> -> vector<64x64xf32>
    %cst_3 = arith.constant dense<0.000000e+00> : vector<64xf32>
    %3 = vector.multi_reduction <add>, %2, %cst_3 [0] : vector<64x64xf32> to vector<64xf32>
    %4 = vector.shape_cast %3 : vector<64xf32> to vector<1x64xf32>
    %cst_4 = arith.constant 1.562500e-02 : f32
    %5 = vector.broadcast %cst_4 : f32 to vector<1x64xf32>
    %6 = arith.mulf %4, %5 : vector<1x64xf32>
    %7 = arith.mulf %2, %2 : vector<64x64xf32>
    %cst_5 = arith.constant dense<0.000000e+00> : vector<64xf32>
    %8 = vector.multi_reduction <add>, %7, %cst_5 [0] : vector<64x64xf32> to vector<64xf32>
    %9 = vector.shape_cast %8 : vector<64xf32> to vector<1x64xf32>
    %cst_6 = arith.constant 1.562500e-02 : f32
    %10 = vector.broadcast %cst_6 : f32 to vector<1x64xf32>
    %11 = arith.mulf %9, %10 : vector<1x64xf32>
    %12 = arith.mulf %6, %6 : vector<1x64xf32>
    %13 = arith.subf %11, %12 : vector<1x64xf32>
    %c0_7 = arith.constant 0 : index
    %c0_8 = arith.constant 0 : index
    %14 = vector.load %arg2[%c0_7, %c0_8] : memref<1x64xf32, #tpu.memory_space<vmem>>, vector<1x64xf32>
    %cst_9 = arith.constant 9.99999974E-6 : f32
    %15 = vector.broadcast %cst_9 : f32 to vector<1x64xf32>
    %16 = arith.addf %13, %15 : vector<1x64xf32>
    %17 = math.rsqrt %16 : vector<1x64xf32>
    %18 = arith.mulf %14, %17 : vector<1x64xf32>
    %c0_10 = arith.constant 0 : index
    %c0_11 = arith.constant 0 : index
    %19 = vector.load %arg3[%c0_10, %c0_11] : memref<1x64xf32, #tpu.memory_space<vmem>>, vector<1x64xf32>
    %20 = arith.mulf %18, %6 : vector<1x64xf32>
    %21 = arith.subf %19, %20 : vector<1x64xf32>
    %22 = vector.broadcast %18 : vector<1x64xf32> to vector<64x64xf32>
    %23 = arith.mulf %22, %2 : vector<64x64xf32>
    %24 = vector.broadcast %21 : vector<1x64xf32> to vector<64x64xf32>
    %25 = arith.addf %23, %24 : vector<64x64xf32>
    %cst_12 = arith.constant 0.000000e+00 : f32
    %26 = vector.broadcast %cst_12 : f32 to vector<64x64xf32>
    %27 = arith.cmpf ogt, %25, %26 : vector<64x64xf32>
    %cst_13 = arith.constant 0.00999999977 : f32
    %28 = vector.broadcast %cst_13 : f32 to vector<64x64xf32>
    %29 = arith.mulf %28, %25 : vector<64x64xf32>
    %30 = arith.select %27, %25, %29 : vector<64x64xi1>, vector<64x64xf32>
    %c0_14 = arith.constant 0 : index
    %c0_15 = arith.constant 0 : index
    %31 = vector.load %arg4[%c0_14, %c0_15] : memref<64x128xf32, #tpu.memory_space<vmem>>, vector<64x128xf32>
    %cst_16 = arith.constant dense<0.000000e+00> : vector<64x128xf32>
    %32 = tpu.matmul %30, %31, %cst_16 {dimension_numbers = #tpu.dot_dimension_numbers<[1], [0], [0], [1], [0, 0, 1, 1], [], []>} : vector<64x64xf32>, vector<64x128xf32>, vector<64x128xf32> -> vector<64x128xf32>
    %cst_17 = arith.constant dense<0.000000e+00> : vector<128xf32>
    %33 = vector.multi_reduction <add>, %32, %cst_17 [0] : vector<64x128xf32> to vector<128xf32>
    %34 = vector.shape_cast %33 : vector<128xf32> to vector<1x128xf32>
    %cst_18 = arith.constant 1.562500e-02 : f32
    %35 = vector.broadcast %cst_18 : f32 to vector<1x128xf32>
    %36 = arith.mulf %34, %35 : vector<1x128xf32>
    %37 = arith.mulf %32, %32 : vector<64x128xf32>
    %cst_19 = arith.constant dense<0.000000e+00> : vector<128xf32>
    %38 = vector.multi_reduction <add>, %37, %cst_19 [0] : vector<64x128xf32> to vector<128xf32>
    %39 = vector.shape_cast %38 : vector<128xf32> to vector<1x128xf32>
    %cst_20 = arith.constant 1.562500e-02 : f32
    %40 = vector.broadcast %cst_20 : f32 to vector<1x128xf32>
    %41 = arith.mulf %39, %40 : vector<1x128xf32>
    %42 = arith.mulf %36, %36 : vector<1x128xf32>
    %43 = arith.subf %41, %42 : vector<1x128xf32>
    %c0_21 = arith.constant 0 : index
    %c0_22 = arith.constant 0 : index
    %44 = vector.load %arg5[%c0_21, %c0_22] : memref<1x128xf32, #tpu.memory_space<vmem>>, vector<1x128xf32>
    %cst_23 = arith.constant 9.99999974E-6 : f32
    %45 = vector.broadcast %cst_23 : f32 to vector<1x128xf32>
    %46 = arith.addf %43, %45 : vector<1x128xf32>
    %47 = math.rsqrt %46 : vector<1x128xf32>
    %48 = arith.mulf %44, %47 : vector<1x128xf32>
    %c0_24 = arith.constant 0 : index
    %c0_25 = arith.constant 0 : index
    %49 = vector.load %arg6[%c0_24, %c0_25] : memref<1x128xf32, #tpu.memory_space<vmem>>, vector<1x128xf32>
    %50 = arith.mulf %48, %36 : vector<1x128xf32>
    %51 = arith.subf %49, %50 : vector<1x128xf32>
    %52 = vector.broadcast %48 : vector<1x128xf32> to vector<64x128xf32>
    %53 = arith.mulf %52, %32 : vector<64x128xf32>
    %54 = vector.broadcast %51 : vector<1x128xf32> to vector<64x128xf32>
    %55 = arith.addf %53, %54 : vector<64x128xf32>
    %cst_26 = arith.constant 0.000000e+00 : f32
    %56 = vector.broadcast %cst_26 : f32 to vector<64x128xf32>
    %57 = arith.cmpf ogt, %55, %56 : vector<64x128xf32>
    %cst_27 = arith.constant 0.00999999977 : f32
    %58 = vector.broadcast %cst_27 : f32 to vector<64x128xf32>
    %59 = arith.mulf %58, %55 : vector<64x128xf32>
    %60 = arith.select %57, %55, %59 : vector<64x128xi1>, vector<64x128xf32>
    %c0_28 = arith.constant 0 : index
    %c0_29 = arith.constant 0 : index
    %61 = vector.load %arg7[%c0_28, %c0_29] : memref<128x512xf32, #tpu.memory_space<vmem>>, vector<128x512xf32>
    %cst_30 = arith.constant dense<0.000000e+00> : vector<64x512xf32>
    %62 = tpu.matmul %60, %61, %cst_30 {dimension_numbers = #tpu.dot_dimension_numbers<[1], [0], [0], [1], [0, 0, 1, 1], [], []>} : vector<64x128xf32>, vector<128x512xf32>, vector<64x512xf32> -> vector<64x512xf32>
    %cst_31 = arith.constant dense<0.000000e+00> : vector<512xf32>
    %63 = vector.multi_reduction <add>, %62, %cst_31 [0] : vector<64x512xf32> to vector<512xf32>
    %64 = vector.shape_cast %63 : vector<512xf32> to vector<1x512xf32>
    %cst_32 = arith.constant 1.562500e-02 : f32
    %65 = vector.broadcast %cst_32 : f32 to vector<1x512xf32>
    %66 = arith.mulf %64, %65 : vector<1x512xf32>
    %67 = arith.mulf %62, %62 : vector<64x512xf32>
    %cst_33 = arith.constant dense<0.000000e+00> : vector<512xf32>
    %68 = vector.multi_reduction <add>, %67, %cst_33 [0] : vector<64x512xf32> to vector<512xf32>
    %69 = vector.shape_cast %68 : vector<512xf32> to vector<1x512xf32>
    %cst_34 = arith.constant 1.562500e-02 : f32
    %70 = vector.broadcast %cst_34 : f32 to vector<1x512xf32>
    %71 = arith.mulf %69, %70 : vector<1x512xf32>
    %72 = arith.mulf %66, %66 : vector<1x512xf32>
    %73 = arith.subf %71, %72 : vector<1x512xf32>
    %c0_35 = arith.constant 0 : index
    %c0_36 = arith.constant 0 : index
    %74 = vector.load %arg8[%c0_35, %c0_36] : memref<1x512xf32, #tpu.memory_space<vmem>>, vector<1x512xf32>
    %cst_37 = arith.constant 9.99999974E-6 : f32
    %75 = vector.broadcast %cst_37 : f32 to vector<1x512xf32>
    %76 = arith.addf %73, %75 : vector<1x512xf32>
    %77 = math.rsqrt %76 : vector<1x512xf32>
    %78 = arith.mulf %74, %77 : vector<1x512xf32>
    %c0_38 = arith.constant 0 : index
    %c0_39 = arith.constant 0 : index
    %79 = vector.load %arg9[%c0_38, %c0_39] : memref<1x512xf32, #tpu.memory_space<vmem>>, vector<1x512xf32>
    %80 = arith.mulf %78, %66 : vector<1x512xf32>
    %81 = arith.subf %79, %80 : vector<1x512xf32>
    %82 = vector.broadcast %78 : vector<1x512xf32> to vector<64x512xf32>
    %83 = arith.mulf %82, %62 : vector<64x512xf32>
    %84 = vector.broadcast %81 : vector<1x512xf32> to vector<64x512xf32>
    %85 = arith.addf %83, %84 : vector<64x512xf32>
    %cst_40 = arith.constant 0.000000e+00 : f32
    %86 = vector.broadcast %cst_40 : f32 to vector<64x512xf32>
    %87 = arith.cmpf ogt, %85, %86 : vector<64x512xf32>
    %cst_41 = arith.constant 0.00999999977 : f32
    %88 = vector.broadcast %cst_41 : f32 to vector<64x512xf32>
    %89 = arith.mulf %88, %85 : vector<64x512xf32>
    %90 = arith.select %87, %85, %89 : vector<64x512xi1>, vector<64x512xf32>
    %c0_42 = arith.constant 0 : index
    %c0_43 = arith.constant 0 : index
    %91 = vector.load %arg10[%c0_42, %c0_43] : memref<512x1024xf32, #tpu.memory_space<vmem>>, vector<512x1024xf32>
    %cst_44 = arith.constant dense<0.000000e+00> : vector<64x1024xf32>
    %92 = tpu.matmul %90, %91, %cst_44 {dimension_numbers = #tpu.dot_dimension_numbers<[1], [0], [0], [1], [0, 0, 1, 1], [], []>} : vector<64x512xf32>, vector<512x1024xf32>, vector<64x1024xf32> -> vector<64x1024xf32>
    %cst_45 = arith.constant dense<0.000000e+00> : vector<1024xf32>
    %93 = vector.multi_reduction <add>, %92, %cst_45 [0] : vector<64x1024xf32> to vector<1024xf32>
    %94 = vector.shape_cast %93 : vector<1024xf32> to vector<1x1024xf32>
    %cst_46 = arith.constant 1.562500e-02 : f32
    %95 = vector.broadcast %cst_46 : f32 to vector<1x1024xf32>
    %96 = arith.mulf %94, %95 : vector<1x1024xf32>
    %97 = arith.mulf %92, %92 : vector<64x1024xf32>
    %cst_47 = arith.constant dense<0.000000e+00> : vector<1024xf32>
    %98 = vector.multi_reduction <add>, %97, %cst_47 [0] : vector<64x1024xf32> to vector<1024xf32>
    %99 = vector.shape_cast %98 : vector<1024xf32> to vector<1x1024xf32>
    %cst_48 = arith.constant 1.562500e-02 : f32
    %100 = vector.broadcast %cst_48 : f32 to vector<1x1024xf32>
    %101 = arith.mulf %99, %100 : vector<1x1024xf32>
    %102 = arith.mulf %96, %96 : vector<1x1024xf32>
    %103 = arith.subf %101, %102 : vector<1x1024xf32>
    %c0_49 = arith.constant 0 : index
    %c0_50 = arith.constant 0 : index
    %104 = vector.load %arg11[%c0_49, %c0_50] : memref<1x1024xf32, #tpu.memory_space<vmem>>, vector<1x1024xf32>
    %cst_51 = arith.constant 9.99999974E-6 : f32
    %105 = vector.broadcast %cst_51 : f32 to vector<1x1024xf32>
    %106 = arith.addf %103, %105 : vector<1x1024xf32>
    %107 = math.rsqrt %106 : vector<1x1024xf32>
    %108 = arith.mulf %104, %107 : vector<1x1024xf32>
    %c0_52 = arith.constant 0 : index
    %c0_53 = arith.constant 0 : index
    %109 = vector.load %arg12[%c0_52, %c0_53] : memref<1x1024xf32, #tpu.memory_space<vmem>>, vector<1x1024xf32>
    %110 = arith.mulf %108, %96 : vector<1x1024xf32>
    %111 = arith.subf %109, %110 : vector<1x1024xf32>
    %112 = vector.broadcast %108 : vector<1x1024xf32> to vector<64x1024xf32>
    %113 = arith.mulf %112, %92 : vector<64x1024xf32>
    %114 = vector.broadcast %111 : vector<1x1024xf32> to vector<64x1024xf32>
    %115 = arith.addf %113, %114 : vector<64x1024xf32>
    %cst_54 = arith.constant 0.000000e+00 : f32
    %116 = vector.broadcast %cst_54 : f32 to vector<64x1024xf32>
    %117 = arith.cmpf ogt, %115, %116 : vector<64x1024xf32>
    %cst_55 = arith.constant 0.00999999977 : f32
    %118 = vector.broadcast %cst_55 : f32 to vector<64x1024xf32>
    %119 = arith.mulf %118, %115 : vector<64x1024xf32>
    %120 = arith.select %117, %115, %119 : vector<64x1024xi1>, vector<64x1024xf32>
    %121 = vector.shape_cast %120 : vector<64x1024xf32> to vector<4x16x1024xf32>
    %cst_56 = arith.constant dense<0xFF800000> : vector<4x1024xf32>
    %122 = vector.multi_reduction <maximumf>, %121, %cst_56 [1] : vector<4x16x1024xf32> to vector<4x1024xf32>
    %c0_57 = arith.constant 0 : index
    %c0_58 = arith.constant 0 : index
    %123 = vector.load %arg13[%c0_57, %c0_58] : memref<4x1024xf32, #tpu.memory_space<vmem>>, vector<4x1024xf32>
    tpu.vector_store %arg13[%c0_57, %c0_58], %122 {strides = array<i32>} : memref<4x1024xf32, #tpu.memory_space<vmem>>, vector<4x1024xf32>,
    return
  }
}

module attributes {stable_mosaic.version = 11 : i64} {
  func.func @_decoder_kernel(%arg0: i32, %arg1: memref<2x2048xf32, #tpu.memory_space<vmem>>, %arg2: memref<1x2048x512xf32, #tpu.memory_space<vmem>>, %arg3: memref<1x1x512xf32, #tpu.memory_space<vmem>>, %arg4: memref<1x512x64xf32, #tpu.memory_space<vmem>>, %arg5: memref<1x1x64xf32, #tpu.memory_space<vmem>>, %arg6: memref<1x1x64xf32, #tpu.memory_space<vmem>>, %arg7: memref<1x1x1xf32, #tpu.memory_space<vmem>>, %arg8: memref<2x128xf32, #tpu.memory_space<vmem>>) attributes {dimension_semantics = [#tpu.dimension_semantics<parallel>], iteration_bounds = array<i64: 5>, scalar_prefetch = 0 : i64, scratch_operands = 0 : i64, tpu.core_type = #tpu.core_type<tc>, window_params = [{pipeline_mode = #tpu.pipeline_mode<synchronous>, transform_indices = @transform_0, window_bounds = array<i64: 2, 2048>}, {transform_indices = @transform_1, window_bounds = array<i64: 1, 2048, 512>}, {transform_indices = @transform_2, window_bounds = array<i64: 1, 1, 512>}, {transform_indices = @transform_3, window_bounds = array<i64: 1, 512, 64>}, {transform_indices = @transform_4, window_bounds = array<i64: 1, 1, 64>}, {transform_indices = @transform_5, window_bounds = array<i64: 1, 1, 64>}, {transform_indices = @transform_6, window_bounds = array<i64: 1, 1, 1>}, {transform_indices = @transform_7, window_bounds = array<i64: 2, 128>}]} {
    %c0 = arith.constant 0 : index
    %c0_0 = arith.constant 0 : index
    %0 = vector.load %arg1[%c0, %c0_0] : memref<2x2048xf32, #tpu.memory_space<vmem>>, vector<2x2048xf32>
    %c0_1 = arith.constant 0 : index
    %c0_2 = arith.constant 0 : index
    %c0_3 = arith.constant 0 : index
    %1 = vector.load %arg2[%c0_1, %c0_2, %c0_3] : memref<1x2048x512xf32, #tpu.memory_space<vmem>>, vector<1x2048x512xf32>
    %2 = vector.shape_cast %1 : vector<1x2048x512xf32> to vector<2048x512xf32>
    %cst = arith.constant dense<0.000000e+00> : vector<2x512xf32>
    %3 = tpu.matmul %0, %2, %cst {dimension_numbers = #tpu.dot_dimension_numbers<[1], [0], [0], [1], [0, 0, 1, 1], [], []>} : vector<2x2048xf32>, vector<2048x512xf32>, vector<2x512xf32> -> vector<2x512xf32>
    %c0_4 = arith.constant 0 : index
    %c0_5 = arith.constant 0 : index
    %c0_6 = arith.constant 0 : index
    %4 = vector.load %arg3[%c0_4, %c0_5, %c0_6] : memref<1x1x512xf32, #tpu.memory_space<vmem>>, vector<1x1x512xf32>
    %5 = vector.shape_cast %4 : vector<1x1x512xf32> to vector<1x512xf32>
    %6 = vector.broadcast %5 : vector<1x512xf32> to vector<2x512xf32>
    %7 = arith.addf %3, %6 : vector<2x512xf32>
    %cst_7 = arith.constant 0.000000e+00 : f32
    %8 = vector.broadcast %cst_7 : f32 to vector<2x512xf32>
    %9 = arith.cmpf ogt, %7, %8 : vector<2x512xf32>
    %cst_8 = arith.constant 0.00999999977 : f32
    %10 = vector.broadcast %cst_8 : f32 to vector<2x512xf32>
    %11 = arith.mulf %10, %7 : vector<2x512xf32>
    %12 = arith.select %9, %7, %11 : vector<2x512xi1>, vector<2x512xf32>
    %c0_9 = arith.constant 0 : index
    %c0_10 = arith.constant 0 : index
    %c0_11 = arith.constant 0 : index
    %13 = vector.load %arg4[%c0_9, %c0_10, %c0_11] : memref<1x512x64xf32, #tpu.memory_space<vmem>>, vector<1x512x64xf32>
    %14 = vector.shape_cast %13 : vector<1x512x64xf32> to vector<512x64xf32>
    %cst_12 = arith.constant dense<0.000000e+00> : vector<2x64xf32>
    %15 = tpu.matmul %12, %14, %cst_12 {dimension_numbers = #tpu.dot_dimension_numbers<[1], [0], [0], [1], [0, 0, 1, 1], [], []>} : vector<2x512xf32>, vector<512x64xf32>, vector<2x64xf32> -> vector<2x64xf32>
    %c0_13 = arith.constant 0 : index
    %c0_14 = arith.constant 0 : index
    %c0_15 = arith.constant 0 : index
    %16 = vector.load %arg5[%c0_13, %c0_14, %c0_15] : memref<1x1x64xf32, #tpu.memory_space<vmem>>, vector<1x1x64xf32>
    %17 = vector.shape_cast %16 : vector<1x1x64xf32> to vector<1x64xf32>
    %18 = vector.broadcast %17 : vector<1x64xf32> to vector<2x64xf32>
    %19 = arith.addf %15, %18 : vector<2x64xf32>
    %cst_16 = arith.constant 0.000000e+00 : f32
    %20 = vector.broadcast %cst_16 : f32 to vector<2x64xf32>
    %21 = arith.cmpf ogt, %19, %20 : vector<2x64xf32>
    %cst_17 = arith.constant 0.00999999977 : f32
    %22 = vector.broadcast %cst_17 : f32 to vector<2x64xf32>
    %23 = arith.mulf %22, %19 : vector<2x64xf32>
    %24 = arith.select %21, %19, %23 : vector<2x64xi1>, vector<2x64xf32>
    %c0_18 = arith.constant 0 : index
    %c0_19 = arith.constant 0 : index
    %c0_20 = arith.constant 0 : index
    %25 = vector.load %arg6[%c0_18, %c0_19, %c0_20] : memref<1x1x64xf32, #tpu.memory_space<vmem>>, vector<1x1x64xf32>
    %26 = vector.shape_cast %25 : vector<1x1x64xf32> to vector<1x64xf32>
    %27 = vector.broadcast %26 : vector<1x64xf32> to vector<2x64xf32>
    %28 = arith.mulf %24, %27 : vector<2x64xf32>
    %cst_21 = arith.constant dense<0.000000e+00> : vector<2xf32>
    %29 = vector.multi_reduction <add>, %28, %cst_21 [1] : vector<2x64xf32> to vector<2xf32>
    %30 = vector.shape_cast %29 : vector<2xf32> to vector<2x1xf32>
    %c0_22 = arith.constant 0 : index
    %c0_23 = arith.constant 0 : index
    %c0_24 = arith.constant 0 : index
    %31 = vector.load %arg7[%c0_22, %c0_23, %c0_24] : memref<1x1x1xf32, #tpu.memory_space<vmem>>, vector<1x1x1xf32>
    %32 = vector.shape_cast %31 : vector<1x1x1xf32> to vector<1x1xf32>
    %33 = vector.broadcast %32 : vector<1x1xf32> to vector<2x1xf32>
    %34 = arith.addf %30, %33 : vector<2x1xf32>
    %35 = vector.shape_cast %34 : vector<2x1xf32> to vector<2x1xf32>
    %36 = vector.broadcast %35 : vector<2x1xf32> to vector<2x128xf32>
    %c0_25 = arith.constant 0 : index
    %c0_26 = arith.constant 0 : index
    %37 = vector.load %arg8[%c0_25, %c0_26] : memref<2x128xf32, #tpu.memory_space<vmem>>, vector<2x128xf32>
    tpu.vector_store %arg8[%c0_25, %c0_26], %36 {strides = array<i32>} : memref<2x128xf32, #tpu.memory_space<vmem>>, vector<2x128xf32>,
    return
  }
  func.func @transform_0(%arg0: i32) -> (i32, i32) {
    %c0_i32 = arith.constant 0 : i32
    %c0_i32_0 = arith.constant 0 : i32
    %c0_i32_1 = arith.constant 0 : i32
    return %c0_i32, %c0_i32_0 : i32, i32
  }
  func.func @transform_1(%arg0: i32) -> (i32, i32, i32) {
    %c0_i32 = arith.constant 0 : i32
    %c0_i32_0 = arith.constant 0 : i32
    %c0_i32_1 = arith.constant 0 : i32
    return %arg0, %c0_i32, %c0_i32_0 : i32, i32, i32
  }
  func.func @transform_2(%arg0: i32) -> (i32, i32, i32) {
    %c0_i32 = arith.constant 0 : i32
    %c0_i32_0 = arith.constant 0 : i32
    %c0_i32_1 = arith.constant 0 : i32
    return %arg0, %c0_i32, %c0_i32_0 : i32, i32, i32
  }
  func.func @transform_3(%arg0: i32) -> (i32, i32, i32) {
    %c0_i32 = arith.constant 0 : i32
    %c0_i32_0 = arith.constant 0 : i32
    %c0_i32_1 = arith.constant 0 : i32
    return %arg0, %c0_i32, %c0_i32_0 : i32, i32, i32
  }
  func.func @transform_4(%arg0: i32) -> (i32, i32, i32) {
    %c0_i32 = arith.constant 0 : i32
    %c0_i32_0 = arith.constant 0 : i32
    %c0_i32_1 = arith.constant 0 : i32
    return %arg0, %c0_i32, %c0_i32_0 : i32, i32, i32
  }
  func.func @transform_5(%arg0: i32) -> (i32, i32, i32) {
    %c0_i32 = arith.constant 0 : i32
    %c0_i32_0 = arith.constant 0 : i32
    %c0_i32_1 = arith.constant 0 : i32
    return %arg0, %c0_i32, %c0_i32_0 : i32, i32, i32
  }
  func.func @transform_6(%arg0: i32) -> (i32, i32, i32) {
    %c0_i32 = arith.constant 0 : i32
    %c0_i32_0 = arith.constant 0 : i32
    %c0_i32_1 = arith.constant 0 : i32
    return %arg0, %c0_i32, %c0_i32_0 : i32, i32, i32
  }
  func.func @transform_7(%arg0: i32) -> (i32, i32) {
    %c0_i32 = arith.constant 0 : i32
    %c0_i32_0 = arith.constant 0 : i32
    return %c0_i32, %arg0 : i32, i32
  }
}

</mosaic_0001>

<llo_original>
// kernel: siamese_multi_decoder.2
$region0: #{siamese_multi_decoder.2}
  #allocation0 [shape = 'u32[]', space=smem, size = 0x4, offset = 0x4, fixed_abs, tag = 'smem constant byte address 0x4 - core index']
  #allocation1 [shape = 'u32[72,128]{1,0:T(1,128)}', space=vmem, size = 0x9000, scoped, tag = 'internal scratch']
  %s0 = inlined_call_operand.vmem [shape: f32[64,8], index: 0, kind: input, shape index: {}]
  %s1 = inlined_call_operand.hbm [shape: f32[8,64], index: 1, kind: input, shape index: {}]
  %s2 = inlined_call_operand.hbm [shape: f32[1,64], index: 2, kind: input, shape index: {}]
  %s3 = inlined_call_operand.hbm [shape: f32[1,64], index: 3, kind: input, shape index: {}]
  %s4 = inlined_call_operand.hbm [shape: f32[64,128], index: 4, kind: input, shape index: {}]
  %s5 = inlined_call_operand.hbm [shape: f32[1,128], index: 5, kind: input, shape index: {}]
  %s6 = inlined_call_operand.hbm [shape: f32[1,128], index: 6, kind: input, shape index: {}]
  %s7 = inlined_call_operand.hbm [shape: f32[128,512], index: 7, kind: input, shape index: {}]
  %s8 = inlined_call_operand.hbm [shape: f32[1,512], index: 8, kind: input, shape index: {}]
  %s9 = inlined_call_operand.hbm [shape: f32[1,512], index: 9, kind: input, shape index: {}]
  %s10 = inlined_call_operand.hbm [shape: f32[512,1024], index: 10, kind: input, shape index: {}]
  %s11 = inlined_call_operand.hbm [shape: f32[1,1024], index: 11, kind: input, shape index: {}]
  %s12 = inlined_call_operand.hbm [shape: f32[1,1024], index: 12, kind: input, shape index: {}]
  %s13 = inlined_call_operand.vmem [shape: f32[4,1024], index: 13, kind: output, shape index: {}]
  %s14 = sld [smem:[#allocation0]]
  $region110: #{siamese_multi_decoder.2} parent=0
    _
  %s16 = ssub.s32 1, %s14
  %s17 = scalar_select 0, %s16, %s14
  $region1: #{siamese_multi_decoder.2} parent=0
    #allocation2 [shape = 'u8[4096]{0}', space=vmem, size = 0x1000, scoped, tag = 'input window, operand 1, single buffered']
    #allocation3 [shape = 's32[1]{0}', space=sflag, size = 0x4, scoped, tag = 'scoped memory for siamese_multi_decoder.2']
    #allocation4 [shape = 'u8[512]{0}', space=vmem, size = 0x400, scoped, tag = 'input window, operand 2, single buffered']
    #allocation5 [shape = 's32[1]{0}', space=sflag, size = 0x4, scoped, tag = 'scoped memory for siamese_multi_decoder.2']
    #allocation6 [shape = 'u8[512]{0}', space=vmem, size = 0x400, scoped, tag = 'input window, operand 3, single buffered']
    #allocation7 [shape = 'u8[32768]{0}', space=vmem, size = 0x8000, scoped, tag = 'input window, operand 4, single buffered']
    #allocation8 [shape = 's32[1]{0}', space=sflag, size = 0x4, scoped, tag = 'scoped memory for siamese_multi_decoder.2']
    #allocation9 [shape = 'u8[512]{0}', space=vmem, size = 0x400, scoped, tag = 'input window, operand 5, single buffered']
    #allocation10 [shape = 'u8[512]{0}', space=vmem, size = 0x400, scoped, tag = 'input window, operand 6, single buffered']
    #allocation11 [shape = 's32[1]{0}', space=sflag, size = 0x4, scoped, tag = 'scoped memory for siamese_multi_decoder.2']
    #allocation12 [shape = 'u8[262144]{0}', space=vmem, size = 0x40000, scoped, tag = 'input window, operand 7, single buffered']
    #allocation13 [shape = 'u8[2048]{0}', space=vmem, size = 0x800, scoped, tag = 'input window, operand 8, single buffered']
    #allocation14 [shape = 's32[1]{0}', space=sflag, size = 0x4, scoped, tag = 'scoped memory for siamese_multi_decoder.2']
    #allocation15 [shape = 'u8[2048]{0}', space=vmem, size = 0x800, scoped, tag = 'input window, operand 9, single buffered']
    #allocation16 [shape = 'u8[2097152]{0}', space=vmem, size = 0x200000, scoped, tag = 'input window, operand 10, single buffered']
    #allocation17 [shape = 's32[1]{0}', space=sflag, size = 0x4, scoped, tag = 'scoped memory for siamese_multi_decoder.2']
    #allocation18 [shape = 'u8[4096]{0}', space=vmem, size = 0x1000, scoped, tag = 'input window, operand 11, single buffered']
    #allocation19 [shape = 'u8[4096]{0}', space=vmem, size = 0x1000, scoped, tag = 'input window, operand 12, single buffered']
    #allocation20 [shape = 's32[1]{0}', space=sflag, size = 0x4, scoped, tag = 'scoped memory for siamese_multi_decoder.2']
    %18 = vsyncpa [#allocation3], 0
    %19 = vsyncpa [#allocation5], 0
    %20 = vsyncpa [#allocation8], 0
    %21 = vsyncpa [#allocation11], 0
    %22 = vsyncpa [#allocation14], 0
    %23 = vsyncpa [#allocation17], 0
    %24 = vsyncpa [#allocation20], 0
    // Predicated region
    $region2: #{siamese_multi_decoder.2} parent=1 // pred_check
      _
    $region3: #{siamese_multi_decoder.2} parent=1 // pred_check_branch
      %26 = sbr.rel (0) target = $region5
    $region4: #{siamese_multi_decoder.2} parent=1 // pred_region
      _
    $region5: #{siamese_multi_decoder.2} parent=1 // pred_fallthru
      _
    // Predicated region
    $region6: #{siamese_multi_decoder.2} parent=1 // pred_check
      _
    $region7: #{siamese_multi_decoder.2} parent=1 // pred_check_branch
      %28 = sbr.rel (0) target = $region9
    $region8: #{siamese_multi_decoder.2} parent=1 // pred_region
      %30 = vsyncadd [#allocation3], 0
      %s32 = sshll.u32 %s1, 4
      %s33 = int_to_ptr.hbm [resolvable:$true] %s32
      %s34 = sshll.u32 [#allocation2], 4
      %s35 = int_to_ptr.vmem [resolvable:$true] %s34
      %37 = dma.hbm_to_vmem [thread:$0]  %s33, 128, %s35, [#allocation3]
    $region9: #{siamese_multi_decoder.2} parent=1 // pred_fallthru
      _
    // Predicated region
    $region10: #{siamese_multi_decoder.2} parent=1 // pred_check
      _
    $region11: #{siamese_multi_decoder.2} parent=1 // pred_check_branch
      %39 = sbr.rel (0) target = $region13
    $region12: #{siamese_multi_decoder.2} parent=1 // pred_region
      %41 = vsyncadd [#allocation5], 0
      %s43 = sshll.u32 %s2, 4
      %s44 = int_to_ptr.hbm [resolvable:$true] %s43
      %s45 = sshll.u32 [#allocation4], 4
      %s46 = int_to_ptr.vmem [resolvable:$true] %s45
      %48 = dma.hbm_to_vmem [thread:$0]  %s44, 16, %s46, [#allocation5]
    $region13: #{siamese_multi_decoder.2} parent=1 // pred_fallthru
      _
    // Predicated region
    $region14: #{siamese_multi_decoder.2} parent=1 // pred_check
      _
    $region15: #{siamese_multi_decoder.2} parent=1 // pred_check_branch
      %50 = sbr.rel (0) target = $region17
    $region16: #{siamese_multi_decoder.2} parent=1 // pred_region
      %52 = vsyncadd [#allocation5], 0
      %s54 = sshll.u32 %s3, 4
      %s55 = int_to_ptr.hbm [resolvable:$true] %s54
      %s56 = sshll.u32 [#allocation6], 4
      %s57 = int_to_ptr.vmem [resolvable:$true] %s56
      %59 = dma.hbm_to_vmem [thread:$0]  %s55, 16, %s57, [#allocation5]
    $region17: #{siamese_multi_decoder.2} parent=1 // pred_fallthru
      _
    // Predicated region
    $region18: #{siamese_multi_decoder.2} parent=1 // pred_check
      _
    $region19: #{siamese_multi_decoder.2} parent=1 // pred_check_branch
      %61 = sbr.rel (0) target = $region21
    $region20: #{siamese_multi_decoder.2} parent=1 // pred_region
      %63 = vsyncadd [#allocation8], 0
      %s64 = sshll.u32 %s4, 4
      %s65 = int_to_ptr.hbm [resolvable:$true] %s64
      %s66 = sshll.u32 [#allocation7], 4
      %s67 = int_to_ptr.vmem [resolvable:$true] %s66
      %72 = dma.hbm_to_vmem [thread:$0]  %s65, 1024, %s67, [#allocation8], 128, 128, 8
    $region21: #{siamese_multi_decoder.2} parent=1 // pred_fallthru
      _
    // Predicated region
    $region22: #{siamese_multi_decoder.2} parent=1 // pred_check
      _
    $region23: #{siamese_multi_decoder.2} parent=1 // pred_check_branch
      %74 = sbr.rel (0) target = $region25
    $region24: #{siamese_multi_decoder.2} parent=1 // pred_region
      %76 = vsyncadd [#allocation8], 0
      %s78 = sshll.u32 %s5, 4
      %s79 = int_to_ptr.hbm [resolvable:$true] %s78
      %s80 = sshll.u32 [#allocation9], 4
      %s81 = int_to_ptr.vmem [resolvable:$true] %s80
      %83 = dma.hbm_to_vmem [thread:$0]  %s79, 16, %s81, [#allocation8]
    $region25: #{siamese_multi_decoder.2} parent=1 // pred_fallthru
      _
    // Predicated region
    $region26: #{siamese_multi_decoder.2} parent=1 // pred_check
      _
    $region27: #{siamese_multi_decoder.2} parent=1 // pred_check_branch
      %85 = sbr.rel (0) target = $region29
    $region28: #{siamese_multi_decoder.2} parent=1 // pred_region
      %87 = vsyncadd [#allocation11], 0
      %s89 = sshll.u32 %s6, 4
      %s90 = int_to_ptr.hbm [resolvable:$true] %s89
      %s91 = sshll.u32 [#allocation10], 4
      %s92 = int_to_ptr.vmem [resolvable:$true] %s91
      %94 = dma.hbm_to_vmem [thread:$0]  %s90, 16, %s92, [#allocation11]
    $region29: #{siamese_multi_decoder.2} parent=1 // pred_fallthru
      _
    // Predicated region
    $region30: #{siamese_multi_decoder.2} parent=1 // pred_check
      _
    $region31: #{siamese_multi_decoder.2} parent=1 // pred_check_branch
      %96 = sbr.rel (0) target = $region33
    $region32: #{siamese_multi_decoder.2} parent=1 // pred_region
      %98 = vsyncadd [#allocation11], 0
      %s99 = sshll.u32 %s7, 4
      %s100 = int_to_ptr.hbm [resolvable:$true] %s99
      %s101 = sshll.u32 [#allocation12], 4
      %s102 = int_to_ptr.vmem [resolvable:$true] %s101
      %107 = dma.hbm_to_vmem [thread:$0]  %s100, 8192, %s102, [#allocation11], 512, 512, 32
    $region33: #{siamese_multi_decoder.2} parent=1 // pred_fallthru
      _
    // Predicated region
    $region34: #{siamese_multi_decoder.2} parent=1 // pred_check
      _
    $region35: #{siamese_multi_decoder.2} parent=1 // pred_check_branch
      %109 = sbr.rel (0) target = $region37
    $region36: #{siamese_multi_decoder.2} parent=1 // pred_region
      %111 = vsyncadd [#allocation14], 0
      %s113 = sshll.u32 %s8, 4
      %s114 = int_to_ptr.hbm [resolvable:$true] %s113
      %s115 = sshll.u32 [#allocation13], 4
      %s116 = int_to_ptr.vmem [resolvable:$true] %s115
      %118 = dma.hbm_to_vmem [thread:$0]  %s114, 64, %s116, [#allocation14]
    $region37: #{siamese_multi_decoder.2} parent=1 // pred_fallthru
      _
    // Predicated region
    $region38: #{siamese_multi_decoder.2} parent=1 // pred_check
      _
    $region39: #{siamese_multi_decoder.2} parent=1 // pred_check_branch
      %120 = sbr.rel (0) target = $region41
    $region40: #{siamese_multi_decoder.2} parent=1 // pred_region
      %122 = vsyncadd [#allocation14], 0
      %s124 = sshll.u32 %s9, 4
      %s125 = int_to_ptr.hbm [resolvable:$true] %s124
      %s126 = sshll.u32 [#allocation15], 4
      %s127 = int_to_ptr.vmem [resolvable:$true] %s126
      %129 = dma.hbm_to_vmem [thread:$0]  %s125, 64, %s127, [#allocation14]
    $region41: #{siamese_multi_decoder.2} parent=1 // pred_fallthru
      _
    // Predicated region
    $region42: #{siamese_multi_decoder.2} parent=1 // pred_check
      _
    $region43: #{siamese_multi_decoder.2} parent=1 // pred_check_branch
      %131 = sbr.rel (0) target = $region45
    $region44: #{siamese_multi_decoder.2} parent=1 // pred_region
      %133 = vsyncadd [#allocation17], 0
      %s134 = sshll.u32 %s10, 4
      %s135 = int_to_ptr.hbm [resolvable:$true] %s134
      %s136 = sshll.u32 [#allocation16], 4
      %s137 = int_to_ptr.vmem [resolvable:$true] %s136
      %142 = dma.hbm_to_vmem [thread:$0]  %s135, 65536, %s137, [#allocation17], 1024, 1024, 64
    $region45: #{siamese_multi_decoder.2} parent=1 // pred_fallthru
      _
    // Predicated region
    $region46: #{siamese_multi_decoder.2} parent=1 // pred_check
      _
    $region47: #{siamese_multi_decoder.2} parent=1 // pred_check_branch
      %144 = sbr.rel (0) target = $region49
    $region48: #{siamese_multi_decoder.2} parent=1 // pred_region
      %146 = vsyncadd [#allocation17], 0
      %s148 = sshll.u32 %s11, 4
      %s149 = int_to_ptr.hbm [resolvable:$true] %s148
      %s150 = sshll.u32 [#allocation18], 4
      %s151 = int_to_ptr.vmem [resolvable:$true] %s150
      %153 = dma.hbm_to_vmem [thread:$0]  %s149, 128, %s151, [#allocation17]
    $region49: #{siamese_multi_decoder.2} parent=1 // pred_fallthru
      _
    // Predicated region
    $region50: #{siamese_multi_decoder.2} parent=1 // pred_check
      _
    $region51: #{siamese_multi_decoder.2} parent=1 // pred_check_branch
      %155 = sbr.rel (0) target = $region53
    $region52: #{siamese_multi_decoder.2} parent=1 // pred_region
      %157 = vsyncadd [#allocation20], 0
      %s159 = sshll.u32 %s12, 4
      %s160 = int_to_ptr.hbm [resolvable:$true] %s159
      %s161 = sshll.u32 [#allocation19], 4
      %s162 = int_to_ptr.vmem [resolvable:$true] %s161
      %164 = dma.hbm_to_vmem [thread:$0]  %s160, 128, %s162, [#allocation20]
    $region53: #{siamese_multi_decoder.2} parent=1 // pred_fallthru
      _
    // Predicated region
    $region54: #{siamese_multi_decoder.2} parent=1 // pred_check
      _
    $region55: #{siamese_multi_decoder.2} parent=1 // pred_check_branch
      %166 = sbr.rel (0) target = $region57
    $region56: #{siamese_multi_decoder.2} parent=1 // pred_region
      %168 = dma.done [#allocation3], 128
    $region57: #{siamese_multi_decoder.2} parent=1 // pred_fallthru
      _
    // Predicated region
    $region58: #{siamese_multi_decoder.2} parent=1 // pred_check
      _
    $region59: #{siamese_multi_decoder.2} parent=1 // pred_check_branch
      %170 = sbr.rel (0) target = $region61
    $region60: #{siamese_multi_decoder.2} parent=1 // pred_region
      %172 = dma.done [#allocation5], 16
    $region61: #{siamese_multi_decoder.2} parent=1 // pred_fallthru
      _
    // Predicated region
    $region62: #{siamese_multi_decoder.2} parent=1 // pred_check
      _
    $region63: #{siamese_multi_decoder.2} parent=1 // pred_check_branch
      %174 = sbr.rel (0) target = $region65
    $region64: #{siamese_multi_decoder.2} parent=1 // pred_region
      %176 = dma.done [#allocation5], 16
    $region65: #{siamese_multi_decoder.2} parent=1 // pred_fallthru
      _
    // Predicated region
    $region66: #{siamese_multi_decoder.2} parent=1 // pred_check
      _
    $region67: #{siamese_multi_decoder.2} parent=1 // pred_check_branch
      %178 = sbr.rel (0) target = $region69
    $region68: #{siamese_multi_decoder.2} parent=1 // pred_region
      %180 = dma.done [#allocation8], 1024
    $region69: #{siamese_multi_decoder.2} parent=1 // pred_fallthru
      _
    // Predicated region
    $region70: #{siamese_multi_decoder.2} parent=1 // pred_check
      _
    $region71: #{siamese_multi_decoder.2} parent=1 // pred_check_branch
      %182 = sbr.rel (0) target = $region73
    $region72: #{siamese_multi_decoder.2} parent=1 // pred_region
      %184 = dma.done [#allocation8], 16
    $region73: #{siamese_multi_decoder.2} parent=1 // pred_fallthru
      _
    // Predicated region
    $region74: #{siamese_multi_decoder.2} parent=1 // pred_check
      _
    $region75: #{siamese_multi_decoder.2} parent=1 // pred_check_branch
      %186 = sbr.rel (0) target = $region77
    $region76: #{siamese_multi_decoder.2} parent=1 // pred_region
      %188 = dma.done [#allocation11], 16
    $region77: #{siamese_multi_decoder.2} parent=1 // pred_fallthru
      _
    // Predicated region
    $region78: #{siamese_multi_decoder.2} parent=1 // pred_check
      _
    $region79: #{siamese_multi_decoder.2} parent=1 // pred_check_branch
      %190 = sbr.rel (0) target = $region81
    $region80: #{siamese_multi_decoder.2} parent=1 // pred_region
      %192 = dma.done [#allocation11], 8192
    $region81: #{siamese_multi_decoder.2} parent=1 // pred_fallthru
      _
    // Predicated region
    $region82: #{siamese_multi_decoder.2} parent=1 // pred_check
      _
    $region83: #{siamese_multi_decoder.2} parent=1 // pred_check_branch
      %194 = sbr.rel (0) target = $region85
    $region84: #{siamese_multi_decoder.2} parent=1 // pred_region
      %196 = dma.done [#allocation14], 64
    $region85: #{siamese_multi_decoder.2} parent=1 // pred_fallthru
      _
    // Predicated region
    $region86: #{siamese_multi_decoder.2} parent=1 // pred_check
      _
    $region87: #{siamese_multi_decoder.2} parent=1 // pred_check_branch
      %198 = sbr.rel (0) target = $region89
    $region88: #{siamese_multi_decoder.2} parent=1 // pred_region
      %200 = dma.done [#allocation14], 64
    $region89: #{siamese_multi_decoder.2} parent=1 // pred_fallthru
      _
    // Predicated region
    $region90: #{siamese_multi_decoder.2} parent=1 // pred_check
      _
    $region91: #{siamese_multi_decoder.2} parent=1 // pred_check_branch
      %202 = sbr.rel (0) target = $region93
    $region92: #{siamese_multi_decoder.2} parent=1 // pred_region
      %204 = dma.done [#allocation17], 65536
    $region93: #{siamese_multi_decoder.2} parent=1 // pred_fallthru
      _
    // Predicated region
    $region94: #{siamese_multi_decoder.2} parent=1 // pred_check
      _
    $region95: #{siamese_multi_decoder.2} parent=1 // pred_check_branch
      %206 = sbr.rel (0) target = $region97
    $region96: #{siamese_multi_decoder.2} parent=1 // pred_region
      %208 = dma.done [#allocation17], 128
    $region97: #{siamese_multi_decoder.2} parent=1 // pred_fallthru
      _
    // Predicated region
    $region98: #{siamese_multi_decoder.2} parent=1 // pred_check
      _
    $region99: #{siamese_multi_decoder.2} parent=1 // pred_check_branch
      %210 = sbr.rel (0) target = $region101
    $region100: #{siamese_multi_decoder.2} parent=1 // pred_region
      %212 = dma.done [#allocation20], 128
    $region101: #{siamese_multi_decoder.2} parent=1 // pred_fallthru
      _
    %v213 = vld [vmem:[%s0] sm:$0xff]
    %v214 = vld [vmem:[%s0 + $0x8] sm:$0xff]
    %v215 = vld [vmem:[%s0 + $0x10] sm:$0xff]
    %v216 = vld [vmem:[%s0 + $0x18] sm:$0xff]
    %v217 = vld [vmem:[%s0 + $0x20] sm:$0xff]
    %v218 = vld [vmem:[%s0 + $0x28] sm:$0xff]
    %v219 = vld [vmem:[%s0 + $0x30] sm:$0xff]
    %v220 = vld [vmem:[%s0 + $0x38] sm:$0xff]
    %v221 = vld [vmem:[#allocation2] sm:$0xff]
    %vm222 = vcmask 64512
    %v224 = vsel %vm222, %v213, 0
    %v227 = vsel %vm222, %v214, 0
    %v230 = vsel %vm222, %v215, 0
    %v233 = vsel %vm222, %v216, 0
    %v236 = vsel %vm222, %v217, 0
    %v239 = vsel %vm222, %v218, 0
    %v242 = vsel %vm222, %v219, 0
    %v245 = vsel %vm222, %v220, 0
    %247 = vmatpush.msra.mxu0 0.0
    %248 = vmatpush.msra.mxu0 0.0
    %249 = vmatpush.msra.mxu0 0.0
    %250 = vmatpush.msra.mxu0 0.0
    %251 = vmatpush.msra.mxu0 0.0
    %252 = vmatpush.msra.mxu0 0.0
    %253 = vmatpush.msra.mxu0 0.0
    %254 = vmatpush.msra.mxu0 0.0
    %255 = vmatpush.msra.mxu0 0.0
    %256 = vmatpush.msra.mxu0 0.0
    %257 = vmatpush.msra.mxu0 0.0
    %258 = vmatpush.msra.mxu0 0.0
    %259 = vmatpush.msra.mxu0 0.0
    %260 = vmatpush.msra.mxu0 0.0
    %261 = vmatpush.msra.mxu0 0.0
    %262 = vmatpush.msra.mxu0 %v221
    %263 = vmatmul.f32.gmra.mxu0 %v224
    %v264 = vpop.f32.mrf.mxu0
    %v265 = vadd.f32 0.0, %v264
    %266 = vmatmul.f32.gmra.mxu0 %v227
    %v267 = vpop.f32.mrf.mxu0
    %v268 = vadd.f32 0.0, %v267
    %269 = vmatmul.f32.gmra.mxu0 %v230
    %v270 = vpop.f32.mrf.mxu0
    %v271 = vadd.f32 0.0, %v270
    %272 = vmatmul.f32.gmra.mxu0 %v233
    %v273 = vpop.f32.mrf.mxu0
    %v274 = vadd.f32 0.0, %v273
    %275 = vmatmul.f32.gmra.mxu0 %v236
    %v276 = vpop.f32.mrf.mxu0
    %v277 = vadd.f32 0.0, %v276
    %278 = vmatmul.f32.gmra.mxu0 %v239
    %v279 = vpop.f32.mrf.mxu0
    %v280 = vadd.f32 0.0, %v279
    %281 = vmatmul.f32.gmra.mxu0 %v242
    %v282 = vpop.f32.mrf.mxu0
    %v283 = vadd.f32 0.0, %v282
    %284 = vmatmul.f32.gmra.mxu0 %v245
    %v285 = vpop.f32.mrf.mxu0
    %v286 = vadd.f32 0.0, %v285
    %287 = vdwg.mxu0
    %vm288 = vcmask 523264
    %v289 = vsel %vm288, %v265, 0.0
    %v290 = vsel %vm288, %v268, 0.0
    %v291 = vadd.f32 %v289, %v290
    %v292 = vsel %vm288, %v271, 0.0
    %v293 = vadd.f32 %v291, %v292
    %v294 = vsel %vm288, %v274, 0.0
    %v295 = vadd.f32 %v293, %v294
    %v296 = vsel %vm288, %v277, 0.0
    %v297 = vadd.f32 %v295, %v296
    %v298 = vsel %vm288, %v280, 0.0
    %v299 = vadd.f32 %v297, %v298
    %v300 = vsel %vm288, %v283, 0.0
    %v301 = vadd.f32 %v299, %v300
    %v302 = vsel %vm288, %v286, 0.0
    %v303 = vadd.f32 %v301, %v302
    %v304 = vrot.slane %v303, 4
    %v305 = vadd.f32 %v303, %v304
    %v306 = vrot.slane %v305, 2
    %v307 = vadd.f32 %v305, %v306
    %v308 = vrot.slane %v307, 1
    %v309 = vadd.f32 %v307, %v308
    %v310 = vmul.f32 %v309, 0.015625
    %v311 = vmul.f32 %v265, %v265
    %v312 = vmul.f32 %v268, %v268
    %v313 = vmul.f32 %v271, %v271
    %v314 = vmul.f32 %v274, %v274
    %v315 = vmul.f32 %v277, %v277
    %v316 = vmul.f32 %v280, %v280
    %v317 = vmul.f32 %v283, %v283
    %v318 = vmul.f32 %v286, %v286
    %v319 = vsel %vm288, %v311, 0.0
    %v320 = vsel %vm288, %v312, 0.0
    %v321 = vadd.f32 %v319, %v320
    %v322 = vsel %vm288, %v313, 0.0
    %v323 = vadd.f32 %v321, %v322
    %v324 = vsel %vm288, %v314, 0.0
    %v325 = vadd.f32 %v323, %v324
    %v326 = vsel %vm288, %v315, 0.0
    %v327 = vadd.f32 %v325, %v326
    %v328 = vsel %vm288, %v316, 0.0
    %v329 = vadd.f32 %v327, %v328
    %v330 = vsel %vm288, %v317, 0.0
    %v331 = vadd.f32 %v329, %v330
    %v332 = vsel %vm288, %v318, 0.0
    %v333 = vadd.f32 %v331, %v332
    %v334 = vrot.slane %v333, 4
    %v335 = vadd.f32 %v333, %v334
    %v336 = vrot.slane %v335, 2
    %v337 = vadd.f32 %v335, %v336
    %v338 = vrot.slane %v337, 1
    %v339 = vadd.f32 %v337, %v338
    %v340 = vmul.f32 %v339, 0.015625
    %v341 = vmul.f32 %v310, %v310
    %v342 = vsub.f32 %v340, %v341
    %v343 = vld [vmem:[#allocation4] sm:$0x1]
    %v344 = vadd.f32 %v342, 1e-05
    %v345 = vrsqrt.pop %v344
    %v346 = vmul.f32 %v345, %v344
    %v347 = vmul.f32 %v346, %v345
    %v348 = vmul.f32 0.5, %v347
    %v349 = vsub.f32 1.5, %v348
    %v350 = vmul.f32 %v345, %v349
    %vm351 = vweird.f32 %v344
    %vm352 = vweird.f32 %v345
    %vm353 = vmor %vm351, %vm352
    %v354 = vsel %vm353, %v345, %v350
    %v355 = vmul.f32 %v343, %v354
    %v356 = vld [vmem:[#allocation6] sm:$0x1]
    %v357 = vmul.f32 %v355, %v310
    %v358 = vsub.f32 %v356, %v357
    %v360 = vperm.slane %v355, 0
    %v362 = vmul.f32 %v360, %v265
    %v363 = vmul.f32 %v360, %v268
    %v364 = vmul.f32 %v360, %v271
    %v365 = vmul.f32 %v360, %v274
    %v366 = vmul.f32 %v360, %v277
    %v367 = vmul.f32 %v360, %v280
    %v368 = vmul.f32 %v360, %v283
    %v369 = vmul.f32 %v360, %v286
    %v371 = vperm.slane %v358, 0
    %v373 = vadd.f32 %v362, %v371
    %v374 = vadd.f32 %v363, %v371
    %v375 = vadd.f32 %v364, %v371
    %v376 = vadd.f32 %v365, %v371
    %v377 = vadd.f32 %v366, %v371
    %v378 = vadd.f32 %v367, %v371
    %v379 = vadd.f32 %v368, %v371
    %v380 = vadd.f32 %v369, %v371
    %vm381 = vcmp.gt.f32.partialorder %v373, 0.0
    %vm382 = vcmp.gt.f32.partialorder %v374, 0.0
    %vm383 = vcmp.gt.f32.partialorder %v375, 0.0
    %vm384 = vcmp.gt.f32.partialorder %v376, 0.0
    %vm385 = vcmp.gt.f32.partialorder %v377, 0.0
    %vm386 = vcmp.gt.f32.partialorder %v378, 0.0
    %vm387 = vcmp.gt.f32.partialorder %v379, 0.0
    %vm388 = vcmp.gt.f32.partialorder %v380, 0.0
    %v389 = vmul.f32 %v373, 0.01
    %v390 = vmul.f32 %v374, 0.01
    %v391 = vmul.f32 %v375, 0.01
    %v392 = vmul.f32 %v376, 0.01
    %v393 = vmul.f32 %v377, 0.01
    %v394 = vmul.f32 %v378, 0.01
    %v395 = vmul.f32 %v379, 0.01
    %v396 = vmul.f32 %v380, 0.01
    %v397 = vsel %vm381, %v373, %v389
    %v398 = vsel %vm382, %v374, %v390
    %v399 = vsel %vm383, %v375, %v391
    %v400 = vsel %vm384, %v376, %v392
    %v401 = vsel %vm385, %v377, %v393
    %v402 = vsel %vm386, %v378, %v394
    %v403 = vsel %vm387, %v379, %v395
    %v404 = vsel %vm388, %v380, %v396
    %v405 = vld [vmem:[#allocation7] sm:$0xff]
    %v406 = vld [vmem:[#allocation7 + $0x8] sm:$0xff]
    %v407 = vld [vmem:[#allocation7 + $0x10] sm:$0xff]
    %v408 = vld [vmem:[#allocation7 + $0x18] sm:$0xff]
    %v409 = vld [vmem:[#allocation7 + $0x20] sm:$0xff]
    %v410 = vld [vmem:[#allocation7 + $0x28] sm:$0xff]
    %v411 = vld [vmem:[#allocation7 + $0x30] sm:$0xff]
    %v412 = vld [vmem:[#allocation7 + $0x38] sm:$0xff]
    %v414 = vsel %vm288, %v397, 0
    %v417 = vsel %vm288, %v398, 0
    %v420 = vsel %vm288, %v399, 0
    %v423 = vsel %vm288, %v400, 0
    %v426 = vsel %vm288, %v401, 0
    %v429 = vsel %vm288, %v402, 0
    %v432 = vsel %vm288, %v403, 0
    %v435 = vsel %vm288, %v404, 0
    %437 = vmatpush.msra.mxu0 0.0
    %438 = vmatpush.msra.mxu0 0.0
    %439 = vmatpush.msra.mxu0 0.0
    %440 = vmatpush.msra.mxu0 0.0
    %441 = vmatpush.msra.mxu0 0.0
    %442 = vmatpush.msra.mxu0 0.0
    %443 = vmatpush.msra.mxu0 0.0
    %444 = vmatpush.msra.mxu0 0.0
    %445 = vmatpush.msra.mxu0 %v412
    %446 = vmatpush.msra.mxu0 %v411
    %447 = vmatpush.msra.mxu0 %v410
    %448 = vmatpush.msra.mxu0 %v409
    %449 = vmatpush.msra.mxu0 %v408
    %450 = vmatpush.msra.mxu0 %v407
    %451 = vmatpush.msra.mxu0 %v406
    %452 = vmatpush.msra.mxu0 %v405
    %453 = vmatmul.f32.gmra.mxu0 %v414
    %v454 = vpop.f32.mrf.mxu0
    %v455 = vadd.f32 0.0, %v454
    %456 = vmatmul.f32.gmra.mxu0 %v417
    %v457 = vpop.f32.mrf.mxu0
    %v458 = vadd.f32 0.0, %v457
    %459 = vmatmul.f32.gmra.mxu0 %v420
    %v460 = vpop.f32.mrf.mxu0
    %v461 = vadd.f32 0.0, %v460
    %462 = vmatmul.f32.gmra.mxu0 %v423
    %v463 = vpop.f32.mrf.mxu0
    %v464 = vadd.f32 0.0, %v463
    %465 = vmatmul.f32.gmra.mxu0 %v426
    %v466 = vpop.f32.mrf.mxu0
    %v467 = vadd.f32 0.0, %v466
    %468 = vmatmul.f32.gmra.mxu0 %v429
    %v469 = vpop.f32.mrf.mxu0
    %v470 = vadd.f32 0.0, %v469
    %471 = vmatmul.f32.gmra.mxu0 %v432
    %v472 = vpop.f32.mrf.mxu0
    %v473 = vadd.f32 0.0, %v472
    %474 = vmatmul.f32.gmra.mxu0 %v435
    %v475 = vpop.f32.mrf.mxu0
    %v476 = vadd.f32 0.0, %v475
    %477 = vdwg.mxu0
    %v478 = vadd.f32 %v455, %v458
    %v479 = vadd.f32 %v478, %v461
    %v480 = vadd.f32 %v479, %v464
    %v481 = vadd.f32 %v480, %v467
    %v482 = vadd.f32 %v481, %v470
    %v483 = vadd.f32 %v482, %v473
    %v484 = vadd.f32 %v483, %v476
    %v485 = vrot.slane %v484, 4
    %v486 = vadd.f32 %v484, %v485
    %v487 = vrot.slane %v486, 2
    %v488 = vadd.f32 %v486, %v487
    %v489 = vrot.slane %v488, 1
    %v490 = vadd.f32 %v488, %v489
    %v491 = vmul.f32 %v490, 0.015625
    %v492 = vmul.f32 %v455, %v455
    %v493 = vmul.f32 %v458, %v458
    %v494 = vmul.f32 %v461, %v461
    %v495 = vmul.f32 %v464, %v464
    %v496 = vmul.f32 %v467, %v467
    %v497 = vmul.f32 %v470, %v470
    %v498 = vmul.f32 %v473, %v473
    %v499 = vmul.f32 %v476, %v476
    %v500 = vadd.f32 %v492, %v493
    %v501 = vadd.f32 %v500, %v494
    %v502 = vadd.f32 %v501, %v495
    %v503 = vadd.f32 %v502, %v496
    %v504 = vadd.f32 %v503, %v497
    %v505 = vadd.f32 %v504, %v498
    %v506 = vadd.f32 %v505, %v499
    %v507 = vrot.slane %v506, 4
    %v508 = vadd.f32 %v506, %v507
    %v509 = vrot.slane %v508, 2
    %v510 = vadd.f32 %v508, %v509
    %v511 = vrot.slane %v510, 1
    %v512 = vadd.f32 %v510, %v511
    %v513 = vmul.f32 %v512, 0.015625
    %v514 = vmul.f32 %v491, %v491
    %v515 = vsub.f32 %v513, %v514
    %v516 = vld [vmem:[#allocation9] sm:$0x1]
    %v517 = vadd.f32 %v515, 1e-05
    %v518 = vrsqrt.pop %v517
    %v519 = vmul.f32 %v518, %v517
    %v520 = vmul.f32 %v519, %v518
    %v521 = vmul.f32 0.5, %v520
    %v522 = vsub.f32 1.5, %v521
    %v523 = vmul.f32 %v518, %v522
    %vm524 = vweird.f32 %v517
    %vm525 = vweird.f32 %v518
    %vm526 = vmor %vm524, %vm525
    %v527 = vsel %vm526, %v518, %v523
    %v528 = vmul.f32 %v516, %v527
    %v529 = vld [vmem:[#allocation10] sm:$0x1]
    %v530 = vmul.f32 %v528, %v491
    %v531 = vsub.f32 %v529, %v530
    %v533 = vperm.slane %v528, 0
    %v535 = vmul.f32 %v533, %v455
    %v536 = vmul.f32 %v533, %v458
    %v537 = vmul.f32 %v533, %v461
    %v538 = vmul.f32 %v533, %v464
    %v539 = vmul.f32 %v533, %v467
    %v540 = vmul.f32 %v533, %v470
    %v541 = vmul.f32 %v533, %v473
    %v542 = vmul.f32 %v533, %v476
    %v544 = vperm.slane %v531, 0
    %v546 = vadd.f32 %v535, %v544
    %v547 = vadd.f32 %v536, %v544
    %v548 = vadd.f32 %v537, %v544
    %v549 = vadd.f32 %v538, %v544
    %v550 = vadd.f32 %v539, %v544
    %v551 = vadd.f32 %v540, %v544
    %v552 = vadd.f32 %v541, %v544
    %v553 = vadd.f32 %v542, %v544
    %vm554 = vcmp.gt.f32.partialorder %v546, 0.0
    %vm555 = vcmp.gt.f32.partialorder %v547, 0.0
    %vm556 = vcmp.gt.f32.partialorder %v548, 0.0
    %vm557 = vcmp.gt.f32.partialorder %v549, 0.0
    %vm558 = vcmp.gt.f32.partialorder %v550, 0.0
    %vm559 = vcmp.gt.f32.partialorder %v551, 0.0
    %vm560 = vcmp.gt.f32.partialorder %v552, 0.0
    %vm561 = vcmp.gt.f32.partialorder %v553, 0.0
    %v562 = vmul.f32 %v546, 0.01
    %v563 = vmul.f32 %v547, 0.01
    %v564 = vmul.f32 %v548, 0.01
    %v565 = vmul.f32 %v549, 0.01
    %v566 = vmul.f32 %v550, 0.01
    %v567 = vmul.f32 %v551, 0.01
    %v568 = vmul.f32 %v552, 0.01
    %v569 = vmul.f32 %v553, 0.01
    %v570 = vsel %vm554, %v546, %v562
    %v571 = vsel %vm555, %v547, %v563
    %v572 = vsel %vm556, %v548, %v564
    %v573 = vsel %vm557, %v549, %v565
    %v574 = vsel %vm558, %v550, %v566
    %v575 = vsel %vm559, %v551, %v567
    %v576 = vsel %vm560, %v552, %v568
    %v577 = vsel %vm561, %v553, %v569
    %v578 = vld [vmem:[#allocation12] sm:$0xff]
    %v579 = vld [vmem:[#allocation12 + $0x8] sm:$0xff]
    %v580 = vld [vmem:[#allocation12 + $0x10] sm:$0xff]
    %v581 = vld [vmem:[#allocation12 + $0x18] sm:$0xff]
    %v582 = vld [vmem:[#allocation12 + $0x20] sm:$0xff]
    %v583 = vld [vmem:[#allocation12 + $0x28] sm:$0xff]
    %v584 = vld [vmem:[#allocation12 + $0x30] sm:$0xff]
    %v585 = vld [vmem:[#allocation12 + $0x38] sm:$0xff]
    %v586 = vld [vmem:[#allocation12 + $0x40] sm:$0xff]
    %v587 = vld [vmem:[#allocation12 + $0x48] sm:$0xff]
    %v588 = vld [vmem:[#allocation12 + $0x50] sm:$0xff]
    %v589 = vld [vmem:[#allocation12 + $0x58] sm:$0xff]
    %v590 = vld [vmem:[#allocation12 + $0x60] sm:$0xff]
    %v591 = vld [vmem:[#allocation12 + $0x68] sm:$0xff]
    %v592 = vld [vmem:[#allocation12 + $0x70] sm:$0xff]
    %v593 = vld [vmem:[#allocation12 + $0x78] sm:$0xff]
    %v594 = vld [vmem:[#allocation12 + $0x80] sm:$0xff]
    %v595 = vld [vmem:[#allocation12 + $0x88] sm:$0xff]
    %v596 = vld [vmem:[#allocation12 + $0x90] sm:$0xff]
    %v597 = vld [vmem:[#allocation12 + $0x98] sm:$0xff]
    %v598 = vld [vmem:[#allocation12 + $0xa0] sm:$0xff]
    %v599 = vld [vmem:[#allocation12 + $0xa8] sm:$0xff]
    %v600 = vld [vmem:[#allocation12 + $0xb0] sm:$0xff]
    %v601 = vld [vmem:[#allocation12 + $0xb8] sm:$0xff]
    %v602 = vld [vmem:[#allocation12 + $0xc0] sm:$0xff]
    %v603 = vld [vmem:[#allocation12 + $0xc8] sm:$0xff]
    %v604 = vld [vmem:[#allocation12 + $0xd0] sm:$0xff]
    %v605 = vld [vmem:[#allocation12 + $0xd8] sm:$0xff]
    %v606 = vld [vmem:[#allocation12 + $0xe0] sm:$0xff]
    %v607 = vld [vmem:[#allocation12 + $0xe8] sm:$0xff]
    %v608 = vld [vmem:[#allocation12 + $0xf0] sm:$0xff]
    %v609 = vld [vmem:[#allocation12 + $0xf8] sm:$0xff]
    %v610 = vld [vmem:[#allocation12 + $0x100] sm:$0xff]
    %v611 = vld [vmem:[#allocation12 + $0x108] sm:$0xff]
    %v612 = vld [vmem:[#allocation12 + $0x110] sm:$0xff]
    %v613 = vld [vmem:[#allocation12 + $0x118] sm:$0xff]
    %v614 = vld [vmem:[#allocation12 + $0x120] sm:$0xff]
    %v615 = vld [vmem:[#allocation12 + $0x128] sm:$0xff]
    %v616 = vld [vmem:[#allocation12 + $0x130] sm:$0xff]
    %v617 = vld [vmem:[#allocation12 + $0x138] sm:$0xff]
    %v618 = vld [vmem:[#allocation12 + $0x140] sm:$0xff]
    %v619 = vld [vmem:[#allocation12 + $0x148] sm:$0xff]
    %v620 = vld [vmem:[#allocation12 + $0x150] sm:$0xff]
    %v621 = vld [vmem:[#allocation12 + $0x158] sm:$0xff]
    %v622 = vld [vmem:[#allocation12 + $0x160] sm:$0xff]
    %v623 = vld [vmem:[#allocation12 + $0x168] sm:$0xff]
    %v624 = vld [vmem:[#allocation12 + $0x170] sm:$0xff]
    %v625 = vld [vmem:[#allocation12 + $0x178] sm:$0xff]
    %v626 = vld [vmem:[#allocation12 + $0x180] sm:$0xff]
    %v627 = vld [vmem:[#allocation12 + $0x188] sm:$0xff]
    %v628 = vld [vmem:[#allocation12 + $0x190] sm:$0xff]
    %v629 = vld [vmem:[#allocation12 + $0x198] sm:$0xff]
    %v630 = vld [vmem:[#allocation12 + $0x1a0] sm:$0xff]
    %v631 = vld [vmem:[#allocation12 + $0x1a8] sm:$0xff]
    %v632 = vld [vmem:[#allocation12 + $0x1b0] sm:$0xff]
    %v633 = vld [vmem:[#allocation12 + $0x1b8] sm:$0xff]
    %v634 = vld [vmem:[#allocation12 + $0x1c0] sm:$0xff]
    %v635 = vld [vmem:[#allocation12 + $0x1c8] sm:$0xff]
    %v636 = vld [vmem:[#allocation12 + $0x1d0] sm:$0xff]
    %v637 = vld [vmem:[#allocation12 + $0x1d8] sm:$0xff]
    %v638 = vld [vmem:[#allocation12 + $0x1e0] sm:$0xff]
    %v639 = vld [vmem:[#allocation12 + $0x1e8] sm:$0xff]
    %v640 = vld [vmem:[#allocation12 + $0x1f0] sm:$0xff]
    %v641 = vld [vmem:[#allocation12 + $0x1f8] sm:$0xff]
    %642 = vmatpush.msra.mxu0 %v638
    %643 = vmatpush.msra.mxu0 %v634
    %644 = vmatpush.msra.mxu0 %v630
    %645 = vmatpush.msra.mxu0 %v626
    %646 = vmatpush.msra.mxu0 %v622
    %647 = vmatpush.msra.mxu0 %v618
    %648 = vmatpush.msra.mxu0 %v614
    %649 = vmatpush.msra.mxu0 %v610
    %650 = vmatpush.msra.mxu0 %v606
    %651 = vmatpush.msra.mxu0 %v602
    %652 = vmatpush.msra.mxu0 %v598
    %653 = vmatpush.msra.mxu0 %v594
    %654 = vmatpush.msra.mxu0 %v590
    %655 = vmatpush.msra.mxu0 %v586
    %656 = vmatpush.msra.mxu0 %v582
    %657 = vmatpush.msra.mxu0 %v578
    %658 = vmatmul.f32.gmra.mxu0 %v570
    %v659 = vpop.f32.mrf.mxu0
    %v660 = vadd.f32 0.0, %v659
    %661 = vmatmul.f32.gmra.mxu0 %v571
    %v662 = vpop.f32.mrf.mxu0
    %v663 = vadd.f32 0.0, %v662
    %664 = vmatmul.f32.gmra.mxu0 %v572
    %v665 = vpop.f32.mrf.mxu0
    %v666 = vadd.f32 0.0, %v665
    %667 = vmatmul.f32.gmra.mxu0 %v573
    %v668 = vpop.f32.mrf.mxu0
    %v669 = vadd.f32 0.0, %v668
    %670 = vmatmul.f32.gmra.mxu0 %v574
    %v671 = vpop.f32.mrf.mxu0
    %v672 = vadd.f32 0.0, %v671
    %673 = vmatmul.f32.gmra.mxu0 %v575
    %v674 = vpop.f32.mrf.mxu0
    %v675 = vadd.f32 0.0, %v674
    %676 = vmatmul.f32.gmra.mxu0 %v576
    %v677 = vpop.f32.mrf.mxu0
    %v678 = vadd.f32 0.0, %v677
    %679 = vmatmul.f32.gmra.mxu0 %v577
    %v680 = vpop.f32.mrf.mxu0
    %v681 = vadd.f32 0.0, %v680
    %682 = vdwg.mxu0
    %683 = vmatpush.msra.mxu0 %v639
    %684 = vmatpush.msra.mxu0 %v635
    %685 = vmatpush.msra.mxu0 %v631
    %686 = vmatpush.msra.mxu0 %v627
    %687 = vmatpush.msra.mxu0 %v623
    %688 = vmatpush.msra.mxu0 %v619
    %689 = vmatpush.msra.mxu0 %v615
    %690 = vmatpush.msra.mxu0 %v611
    %691 = vmatpush.msra.mxu0 %v607
    %692 = vmatpush.msra.mxu0 %v603
    %693 = vmatpush.msra.mxu0 %v599
    %694 = vmatpush.msra.mxu0 %v595
    %695 = vmatpush.msra.mxu0 %v591
    %696 = vmatpush.msra.mxu0 %v587
    %697 = vmatpush.msra.mxu0 %v583
    %698 = vmatpush.msra.mxu0 %v579
    %699 = vmatmul.f32.gmra.mxu0 %v570
    %v700 = vpop.f32.mrf.mxu0
    %v701 = vadd.f32 0.0, %v700
    %702 = vmatmul.f32.gmra.mxu0 %v571
    %v703 = vpop.f32.mrf.mxu0
    %v704 = vadd.f32 0.0, %v703
    %705 = vmatmul.f32.gmra.mxu0 %v572
    %v706 = vpop.f32.mrf.mxu0
    %v707 = vadd.f32 0.0, %v706
    %708 = vmatmul.f32.gmra.mxu0 %v573
    %v709 = vpop.f32.mrf.mxu0
    %v710 = vadd.f32 0.0, %v709
    %711 = vmatmul.f32.gmra.mxu0 %v574
    %v712 = vpop.f32.mrf.mxu0
    %v713 = vadd.f32 0.0, %v712
    %714 = vmatmul.f32.gmra.mxu0 %v575
    %v715 = vpop.f32.mrf.mxu0
    %v716 = vadd.f32 0.0, %v715
    %717 = vmatmul.f32.gmra.mxu0 %v576
    %v718 = vpop.f32.mrf.mxu0
    %v719 = vadd.f32 0.0, %v718
    %720 = vmatmul.f32.gmra.mxu0 %v577
    %v721 = vpop.f32.mrf.mxu0
    %v722 = vadd.f32 0.0, %v721
    %723 = vdwg.mxu0
    %724 = vmatpush.msra.mxu0 %v640
    %725 = vmatpush.msra.mxu0 %v636
    %726 = vmatpush.msra.mxu0 %v632
    %727 = vmatpush.msra.mxu0 %v628
    %728 = vmatpush.msra.mxu0 %v624
    %729 = vmatpush.msra.mxu0 %v620
    %730 = vmatpush.msra.mxu0 %v616
    %731 = vmatpush.msra.mxu0 %v612
    %732 = vmatpush.msra.mxu0 %v608
    %733 = vmatpush.msra.mxu0 %v604
    %734 = vmatpush.msra.mxu0 %v600
    %735 = vmatpush.msra.mxu0 %v596
    %736 = vmatpush.msra.mxu0 %v592
    %737 = vmatpush.msra.mxu0 %v588
    %738 = vmatpush.msra.mxu0 %v584
    %739 = vmatpush.msra.mxu0 %v580
    %740 = vmatmul.f32.gmra.mxu0 %v570
    %v741 = vpop.f32.mrf.mxu0
    %v742 = vadd.f32 0.0, %v741
    %743 = vmatmul.f32.gmra.mxu0 %v571
    %v744 = vpop.f32.mrf.mxu0
    %v745 = vadd.f32 0.0, %v744
    %746 = vmatmul.f32.gmra.mxu0 %v572
    %v747 = vpop.f32.mrf.mxu0
    %v748 = vadd.f32 0.0, %v747
    %749 = vmatmul.f32.gmra.mxu0 %v573
    %v750 = vpop.f32.mrf.mxu0
    %v751 = vadd.f32 0.0, %v750
    %752 = vmatmul.f32.gmra.mxu0 %v574
    %v753 = vpop.f32.mrf.mxu0
    %v754 = vadd.f32 0.0, %v753
    %755 = vmatmul.f32.gmra.mxu0 %v575
    %v756 = vpop.f32.mrf.mxu0
    %v757 = vadd.f32 0.0, %v756
    %758 = vmatmul.f32.gmra.mxu0 %v576
    %v759 = vpop.f32.mrf.mxu0
    %v760 = vadd.f32 0.0, %v759
    %761 = vmatmul.f32.gmra.mxu0 %v577
    %v762 = vpop.f32.mrf.mxu0
    %v763 = vadd.f32 0.0, %v762
    %764 = vdwg.mxu0
    %765 = vmatpush.msra.mxu0 %v641
    %766 = vmatpush.msra.mxu0 %v637
    %767 = vmatpush.msra.mxu0 %v633
    %768 = vmatpush.msra.mxu0 %v629
    %769 = vmatpush.msra.mxu0 %v625
    %770 = vmatpush.msra.mxu0 %v621
    %771 = vmatpush.msra.mxu0 %v617
    %772 = vmatpush.msra.mxu0 %v613
    %773 = vmatpush.msra.mxu0 %v609
    %774 = vmatpush.msra.mxu0 %v605
    %775 = vmatpush.msra.mxu0 %v601
    %776 = vmatpush.msra.mxu0 %v597
    %777 = vmatpush.msra.mxu0 %v593
    %778 = vmatpush.msra.mxu0 %v589
    %779 = vmatpush.msra.mxu0 %v585
    %780 = vmatpush.msra.mxu0 %v581
    %781 = vmatmul.f32.gmra.mxu0 %v570
    %v782 = vpop.f32.mrf.mxu0
    %v783 = vadd.f32 0.0, %v782
    %784 = vmatmul.f32.gmra.mxu0 %v571
    %v785 = vpop.f32.mrf.mxu0
    %v786 = vadd.f32 0.0, %v785
    %787 = vmatmul.f32.gmra.mxu0 %v572
    %v788 = vpop.f32.mrf.mxu0
    %v789 = vadd.f32 0.0, %v788
    %790 = vmatmul.f32.gmra.mxu0 %v573
    %v791 = vpop.f32.mrf.mxu0
    %v792 = vadd.f32 0.0, %v791
    %793 = vmatmul.f32.gmra.mxu0 %v574
    %v794 = vpop.f32.mrf.mxu0
    %v795 = vadd.f32 0.0, %v794
    %796 = vmatmul.f32.gmra.mxu0 %v575
    %v797 = vpop.f32.mrf.mxu0
    %v798 = vadd.f32 0.0, %v797
    %799 = vmatmul.f32.gmra.mxu0 %v576
    %v800 = vpop.f32.mrf.mxu0
    %v801 = vadd.f32 0.0, %v800
    %802 = vmatmul.f32.gmra.mxu0 %v577
    %v803 = vpop.f32.mrf.mxu0
    %v804 = vadd.f32 0.0, %v803
    %805 = vdwg.mxu0
    %v806 = vadd.f32 %v660, %v663
    %v807 = vadd.f32 %v806, %v666
    %v808 = vadd.f32 %v807, %v669
    %v809 = vadd.f32 %v808, %v672
    %v810 = vadd.f32 %v809, %v675
    %v811 = vadd.f32 %v810, %v678
    %v812 = vadd.f32 %v811, %v681
    %v813 = vrot.slane %v812, 4
    %v814 = vadd.f32 %v812, %v813
    %v815 = vrot.slane %v814, 2
    %v816 = vadd.f32 %v814, %v815
    %v817 = vrot.slane %v816, 1
    %v818 = vadd.f32 %v816, %v817
    %v819 = vadd.f32 %v701, %v704
    %v820 = vadd.f32 %v819, %v707
    %v821 = vadd.f32 %v820, %v710
    %v822 = vadd.f32 %v821, %v713
    %v823 = vadd.f32 %v822, %v716
    %v824 = vadd.f32 %v823, %v719
    %v825 = vadd.f32 %v824, %v722
    %v826 = vrot.slane %v825, 4
    %v827 = vadd.f32 %v825, %v826
    %v828 = vrot.slane %v827, 2
    %v829 = vadd.f32 %v827, %v828
    %v830 = vrot.slane %v829, 1
    %v831 = vadd.f32 %v829, %v830
    %v832 = vadd.f32 %v742, %v745
    %v833 = vadd.f32 %v832, %v748
    %v834 = vadd.f32 %v833, %v751
    %v835 = vadd.f32 %v834, %v754
    %v836 = vadd.f32 %v835, %v757
    %v837 = vadd.f32 %v836, %v760
    %v838 = vadd.f32 %v837, %v763
    %v839 = vrot.slane %v838, 4
    %v840 = vadd.f32 %v838, %v839
    %v841 = vrot.slane %v840, 2
    %v842 = vadd.f32 %v840, %v841
    %v843 = vrot.slane %v842, 1
    %v844 = vadd.f32 %v842, %v843
    %v845 = vadd.f32 %v783, %v786
    %v846 = vadd.f32 %v845, %v789
    %v847 = vadd.f32 %v846, %v792
    %v848 = vadd.f32 %v847, %v795
    %v849 = vadd.f32 %v848, %v798
    %v850 = vadd.f32 %v849, %v801
    %v851 = vadd.f32 %v850, %v804
    %v852 = vrot.slane %v851, 4
    %v853 = vadd.f32 %v851, %v852
    %v854 = vrot.slane %v853, 2
    %v855 = vadd.f32 %v853, %v854
    %v856 = vrot.slane %v855, 1
    %v857 = vadd.f32 %v855, %v856
    %v858 = vmul.f32 %v818, 0.015625
    %v859 = vmul.f32 %v831, 0.015625
    %v860 = vmul.f32 %v844, 0.015625
    %v861 = vmul.f32 %v857, 0.015625
    %v862 = vmul.f32 %v660, %v660
    %v863 = vmul.f32 %v701, %v701
    %v864 = vmul.f32 %v742, %v742
    %v865 = vmul.f32 %v783, %v783
    %v866 = vmul.f32 %v663, %v663
    %v867 = vmul.f32 %v704, %v704
    %v868 = vmul.f32 %v745, %v745
    %v869 = vmul.f32 %v786, %v786
    %v870 = vmul.f32 %v666, %v666
    %v871 = vmul.f32 %v707, %v707
    %v872 = vmul.f32 %v748, %v748
    %v873 = vmul.f32 %v789, %v789
    %v874 = vmul.f32 %v669, %v669
    %v875 = vmul.f32 %v710, %v710
    %v876 = vmul.f32 %v751, %v751
    %v877 = vmul.f32 %v792, %v792
    %v878 = vmul.f32 %v672, %v672
    %v879 = vmul.f32 %v713, %v713
    %v880 = vmul.f32 %v754, %v754
    %v881 = vmul.f32 %v795, %v795
    %v882 = vmul.f32 %v675, %v675
    %v883 = vmul.f32 %v716, %v716
    %v884 = vmul.f32 %v757, %v757
    %v885 = vmul.f32 %v798, %v798
    %v886 = vmul.f32 %v678, %v678
    %v887 = vmul.f32 %v719, %v719
    %v888 = vmul.f32 %v760, %v760
    %v889 = vmul.f32 %v801, %v801
    %v890 = vmul.f32 %v681, %v681
    %v891 = vmul.f32 %v722, %v722
    %v892 = vmul.f32 %v763, %v763
    %v893 = vmul.f32 %v804, %v804
    %v894 = vadd.f32 %v862, %v866
    %v895 = vadd.f32 %v894, %v870
    %v896 = vadd.f32 %v895, %v874
    %v897 = vadd.f32 %v896, %v878
    %v898 = vadd.f32 %v897, %v882
    %v899 = vadd.f32 %v898, %v886
    %v900 = vadd.f32 %v899, %v890
    %v901 = vrot.slane %v900, 4
    %v902 = vadd.f32 %v900, %v901
    %v903 = vrot.slane %v902, 2
    %v904 = vadd.f32 %v902, %v903
    %v905 = vrot.slane %v904, 1
    %v906 = vadd.f32 %v904, %v905
    %v907 = vadd.f32 %v863, %v867
    %v908 = vadd.f32 %v907, %v871
    %v909 = vadd.f32 %v908, %v875
    %v910 = vadd.f32 %v909, %v879
    %v911 = vadd.f32 %v910, %v883
    %v912 = vadd.f32 %v911, %v887
    %v913 = vadd.f32 %v912, %v891
    %v914 = vrot.slane %v913, 4
    %v915 = vadd.f32 %v913, %v914
    %v916 = vrot.slane %v915, 2
    %v917 = vadd.f32 %v915, %v916
    %v918 = vrot.slane %v917, 1
    %v919 = vadd.f32 %v917, %v918
    %v920 = vadd.f32 %v864, %v868
    %v921 = vadd.f32 %v920, %v872
    %v922 = vadd.f32 %v921, %v876
    %v923 = vadd.f32 %v922, %v880
    %v924 = vadd.f32 %v923, %v884
    %v925 = vadd.f32 %v924, %v888
    %v926 = vadd.f32 %v925, %v892
    %v927 = vrot.slane %v926, 4
    %v928 = vadd.f32 %v926, %v927
    %v929 = vrot.slane %v928, 2
    %v930 = vadd.f32 %v928, %v929
    %v931 = vrot.slane %v930, 1
    %v932 = vadd.f32 %v930, %v931
    %v933 = vadd.f32 %v865, %v869
    %v934 = vadd.f32 %v933, %v873
    %v935 = vadd.f32 %v934, %v877
    %v936 = vadd.f32 %v935, %v881
    %v937 = vadd.f32 %v936, %v885
    %v938 = vadd.f32 %v937, %v889
    %v939 = vadd.f32 %v938, %v893
    %v940 = vrot.slane %v939, 4
    %v941 = vadd.f32 %v939, %v940
    %v942 = vrot.slane %v941, 2
    %v943 = vadd.f32 %v941, %v942
    %v944 = vrot.slane %v943, 1
    %v945 = vadd.f32 %v943, %v944
    %v946 = vmul.f32 %v906, 0.015625
    %v947 = vmul.f32 %v919, 0.015625
    %v948 = vmul.f32 %v932, 0.015625
    %v949 = vmul.f32 %v945, 0.015625
    %v950 = vmul.f32 %v858, %v858
    %v951 = vmul.f32 %v859, %v859
    %v952 = vmul.f32 %v860, %v860
    %v953 = vmul.f32 %v861, %v861
    %v954 = vsub.f32 %v946, %v950
    %v955 = vsub.f32 %v947, %v951
    %v956 = vsub.f32 %v948, %v952
    %v957 = vsub.f32 %v949, %v953
    %v958 = vld [vmem:[#allocation13] sm:$0xf]
    %v959 = vadd.f32 %v954, 1e-05
    %v960 = vadd.f32 %v955, 1e-05
    %v961 = vadd.f32 %v956, 1e-05
    %v962 = vadd.f32 %v957, 1e-05
    %v963 = vrsqrt.pop %v959
    %v964 = vmul.f32 %v963, %v959
    %v965 = vmul.f32 %v964, %v963
    %v966 = vmul.f32 0.5, %v965
    %v967 = vsub.f32 1.5, %v966
    %v968 = vmul.f32 %v963, %v967
    %vm969 = vweird.f32 %v959
    %vm970 = vweird.f32 %v963
    %vm971 = vmor %vm969, %vm970
    %v972 = vsel %vm971, %v963, %v968
    %v973 = vrsqrt.pop %v960
    %v974 = vmul.f32 %v973, %v960
    %v975 = vmul.f32 %v974, %v973
    %v976 = vmul.f32 0.5, %v975
    %v977 = vsub.f32 1.5, %v976
    %v978 = vmul.f32 %v973, %v977
    %vm979 = vweird.f32 %v960
    %vm980 = vweird.f32 %v973
    %vm981 = vmor %vm979, %vm980
    %v982 = vsel %vm981, %v973, %v978
    %v983 = vrsqrt.pop %v961
    %v984 = vmul.f32 %v983, %v961
    %v985 = vmul.f32 %v984, %v983
    %v986 = vmul.f32 0.5, %v985
    %v987 = vsub.f32 1.5, %v986
    %v988 = vmul.f32 %v983, %v987
    %vm989 = vweird.f32 %v961
    %vm990 = vweird.f32 %v983
    %vm991 = vmor %vm989, %vm990
    %v992 = vsel %vm991, %v983, %v988
    %v993 = vrsqrt.pop %v962
    %v994 = vmul.f32 %v993, %v962
    %v995 = vmul.f32 %v994, %v993
    %v996 = vmul.f32 0.5, %v995
    %v997 = vsub.f32 1.5, %v996
    %v998 = vmul.f32 %v993, %v997
    %vm999 = vweird.f32 %v962
    %vm1000 = vweird.f32 %v993
    %vm1001 = vmor %vm999, %vm1000
    %v1002 = vsel %vm1001, %v993, %v998
    %v1007 = vrot.slane %v982, 7
    %v1008 = vrot.slane %v992, 6
    %v1009 = vrot.slane %v1002, 5
    %vm1010 = vcmask 1040384
    %v1011 = vsel %vm1010, %v972, %v1007
    %vm1012 = vcmask 1042434
    %v1013 = vsel %vm1012, %v1008, %v1009
    %vm1014 = vcmask 1041408
    %v1015 = vsel %vm1014, %v1011, %v1013
    %v1017 = vmul.f32 %v958, %v1015
    %v1018 = vld [vmem:[#allocation15] sm:$0xf]
    %v1023 = vrot.slane %v859, 7
    %v1024 = vrot.slane %v860, 6
    %v1025 = vrot.slane %v861, 5
    %v1026 = vsel %vm1010, %v858, %v1023
    %v1027 = vsel %vm1012, %v1024, %v1025
    %v1028 = vsel %vm1014, %v1026, %v1027
    %v1030 = vmul.f32 %v1017, %v1028
    %v1031 = vsub.f32 %v1018, %v1030
    %v1033 = vperm.slane %v1017, 0
    %v1034 = vperm.slane %v1017, 1
    %v1035 = vperm.slane %v1017, 2
    %v1036 = vperm.slane %v1017, 3
    %v1041 = vmul.f32 %v1033, %v660
    %v1042 = vmul.f32 %v1034, %v701
    %v1043 = vmul.f32 %v1035, %v742
    %v1044 = vmul.f32 %v1036, %v783
    %v1045 = vmul.f32 %v1033, %v663
    %v1046 = vmul.f32 %v1034, %v704
    %v1047 = vmul.f32 %v1035, %v745
    %v1048 = vmul.f32 %v1036, %v786
    %v1049 = vmul.f32 %v1033, %v666
    %v1050 = vmul.f32 %v1034, %v707
    %v1051 = vmul.f32 %v1035, %v748
    %v1052 = vmul.f32 %v1036, %v789
    %v1053 = vmul.f32 %v1033, %v669
    %v1054 = vmul.f32 %v1034, %v710
    %v1055 = vmul.f32 %v1035, %v751
    %v1056 = vmul.f32 %v1036, %v792
    %v1057 = vmul.f32 %v1033, %v672
    %v1058 = vmul.f32 %v1034, %v713
    %v1059 = vmul.f32 %v1035, %v754
    %v1060 = vmul.f32 %v1036, %v795
    %v1061 = vmul.f32 %v1033, %v675
    %v1062 = vmul.f32 %v1034, %v716
    %v1063 = vmul.f32 %v1035, %v757
    %v1064 = vmul.f32 %v1036, %v798
    %v1065 = vmul.f32 %v1033, %v678
    %v1066 = vmul.f32 %v1034, %v719
    %v1067 = vmul.f32 %v1035, %v760
    %v1068 = vmul.f32 %v1036, %v801
    %v1069 = vmul.f32 %v1033, %v681
    %v1070 = vmul.f32 %v1034, %v722
    %v1071 = vmul.f32 %v1035, %v763
    %v1072 = vmul.f32 %v1036, %v804
    %v1074 = vperm.slane %v1031, 0
    %v1075 = vperm.slane %v1031, 1
    %v1076 = vperm.slane %v1031, 2
    %v1077 = vperm.slane %v1031, 3
    %v1082 = vadd.f32 %v1041, %v1074
    %v1083 = vadd.f32 %v1042, %v1075
    %v1084 = vadd.f32 %v1043, %v1076
    %v1085 = vadd.f32 %v1044, %v1077
    %v1086 = vadd.f32 %v1045, %v1074
    %v1087 = vadd.f32 %v1046, %v1075
    %v1088 = vadd.f32 %v1047, %v1076
    %v1089 = vadd.f32 %v1048, %v1077
    %v1090 = vadd.f32 %v1049, %v1074
    %v1091 = vadd.f32 %v1050, %v1075
    %v1092 = vadd.f32 %v1051, %v1076
    %v1093 = vadd.f32 %v1052, %v1077
    %v1094 = vadd.f32 %v1053, %v1074
    %v1095 = vadd.f32 %v1054, %v1075
    %v1096 = vadd.f32 %v1055, %v1076
    %v1097 = vadd.f32 %v1056, %v1077
    %v1098 = vadd.f32 %v1057, %v1074
    %v1099 = vadd.f32 %v1058, %v1075
    %v1100 = vadd.f32 %v1059, %v1076
    %v1101 = vadd.f32 %v1060, %v1077
    %v1102 = vadd.f32 %v1061, %v1074
    %v1103 = vadd.f32 %v1062, %v1075
    %v1104 = vadd.f32 %v1063, %v1076
    %v1105 = vadd.f32 %v1064, %v1077
    %v1106 = vadd.f32 %v1065, %v1074
    %v1107 = vadd.f32 %v1066, %v1075
    %v1108 = vadd.f32 %v1067, %v1076
    %v1109 = vadd.f32 %v1068, %v1077
    %v1110 = vadd.f32 %v1069, %v1074
    %v1111 = vadd.f32 %v1070, %v1075
    %v1112 = vadd.f32 %v1071, %v1076
    %v1113 = vadd.f32 %v1072, %v1077
    %vm1114 = vcmp.gt.f32.partialorder %v1082, 0.0
    %vm1115 = vcmp.gt.f32.partialorder %v1083, 0.0
    %vm1116 = vcmp.gt.f32.partialorder %v1084, 0.0
    %vm1117 = vcmp.gt.f32.partialorder %v1085, 0.0
    %vm1118 = vcmp.gt.f32.partialorder %v1086, 0.0
    %vm1119 = vcmp.gt.f32.partialorder %v1087, 0.0
    %vm1120 = vcmp.gt.f32.partialorder %v1088, 0.0
    %vm1121 = vcmp.gt.f32.partialorder %v1089, 0.0
    %vm1122 = vcmp.gt.f32.partialorder %v1090, 0.0
    %vm1123 = vcmp.gt.f32.partialorder %v1091, 0.0
    %vm1124 = vcmp.gt.f32.partialorder %v1092, 0.0
    %vm1125 = vcmp.gt.f32.partialorder %v1093, 0.0
    %vm1126 = vcmp.gt.f32.partialorder %v1094, 0.0
    %vm1127 = vcmp.gt.f32.partialorder %v1095, 0.0
    %vm1128 = vcmp.gt.f32.partialorder %v1096, 0.0
    %vm1129 = vcmp.gt.f32.partialorder %v1097, 0.0
    %vm1130 = vcmp.gt.f32.partialorder %v1098, 0.0
    %vm1131 = vcmp.gt.f32.partialorder %v1099, 0.0
    %vm1132 = vcmp.gt.f32.partialorder %v1100, 0.0
    %vm1133 = vcmp.gt.f32.partialorder %v1101, 0.0
    %vm1134 = vcmp.gt.f32.partialorder %v1102, 0.0
    %vm1135 = vcmp.gt.f32.partialorder %v1103, 0.0
    %vm1136 = vcmp.gt.f32.partialorder %v1104, 0.0
    %vm1137 = vcmp.gt.f32.partialorder %v1105, 0.0
    %vm1138 = vcmp.gt.f32.partialorder %v1106, 0.0
    %vm1139 = vcmp.gt.f32.partialorder %v1107, 0.0
    %vm1140 = vcmp.gt.f32.partialorder %v1108, 0.0
    %vm1141 = vcmp.gt.f32.partialorder %v1109, 0.0
    %vm1142 = vcmp.gt.f32.partialorder %v1110, 0.0
    %vm1143 = vcmp.gt.f32.partialorder %v1111, 0.0
    %vm1144 = vcmp.gt.f32.partialorder %v1112, 0.0
    %vm1145 = vcmp.gt.f32.partialorder %v1113, 0.0
    %v1146 = vmul.f32 %v1082, 0.01
    %v1147 = vmul.f32 %v1083, 0.01
    %v1148 = vmul.f32 %v1084, 0.01
    %v1149 = vmul.f32 %v1085, 0.01
    %v1150 = vmul.f32 %v1086, 0.01
    %v1151 = vmul.f32 %v1087, 0.01
    %v1152 = vmul.f32 %v1088, 0.01
    %v1153 = vmul.f32 %v1089, 0.01
    %v1154 = vmul.f32 %v1090, 0.01
    %v1155 = vmul.f32 %v1091, 0.01
    %v1156 = vmul.f32 %v1092, 0.01
    %v1157 = vmul.f32 %v1093, 0.01
    %v1158 = vmul.f32 %v1094, 0.01
    %v1159 = vmul.f32 %v1095, 0.01
    %v1160 = vmul.f32 %v1096, 0.01
    %v1161 = vmul.f32 %v1097, 0.01
    %v1162 = vmul.f32 %v1098, 0.01
    %v1163 = vmul.f32 %v1099, 0.01
    %v1164 = vmul.f32 %v1100, 0.01
    %v1165 = vmul.f32 %v1101, 0.01
    %v1166 = vmul.f32 %v1102, 0.01
    %v1167 = vmul.f32 %v1103, 0.01
    %v1168 = vmul.f32 %v1104, 0.01
    %v1169 = vmul.f32 %v1105, 0.01
    %v1170 = vmul.f32 %v1106, 0.01
    %v1171 = vmul.f32 %v1107, 0.01
    %v1172 = vmul.f32 %v1108, 0.01
    %v1173 = vmul.f32 %v1109, 0.01
    %v1174 = vmul.f32 %v1110, 0.01
    %v1175 = vmul.f32 %v1111, 0.01
    %v1176 = vmul.f32 %v1112, 0.01
    %v1177 = vmul.f32 %v1113, 0.01
    %v1178 = vsel %vm1114, %v1082, %v1146
    %v1179 = vsel %vm1115, %v1083, %v1147
    %v1180 = vsel %vm1116, %v1084, %v1148
    %v1181 = vsel %vm1117, %v1085, %v1149
    %v1182 = vsel %vm1118, %v1086, %v1150
    %v1183 = vsel %vm1119, %v1087, %v1151
    %v1184 = vsel %vm1120, %v1088, %v1152
    %v1185 = vsel %vm1121, %v1089, %v1153
    %v1186 = vsel %vm1122, %v1090, %v1154
    %v1187 = vsel %vm1123, %v1091, %v1155
    %v1188 = vsel %vm1124, %v1092, %v1156
    %v1189 = vsel %vm1125, %v1093, %v1157
    %v1190 = vsel %vm1126, %v1094, %v1158
    %v1191 = vsel %vm1127, %v1095, %v1159
    %v1192 = vsel %vm1128, %v1096, %v1160
    %v1193 = vsel %vm1129, %v1097, %v1161
    %v1194 = vsel %vm1130, %v1098, %v1162
    %v1195 = vsel %vm1131, %v1099, %v1163
    %v1196 = vsel %vm1132, %v1100, %v1164
    %v1197 = vsel %vm1133, %v1101, %v1165
    %v1198 = vsel %vm1134, %v1102, %v1166
    %v1199 = vsel %vm1135, %v1103, %v1167
    %v1200 = vsel %vm1136, %v1104, %v1168
    %v1201 = vsel %vm1137, %v1105, %v1169
    %v1202 = vsel %vm1138, %v1106, %v1170
    %v1203 = vsel %vm1139, %v1107, %v1171
    %v1204 = vsel %vm1140, %v1108, %v1172
    %v1205 = vsel %vm1141, %v1109, %v1173
    %v1206 = vsel %vm1142, %v1110, %v1174
    %v1207 = vsel %vm1143, %v1111, %v1175
    %v1208 = vsel %vm1144, %v1112, %v1176
    %v1209 = vsel %vm1145, %v1113, %v1177
    %v1210 = vld [vmem:[#allocation16] sm:$0xff]
    %v1211 = vld [vmem:[#allocation16 + $0x8] sm:$0xff]
    %v1212 = vld [vmem:[#allocation16 + $0x10] sm:$0xff]
    %v1213 = vld [vmem:[#allocation16 + $0x18] sm:$0xff]
    %v1214 = vld [vmem:[#allocation16 + $0x20] sm:$0xff]
    %v1215 = vld [vmem:[#allocation16 + $0x28] sm:$0xff]
    %v1216 = vld [vmem:[#allocation16 + $0x30] sm:$0xff]
    %v1217 = vld [vmem:[#allocation16 + $0x38] sm:$0xff]
    %v1218 = vld [vmem:[#allocation16 + $0x40] sm:$0xff]
    %v1219 = vld [vmem:[#allocation16 + $0x48] sm:$0xff]
    %v1220 = vld [vmem:[#allocation16 + $0x50] sm:$0xff]
    %v1221 = vld [vmem:[#allocation16 + $0x58] sm:$0xff]
    %v1222 = vld [vmem:[#allocation16 + $0x60] sm:$0xff]
    %v1223 = vld [vmem:[#allocation16 + $0x68] sm:$0xff]
    %v1224 = vld [vmem:[#allocation16 + $0x70] sm:$0xff]
    %v1225 = vld [vmem:[#allocation16 + $0x78] sm:$0xff]
    %v1226 = vld [vmem:[#allocation16 + $0x80] sm:$0xff]
    %v1227 = vld [vmem:[#allocation16 + $0x88] sm:$0xff]
    %v1228 = vld [vmem:[#allocation16 + $0x90] sm:$0xff]
    %v1229 = vld [vmem:[#allocation16 + $0x98] sm:$0xff]
    %v1230 = vld [vmem:[#allocation16 + $0xa0] sm:$0xff]
    %v1231 = vld [vmem:[#allocation16 + $0xa8] sm:$0xff]
    %v1232 = vld [vmem:[#allocation16 + $0xb0] sm:$0xff]
    %v1233 = vld [vmem:[#allocation16 + $0xb8] sm:$0xff]
    %v1234 = vld [vmem:[#allocation16 + $0xc0] sm:$0xff]
    %v1235 = vld [vmem:[#allocation16 + $0xc8] sm:$0xff]
    %v1236 = vld [vmem:[#allocation16 + $0xd0] sm:$0xff]
    %v1237 = vld [vmem:[#allocation16 + $0xd8] sm:$0xff]
    %v1238 = vld [vmem:[#allocation16 + $0xe0] sm:$0xff]
    %v1239 = vld [vmem:[#allocation16 + $0xe8] sm:$0xff]
    %v1240 = vld [vmem:[#allocation16 + $0xf0] sm:$0xff]
    %v1241 = vld [vmem:[#allocation16 + $0xf8] sm:$0xff]
    %v1242 = vld [vmem:[#allocation16 + $0x100] sm:$0xff]
    %v1243 = vld [vmem:[#allocation16 + $0x108] sm:$0xff]
    %v1244 = vld [vmem:[#allocation16 + $0x110] sm:$0xff]
    %v1245 = vld [vmem:[#allocation16 + $0x118] sm:$0xff]
    %v1246 = vld [vmem:[#allocation16 + $0x120] sm:$0xff]
    %v1247 = vld [vmem:[#allocation16 + $0x128] sm:$0xff]
    %v1248 = vld [vmem:[#allocation16 + $0x130] sm:$0xff]
    %v1249 = vld [vmem:[#allocation16 + $0x138] sm:$0xff]
    %v1250 = vld [vmem:[#allocation16 + $0x140] sm:$0xff]
    %v1251 = vld [vmem:[#allocation16 + $0x148] sm:$0xff]
    %v1252 = vld [vmem:[#allocation16 + $0x150] sm:$0xff]
    %v1253 = vld [vmem:[#allocation16 + $0x158] sm:$0xff]
    %v1254 = vld [vmem:[#allocation16 + $0x160] sm:$0xff]
    %v1255 = vld [vmem:[#allocation16 + $0x168] sm:$0xff]
    %v1256 = vld [vmem:[#allocation16 + $0x170] sm:$0xff]
    %v1257 = vld [vmem:[#allocation16 + $0x178] sm:$0xff]
    %v1258 = vld [vmem:[#allocation16 + $0x180] sm:$0xff]
    %v1259 = vld [vmem:[#allocation16 + $0x188] sm:$0xff]
    %v1260 = vld [vmem:[#allocation16 + $0x190] sm:$0xff]
    %v1261 = vld [vmem:[#allocation16 + $0x198] sm:$0xff]
    %v1262 = vld [vmem:[#allocation16 + $0x1a0] sm:$0xff]
    %v1263 = vld [vmem:[#allocation16 + $0x1a8] sm:$0xff]
    %v1264 = vld [vmem:[#allocation16 + $0x1b0] sm:$0xff]
    %v1265 = vld [vmem:[#allocation16 + $0x1b8] sm:$0xff]
    %v1266 = vld [vmem:[#allocation16 + $0x1c0] sm:$0xff]
    %v1267 = vld [vmem:[#allocation16 + $0x1c8] sm:$0xff]
    %v1268 = vld [vmem:[#allocation16 + $0x1d0] sm:$0xff]
    %v1269 = vld [vmem:[#allocation16 + $0x1d8] sm:$0xff]
    %v1270 = vld [vmem:[#allocation16 + $0x1e0] sm:$0xff]
    %v1271 = vld [vmem:[#allocation16 + $0x1e8] sm:$0xff]
    %v1272 = vld [vmem:[#allocation16 + $0x1f0] sm:$0xff]
    %v1273 = vld [vmem:[#allocation16 + $0x1f8] sm:$0xff]
    %v1274 = vld [vmem:[#allocation16 + $0x200] sm:$0xff]
    %v1275 = vld [vmem:[#allocation16 + $0x208] sm:$0xff]
    %v1276 = vld [vmem:[#allocation16 + $0x210] sm:$0xff]
    %v1277 = vld [vmem:[#allocation16 + $0x218] sm:$0xff]
    %v1278 = vld [vmem:[#allocation16 + $0x220] sm:$0xff]
    %v1279 = vld [vmem:[#allocation16 + $0x228] sm:$0xff]
    %v1280 = vld [vmem:[#allocation16 + $0x230] sm:$0xff]
    %v1281 = vld [vmem:[#allocation16 + $0x238] sm:$0xff]
    %v1282 = vld [vmem:[#allocation16 + $0x240] sm:$0xff]
    %v1283 = vld [vmem:[#allocation16 + $0x248] sm:$0xff]
    %v1284 = vld [vmem:[#allocation16 + $0x250] sm:$0xff]
    %v1285 = vld [vmem:[#allocation16 + $0x258] sm:$0xff]
    %v1286 = vld [vmem:[#allocation16 + $0x260] sm:$0xff]
    %v1287 = vld [vmem:[#allocation16 + $0x268] sm:$0xff]
    %v1288 = vld [vmem:[#allocation16 + $0x270] sm:$0xff]
    %v1289 = vld [vmem:[#allocation16 + $0x278] sm:$0xff]
    %v1290 = vld [vmem:[#allocation16 + $0x280] sm:$0xff]
    %v1291 = vld [vmem:[#allocation16 + $0x288] sm:$0xff]
    %v1292 = vld [vmem:[#allocation16 + $0x290] sm:$0xff]
    %v1293 = vld [vmem:[#allocation16 + $0x298] sm:$0xff]
    %v1294 = vld [vmem:[#allocation16 + $0x2a0] sm:$0xff]
    %v1295 = vld [vmem:[#allocation16 + $0x2a8] sm:$0xff]
    %v1296 = vld [vmem:[#allocation16 + $0x2b0] sm:$0xff]
    %v1297 = vld [vmem:[#allocation16 + $0x2b8] sm:$0xff]
    %v1298 = vld [vmem:[#allocation16 + $0x2c0] sm:$0xff]
    %v1299 = vld [vmem:[#allocation16 + $0x2c8] sm:$0xff]
    %v1300 = vld [vmem:[#allocation16 + $0x2d0] sm:$0xff]
    %v1301 = vld [vmem:[#allocation16 + $0x2d8] sm:$0xff]
    %v1302 = vld [vmem:[#allocation16 + $0x2e0] sm:$0xff]
    %v1303 = vld [vmem:[#allocation16 + $0x2e8] sm:$0xff]
    %v1304 = vld [vmem:[#allocation16 + $0x2f0] sm:$0xff]
    %v1305 = vld [vmem:[#allocation16 + $0x2f8] sm:$0xff]
    %v1306 = vld [vmem:[#allocation16 + $0x300] sm:$0xff]
    %v1307 = vld [vmem:[#allocation16 + $0x308] sm:$0xff]
    %v1308 = vld [vmem:[#allocation16 + $0x310] sm:$0xff]
    %v1309 = vld [vmem:[#allocation16 + $0x318] sm:$0xff]
    %v1310 = vld [vmem:[#allocation16 + $0x320] sm:$0xff]
    %v1311 = vld [vmem:[#allocation16 + $0x328] sm:$0xff]
    %v1312 = vld [vmem:[#allocation16 + $0x330] sm:$0xff]
    %v1313 = vld [vmem:[#allocation16 + $0x338] sm:$0xff]
    %v1314 = vld [vmem:[#allocation16 + $0x340] sm:$0xff]
    %v1315 = vld [vmem:[#allocation16 + $0x348] sm:$0xff]
    %v1316 = vld [vmem:[#allocation16 + $0x350] sm:$0xff]
    %v1317 = vld [vmem:[#allocation16 + $0x358] sm:$0xff]
    %v1318 = vld [vmem:[#allocation16 + $0x360] sm:$0xff]
    %v1319 = vld [vmem:[#allocation16 + $0x368] sm:$0xff]
    %v1320 = vld [vmem:[#allocation16 + $0x370] sm:$0xff]
    %v1321 = vld [vmem:[#allocation16 + $0x378] sm:$0xff]
    %v1322 = vld [vmem:[#allocation16 + $0x380] sm:$0xff]
    %v1323 = vld [vmem:[#allocation16 + $0x388] sm:$0xff]
    %v1324 = vld [vmem:[#allocation16 + $0x390] sm:$0xff]
    %v1325 = vld [vmem:[#allocation16 + $0x398] sm:$0xff]
    %v1326 = vld [vmem:[#allocation16 + $0x3a0] sm:$0xff]
    %v1327 = vld [vmem:[#allocation16 + $0x3a8] sm:$0xff]
    %v1328 = vld [vmem:[#allocation16 + $0x3b0] sm:$0xff]
    %v1329 = vld [vmem:[#allocation16 + $0x3b8] sm:$0xff]
    %v1330 = vld [vmem:[#allocation16 + $0x3c0] sm:$0xff]
    %v1331 = vld [vmem:[#allocation16 + $0x3c8] sm:$0xff]
    %v1332 = vld [vmem:[#allocation16 + $0x3d0] sm:$0xff]
    %v1333 = vld [vmem:[#allocation16 + $0x3d8] sm:$0xff]
    %v1334 = vld [vmem:[#allocation16 + $0x3e0] sm:$0xff]
    %v1335 = vld [vmem:[#allocation16 + $0x3e8] sm:$0xff]
    %v1336 = vld [vmem:[#allocation16 + $0x3f0] sm:$0xff]
    %v1337 = vld [vmem:[#allocation16 + $0x3f8] sm:$0xff]
    %v1338 = vld [vmem:[#allocation16 + $0x400] sm:$0xff]
    %v1339 = vld [vmem:[#allocation16 + $0x408] sm:$0xff]
    %v1340 = vld [vmem:[#allocation16 + $0x410] sm:$0xff]
    %v1341 = vld [vmem:[#allocation16 + $0x418] sm:$0xff]
    %v1342 = vld [vmem:[#allocation16 + $0x420] sm:$0xff]
    %v1343 = vld [vmem:[#allocation16 + $0x428] sm:$0xff]
    %v1344 = vld [vmem:[#allocation16 + $0x430] sm:$0xff]
    %v1345 = vld [vmem:[#allocation16 + $0x438] sm:$0xff]
    %v1346 = vld [vmem:[#allocation16 + $0x440] sm:$0xff]
    %v1347 = vld [vmem:[#allocation16 + $0x448] sm:$0xff]
    %v1348 = vld [vmem:[#allocation16 + $0x450] sm:$0xff]
    %v1349 = vld [vmem:[#allocation16 + $0x458] sm:$0xff]
    %v1350 = vld [vmem:[#allocation16 + $0x460] sm:$0xff]
    %v1351 = vld [vmem:[#allocation16 + $0x468] sm:$0xff]
    %v1352 = vld [vmem:[#allocation16 + $0x470] sm:$0xff]
    %v1353 = vld [vmem:[#allocation16 + $0x478] sm:$0xff]
    %v1354 = vld [vmem:[#allocation16 + $0x480] sm:$0xff]
    %v1355 = vld [vmem:[#allocation16 + $0x488] sm:$0xff]
    %v1356 = vld [vmem:[#allocation16 + $0x490] sm:$0xff]
    %v1357 = vld [vmem:[#allocation16 + $0x498] sm:$0xff]
    %v1358 = vld [vmem:[#allocation16 + $0x4a0] sm:$0xff]
    %v1359 = vld [vmem:[#allocation16 + $0x4a8] sm:$0xff]
    %v1360 = vld [vmem:[#allocation16 + $0x4b0] sm:$0xff]
    %v1361 = vld [vmem:[#allocation16 + $0x4b8] sm:$0xff]
    %v1362 = vld [vmem:[#allocation16 + $0x4c0] sm:$0xff]
    %v1363 = vld [vmem:[#allocation16 + $0x4c8] sm:$0xff]
    %v1364 = vld [vmem:[#allocation16 + $0x4d0] sm:$0xff]
    %v1365 = vld [vmem:[#allocation16 + $0x4d8] sm:$0xff]
    %v1366 = vld [vmem:[#allocation16 + $0x4e0] sm:$0xff]
    %v1367 = vld [vmem:[#allocation16 + $0x4e8] sm:$0xff]
    %v1368 = vld [vmem:[#allocation16 + $0x4f0] sm:$0xff]
    %v1369 = vld [vmem:[#allocation16 + $0x4f8] sm:$0xff]
    %v1370 = vld [vmem:[#allocation16 + $0x500] sm:$0xff]
    %v1371 = vld [vmem:[#allocation16 + $0x508] sm:$0xff]
    %v1372 = vld [vmem:[#allocation16 + $0x510] sm:$0xff]
    %v1373 = vld [vmem:[#allocation16 + $0x518] sm:$0xff]
    %v1374 = vld [vmem:[#allocation16 + $0x520] sm:$0xff]
    %v1375 = vld [vmem:[#allocation16 + $0x528] sm:$0xff]
    %v1376 = vld [vmem:[#allocation16 + $0x530] sm:$0xff]
    %v1377 = vld [vmem:[#allocation16 + $0x538] sm:$0xff]
    %v1378 = vld [vmem:[#allocation16 + $0x540] sm:$0xff]
    %v1379 = vld [vmem:[#allocation16 + $0x548] sm:$0xff]
    %v1380 = vld [vmem:[#allocation16 + $0x550] sm:$0xff]
    %v1381 = vld [vmem:[#allocation16 + $0x558] sm:$0xff]
    %v1382 = vld [vmem:[#allocation16 + $0x560] sm:$0xff]
    %v1383 = vld [vmem:[#allocation16 + $0x568] sm:$0xff]
    %v1384 = vld [vmem:[#allocation16 + $0x570] sm:$0xff]
    %v1385 = vld [vmem:[#allocation16 + $0x578] sm:$0xff]
    %v1386 = vld [vmem:[#allocation16 + $0x580] sm:$0xff]
    %v1387 = vld [vmem:[#allocation16 + $0x588] sm:$0xff]
    %v1388 = vld [vmem:[#allocation16 + $0x590] sm:$0xff]
    %v1389 = vld [vmem:[#allocation16 + $0x598] sm:$0xff]
    %v1390 = vld [vmem:[#allocation16 + $0x5a0] sm:$0xff]
    %v1391 = vld [vmem:[#allocation16 + $0x5a8] sm:$0xff]
    %v1392 = vld [vmem:[#allocation16 + $0x5b0] sm:$0xff]
    %v1393 = vld [vmem:[#allocation16 + $0x5b8] sm:$0xff]
    %v1394 = vld [vmem:[#allocation16 + $0x5c0] sm:$0xff]
    %v1395 = vld [vmem:[#allocation16 + $0x5c8] sm:$0xff]
    %v1396 = vld [vmem:[#allocation16 + $0x5d0] sm:$0xff]
    %v1397 = vld [vmem:[#allocation16 + $0x5d8] sm:$0xff]
    %v1398 = vld [vmem:[#allocation16 + $0x5e0] sm:$0xff]
    %v1399 = vld [vmem:[#allocation16 + $0x5e8] sm:$0xff]
    %v1400 = vld [vmem:[#allocation16 + $0x5f0] sm:$0xff]
    %v1401 = vld [vmem:[#allocation16 + $0x5f8] sm:$0xff]
    %v1402 = vld [vmem:[#allocation16 + $0x600] sm:$0xff]
    %v1403 = vld [vmem:[#allocation16 + $0x608] sm:$0xff]
    %v1404 = vld [vmem:[#allocation16 + $0x610] sm:$0xff]
    %v1405 = vld [vmem:[#allocation16 + $0x618] sm:$0xff]
    %v1406 = vld [vmem:[#allocation16 + $0x620] sm:$0xff]
    %v1407 = vld [vmem:[#allocation16 + $0x628] sm:$0xff]
    %v1408 = vld [vmem:[#allocation16 + $0x630] sm:$0xff]
    %v1409 = vld [vmem:[#allocation16 + $0x638] sm:$0xff]
    %v1410 = vld [vmem:[#allocation16 + $0x640] sm:$0xff]
    %v1411 = vld [vmem:[#allocation16 + $0x648] sm:$0xff]
    %v1412 = vld [vmem:[#allocation16 + $0x650] sm:$0xff]
    %v1413 = vld [vmem:[#allocation16 + $0x658] sm:$0xff]
    %v1414 = vld [vmem:[#allocation16 + $0x660] sm:$0xff]
    %v1415 = vld [vmem:[#allocation16 + $0x668] sm:$0xff]
    %v1416 = vld [vmem:[#allocation16 + $0x670] sm:$0xff]
    %v1417 = vld [vmem:[#allocation16 + $0x678] sm:$0xff]
    %v1418 = vld [vmem:[#allocation16 + $0x680] sm:$0xff]
    %v1419 = vld [vmem:[#allocation16 + $0x688] sm:$0xff]
    %v1420 = vld [vmem:[#allocation16 + $0x690] sm:$0xff]
    %v1421 = vld [vmem:[#allocation16 + $0x698] sm:$0xff]
    %v1422 = vld [vmem:[#allocation16 + $0x6a0] sm:$0xff]
    %v1423 = vld [vmem:[#allocation16 + $0x6a8] sm:$0xff]
    %v1424 = vld [vmem:[#allocation16 + $0x6b0] sm:$0xff]
    %v1425 = vld [vmem:[#allocation16 + $0x6b8] sm:$0xff]
    %v1426 = vld [vmem:[#allocation16 + $0x6c0] sm:$0xff]
    %v1427 = vld [vmem:[#allocation16 + $0x6c8] sm:$0xff]
    %v1428 = vld [vmem:[#allocation16 + $0x6d0] sm:$0xff]
    %v1429 = vld [vmem:[#allocation16 + $0x6d8] sm:$0xff]
    %v1430 = vld [vmem:[#allocation16 + $0x6e0] sm:$0xff]
    %v1431 = vld [vmem:[#allocation16 + $0x6e8] sm:$0xff]
    %v1432 = vld [vmem:[#allocation16 + $0x6f0] sm:$0xff]
    %v1433 = vld [vmem:[#allocation16 + $0x6f8] sm:$0xff]
    %v1434 = vld [vmem:[#allocation16 + $0x700] sm:$0xff]
    %v1435 = vld [vmem:[#allocation16 + $0x708] sm:$0xff]
    %v1436 = vld [vmem:[#allocation16 + $0x710] sm:$0xff]
    %v1437 = vld [vmem:[#allocation16 + $0x718] sm:$0xff]
    %v1438 = vld [vmem:[#allocation16 + $0x720] sm:$0xff]
    %v1439 = vld [vmem:[#allocation16 + $0x728] sm:$0xff]
    %v1440 = vld [vmem:[#allocation16 + $0x730] sm:$0xff]
    %v1441 = vld [vmem:[#allocation16 + $0x738] sm:$0xff]
    %v1442 = vld [vmem:[#allocation16 + $0x740] sm:$0xff]
    %v1443 = vld [vmem:[#allocation16 + $0x748] sm:$0xff]
    %v1444 = vld [vmem:[#allocation16 + $0x750] sm:$0xff]
    %v1445 = vld [vmem:[#allocation16 + $0x758] sm:$0xff]
    %v1446 = vld [vmem:[#allocation16 + $0x760] sm:$0xff]
    %v1447 = vld [vmem:[#allocation16 + $0x768] sm:$0xff]
    %v1448 = vld [vmem:[#allocation16 + $0x770] sm:$0xff]
    %v1449 = vld [vmem:[#allocation16 + $0x778] sm:$0xff]
    %v1450 = vld [vmem:[#allocation16 + $0x780] sm:$0xff]
    %v1451 = vld [vmem:[#allocation16 + $0x788] sm:$0xff]
    %v1452 = vld [vmem:[#allocation16 + $0x790] sm:$0xff]
    %v1453 = vld [vmem:[#allocation16 + $0x798] sm:$0xff]
    %v1454 = vld [vmem:[#allocation16 + $0x7a0] sm:$0xff]
    %v1455 = vld [vmem:[#allocation16 + $0x7a8] sm:$0xff]
    %v1456 = vld [vmem:[#allocation16 + $0x7b0] sm:$0xff]
    %v1457 = vld [vmem:[#allocation16 + $0x7b8] sm:$0xff]
    %v1458 = vld [vmem:[#allocation16 + $0x7c0] sm:$0xff]
    %v1459 = vld [vmem:[#allocation16 + $0x7c8] sm:$0xff]
    %v1460 = vld [vmem:[#allocation16 + $0x7d0] sm:$0xff]
    %v1461 = vld [vmem:[#allocation16 + $0x7d8] sm:$0xff]
    %v1462 = vld [vmem:[#allocation16 + $0x7e0] sm:$0xff]
    %v1463 = vld [vmem:[#allocation16 + $0x7e8] sm:$0xff]
    %v1464 = vld [vmem:[#allocation16 + $0x7f0] sm:$0xff]
    %v1465 = vld [vmem:[#allocation16 + $0x7f8] sm:$0xff]
    %v1466 = vld [vmem:[#allocation16 + $0x800] sm:$0xff]
    %v1467 = vld [vmem:[#allocation16 + $0x808] sm:$0xff]
    %v1468 = vld [vmem:[#allocation16 + $0x810] sm:$0xff]
    %v1469 = vld [vmem:[#allocation16 + $0x818] sm:$0xff]
    %v1470 = vld [vmem:[#allocation16 + $0x820] sm:$0xff]
    %v1471 = vld [vmem:[#allocation16 + $0x828] sm:$0xff]
    %v1472 = vld [vmem:[#allocation16 + $0x830] sm:$0xff]
    %v1473 = vld [vmem:[#allocation16 + $0x838] sm:$0xff]
    %v1474 = vld [vmem:[#allocation16 + $0x840] sm:$0xff]
    %v1475 = vld [vmem:[#allocation16 + $0x848] sm:$0xff]
    %v1476 = vld [vmem:[#allocation16 + $0x850] sm:$0xff]
    %v1477 = vld [vmem:[#allocation16 + $0x858] sm:$0xff]
    %v1478 = vld [vmem:[#allocation16 + $0x860] sm:$0xff]
    %v1479 = vld [vmem:[#allocation16 + $0x868] sm:$0xff]
    %v1480 = vld [vmem:[#allocation16 + $0x870] sm:$0xff]
    %v1481 = vld [vmem:[#allocation16 + $0x878] sm:$0xff]
    %v1482 = vld [vmem:[#allocation16 + $0x880] sm:$0xff]
    %v1483 = vld [vmem:[#allocation16 + $0x888] sm:$0xff]
    %v1484 = vld [vmem:[#allocation16 + $0x890] sm:$0xff]
    %v1485 = vld [vmem:[#allocation16 + $0x898] sm:$0xff]
    %v1486 = vld [vmem:[#allocation16 + $0x8a0] sm:$0xff]
    %v1487 = vld [vmem:[#allocation16 + $0x8a8] sm:$0xff]
    %v1488 = vld [vmem:[#allocation16 + $0x8b0] sm:$0xff]
    %v1489 = vld [vmem:[#allocation16 + $0x8b8] sm:$0xff]
    %v1490 = vld [vmem:[#allocation16 + $0x8c0] sm:$0xff]
    %v1491 = vld [vmem:[#allocation16 + $0x8c8] sm:$0xff]
    %v1492 = vld [vmem:[#allocation16 + $0x8d0] sm:$0xff]
    %v1493 = vld [vmem:[#allocation16 + $0x8d8] sm:$0xff]
    %v1494 = vld [vmem:[#allocation16 + $0x8e0] sm:$0xff]
    %v1495 = vld [vmem:[#allocation16 + $0x8e8] sm:$0xff]
    %v1496 = vld [vmem:[#allocation16 + $0x8f0] sm:$0xff]
    %v1497 = vld [vmem:[#allocation16 + $0x8f8] sm:$0xff]
    %v1498 = vld [vmem:[#allocation16 + $0x900] sm:$0xff]
    %v1499 = vld [vmem:[#allocation16 + $0x908] sm:$0xff]
    %v1500 = vld [vmem:[#allocation16 + $0x910] sm:$0xff]
    %v1501 = vld [vmem:[#allocation16 + $0x918] sm:$0xff]
    %v1502 = vld [vmem:[#allocation16 + $0x920] sm:$0xff]
    %v1503 = vld [vmem:[#allocation16 + $0x928] sm:$0xff]
    %v1504 = vld [vmem:[#allocation16 + $0x930] sm:$0xff]
    %v1505 = vld [vmem:[#allocation16 + $0x938] sm:$0xff]
    %v1506 = vld [vmem:[#allocation16 + $0x940] sm:$0xff]
    %v1507 = vld [vmem:[#allocation16 + $0x948] sm:$0xff]
    %v1508 = vld [vmem:[#allocation16 + $0x950] sm:$0xff]
    %v1509 = vld [vmem:[#allocation16 + $0x958] sm:$0xff]
    %v1510 = vld [vmem:[#allocation16 + $0x960] sm:$0xff]
    %v1511 = vld [vmem:[#allocation16 + $0x968] sm:$0xff]
    %v1512 = vld [vmem:[#allocation16 + $0x970] sm:$0xff]
    %v1513 = vld [vmem:[#allocation16 + $0x978] sm:$0xff]
    %v1514 = vld [vmem:[#allocation16 + $0x980] sm:$0xff]
    %v1515 = vld [vmem:[#allocation16 + $0x988] sm:$0xff]
    %v1516 = vld [vmem:[#allocation16 + $0x990] sm:$0xff]
    %v1517 = vld [vmem:[#allocation16 + $0x998] sm:$0xff]
    %v1518 = vld [vmem:[#allocation16 + $0x9a0] sm:$0xff]
    %v1519 = vld [vmem:[#allocation16 + $0x9a8] sm:$0xff]
    %v1520 = vld [vmem:[#allocation16 + $0x9b0] sm:$0xff]
    %v1521 = vld [vmem:[#allocation16 + $0x9b8] sm:$0xff]
    %v1522 = vld [vmem:[#allocation16 + $0x9c0] sm:$0xff]
    %v1523 = vld [vmem:[#allocation16 + $0x9c8] sm:$0xff]
    %v1524 = vld [vmem:[#allocation16 + $0x9d0] sm:$0xff]
    %v1525 = vld [vmem:[#allocation16 + $0x9d8] sm:$0xff]
    %v1526 = vld [vmem:[#allocation16 + $0x9e0] sm:$0xff]
    %v1527 = vld [vmem:[#allocation16 + $0x9e8] sm:$0xff]
    %v1528 = vld [vmem:[#allocation16 + $0x9f0] sm:$0xff]
    %v1529 = vld [vmem:[#allocation16 + $0x9f8] sm:$0xff]
    %v1530 = vld [vmem:[#allocation16 + $0xa00] sm:$0xff]
    %v1531 = vld [vmem:[#allocation16 + $0xa08] sm:$0xff]
    %v1532 = vld [vmem:[#allocation16 + $0xa10] sm:$0xff]
    %v1533 = vld [vmem:[#allocation16 + $0xa18] sm:$0xff]
    %v1534 = vld [vmem:[#allocation16 + $0xa20] sm:$0xff]
    %v1535 = vld [vmem:[#allocation16 + $0xa28] sm:$0xff]
    %v1536 = vld [vmem:[#allocation16 + $0xa30] sm:$0xff]
    %v1537 = vld [vmem:[#allocation16 + $0xa38] sm:$0xff]
    %v1538 = vld [vmem:[#allocation16 + $0xa40] sm:$0xff]
    %v1539 = vld [vmem:[#allocation16 + $0xa48] sm:$0xff]
    %v1540 = vld [vmem:[#allocation16 + $0xa50] sm:$0xff]
    %v1541 = vld [vmem:[#allocation16 + $0xa58] sm:$0xff]
    %v1542 = vld [vmem:[#allocation16 + $0xa60] sm:$0xff]
    %v1543 = vld [vmem:[#allocation16 + $0xa68] sm:$0xff]
    %v1544 = vld [vmem:[#allocation16 + $0xa70] sm:$0xff]
    %v1545 = vld [vmem:[#allocation16 + $0xa78] sm:$0xff]
    %v1546 = vld [vmem:[#allocation16 + $0xa80] sm:$0xff]
    %v1547 = vld [vmem:[#allocation16 + $0xa88] sm:$0xff]
    %v1548 = vld [vmem:[#allocation16 + $0xa90] sm:$0xff]
    %v1549 = vld [vmem:[#allocation16 + $0xa98] sm:$0xff]
    %v1550 = vld [vmem:[#allocation16 + $0xaa0] sm:$0xff]
    %v1551 = vld [vmem:[#allocation16 + $0xaa8] sm:$0xff]
    %v1552 = vld [vmem:[#allocation16 + $0xab0] sm:$0xff]
    %v1553 = vld [vmem:[#allocation16 + $0xab8] sm:$0xff]
    %v1554 = vld [vmem:[#allocation16 + $0xac0] sm:$0xff]
    %v1555 = vld [vmem:[#allocation16 + $0xac8] sm:$0xff]
    %v1556 = vld [vmem:[#allocation16 + $0xad0] sm:$0xff]
    %v1557 = vld [vmem:[#allocation16 + $0xad8] sm:$0xff]
    %v1558 = vld [vmem:[#allocation16 + $0xae0] sm:$0xff]
    %v1559 = vld [vmem:[#allocation16 + $0xae8] sm:$0xff]
    %v1560 = vld [vmem:[#allocation16 + $0xaf0] sm:$0xff]
    %v1561 = vld [vmem:[#allocation16 + $0xaf8] sm:$0xff]
    %v1562 = vld [vmem:[#allocation16 + $0xb00] sm:$0xff]
    %v1563 = vld [vmem:[#allocation16 + $0xb08] sm:$0xff]
    %v1564 = vld [vmem:[#allocation16 + $0xb10] sm:$0xff]
    %v1565 = vld [vmem:[#allocation16 + $0xb18] sm:$0xff]
    %v1566 = vld [vmem:[#allocation16 + $0xb20] sm:$0xff]
    %v1567 = vld [vmem:[#allocation16 + $0xb28] sm:$0xff]
    %v1568 = vld [vmem:[#allocation16 + $0xb30] sm:$0xff]
    %v1569 = vld [vmem:[#allocation16 + $0xb38] sm:$0xff]
    %v1570 = vld [vmem:[#allocation16 + $0xb40] sm:$0xff]
    %v1571 = vld [vmem:[#allocation16 + $0xb48] sm:$0xff]
    %v1572 = vld [vmem:[#allocation16 + $0xb50] sm:$0xff]
    %v1573 = vld [vmem:[#allocation16 + $0xb58] sm:$0xff]
    %v1574 = vld [vmem:[#allocation16 + $0xb60] sm:$0xff]
    %v1575 = vld [vmem:[#allocation16 + $0xb68] sm:$0xff]
    %v1576 = vld [vmem:[#allocation16 + $0xb70] sm:$0xff]
    %v1577 = vld [vmem:[#allocation16 + $0xb78] sm:$0xff]
    %v1578 = vld [vmem:[#allocation16 + $0xb80] sm:$0xff]
    %v1579 = vld [vmem:[#allocation16 + $0xb88] sm:$0xff]
    %v1580 = vld [vmem:[#allocation16 + $0xb90] sm:$0xff]
    %v1581 = vld [vmem:[#allocation16 + $0xb98] sm:$0xff]
    %v1582 = vld [vmem:[#allocation16 + $0xba0] sm:$0xff]
    %v1583 = vld [vmem:[#allocation16 + $0xba8] sm:$0xff]
    %v1584 = vld [vmem:[#allocation16 + $0xbb0] sm:$0xff]
    %v1585 = vld [vmem:[#allocation16 + $0xbb8] sm:$0xff]
    %v1586 = vld [vmem:[#allocation16 + $0xbc0] sm:$0xff]
    %v1587 = vld [vmem:[#allocation16 + $0xbc8] sm:$0xff]
    %v1588 = vld [vmem:[#allocation16 + $0xbd0] sm:$0xff]
    %v1589 = vld [vmem:[#allocation16 + $0xbd8] sm:$0xff]
    %v1590 = vld [vmem:[#allocation16 + $0xbe0] sm:$0xff]
    %v1591 = vld [vmem:[#allocation16 + $0xbe8] sm:$0xff]
    %v1592 = vld [vmem:[#allocation16 + $0xbf0] sm:$0xff]
    %v1593 = vld [vmem:[#allocation16 + $0xbf8] sm:$0xff]
    %v1594 = vld [vmem:[#allocation16 + $0xc00] sm:$0xff]
    %v1595 = vld [vmem:[#allocation16 + $0xc08] sm:$0xff]
    %v1596 = vld [vmem:[#allocation16 + $0xc10] sm:$0xff]
    %v1597 = vld [vmem:[#allocation16 + $0xc18] sm:$0xff]
    %v1598 = vld [vmem:[#allocation16 + $0xc20] sm:$0xff]
    %v1599 = vld [vmem:[#allocation16 + $0xc28] sm:$0xff]
    %v1600 = vld [vmem:[#allocation16 + $0xc30] sm:$0xff]
    %v1601 = vld [vmem:[#allocation16 + $0xc38] sm:$0xff]
    %v1602 = vld [vmem:[#allocation16 + $0xc40] sm:$0xff]
    %v1603 = vld [vmem:[#allocation16 + $0xc48] sm:$0xff]
    %v1604 = vld [vmem:[#allocation16 + $0xc50] sm:$0xff]
    %v1605 = vld [vmem:[#allocation16 + $0xc58] sm:$0xff]
    %v1606 = vld [vmem:[#allocation16 + $0xc60] sm:$0xff]
    %v1607 = vld [vmem:[#allocation16 + $0xc68] sm:$0xff]
    %v1608 = vld [vmem:[#allocation16 + $0xc70] sm:$0xff]
    %v1609 = vld [vmem:[#allocation16 + $0xc78] sm:$0xff]
    %v1610 = vld [vmem:[#allocation16 + $0xc80] sm:$0xff]
    %v1611 = vld [vmem:[#allocation16 + $0xc88] sm:$0xff]
    %v1612 = vld [vmem:[#allocation16 + $0xc90] sm:$0xff]
    %v1613 = vld [vmem:[#allocation16 + $0xc98] sm:$0xff]
    %v1614 = vld [vmem:[#allocation16 + $0xca0] sm:$0xff]
    %v1615 = vld [vmem:[#allocation16 + $0xca8] sm:$0xff]
    %v1616 = vld [vmem:[#allocation16 + $0xcb0] sm:$0xff]
    %v1617 = vld [vmem:[#allocation16 + $0xcb8] sm:$0xff]
    %v1618 = vld [vmem:[#allocation16 + $0xcc0] sm:$0xff]
    %v1619 = vld [vmem:[#allocation16 + $0xcc8] sm:$0xff]
    %v1620 = vld [vmem:[#allocation16 + $0xcd0] sm:$0xff]
    %v1621 = vld [vmem:[#allocation16 + $0xcd8] sm:$0xff]
    %v1622 = vld [vmem:[#allocation16 + $0xce0] sm:$0xff]
    %v1623 = vld [vmem:[#allocation16 + $0xce8] sm:$0xff]
    %v1624 = vld [vmem:[#allocation16 + $0xcf0] sm:$0xff]
    %v1625 = vld [vmem:[#allocation16 + $0xcf8] sm:$0xff]
    %v1626 = vld [vmem:[#allocation16 + $0xd00] sm:$0xff]
    %v1627 = vld [vmem:[#allocation16 + $0xd08] sm:$0xff]
    %v1628 = vld [vmem:[#allocation16 + $0xd10] sm:$0xff]
    %v1629 = vld [vmem:[#allocation16 + $0xd18] sm:$0xff]
    %v1630 = vld [vmem:[#allocation16 + $0xd20] sm:$0xff]
    %v1631 = vld [vmem:[#allocation16 + $0xd28] sm:$0xff]
    %v1632 = vld [vmem:[#allocation16 + $0xd30] sm:$0xff]
    %v1633 = vld [vmem:[#allocation16 + $0xd38] sm:$0xff]
    %v1634 = vld [vmem:[#allocation16 + $0xd40] sm:$0xff]
    %v1635 = vld [vmem:[#allocation16 + $0xd48] sm:$0xff]
    %v1636 = vld [vmem:[#allocation16 + $0xd50] sm:$0xff]
    %v1637 = vld [vmem:[#allocation16 + $0xd58] sm:$0xff]
    %v1638 = vld [vmem:[#allocation16 + $0xd60] sm:$0xff]
    %v1639 = vld [vmem:[#allocation16 + $0xd68] sm:$0xff]
    %v1640 = vld [vmem:[#allocation16 + $0xd70] sm:$0xff]
    %v1641 = vld [vmem:[#allocation16 + $0xd78] sm:$0xff]
    %v1642 = vld [vmem:[#allocation16 + $0xd80] sm:$0xff]
    %v1643 = vld [vmem:[#allocation16 + $0xd88] sm:$0xff]
    %v1644 = vld [vmem:[#allocation16 + $0xd90] sm:$0xff]
    %v1645 = vld [vmem:[#allocation16 + $0xd98] sm:$0xff]
    %v1646 = vld [vmem:[#allocation16 + $0xda0] sm:$0xff]
    %v1647 = vld [vmem:[#allocation16 + $0xda8] sm:$0xff]
    %v1648 = vld [vmem:[#allocation16 + $0xdb0] sm:$0xff]
    %v1649 = vld [vmem:[#allocation16 + $0xdb8] sm:$0xff]
    %v1650 = vld [vmem:[#allocation16 + $0xdc0] sm:$0xff]
    %v1651 = vld [vmem:[#allocation16 + $0xdc8] sm:$0xff]
    %v1652 = vld [vmem:[#allocation16 + $0xdd0] sm:$0xff]
    %v1653 = vld [vmem:[#allocation16 + $0xdd8] sm:$0xff]
    %v1654 = vld [vmem:[#allocation16 + $0xde0] sm:$0xff]
    %v1655 = vld [vmem:[#allocation16 + $0xde8] sm:$0xff]
    %v1656 = vld [vmem:[#allocation16 + $0xdf0] sm:$0xff]
    %v1657 = vld [vmem:[#allocation16 + $0xdf8] sm:$0xff]
    %v1658 = vld [vmem:[#allocation16 + $0xe00] sm:$0xff]
    %v1659 = vld [vmem:[#allocation16 + $0xe08] sm:$0xff]
    %v1660 = vld [vmem:[#allocation16 + $0xe10] sm:$0xff]
    %v1661 = vld [vmem:[#allocation16 + $0xe18] sm:$0xff]
    %v1662 = vld [vmem:[#allocation16 + $0xe20] sm:$0xff]
    %v1663 = vld [vmem:[#allocation16 + $0xe28] sm:$0xff]
    %v1664 = vld [vmem:[#allocation16 + $0xe30] sm:$0xff]
    %v1665 = vld [vmem:[#allocation16 + $0xe38] sm:$0xff]
    %v1666 = vld [vmem:[#allocation16 + $0xe40] sm:$0xff]
    %v1667 = vld [vmem:[#allocation16 + $0xe48] sm:$0xff]
    %v1668 = vld [vmem:[#allocation16 + $0xe50] sm:$0xff]
    %v1669 = vld [vmem:[#allocation16 + $0xe58] sm:$0xff]
    %v1670 = vld [vmem:[#allocation16 + $0xe60] sm:$0xff]
    %v1671 = vld [vmem:[#allocation16 + $0xe68] sm:$0xff]
    %v1672 = vld [vmem:[#allocation16 + $0xe70] sm:$0xff]
    %v1673 = vld [vmem:[#allocation16 + $0xe78] sm:$0xff]
    %v1674 = vld [vmem:[#allocation16 + $0xe80] sm:$0xff]
    %v1675 = vld [vmem:[#allocation16 + $0xe88] sm:$0xff]
    %v1676 = vld [vmem:[#allocation16 + $0xe90] sm:$0xff]
    %v1677 = vld [vmem:[#allocation16 + $0xe98] sm:$0xff]
    %v1678 = vld [vmem:[#allocation16 + $0xea0] sm:$0xff]
    %v1679 = vld [vmem:[#allocation16 + $0xea8] sm:$0xff]
    %v1680 = vld [vmem:[#allocation16 + $0xeb0] sm:$0xff]
    %v1681 = vld [vmem:[#allocation16 + $0xeb8] sm:$0xff]
    %v1682 = vld [vmem:[#allocation16 + $0xec0] sm:$0xff]
    %v1683 = vld [vmem:[#allocation16 + $0xec8] sm:$0xff]
    %v1684 = vld [vmem:[#allocation16 + $0xed0] sm:$0xff]
    %v1685 = vld [vmem:[#allocation16 + $0xed8] sm:$0xff]
    %v1686 = vld [vmem:[#allocation16 + $0xee0] sm:$0xff]
    %v1687 = vld [vmem:[#allocation16 + $0xee8] sm:$0xff]
    %v1688 = vld [vmem:[#allocation16 + $0xef0] sm:$0xff]
    %v1689 = vld [vmem:[#allocation16 + $0xef8] sm:$0xff]
    %v1690 = vld [vmem:[#allocation16 + $0xf00] sm:$0xff]
    %v1691 = vld [vmem:[#allocation16 + $0xf08] sm:$0xff]
    %v1692 = vld [vmem:[#allocation16 + $0xf10] sm:$0xff]
    %v1693 = vld [vmem:[#allocation16 + $0xf18] sm:$0xff]
    %v1694 = vld [vmem:[#allocation16 + $0xf20] sm:$0xff]
    %v1695 = vld [vmem:[#allocation16 + $0xf28] sm:$0xff]
    %v1696 = vld [vmem:[#allocation16 + $0xf30] sm:$0xff]
    %v1697 = vld [vmem:[#allocation16 + $0xf38] sm:$0xff]
    %v1698 = vld [vmem:[#allocation16 + $0xf40] sm:$0xff]
    %v1699 = vld [vmem:[#allocation16 + $0xf48] sm:$0xff]
    %v1700 = vld [vmem:[#allocation16 + $0xf50] sm:$0xff]
    %v1701 = vld [vmem:[#allocation16 + $0xf58] sm:$0xff]
    %v1702 = vld [vmem:[#allocation16 + $0xf60] sm:$0xff]
    %v1703 = vld [vmem:[#allocation16 + $0xf68] sm:$0xff]
    %v1704 = vld [vmem:[#allocation16 + $0xf70] sm:$0xff]
    %v1705 = vld [vmem:[#allocation16 + $0xf78] sm:$0xff]
    %v1706 = vld [vmem:[#allocation16 + $0xf80] sm:$0xff]
    %v1707 = vld [vmem:[#allocation16 + $0xf88] sm:$0xff]
    %v1708 = vld [vmem:[#allocation16 + $0xf90] sm:$0xff]
    %v1709 = vld [vmem:[#allocation16 + $0xf98] sm:$0xff]
    %v1710 = vld [vmem:[#allocation16 + $0xfa0] sm:$0xff]
    %v1711 = vld [vmem:[#allocation16 + $0xfa8] sm:$0xff]
    %v1712 = vld [vmem:[#allocation16 + $0xfb0] sm:$0xff]
    %v1713 = vld [vmem:[#allocation16 + $0xfb8] sm:$0xff]
    %v1714 = vld [vmem:[#allocation16 + $0xfc0] sm:$0xff]
    %v1715 = vld [vmem:[#allocation16 + $0xfc8] sm:$0xff]
    %v1716 = vld [vmem:[#allocation16 + $0xfd0] sm:$0xff]
    %v1717 = vld [vmem:[#allocation16 + $0xfd8] sm:$0xff]
    %v1718 = vld [vmem:[#allocation16 + $0xfe0] sm:$0xff]
    %v1719 = vld [vmem:[#allocation16 + $0xfe8] sm:$0xff]
    %v1720 = vld [vmem:[#allocation16 + $0xff0] sm:$0xff]
    %v1721 = vld [vmem:[#allocation16 + $0xff8] sm:$0xff]
    %1722 = vmatpush.msra.mxu0 %v1330
    %1723 = vmatpush.msra.mxu0 %v1322
    %1724 = vmatpush.msra.mxu0 %v1314
    %1725 = vmatpush.msra.mxu0 %v1306
    %1726 = vmatpush.msra.mxu0 %v1298
    %1727 = vmatpush.msra.mxu0 %v1290
    %1728 = vmatpush.msra.mxu0 %v1282
    %1729 = vmatpush.msra.mxu0 %v1274
    %1730 = vmatpush.msra.mxu0 %v1266
    %1731 = vmatpush.msra.mxu0 %v1258
    %1732 = vmatpush.msra.mxu0 %v1250
    %1733 = vmatpush.msra.mxu0 %v1242
    %1734 = vmatpush.msra.mxu0 %v1234
    %1735 = vmatpush.msra.mxu0 %v1226
    %1736 = vmatpush.msra.mxu0 %v1218
    %1737 = vmatpush.msra.mxu0 %v1210
    %1738 = vmatmul.f32.gmra.mxu0 %v1178
    %v1739 = vpop.f32.mrf.mxu0
    %v1740 = vadd.f32 0.0, %v1739
    %1741 = vmatmul.f32.gmra.mxu0 %v1182
    %v1742 = vpop.f32.mrf.mxu0
    %v1743 = vadd.f32 0.0, %v1742
    %1744 = vmatmul.f32.gmra.mxu0 %v1186
    %v1745 = vpop.f32.mrf.mxu0
    %v1746 = vadd.f32 0.0, %v1745
    %1747 = vmatmul.f32.gmra.mxu0 %v1190
    %v1748 = vpop.f32.mrf.mxu0
    %v1749 = vadd.f32 0.0, %v1748
    %1750 = vmatmul.f32.gmra.mxu0 %v1194
    %v1751 = vpop.f32.mrf.mxu0
    %v1752 = vadd.f32 0.0, %v1751
    %1753 = vmatmul.f32.gmra.mxu0 %v1198
    %v1754 = vpop.f32.mrf.mxu0
    %v1755 = vadd.f32 0.0, %v1754
    %1756 = vmatmul.f32.gmra.mxu0 %v1202
    %v1757 = vpop.f32.mrf.mxu0
    %v1758 = vadd.f32 0.0, %v1757
    %1759 = vmatmul.f32.gmra.mxu0 %v1206
    %v1760 = vpop.f32.mrf.mxu0
    %v1761 = vadd.f32 0.0, %v1760
    %1762 = vdwg.mxu0
    %1763 = vmatpush.msra.mxu0 %v1458
    %1764 = vmatpush.msra.mxu0 %v1450
    %1765 = vmatpush.msra.mxu0 %v1442
    %1766 = vmatpush.msra.mxu0 %v1434
    %1767 = vmatpush.msra.mxu0 %v1426
    %1768 = vmatpush.msra.mxu0 %v1418
    %1769 = vmatpush.msra.mxu0 %v1410
    %1770 = vmatpush.msra.mxu0 %v1402
    %1771 = vmatpush.msra.mxu0 %v1394
    %1772 = vmatpush.msra.mxu0 %v1386
    %1773 = vmatpush.msra.mxu0 %v1378
    %1774 = vmatpush.msra.mxu0 %v1370
    %1775 = vmatpush.msra.mxu0 %v1362
    %1776 = vmatpush.msra.mxu0 %v1354
    %1777 = vmatpush.msra.mxu0 %v1346
    %1778 = vmatpush.msra.mxu0 %v1338
    %1779 = vmatmul.f32.gmra.mxu0 %v1179
    %v1780 = vpop.f32.mrf.mxu0
    %v1781 = vadd.f32 %v1740, %v1780
    %1782 = vmatmul.f32.gmra.mxu0 %v1183
    %v1783 = vpop.f32.mrf.mxu0
    %v1784 = vadd.f32 %v1743, %v1783
    %1785 = vmatmul.f32.gmra.mxu0 %v1187
    %v1786 = vpop.f32.mrf.mxu0
    %v1787 = vadd.f32 %v1746, %v1786
    %1788 = vmatmul.f32.gmra.mxu0 %v1191
    %v1789 = vpop.f32.mrf.mxu0
    %v1790 = vadd.f32 %v1749, %v1789
    %1791 = vmatmul.f32.gmra.mxu0 %v1195
    %v1792 = vpop.f32.mrf.mxu0
    %v1793 = vadd.f32 %v1752, %v1792
    %1794 = vmatmul.f32.gmra.mxu0 %v1199
    %v1795 = vpop.f32.mrf.mxu0
    %v1796 = vadd.f32 %v1755, %v1795
    %1797 = vmatmul.f32.gmra.mxu0 %v1203
    %v1798 = vpop.f32.mrf.mxu0
    %v1799 = vadd.f32 %v1758, %v1798
    %1800 = vmatmul.f32.gmra.mxu0 %v1207
    %v1801 = vpop.f32.mrf.mxu0
    %v1802 = vadd.f32 %v1761, %v1801
    %1803 = vdwg.mxu0
    %1804 = vmatpush.msra.mxu0 %v1586
    %1805 = vmatpush.msra.mxu0 %v1578
    %1806 = vmatpush.msra.mxu0 %v1570
    %1807 = vmatpush.msra.mxu0 %v1562
    %1808 = vmatpush.msra.mxu0 %v1554
    %1809 = vmatpush.msra.mxu0 %v1546
    %1810 = vmatpush.msra.mxu0 %v1538
    %1811 = vmatpush.msra.mxu0 %v1530
    %1812 = vmatpush.msra.mxu0 %v1522
    %1813 = vmatpush.msra.mxu0 %v1514
    %1814 = vmatpush.msra.mxu0 %v1506
    %1815 = vmatpush.msra.mxu0 %v1498
    %1816 = vmatpush.msra.mxu0 %v1490
    %1817 = vmatpush.msra.mxu0 %v1482
    %1818 = vmatpush.msra.mxu0 %v1474
    %1819 = vmatpush.msra.mxu0 %v1466
    %1820 = vmatmul.f32.gmra.mxu0 %v1180
    %v1821 = vpop.f32.mrf.mxu0
    %v1822 = vadd.f32 %v1781, %v1821
    %1823 = vmatmul.f32.gmra.mxu0 %v1184
    %v1824 = vpop.f32.mrf.mxu0
    %v1825 = vadd.f32 %v1784, %v1824
    %1826 = vmatmul.f32.gmra.mxu0 %v1188
    %v1827 = vpop.f32.mrf.mxu0
    %v1828 = vadd.f32 %v1787, %v1827
    %1829 = vmatmul.f32.gmra.mxu0 %v1192
    %v1830 = vpop.f32.mrf.mxu0
    %v1831 = vadd.f32 %v1790, %v1830
    %1832 = vmatmul.f32.gmra.mxu0 %v1196
    %v1833 = vpop.f32.mrf.mxu0
    %v1834 = vadd.f32 %v1793, %v1833
    %1835 = vmatmul.f32.gmra.mxu0 %v1200
    %v1836 = vpop.f32.mrf.mxu0
    %v1837 = vadd.f32 %v1796, %v1836
    %1838 = vmatmul.f32.gmra.mxu0 %v1204
    %v1839 = vpop.f32.mrf.mxu0
    %v1840 = vadd.f32 %v1799, %v1839
    %1841 = vmatmul.f32.gmra.mxu0 %v1208
    %v1842 = vpop.f32.mrf.mxu0
    %v1843 = vadd.f32 %v1802, %v1842
    %1844 = vdwg.mxu0
    %1845 = vmatpush.msra.mxu0 %v1714
    %1846 = vmatpush.msra.mxu0 %v1706
    %1847 = vmatpush.msra.mxu0 %v1698
    %1848 = vmatpush.msra.mxu0 %v1690
    %1849 = vmatpush.msra.mxu0 %v1682
    %1850 = vmatpush.msra.mxu0 %v1674
    %1851 = vmatpush.msra.mxu0 %v1666
    %1852 = vmatpush.msra.mxu0 %v1658
    %1853 = vmatpush.msra.mxu0 %v1650
    %1854 = vmatpush.msra.mxu0 %v1642
    %1855 = vmatpush.msra.mxu0 %v1634
    %1856 = vmatpush.msra.mxu0 %v1626
    %1857 = vmatpush.msra.mxu0 %v1618
    %1858 = vmatpush.msra.mxu0 %v1610
    %1859 = vmatpush.msra.mxu0 %v1602
    %1860 = vmatpush.msra.mxu0 %v1594
    %1861 = vmatmul.f32.gmra.mxu0 %v1181
    %v1862 = vpop.f32.mrf.mxu0
    %v1863 = vadd.f32 %v1822, %v1862
    %1864 = vmatmul.f32.gmra.mxu0 %v1185
    %v1865 = vpop.f32.mrf.mxu0
    %v1866 = vadd.f32 %v1825, %v1865
    %1867 = vmatmul.f32.gmra.mxu0 %v1189
    %v1868 = vpop.f32.mrf.mxu0
    %v1869 = vadd.f32 %v1828, %v1868
    %1870 = vmatmul.f32.gmra.mxu0 %v1193
    %v1871 = vpop.f32.mrf.mxu0
    %v1872 = vadd.f32 %v1831, %v1871
    %1873 = vmatmul.f32.gmra.mxu0 %v1197
    %v1874 = vpop.f32.mrf.mxu0
    %v1875 = vadd.f32 %v1834, %v1874
    %1876 = vmatmul.f32.gmra.mxu0 %v1201
    %v1877 = vpop.f32.mrf.mxu0
    %v1878 = vadd.f32 %v1837, %v1877
    %1879 = vmatmul.f32.gmra.mxu0 %v1205
    %v1880 = vpop.f32.mrf.mxu0
    %v1881 = vadd.f32 %v1840, %v1880
    %1882 = vmatmul.f32.gmra.mxu0 %v1209
    %v1883 = vpop.f32.mrf.mxu0
    %v1884 = vadd.f32 %v1843, %v1883
    %1885 = vdwg.mxu0
    %1886 = vmatpush.msra.mxu0 %v1331
    %1887 = vmatpush.msra.mxu0 %v1323
    %1888 = vmatpush.msra.mxu0 %v1315
    %1889 = vmatpush.msra.mxu0 %v1307
    %1890 = vmatpush.msra.mxu0 %v1299
    %1891 = vmatpush.msra.mxu0 %v1291
    %1892 = vmatpush.msra.mxu0 %v1283
    %1893 = vmatpush.msra.mxu0 %v1275
    %1894 = vmatpush.msra.mxu0 %v1267
    %1895 = vmatpush.msra.mxu0 %v1259
    %1896 = vmatpush.msra.mxu0 %v1251
    %1897 = vmatpush.msra.mxu0 %v1243
    %1898 = vmatpush.msra.mxu0 %v1235
    %1899 = vmatpush.msra.mxu0 %v1227
    %1900 = vmatpush.msra.mxu0 %v1219
    %1901 = vmatpush.msra.mxu0 %v1211
    %1902 = vmatmul.f32.gmra.mxu0 %v1178
    %v1903 = vpop.f32.mrf.mxu0
    %v1904 = vadd.f32 0.0, %v1903
    %1905 = vmatmul.f32.gmra.mxu0 %v1182
    %v1906 = vpop.f32.mrf.mxu0
    %v1907 = vadd.f32 0.0, %v1906
    %1908 = vmatmul.f32.gmra.mxu0 %v1186
    %v1909 = vpop.f32.mrf.mxu0
    %v1910 = vadd.f32 0.0, %v1909
    %1911 = vmatmul.f32.gmra.mxu0 %v1190
    %v1912 = vpop.f32.mrf.mxu0
    %v1913 = vadd.f32 0.0, %v1912
    %1914 = vmatmul.f32.gmra.mxu0 %v1194
    %v1915 = vpop.f32.mrf.mxu0
    %v1916 = vadd.f32 0.0, %v1915
    %1917 = vmatmul.f32.gmra.mxu0 %v1198
    %v1918 = vpop.f32.mrf.mxu0
    %v1919 = vadd.f32 0.0, %v1918
    %1920 = vmatmul.f32.gmra.mxu0 %v1202
    %v1921 = vpop.f32.mrf.mxu0
    %v1922 = vadd.f32 0.0, %v1921
    %1923 = vmatmul.f32.gmra.mxu0 %v1206
    %v1924 = vpop.f32.mrf.mxu0
    %v1925 = vadd.f32 0.0, %v1924
    %1926 = vdwg.mxu0
    %1927 = vmatpush.msra.mxu0 %v1459
    %1928 = vmatpush.msra.mxu0 %v1451
    %1929 = vmatpush.msra.mxu0 %v1443
    %1930 = vmatpush.msra.mxu0 %v1435
    %1931 = vmatpush.msra.mxu0 %v1427
    %1932 = vmatpush.msra.mxu0 %v1419
    %1933 = vmatpush.msra.mxu0 %v1411
    %1934 = vmatpush.msra.mxu0 %v1403
    %1935 = vmatpush.msra.mxu0 %v1395
    %1936 = vmatpush.msra.mxu0 %v1387
    %1937 = vmatpush.msra.mxu0 %v1379
    %1938 = vmatpush.msra.mxu0 %v1371
    %1939 = vmatpush.msra.mxu0 %v1363
    %1940 = vmatpush.msra.mxu0 %v1355
    %1941 = vmatpush.msra.mxu0 %v1347
    %1942 = vmatpush.msra.mxu0 %v1339
    %1943 = vmatmul.f32.gmra.mxu0 %v1179
    %v1944 = vpop.f32.mrf.mxu0
    %v1945 = vadd.f32 %v1904, %v1944
    %1946 = vmatmul.f32.gmra.mxu0 %v1183
    %v1947 = vpop.f32.mrf.mxu0
    %v1948 = vadd.f32 %v1907, %v1947
    %1949 = vmatmul.f32.gmra.mxu0 %v1187
    %v1950 = vpop.f32.mrf.mxu0
    %v1951 = vadd.f32 %v1910, %v1950
    %1952 = vmatmul.f32.gmra.mxu0 %v1191
    %v1953 = vpop.f32.mrf.mxu0
    %v1954 = vadd.f32 %v1913, %v1953
    %1955 = vmatmul.f32.gmra.mxu0 %v1195
    %v1956 = vpop.f32.mrf.mxu0
    %v1957 = vadd.f32 %v1916, %v1956
    %1958 = vmatmul.f32.gmra.mxu0 %v1199
    %v1959 = vpop.f32.mrf.mxu0
    %v1960 = vadd.f32 %v1919, %v1959
    %1961 = vmatmul.f32.gmra.mxu0 %v1203
    %v1962 = vpop.f32.mrf.mxu0
    %v1963 = vadd.f32 %v1922, %v1962
    %1964 = vmatmul.f32.gmra.mxu0 %v1207
    %v1965 = vpop.f32.mrf.mxu0
    %v1966 = vadd.f32 %v1925, %v1965
    %1967 = vdwg.mxu0
    %1968 = vmatpush.msra.mxu0 %v1587
    %1969 = vmatpush.msra.mxu0 %v1579
    %1970 = vmatpush.msra.mxu0 %v1571
    %1971 = vmatpush.msra.mxu0 %v1563
    %1972 = vmatpush.msra.mxu0 %v1555
    %1973 = vmatpush.msra.mxu0 %v1547
    %1974 = vmatpush.msra.mxu0 %v1539
    %1975 = vmatpush.msra.mxu0 %v1531
    %1976 = vmatpush.msra.mxu0 %v1523
    %1977 = vmatpush.msra.mxu0 %v1515
    %1978 = vmatpush.msra.mxu0 %v1507
    %1979 = vmatpush.msra.mxu0 %v1499
    %1980 = vmatpush.msra.mxu0 %v1491
    %1981 = vmatpush.msra.mxu0 %v1483
    %1982 = vmatpush.msra.mxu0 %v1475
    %1983 = vmatpush.msra.mxu0 %v1467
    %1984 = vmatmul.f32.gmra.mxu0 %v1180
    %v1985 = vpop.f32.mrf.mxu0
    %v1986 = vadd.f32 %v1945, %v1985
    %1987 = vmatmul.f32.gmra.mxu0 %v1184
    %v1988 = vpop.f32.mrf.mxu0
    %v1989 = vadd.f32 %v1948, %v1988
    %1990 = vmatmul.f32.gmra.mxu0 %v1188
    %v1991 = vpop.f32.mrf.mxu0
    %v1992 = vadd.f32 %v1951, %v1991
    %1993 = vmatmul.f32.gmra.mxu0 %v1192
    %v1994 = vpop.f32.mrf.mxu0
    %v1995 = vadd.f32 %v1954, %v1994
    %1996 = vmatmul.f32.gmra.mxu0 %v1196
    %v1997 = vpop.f32.mrf.mxu0
    %v1998 = vadd.f32 %v1957, %v1997
    %1999 = vmatmul.f32.gmra.mxu0 %v1200
    %v2000 = vpop.f32.mrf.mxu0
    %v2001 = vadd.f32 %v1960, %v2000
    %2002 = vmatmul.f32.gmra.mxu0 %v1204
    %v2003 = vpop.f32.mrf.mxu0
    %v2004 = vadd.f32 %v1963, %v2003
    %2005 = vmatmul.f32.gmra.mxu0 %v1208
    %v2006 = vpop.f32.mrf.mxu0
    %v2007 = vadd.f32 %v1966, %v2006
    %2008 = vdwg.mxu0
    %2009 = vmatpush.msra.mxu0 %v1715
    %2010 = vmatpush.msra.mxu0 %v1707
    %2011 = vmatpush.msra.mxu0 %v1699
    %2012 = vmatpush.msra.mxu0 %v1691
    %2013 = vmatpush.msra.mxu0 %v1683
    %2014 = vmatpush.msra.mxu0 %v1675
    %2015 = vmatpush.msra.mxu0 %v1667
    %2016 = vmatpush.msra.mxu0 %v1659
    %2017 = vmatpush.msra.mxu0 %v1651
    %2018 = vmatpush.msra.mxu0 %v1643
    %2019 = vmatpush.msra.mxu0 %v1635
    %2020 = vmatpush.msra.mxu0 %v1627
    %2021 = vmatpush.msra.mxu0 %v1619
    %2022 = vmatpush.msra.mxu0 %v1611
    %2023 = vmatpush.msra.mxu0 %v1603
    %2024 = vmatpush.msra.mxu0 %v1595
    %2025 = vmatmul.f32.gmra.mxu0 %v1181
    %v2026 = vpop.f32.mrf.mxu0
    %v2027 = vadd.f32 %v1986, %v2026
    %2028 = vmatmul.f32.gmra.mxu0 %v1185
    %v2029 = vpop.f32.mrf.mxu0
    %v2030 = vadd.f32 %v1989, %v2029
    %2031 = vmatmul.f32.gmra.mxu0 %v1189
    %v2032 = vpop.f32.mrf.mxu0
    %v2033 = vadd.f32 %v1992, %v2032
    %2034 = vmatmul.f32.gmra.mxu0 %v1193
    %v2035 = vpop.f32.mrf.mxu0
    %v2036 = vadd.f32 %v1995, %v2035
    %2037 = vmatmul.f32.gmra.mxu0 %v1197
    %v2038 = vpop.f32.mrf.mxu0
    %v2039 = vadd.f32 %v1998, %v2038
    %2040 = vmatmul.f32.gmra.mxu0 %v1201
    %v2041 = vpop.f32.mrf.mxu0
    %v2042 = vadd.f32 %v2001, %v2041
    %2043 = vmatmul.f32.gmra.mxu0 %v1205
    %v2044 = vpop.f32.mrf.mxu0
    %v2045 = vadd.f32 %v2004, %v2044
    %2046 = vmatmul.f32.gmra.mxu0 %v1209
    %v2047 = vpop.f32.mrf.mxu0
    %v2048 = vadd.f32 %v2007, %v2047
    %2049 = vdwg.mxu0
    %2050 = vmatpush.msra.mxu0 %v1332
    %2051 = vmatpush.msra.mxu0 %v1324
    %2052 = vmatpush.msra.mxu0 %v1316
    %2053 = vmatpush.msra.mxu0 %v1308
    %2054 = vmatpush.msra.mxu0 %v1300
    %2055 = vmatpush.msra.mxu0 %v1292
    %2056 = vmatpush.msra.mxu0 %v1284
    %2057 = vmatpush.msra.mxu0 %v1276
    %2058 = vmatpush.msra.mxu0 %v1268
    %2059 = vmatpush.msra.mxu0 %v1260
    %2060 = vmatpush.msra.mxu0 %v1252
    %2061 = vmatpush.msra.mxu0 %v1244
    %2062 = vmatpush.msra.mxu0 %v1236
    %2063 = vmatpush.msra.mxu0 %v1228
    %2064 = vmatpush.msra.mxu0 %v1220
    %2065 = vmatpush.msra.mxu0 %v1212
    %2066 = vmatmul.f32.gmra.mxu0 %v1178
    %v2067 = vpop.f32.mrf.mxu0
    %v2068 = vadd.f32 0.0, %v2067
    %2069 = vmatmul.f32.gmra.mxu0 %v1182
    %v2070 = vpop.f32.mrf.mxu0
    %v2071 = vadd.f32 0.0, %v2070
    %2072 = vmatmul.f32.gmra.mxu0 %v1186
    %v2073 = vpop.f32.mrf.mxu0
    %v2074 = vadd.f32 0.0, %v2073
    %2075 = vmatmul.f32.gmra.mxu0 %v1190
    %v2076 = vpop.f32.mrf.mxu0
    %v2077 = vadd.f32 0.0, %v2076
    %2078 = vmatmul.f32.gmra.mxu0 %v1194
    %v2079 = vpop.f32.mrf.mxu0
    %v2080 = vadd.f32 0.0, %v2079
    %2081 = vmatmul.f32.gmra.mxu0 %v1198
    %v2082 = vpop.f32.mrf.mxu0
    %v2083 = vadd.f32 0.0, %v2082
    %2084 = vmatmul.f32.gmra.mxu0 %v1202
    %v2085 = vpop.f32.mrf.mxu0
    %v2086 = vadd.f32 0.0, %v2085
    %2087 = vmatmul.f32.gmra.mxu0 %v1206
    %v2088 = vpop.f32.mrf.mxu0
    %v2089 = vadd.f32 0.0, %v2088
    %2090 = vdwg.mxu0
    %2091 = vmatpush.msra.mxu0 %v1460
    %2092 = vmatpush.msra.mxu0 %v1452
    %2093 = vmatpush.msra.mxu0 %v1444
    %2094 = vmatpush.msra.mxu0 %v1436
    %2095 = vmatpush.msra.mxu0 %v1428
    %2096 = vmatpush.msra.mxu0 %v1420
    %2097 = vmatpush.msra.mxu0 %v1412
    %2098 = vmatpush.msra.mxu0 %v1404
    %2099 = vmatpush.msra.mxu0 %v1396
    %2100 = vmatpush.msra.mxu0 %v1388
    %2101 = vmatpush.msra.mxu0 %v1380
    %2102 = vmatpush.msra.mxu0 %v1372
    %2103 = vmatpush.msra.mxu0 %v1364
    %2104 = vmatpush.msra.mxu0 %v1356
    %2105 = vmatpush.msra.mxu0 %v1348
    %2106 = vmatpush.msra.mxu0 %v1340
    %2107 = vmatmul.f32.gmra.mxu0 %v1179
    %v2108 = vpop.f32.mrf.mxu0
    %v2109 = vadd.f32 %v2068, %v2108
    %2110 = vmatmul.f32.gmra.mxu0 %v1183
    %v2111 = vpop.f32.mrf.mxu0
    %v2112 = vadd.f32 %v2071, %v2111
    %2113 = vmatmul.f32.gmra.mxu0 %v1187
    %v2114 = vpop.f32.mrf.mxu0
    %v2115 = vadd.f32 %v2074, %v2114
    %2116 = vmatmul.f32.gmra.mxu0 %v1191
    %v2117 = vpop.f32.mrf.mxu0
    %v2118 = vadd.f32 %v2077, %v2117
    %2119 = vmatmul.f32.gmra.mxu0 %v1195
    %v2120 = vpop.f32.mrf.mxu0
    %v2121 = vadd.f32 %v2080, %v2120
    %2122 = vmatmul.f32.gmra.mxu0 %v1199
    %v2123 = vpop.f32.mrf.mxu0
    %v2124 = vadd.f32 %v2083, %v2123
    %2125 = vmatmul.f32.gmra.mxu0 %v1203
    %v2126 = vpop.f32.mrf.mxu0
    %v2127 = vadd.f32 %v2086, %v2126
    %2128 = vmatmul.f32.gmra.mxu0 %v1207
    %v2129 = vpop.f32.mrf.mxu0
    %v2130 = vadd.f32 %v2089, %v2129
    %2131 = vdwg.mxu0
    %2132 = vmatpush.msra.mxu0 %v1588
    %2133 = vmatpush.msra.mxu0 %v1580
    %2134 = vmatpush.msra.mxu0 %v1572
    %2135 = vmatpush.msra.mxu0 %v1564
    %2136 = vmatpush.msra.mxu0 %v1556
    %2137 = vmatpush.msra.mxu0 %v1548
    %2138 = vmatpush.msra.mxu0 %v1540
    %2139 = vmatpush.msra.mxu0 %v1532
    %2140 = vmatpush.msra.mxu0 %v1524
    %2141 = vmatpush.msra.mxu0 %v1516
    %2142 = vmatpush.msra.mxu0 %v1508
    %2143 = vmatpush.msra.mxu0 %v1500
    %2144 = vmatpush.msra.mxu0 %v1492
    %2145 = vmatpush.msra.mxu0 %v1484
    %2146 = vmatpush.msra.mxu0 %v1476
    %2147 = vmatpush.msra.mxu0 %v1468
    %2148 = vmatmul.f32.gmra.mxu0 %v1180
    %v2149 = vpop.f32.mrf.mxu0
    %v2150 = vadd.f32 %v2109, %v2149
    %2151 = vmatmul.f32.gmra.mxu0 %v1184
    %v2152 = vpop.f32.mrf.mxu0
    %v2153 = vadd.f32 %v2112, %v2152
    %2154 = vmatmul.f32.gmra.mxu0 %v1188
    %v2155 = vpop.f32.mrf.mxu0
    %v2156 = vadd.f32 %v2115, %v2155
    %2157 = vmatmul.f32.gmra.mxu0 %v1192
    %v2158 = vpop.f32.mrf.mxu0
    %v2159 = vadd.f32 %v2118, %v2158
    %2160 = vmatmul.f32.gmra.mxu0 %v1196
    %v2161 = vpop.f32.mrf.mxu0
    %v2162 = vadd.f32 %v2121, %v2161
    %2163 = vmatmul.f32.gmra.mxu0 %v1200
    %v2164 = vpop.f32.mrf.mxu0
    %v2165 = vadd.f32 %v2124, %v2164
    %2166 = vmatmul.f32.gmra.mxu0 %v1204
    %v2167 = vpop.f32.mrf.mxu0
    %v2168 = vadd.f32 %v2127, %v2167
    %2169 = vmatmul.f32.gmra.mxu0 %v1208
    %v2170 = vpop.f32.mrf.mxu0
    %v2171 = vadd.f32 %v2130, %v2170
    %2172 = vdwg.mxu0
    %2173 = vmatpush.msra.mxu0 %v1716
    %2174 = vmatpush.msra.mxu0 %v1708
    %2175 = vmatpush.msra.mxu0 %v1700
    %2176 = vmatpush.msra.mxu0 %v1692
    %2177 = vmatpush.msra.mxu0 %v1684
    %2178 = vmatpush.msra.mxu0 %v1676
    %2179 = vmatpush.msra.mxu0 %v1668
    %2180 = vmatpush.msra.mxu0 %v1660
    %2181 = vmatpush.msra.mxu0 %v1652
    %2182 = vmatpush.msra.mxu0 %v1644
    %2183 = vmatpush.msra.mxu0 %v1636
    %2184 = vmatpush.msra.mxu0 %v1628
    %2185 = vmatpush.msra.mxu0 %v1620
    %2186 = vmatpush.msra.mxu0 %v1612
    %2187 = vmatpush.msra.mxu0 %v1604
    %2188 = vmatpush.msra.mxu0 %v1596
    %2189 = vmatmul.f32.gmra.mxu0 %v1181
    %v2190 = vpop.f32.mrf.mxu0
    %v2191 = vadd.f32 %v2150, %v2190
    %2192 = vmatmul.f32.gmra.mxu0 %v1185
    %v2193 = vpop.f32.mrf.mxu0
    %v2194 = vadd.f32 %v2153, %v2193
    %2195 = vmatmul.f32.gmra.mxu0 %v1189
    %v2196 = vpop.f32.mrf.mxu0
    %v2197 = vadd.f32 %v2156, %v2196
    %2198 = vmatmul.f32.gmra.mxu0 %v1193
    %v2199 = vpop.f32.mrf.mxu0
    %v2200 = vadd.f32 %v2159, %v2199
    %2201 = vmatmul.f32.gmra.mxu0 %v1197
    %v2202 = vpop.f32.mrf.mxu0
    %v2203 = vadd.f32 %v2162, %v2202
    %2204 = vmatmul.f32.gmra.mxu0 %v1201
    %v2205 = vpop.f32.mrf.mxu0
    %v2206 = vadd.f32 %v2165, %v2205
    %2207 = vmatmul.f32.gmra.mxu0 %v1205
    %v2208 = vpop.f32.mrf.mxu0
    %v2209 = vadd.f32 %v2168, %v2208
    %2210 = vmatmul.f32.gmra.mxu0 %v1209
    %v2211 = vpop.f32.mrf.mxu0
    %v2212 = vadd.f32 %v2171, %v2211
    %2213 = vdwg.mxu0
    %2214 = vmatpush.msra.mxu0 %v1333
    %2215 = vmatpush.msra.mxu0 %v1325
    %2216 = vmatpush.msra.mxu0 %v1317
    %2217 = vmatpush.msra.mxu0 %v1309
    %2218 = vmatpush.msra.mxu0 %v1301
    %2219 = vmatpush.msra.mxu0 %v1293
    %2220 = vmatpush.msra.mxu0 %v1285
    %2221 = vmatpush.msra.mxu0 %v1277
    %2222 = vmatpush.msra.mxu0 %v1269
    %2223 = vmatpush.msra.mxu0 %v1261
    %2224 = vmatpush.msra.mxu0 %v1253
    %2225 = vmatpush.msra.mxu0 %v1245
    %2226 = vmatpush.msra.mxu0 %v1237
    %2227 = vmatpush.msra.mxu0 %v1229
    %2228 = vmatpush.msra.mxu0 %v1221
    %2229 = vmatpush.msra.mxu0 %v1213
    %2230 = vmatmul.f32.gmra.mxu0 %v1178
    %v2231 = vpop.f32.mrf.mxu0
    %v2232 = vadd.f32 0.0, %v2231
    %2233 = vmatmul.f32.gmra.mxu0 %v1182
    %v2234 = vpop.f32.mrf.mxu0
    %v2235 = vadd.f32 0.0, %v2234
    %2236 = vmatmul.f32.gmra.mxu0 %v1186
    %v2237 = vpop.f32.mrf.mxu0
    %v2238 = vadd.f32 0.0, %v2237
    %2239 = vmatmul.f32.gmra.mxu0 %v1190
    %v2240 = vpop.f32.mrf.mxu0
    %v2241 = vadd.f32 0.0, %v2240
    %2242 = vmatmul.f32.gmra.mxu0 %v1194
    %v2243 = vpop.f32.mrf.mxu0
    %v2244 = vadd.f32 0.0, %v2243
    %2245 = vmatmul.f32.gmra.mxu0 %v1198
    %v2246 = vpop.f32.mrf.mxu0
    %v2247 = vadd.f32 0.0, %v2246
    %2248 = vmatmul.f32.gmra.mxu0 %v1202
    %v2249 = vpop.f32.mrf.mxu0
    %v2250 = vadd.f32 0.0, %v2249
    %2251 = vmatmul.f32.gmra.mxu0 %v1206
    %v2252 = vpop.f32.mrf.mxu0
    %v2253 = vadd.f32 0.0, %v2252
    %2254 = vdwg.mxu0
    %2255 = vmatpush.msra.mxu0 %v1461
    %2256 = vmatpush.msra.mxu0 %v1453
    %2257 = vmatpush.msra.mxu0 %v1445
    %2258 = vmatpush.msra.mxu0 %v1437
    %2259 = vmatpush.msra.mxu0 %v1429
    %2260 = vmatpush.msra.mxu0 %v1421
    %2261 = vmatpush.msra.mxu0 %v1413
    %2262 = vmatpush.msra.mxu0 %v1405
    %2263 = vmatpush.msra.mxu0 %v1397
    %2264 = vmatpush.msra.mxu0 %v1389
    %2265 = vmatpush.msra.mxu0 %v1381
    %2266 = vmatpush.msra.mxu0 %v1373
    %2267 = vmatpush.msra.mxu0 %v1365
    %2268 = vmatpush.msra.mxu0 %v1357
    %2269 = vmatpush.msra.mxu0 %v1349
    %2270 = vmatpush.msra.mxu0 %v1341
    %2271 = vmatmul.f32.gmra.mxu0 %v1179
    %v2272 = vpop.f32.mrf.mxu0
    %v2273 = vadd.f32 %v2232, %v2272
    %2274 = vmatmul.f32.gmra.mxu0 %v1183
    %v2275 = vpop.f32.mrf.mxu0
    %v2276 = vadd.f32 %v2235, %v2275
    %2277 = vmatmul.f32.gmra.mxu0 %v1187
    %v2278 = vpop.f32.mrf.mxu0
    %v2279 = vadd.f32 %v2238, %v2278
    %2280 = vmatmul.f32.gmra.mxu0 %v1191
    %v2281 = vpop.f32.mrf.mxu0
    %v2282 = vadd.f32 %v2241, %v2281
    %2283 = vmatmul.f32.gmra.mxu0 %v1195
    %v2284 = vpop.f32.mrf.mxu0
    %v2285 = vadd.f32 %v2244, %v2284
    %2286 = vmatmul.f32.gmra.mxu0 %v1199
    %v2287 = vpop.f32.mrf.mxu0
    %v2288 = vadd.f32 %v2247, %v2287
    %2289 = vmatmul.f32.gmra.mxu0 %v1203
    %v2290 = vpop.f32.mrf.mxu0
    %v2291 = vadd.f32 %v2250, %v2290
    %2292 = vmatmul.f32.gmra.mxu0 %v1207
    %v2293 = vpop.f32.mrf.mxu0
    %v2294 = vadd.f32 %v2253, %v2293
    %2295 = vdwg.mxu0
    %2296 = vmatpush.msra.mxu0 %v1589
    %2297 = vmatpush.msra.mxu0 %v1581
    %2298 = vmatpush.msra.mxu0 %v1573
    %2299 = vmatpush.msra.mxu0 %v1565
    %2300 = vmatpush.msra.mxu0 %v1557
    %2301 = vmatpush.msra.mxu0 %v1549
    %2302 = vmatpush.msra.mxu0 %v1541
    %2303 = vmatpush.msra.mxu0 %v1533
    %2304 = vmatpush.msra.mxu0 %v1525
    %2305 = vmatpush.msra.mxu0 %v1517
    %2306 = vmatpush.msra.mxu0 %v1509
    %2307 = vmatpush.msra.mxu0 %v1501
    %2308 = vmatpush.msra.mxu0 %v1493
    %2309 = vmatpush.msra.mxu0 %v1485
    %2310 = vmatpush.msra.mxu0 %v1477
    %2311 = vmatpush.msra.mxu0 %v1469
    %2312 = vmatmul.f32.gmra.mxu0 %v1180
    %v2313 = vpop.f32.mrf.mxu0
    %v2314 = vadd.f32 %v2273, %v2313
    %2315 = vmatmul.f32.gmra.mxu0 %v1184
    %v2316 = vpop.f32.mrf.mxu0
    %v2317 = vadd.f32 %v2276, %v2316
    %2318 = vmatmul.f32.gmra.mxu0 %v1188
    %v2319 = vpop.f32.mrf.mxu0
    %v2320 = vadd.f32 %v2279, %v2319
    %2321 = vmatmul.f32.gmra.mxu0 %v1192
    %v2322 = vpop.f32.mrf.mxu0
    %v2323 = vadd.f32 %v2282, %v2322
    %2324 = vmatmul.f32.gmra.mxu0 %v1196
    %v2325 = vpop.f32.mrf.mxu0
    %v2326 = vadd.f32 %v2285, %v2325
    %2327 = vmatmul.f32.gmra.mxu0 %v1200
    %v2328 = vpop.f32.mrf.mxu0
    %v2329 = vadd.f32 %v2288, %v2328
    %2330 = vmatmul.f32.gmra.mxu0 %v1204
    %v2331 = vpop.f32.mrf.mxu0
    %v2332 = vadd.f32 %v2291, %v2331
    %2333 = vmatmul.f32.gmra.mxu0 %v1208
    %v2334 = vpop.f32.mrf.mxu0
    %v2335 = vadd.f32 %v2294, %v2334
    %2336 = vdwg.mxu0
    %2337 = vmatpush.msra.mxu0 %v1717
    %2338 = vmatpush.msra.mxu0 %v1709
    %2339 = vmatpush.msra.mxu0 %v1701
    %2340 = vmatpush.msra.mxu0 %v1693
    %2341 = vmatpush.msra.mxu0 %v1685
    %2342 = vmatpush.msra.mxu0 %v1677
    %2343 = vmatpush.msra.mxu0 %v1669
    %2344 = vmatpush.msra.mxu0 %v1661
    %2345 = vmatpush.msra.mxu0 %v1653
    %2346 = vmatpush.msra.mxu0 %v1645
    %2347 = vmatpush.msra.mxu0 %v1637
    %2348 = vmatpush.msra.mxu0 %v1629
    %2349 = vmatpush.msra.mxu0 %v1621
    %2350 = vmatpush.msra.mxu0 %v1613
    %2351 = vmatpush.msra.mxu0 %v1605
    %2352 = vmatpush.msra.mxu0 %v1597
    %2353 = vmatmul.f32.gmra.mxu0 %v1181
    %v2354 = vpop.f32.mrf.mxu0
    %v2355 = vadd.f32 %v2314, %v2354
    %2356 = vmatmul.f32.gmra.mxu0 %v1185
    %v2357 = vpop.f32.mrf.mxu0
    %v2358 = vadd.f32 %v2317, %v2357
    %2359 = vmatmul.f32.gmra.mxu0 %v1189
    %v2360 = vpop.f32.mrf.mxu0
    %v2361 = vadd.f32 %v2320, %v2360
    %2362 = vmatmul.f32.gmra.mxu0 %v1193
    %v2363 = vpop.f32.mrf.mxu0
    %v2364 = vadd.f32 %v2323, %v2363
    %2365 = vmatmul.f32.gmra.mxu0 %v1197
    %v2366 = vpop.f32.mrf.mxu0
    %v2367 = vadd.f32 %v2326, %v2366
    %2368 = vmatmul.f32.gmra.mxu0 %v1201
    %v2369 = vpop.f32.mrf.mxu0
    %v2370 = vadd.f32 %v2329, %v2369
    %2371 = vmatmul.f32.gmra.mxu0 %v1205
    %v2372 = vpop.f32.mrf.mxu0
    %v2373 = vadd.f32 %v2332, %v2372
    %2374 = vmatmul.f32.gmra.mxu0 %v1209
    %v2375 = vpop.f32.mrf.mxu0
    %v2376 = vadd.f32 %v2335, %v2375
    %2377 = vdwg.mxu0
    %2378 = vmatpush.msra.mxu0 %v1334
    %2379 = vmatpush.msra.mxu0 %v1326
    %2380 = vmatpush.msra.mxu0 %v1318
    %2381 = vmatpush.msra.mxu0 %v1310
    %2382 = vmatpush.msra.mxu0 %v1302
    %2383 = vmatpush.msra.mxu0 %v1294
    %2384 = vmatpush.msra.mxu0 %v1286
    %2385 = vmatpush.msra.mxu0 %v1278
    %2386 = vmatpush.msra.mxu0 %v1270
    %2387 = vmatpush.msra.mxu0 %v1262
    %2388 = vmatpush.msra.mxu0 %v1254
    %2389 = vmatpush.msra.mxu0 %v1246
    %2390 = vmatpush.msra.mxu0 %v1238
    %2391 = vmatpush.msra.mxu0 %v1230
    %2392 = vmatpush.msra.mxu0 %v1222
    %2393 = vmatpush.msra.mxu0 %v1214
    %2394 = vmatmul.f32.gmra.mxu0 %v1178
    %v2395 = vpop.f32.mrf.mxu0
    %v2396 = vadd.f32 0.0, %v2395
    %2397 = vmatmul.f32.gmra.mxu0 %v1182
    %v2398 = vpop.f32.mrf.mxu0
    %v2399 = vadd.f32 0.0, %v2398
    %2400 = vmatmul.f32.gmra.mxu0 %v1186
    %v2401 = vpop.f32.mrf.mxu0
    %v2402 = vadd.f32 0.0, %v2401
    %2403 = vmatmul.f32.gmra.mxu0 %v1190
    %v2404 = vpop.f32.mrf.mxu0
    %v2405 = vadd.f32 0.0, %v2404
    %2406 = vmatmul.f32.gmra.mxu0 %v1194
    %v2407 = vpop.f32.mrf.mxu0
    %v2408 = vadd.f32 0.0, %v2407
    %2409 = vmatmul.f32.gmra.mxu0 %v1198
    %v2410 = vpop.f32.mrf.mxu0
    %v2411 = vadd.f32 0.0, %v2410
    %2412 = vmatmul.f32.gmra.mxu0 %v1202
    %v2413 = vpop.f32.mrf.mxu0
    %v2414 = vadd.f32 0.0, %v2413
    %2415 = vmatmul.f32.gmra.mxu0 %v1206
    %v2416 = vpop.f32.mrf.mxu0
    %v2417 = vadd.f32 0.0, %v2416
    %2418 = vdwg.mxu0
    %2419 = vmatpush.msra.mxu0 %v1462
    %2420 = vmatpush.msra.mxu0 %v1454
    %2421 = vmatpush.msra.mxu0 %v1446
    %2422 = vmatpush.msra.mxu0 %v1438
    %2423 = vmatpush.msra.mxu0 %v1430
    %2424 = vmatpush.msra.mxu0 %v1422
    %2425 = vmatpush.msra.mxu0 %v1414
    %2426 = vmatpush.msra.mxu0 %v1406
    %2427 = vmatpush.msra.mxu0 %v1398
    %2428 = vmatpush.msra.mxu0 %v1390
    %2429 = vmatpush.msra.mxu0 %v1382
    %2430 = vmatpush.msra.mxu0 %v1374
    %2431 = vmatpush.msra.mxu0 %v1366
    %2432 = vmatpush.msra.mxu0 %v1358
    %2433 = vmatpush.msra.mxu0 %v1350
    %2434 = vmatpush.msra.mxu0 %v1342
    %2435 = vmatmul.f32.gmra.mxu0 %v1179
    %v2436 = vpop.f32.mrf.mxu0
    %v2437 = vadd.f32 %v2396, %v2436
    %2438 = vmatmul.f32.gmra.mxu0 %v1183
    %v2439 = vpop.f32.mrf.mxu0
    %v2440 = vadd.f32 %v2399, %v2439
    %2441 = vmatmul.f32.gmra.mxu0 %v1187
    %v2442 = vpop.f32.mrf.mxu0
    %v2443 = vadd.f32 %v2402, %v2442
    %2444 = vmatmul.f32.gmra.mxu0 %v1191
    %v2445 = vpop.f32.mrf.mxu0
    %v2446 = vadd.f32 %v2405, %v2445
    %2447 = vmatmul.f32.gmra.mxu0 %v1195
    %v2448 = vpop.f32.mrf.mxu0
    %v2449 = vadd.f32 %v2408, %v2448
    %2450 = vmatmul.f32.gmra.mxu0 %v1199
    %v2451 = vpop.f32.mrf.mxu0
    %v2452 = vadd.f32 %v2411, %v2451
    %2453 = vmatmul.f32.gmra.mxu0 %v1203
    %v2454 = vpop.f32.mrf.mxu0
    %v2455 = vadd.f32 %v2414, %v2454
    %2456 = vmatmul.f32.gmra.mxu0 %v1207
    %v2457 = vpop.f32.mrf.mxu0
    %v2458 = vadd.f32 %v2417, %v2457
    %2459 = vdwg.mxu0
    %2460 = vmatpush.msra.mxu0 %v1590
    %2461 = vmatpush.msra.mxu0 %v1582
    %2462 = vmatpush.msra.mxu0 %v1574
    %2463 = vmatpush.msra.mxu0 %v1566
    %2464 = vmatpush.msra.mxu0 %v1558
    %2465 = vmatpush.msra.mxu0 %v1550
    %2466 = vmatpush.msra.mxu0 %v1542
    %2467 = vmatpush.msra.mxu0 %v1534
    %2468 = vmatpush.msra.mxu0 %v1526
    %2469 = vmatpush.msra.mxu0 %v1518
    %2470 = vmatpush.msra.mxu0 %v1510
    %2471 = vmatpush.msra.mxu0 %v1502
    %2472 = vmatpush.msra.mxu0 %v1494
    %2473 = vmatpush.msra.mxu0 %v1486
    %2474 = vmatpush.msra.mxu0 %v1478
    %2475 = vmatpush.msra.mxu0 %v1470
    %2476 = vmatmul.f32.gmra.mxu0 %v1180
    %v2477 = vpop.f32.mrf.mxu0
    %v2478 = vadd.f32 %v2437, %v2477
    %2479 = vmatmul.f32.gmra.mxu0 %v1184
    %v2480 = vpop.f32.mrf.mxu0
    %v2481 = vadd.f32 %v2440, %v2480
    %2482 = vmatmul.f32.gmra.mxu0 %v1188
    %v2483 = vpop.f32.mrf.mxu0
    %v2484 = vadd.f32 %v2443, %v2483
    %2485 = vmatmul.f32.gmra.mxu0 %v1192
    %v2486 = vpop.f32.mrf.mxu0
    %v2487 = vadd.f32 %v2446, %v2486
    %2488 = vmatmul.f32.gmra.mxu0 %v1196
    %v2489 = vpop.f32.mrf.mxu0
    %v2490 = vadd.f32 %v2449, %v2489
    %2491 = vmatmul.f32.gmra.mxu0 %v1200
    %v2492 = vpop.f32.mrf.mxu0
    %v2493 = vadd.f32 %v2452, %v2492
    %2494 = vmatmul.f32.gmra.mxu0 %v1204
    %v2495 = vpop.f32.mrf.mxu0
    %v2496 = vadd.f32 %v2455, %v2495
    %2497 = vmatmul.f32.gmra.mxu0 %v1208
    %v2498 = vpop.f32.mrf.mxu0
    %v2499 = vadd.f32 %v2458, %v2498
    %2500 = vdwg.mxu0
    %2501 = vmatpush.msra.mxu0 %v1718
    %2502 = vmatpush.msra.mxu0 %v1710
    %2503 = vmatpush.msra.mxu0 %v1702
    %2504 = vmatpush.msra.mxu0 %v1694
    %2505 = vmatpush.msra.mxu0 %v1686
    %2506 = vmatpush.msra.mxu0 %v1678
    %2507 = vmatpush.msra.mxu0 %v1670
    %2508 = vmatpush.msra.mxu0 %v1662
    %2509 = vmatpush.msra.mxu0 %v1654
    %2510 = vmatpush.msra.mxu0 %v1646
    %2511 = vmatpush.msra.mxu0 %v1638
    %2512 = vmatpush.msra.mxu0 %v1630
    %2513 = vmatpush.msra.mxu0 %v1622
    %2514 = vmatpush.msra.mxu0 %v1614
    %2515 = vmatpush.msra.mxu0 %v1606
    %2516 = vmatpush.msra.mxu0 %v1598
    %2517 = vmatmul.f32.gmra.mxu0 %v1181
    %v2518 = vpop.f32.mrf.mxu0
    %v2519 = vadd.f32 %v2478, %v2518
    %2520 = vmatmul.f32.gmra.mxu0 %v1185
    %v2521 = vpop.f32.mrf.mxu0
    %v2522 = vadd.f32 %v2481, %v2521
    %2523 = vmatmul.f32.gmra.mxu0 %v1189
    %v2524 = vpop.f32.mrf.mxu0
    %v2525 = vadd.f32 %v2484, %v2524
    %2526 = vmatmul.f32.gmra.mxu0 %v1193
    %v2527 = vpop.f32.mrf.mxu0
    %v2528 = vadd.f32 %v2487, %v2527
    %2529 = vmatmul.f32.gmra.mxu0 %v1197
    %v2530 = vpop.f32.mrf.mxu0
    %v2531 = vadd.f32 %v2490, %v2530
    %2532 = vmatmul.f32.gmra.mxu0 %v1201
    %v2533 = vpop.f32.mrf.mxu0
    %v2534 = vadd.f32 %v2493, %v2533
    %2535 = vmatmul.f32.gmra.mxu0 %v1205
    %v2536 = vpop.f32.mrf.mxu0
    %v2537 = vadd.f32 %v2496, %v2536
    %2538 = vmatmul.f32.gmra.mxu0 %v1209
    %v2539 = vpop.f32.mrf.mxu0
    %v2540 = vadd.f32 %v2499, %v2539
    %2541 = vdwg.mxu0
    %2542 = vmatpush.msra.mxu0 %v1335
    %2543 = vmatpush.msra.mxu0 %v1327
    %2544 = vmatpush.msra.mxu0 %v1319
    %2545 = vmatpush.msra.mxu0 %v1311
    %2546 = vmatpush.msra.mxu0 %v1303
    %2547 = vmatpush.msra.mxu0 %v1295
    %2548 = vmatpush.msra.mxu0 %v1287
    %2549 = vmatpush.msra.mxu0 %v1279
    %2550 = vmatpush.msra.mxu0 %v1271
    %2551 = vmatpush.msra.mxu0 %v1263
    %2552 = vmatpush.msra.mxu0 %v1255
    %2553 = vmatpush.msra.mxu0 %v1247
    %2554 = vmatpush.msra.mxu0 %v1239
    %2555 = vmatpush.msra.mxu0 %v1231
    %2556 = vmatpush.msra.mxu0 %v1223
    %2557 = vmatpush.msra.mxu0 %v1215
    %2558 = vmatmul.f32.gmra.mxu0 %v1178
    %v2559 = vpop.f32.mrf.mxu0
    %v2560 = vadd.f32 0.0, %v2559
    %2561 = vmatmul.f32.gmra.mxu0 %v1182
    %v2562 = vpop.f32.mrf.mxu0
    %v2563 = vadd.f32 0.0, %v2562
    %2564 = vmatmul.f32.gmra.mxu0 %v1186
    %v2565 = vpop.f32.mrf.mxu0
    %v2566 = vadd.f32 0.0, %v2565
    %2567 = vmatmul.f32.gmra.mxu0 %v1190
    %v2568 = vpop.f32.mrf.mxu0
    %v2569 = vadd.f32 0.0, %v2568
    %2570 = vmatmul.f32.gmra.mxu0 %v1194
    %v2571 = vpop.f32.mrf.mxu0
    %v2572 = vadd.f32 0.0, %v2571
    %2573 = vmatmul.f32.gmra.mxu0 %v1198
    %v2574 = vpop.f32.mrf.mxu0
    %v2575 = vadd.f32 0.0, %v2574
    %2576 = vmatmul.f32.gmra.mxu0 %v1202
    %v2577 = vpop.f32.mrf.mxu0
    %v2578 = vadd.f32 0.0, %v2577
    %2579 = vmatmul.f32.gmra.mxu0 %v1206
    %v2580 = vpop.f32.mrf.mxu0
    %v2581 = vadd.f32 0.0, %v2580
    %2582 = vdwg.mxu0
    %2583 = vmatpush.msra.mxu0 %v1463
    %2584 = vmatpush.msra.mxu0 %v1455
    %2585 = vmatpush.msra.mxu0 %v1447
    %2586 = vmatpush.msra.mxu0 %v1439
    %2587 = vmatpush.msra.mxu0 %v1431
    %2588 = vmatpush.msra.mxu0 %v1423
    %2589 = vmatpush.msra.mxu0 %v1415
    %2590 = vmatpush.msra.mxu0 %v1407
    %2591 = vmatpush.msra.mxu0 %v1399
    %2592 = vmatpush.msra.mxu0 %v1391
    %2593 = vmatpush.msra.mxu0 %v1383
    %2594 = vmatpush.msra.mxu0 %v1375
    %2595 = vmatpush.msra.mxu0 %v1367
    %2596 = vmatpush.msra.mxu0 %v1359
    %2597 = vmatpush.msra.mxu0 %v1351
    %2598 = vmatpush.msra.mxu0 %v1343
    %2599 = vmatmul.f32.gmra.mxu0 %v1179
    %v2600 = vpop.f32.mrf.mxu0
    %v2601 = vadd.f32 %v2560, %v2600
    %2602 = vmatmul.f32.gmra.mxu0 %v1183
    %v2603 = vpop.f32.mrf.mxu0
    %v2604 = vadd.f32 %v2563, %v2603
    %2605 = vmatmul.f32.gmra.mxu0 %v1187
    %v2606 = vpop.f32.mrf.mxu0
    %v2607 = vadd.f32 %v2566, %v2606
    %2608 = vmatmul.f32.gmra.mxu0 %v1191
    %v2609 = vpop.f32.mrf.mxu0
    %v2610 = vadd.f32 %v2569, %v2609
    %2611 = vmatmul.f32.gmra.mxu0 %v1195
    %v2612 = vpop.f32.mrf.mxu0
    %v2613 = vadd.f32 %v2572, %v2612
    %2614 = vmatmul.f32.gmra.mxu0 %v1199
    %v2615 = vpop.f32.mrf.mxu0
    %v2616 = vadd.f32 %v2575, %v2615
    %2617 = vmatmul.f32.gmra.mxu0 %v1203
    %v2618 = vpop.f32.mrf.mxu0
    %v2619 = vadd.f32 %v2578, %v2618
    %2620 = vmatmul.f32.gmra.mxu0 %v1207
    %v2621 = vpop.f32.mrf.mxu0
    %v2622 = vadd.f32 %v2581, %v2621
    %2623 = vdwg.mxu0
    %2624 = vmatpush.msra.mxu0 %v1591
    %2625 = vmatpush.msra.mxu0 %v1583
    %2626 = vmatpush.msra.mxu0 %v1575
    %2627 = vmatpush.msra.mxu0 %v1567
    %2628 = vmatpush.msra.mxu0 %v1559
    %2629 = vmatpush.msra.mxu0 %v1551
    %2630 = vmatpush.msra.mxu0 %v1543
    %2631 = vmatpush.msra.mxu0 %v1535
    %2632 = vmatpush.msra.mxu0 %v1527
    %2633 = vmatpush.msra.mxu0 %v1519
    %2634 = vmatpush.msra.mxu0 %v1511
    %2635 = vmatpush.msra.mxu0 %v1503
    %2636 = vmatpush.msra.mxu0 %v1495
    %2637 = vmatpush.msra.mxu0 %v1487
    %2638 = vmatpush.msra.mxu0 %v1479
    %2639 = vmatpush.msra.mxu0 %v1471
    %2640 = vmatmul.f32.gmra.mxu0 %v1180
    %v2641 = vpop.f32.mrf.mxu0
    %v2642 = vadd.f32 %v2601, %v2641
    %2643 = vmatmul.f32.gmra.mxu0 %v1184
    %v2644 = vpop.f32.mrf.mxu0
    %v2645 = vadd.f32 %v2604, %v2644
    %2646 = vmatmul.f32.gmra.mxu0 %v1188
    %v2647 = vpop.f32.mrf.mxu0
    %v2648 = vadd.f32 %v2607, %v2647
    %2649 = vmatmul.f32.gmra.mxu0 %v1192
    %v2650 = vpop.f32.mrf.mxu0
    %v2651 = vadd.f32 %v2610, %v2650
    %2652 = vmatmul.f32.gmra.mxu0 %v1196
    %v2653 = vpop.f32.mrf.mxu0
    %v2654 = vadd.f32 %v2613, %v2653
    %2655 = vmatmul.f32.gmra.mxu0 %v1200
    %v2656 = vpop.f32.mrf.mxu0
    %v2657 = vadd.f32 %v2616, %v2656
    %2658 = vmatmul.f32.gmra.mxu0 %v1204
    %v2659 = vpop.f32.mrf.mxu0
    %v2660 = vadd.f32 %v2619, %v2659
    %2661 = vmatmul.f32.gmra.mxu0 %v1208
    %v2662 = vpop.f32.mrf.mxu0
    %v2663 = vadd.f32 %v2622, %v2662
    %2664 = vdwg.mxu0
    %2665 = vmatpush.msra.mxu0 %v1719
    %2666 = vmatpush.msra.mxu0 %v1711
    %2667 = vmatpush.msra.mxu0 %v1703
    %2668 = vmatpush.msra.mxu0 %v1695
    %2669 = vmatpush.msra.mxu0 %v1687
    %2670 = vmatpush.msra.mxu0 %v1679
    %2671 = vmatpush.msra.mxu0 %v1671
    %2672 = vmatpush.msra.mxu0 %v1663
    %2673 = vmatpush.msra.mxu0 %v1655
    %2674 = vmatpush.msra.mxu0 %v1647
    %2675 = vmatpush.msra.mxu0 %v1639
    %2676 = vmatpush.msra.mxu0 %v1631
    %2677 = vmatpush.msra.mxu0 %v1623
    %2678 = vmatpush.msra.mxu0 %v1615
    %2679 = vmatpush.msra.mxu0 %v1607
    %2680 = vmatpush.msra.mxu0 %v1599
    %2681 = vmatmul.f32.gmra.mxu0 %v1181
    %v2682 = vpop.f32.mrf.mxu0
    %v2683 = vadd.f32 %v2642, %v2682
    %2684 = vmatmul.f32.gmra.mxu0 %v1185
    %v2685 = vpop.f32.mrf.mxu0
    %v2686 = vadd.f32 %v2645, %v2685
    %2687 = vmatmul.f32.gmra.mxu0 %v1189
    %v2688 = vpop.f32.mrf.mxu0
    %v2689 = vadd.f32 %v2648, %v2688
    %2690 = vmatmul.f32.gmra.mxu0 %v1193
    %v2691 = vpop.f32.mrf.mxu0
    %v2692 = vadd.f32 %v2651, %v2691
    %2693 = vmatmul.f32.gmra.mxu0 %v1197
    %v2694 = vpop.f32.mrf.mxu0
    %v2695 = vadd.f32 %v2654, %v2694
    %2696 = vmatmul.f32.gmra.mxu0 %v1201
    %v2697 = vpop.f32.mrf.mxu0
    %v2698 = vadd.f32 %v2657, %v2697
    %2699 = vmatmul.f32.gmra.mxu0 %v1205
    %v2700 = vpop.f32.mrf.mxu0
    %v2701 = vadd.f32 %v2660, %v2700
    %2702 = vmatmul.f32.gmra.mxu0 %v1209
    %v2703 = vpop.f32.mrf.mxu0
    %v2704 = vadd.f32 %v2663, %v2703
    %2705 = vdwg.mxu0
    %2706 = vmatpush.msra.mxu0 %v1336
    %2707 = vmatpush.msra.mxu0 %v1328
    %2708 = vmatpush.msra.mxu0 %v1320
    %2709 = vmatpush.msra.mxu0 %v1312
    %2710 = vmatpush.msra.mxu0 %v1304
    %2711 = vmatpush.msra.mxu0 %v1296
    %2712 = vmatpush.msra.mxu0 %v1288
    %2713 = vmatpush.msra.mxu0 %v1280
    %2714 = vmatpush.msra.mxu0 %v1272
    %2715 = vmatpush.msra.mxu0 %v1264
    %2716 = vmatpush.msra.mxu0 %v1256
    %2717 = vmatpush.msra.mxu0 %v1248
    %2718 = vmatpush.msra.mxu0 %v1240
    %2719 = vmatpush.msra.mxu0 %v1232
    %2720 = vmatpush.msra.mxu0 %v1224
    %2721 = vmatpush.msra.mxu0 %v1216
    %2722 = vmatmul.f32.gmra.mxu0 %v1178
    %v2723 = vpop.f32.mrf.mxu0
    %v2724 = vadd.f32 0.0, %v2723
    %2725 = vmatmul.f32.gmra.mxu0 %v1182
    %v2726 = vpop.f32.mrf.mxu0
    %v2727 = vadd.f32 0.0, %v2726
    %2728 = vmatmul.f32.gmra.mxu0 %v1186
    %v2729 = vpop.f32.mrf.mxu0
    %v2730 = vadd.f32 0.0, %v2729
    %2731 = vmatmul.f32.gmra.mxu0 %v1190
    %v2732 = vpop.f32.mrf.mxu0
    %v2733 = vadd.f32 0.0, %v2732
    %2734 = vmatmul.f32.gmra.mxu0 %v1194
    %v2735 = vpop.f32.mrf.mxu0
    %v2736 = vadd.f32 0.0, %v2735
    %2737 = vmatmul.f32.gmra.mxu0 %v1198
    %v2738 = vpop.f32.mrf.mxu0
    %v2739 = vadd.f32 0.0, %v2738
    %2740 = vmatmul.f32.gmra.mxu0 %v1202
    %v2741 = vpop.f32.mrf.mxu0
    %v2742 = vadd.f32 0.0, %v2741
    %2743 = vmatmul.f32.gmra.mxu0 %v1206
    %v2744 = vpop.f32.mrf.mxu0
    %v2745 = vadd.f32 0.0, %v2744
    %2746 = vdwg.mxu0
    %2747 = vmatpush.msra.mxu0 %v1464
    %2748 = vmatpush.msra.mxu0 %v1456
    %2749 = vmatpush.msra.mxu0 %v1448
    %2750 = vmatpush.msra.mxu0 %v1440
    %2751 = vmatpush.msra.mxu0 %v1432
    %2752 = vmatpush.msra.mxu0 %v1424
    %2753 = vmatpush.msra.mxu0 %v1416
    %2754 = vmatpush.msra.mxu0 %v1408
    %2755 = vmatpush.msra.mxu0 %v1400
    %2756 = vmatpush.msra.mxu0 %v1392
    %2757 = vmatpush.msra.mxu0 %v1384
    %2758 = vmatpush.msra.mxu0 %v1376
    %2759 = vmatpush.msra.mxu0 %v1368
    %2760 = vmatpush.msra.mxu0 %v1360
    %2761 = vmatpush.msra.mxu0 %v1352
    %2762 = vmatpush.msra.mxu0 %v1344
    %2763 = vmatmul.f32.gmra.mxu0 %v1179
    %v2764 = vpop.f32.mrf.mxu0
    %v2765 = vadd.f32 %v2724, %v2764
    %2766 = vmatmul.f32.gmra.mxu0 %v1183
    %v2767 = vpop.f32.mrf.mxu0
    %v2768 = vadd.f32 %v2727, %v2767
    %2769 = vmatmul.f32.gmra.mxu0 %v1187
    %v2770 = vpop.f32.mrf.mxu0
    %v2771 = vadd.f32 %v2730, %v2770
    %2772 = vmatmul.f32.gmra.mxu0 %v1191
    %v2773 = vpop.f32.mrf.mxu0
    %v2774 = vadd.f32 %v2733, %v2773
    %2775 = vmatmul.f32.gmra.mxu0 %v1195
    %v2776 = vpop.f32.mrf.mxu0
    %v2777 = vadd.f32 %v2736, %v2776
    %2778 = vmatmul.f32.gmra.mxu0 %v1199
    %v2779 = vpop.f32.mrf.mxu0
    %v2780 = vadd.f32 %v2739, %v2779
    %2781 = vmatmul.f32.gmra.mxu0 %v1203
    %v2782 = vpop.f32.mrf.mxu0
    %v2783 = vadd.f32 %v2742, %v2782
    %2784 = vmatmul.f32.gmra.mxu0 %v1207
    %v2785 = vpop.f32.mrf.mxu0
    %v2786 = vadd.f32 %v2745, %v2785
    %2787 = vdwg.mxu0
    %2788 = vmatpush.msra.mxu0 %v1592
    %2789 = vmatpush.msra.mxu0 %v1584
    %2790 = vmatpush.msra.mxu0 %v1576
    %2791 = vmatpush.msra.mxu0 %v1568
    %2792 = vmatpush.msra.mxu0 %v1560
    %2793 = vmatpush.msra.mxu0 %v1552
    %2794 = vmatpush.msra.mxu0 %v1544
    %2795 = vmatpush.msra.mxu0 %v1536
    %2796 = vmatpush.msra.mxu0 %v1528
    %2797 = vmatpush.msra.mxu0 %v1520
    %2798 = vmatpush.msra.mxu0 %v1512
    %2799 = vmatpush.msra.mxu0 %v1504
    %2800 = vmatpush.msra.mxu0 %v1496
    %2801 = vmatpush.msra.mxu0 %v1488
    %2802 = vmatpush.msra.mxu0 %v1480
    %2803 = vmatpush.msra.mxu0 %v1472
    %2804 = vmatmul.f32.gmra.mxu0 %v1180
    %v2805 = vpop.f32.mrf.mxu0
    %v2806 = vadd.f32 %v2765, %v2805
    %2807 = vmatmul.f32.gmra.mxu0 %v1184
    %v2808 = vpop.f32.mrf.mxu0
    %v2809 = vadd.f32 %v2768, %v2808
    %2810 = vmatmul.f32.gmra.mxu0 %v1188
    %v2811 = vpop.f32.mrf.mxu0
    %v2812 = vadd.f32 %v2771, %v2811
    %2813 = vmatmul.f32.gmra.mxu0 %v1192
    %v2814 = vpop.f32.mrf.mxu0
    %v2815 = vadd.f32 %v2774, %v2814
    %2816 = vmatmul.f32.gmra.mxu0 %v1196
    %v2817 = vpop.f32.mrf.mxu0
    %v2818 = vadd.f32 %v2777, %v2817
    %2819 = vmatmul.f32.gmra.mxu0 %v1200
    %v2820 = vpop.f32.mrf.mxu0
    %v2821 = vadd.f32 %v2780, %v2820
    %2822 = vmatmul.f32.gmra.mxu0 %v1204
    %v2823 = vpop.f32.mrf.mxu0
    %v2824 = vadd.f32 %v2783, %v2823
    %2825 = vmatmul.f32.gmra.mxu0 %v1208
    %v2826 = vpop.f32.mrf.mxu0
    %v2827 = vadd.f32 %v2786, %v2826
    %2828 = vdwg.mxu0
    %2829 = vmatpush.msra.mxu0 %v1720
    %2830 = vmatpush.msra.mxu0 %v1712
    %2831 = vmatpush.msra.mxu0 %v1704
    %2832 = vmatpush.msra.mxu0 %v1696
    %2833 = vmatpush.msra.mxu0 %v1688
    %2834 = vmatpush.msra.mxu0 %v1680
    %2835 = vmatpush.msra.mxu0 %v1672
    %2836 = vmatpush.msra.mxu0 %v1664
    %2837 = vmatpush.msra.mxu0 %v1656
    %2838 = vmatpush.msra.mxu0 %v1648
    %2839 = vmatpush.msra.mxu0 %v1640
    %2840 = vmatpush.msra.mxu0 %v1632
    %2841 = vmatpush.msra.mxu0 %v1624
    %2842 = vmatpush.msra.mxu0 %v1616
    %2843 = vmatpush.msra.mxu0 %v1608
    %2844 = vmatpush.msra.mxu0 %v1600
    %2845 = vmatmul.f32.gmra.mxu0 %v1181
    %v2846 = vpop.f32.mrf.mxu0
    %v2847 = vadd.f32 %v2806, %v2846
    %2848 = vmatmul.f32.gmra.mxu0 %v1185
    %v2849 = vpop.f32.mrf.mxu0
    %v2850 = vadd.f32 %v2809, %v2849
    %2851 = vmatmul.f32.gmra.mxu0 %v1189
    %v2852 = vpop.f32.mrf.mxu0
    %v2853 = vadd.f32 %v2812, %v2852
    %2854 = vmatmul.f32.gmra.mxu0 %v1193
    %v2855 = vpop.f32.mrf.mxu0
    %v2856 = vadd.f32 %v2815, %v2855
    %2857 = vmatmul.f32.gmra.mxu0 %v1197
    %v2858 = vpop.f32.mrf.mxu0
    %v2859 = vadd.f32 %v2818, %v2858
    %2860 = vmatmul.f32.gmra.mxu0 %v1201
    %v2861 = vpop.f32.mrf.mxu0
    %v2862 = vadd.f32 %v2821, %v2861
    %2863 = vmatmul.f32.gmra.mxu0 %v1205
    %v2864 = vpop.f32.mrf.mxu0
    %v2865 = vadd.f32 %v2824, %v2864
    %2866 = vmatmul.f32.gmra.mxu0 %v1209
    %v2867 = vpop.f32.mrf.mxu0
    %v2868 = vadd.f32 %v2827, %v2867
    %2869 = vdwg.mxu0
    %2870 = vmatpush.msra.mxu0 %v1337
    %2871 = vmatpush.msra.mxu0 %v1329
    %2872 = vmatpush.msra.mxu0 %v1321
    %2873 = vmatpush.msra.mxu0 %v1313
    %2874 = vmatpush.msra.mxu0 %v1305
    %2875 = vmatpush.msra.mxu0 %v1297
    %2876 = vmatpush.msra.mxu0 %v1289
    %2877 = vmatpush.msra.mxu0 %v1281
    %2878 = vmatpush.msra.mxu0 %v1273
    %2879 = vmatpush.msra.mxu0 %v1265
    %2880 = vmatpush.msra.mxu0 %v1257
    %2881 = vmatpush.msra.mxu0 %v1249
    %2882 = vmatpush.msra.mxu0 %v1241
    %2883 = vmatpush.msra.mxu0 %v1233
    %2884 = vmatpush.msra.mxu0 %v1225
    %2885 = vmatpush.msra.mxu0 %v1217
    %2886 = vmatmul.f32.gmra.mxu0 %v1178
    %v2887 = vpop.f32.mrf.mxu0
    %v2888 = vadd.f32 0.0, %v2887
    %2889 = vmatmul.f32.gmra.mxu0 %v1182
    %v2890 = vpop.f32.mrf.mxu0
    %v2891 = vadd.f32 0.0, %v2890
    %2892 = vmatmul.f32.gmra.mxu0 %v1186
    %v2893 = vpop.f32.mrf.mxu0
    %v2894 = vadd.f32 0.0, %v2893
    %2895 = vmatmul.f32.gmra.mxu0 %v1190
    %v2896 = vpop.f32.mrf.mxu0
    %v2897 = vadd.f32 0.0, %v2896
    %2898 = vmatmul.f32.gmra.mxu0 %v1194
    %v2899 = vpop.f32.mrf.mxu0
    %v2900 = vadd.f32 0.0, %v2899
    %2901 = vmatmul.f32.gmra.mxu0 %v1198
    %v2902 = vpop.f32.mrf.mxu0
    %v2903 = vadd.f32 0.0, %v2902
    %2904 = vmatmul.f32.gmra.mxu0 %v1202
    %v2905 = vpop.f32.mrf.mxu0
    %v2906 = vadd.f32 0.0, %v2905
    %2907 = vmatmul.f32.gmra.mxu0 %v1206
    %v2908 = vpop.f32.mrf.mxu0
    %v2909 = vadd.f32 0.0, %v2908
    %2910 = vdwg.mxu0
    %2911 = vmatpush.msra.mxu0 %v1465
    %2912 = vmatpush.msra.mxu0 %v1457
    %2913 = vmatpush.msra.mxu0 %v1449
    %2914 = vmatpush.msra.mxu0 %v1441
    %2915 = vmatpush.msra.mxu0 %v1433
    %2916 = vmatpush.msra.mxu0 %v1425
    %2917 = vmatpush.msra.mxu0 %v1417
    %2918 = vmatpush.msra.mxu0 %v1409
    %2919 = vmatpush.msra.mxu0 %v1401
    %2920 = vmatpush.msra.mxu0 %v1393
    %2921 = vmatpush.msra.mxu0 %v1385
    %2922 = vmatpush.msra.mxu0 %v1377
    %2923 = vmatpush.msra.mxu0 %v1369
    %2924 = vmatpush.msra.mxu0 %v1361
    %2925 = vmatpush.msra.mxu0 %v1353
    %2926 = vmatpush.msra.mxu0 %v1345
    %2927 = vmatmul.f32.gmra.mxu0 %v1179
    %v2928 = vpop.f32.mrf.mxu0
    %v2929 = vadd.f32 %v2888, %v2928
    %2930 = vmatmul.f32.gmra.mxu0 %v1183
    %v2931 = vpop.f32.mrf.mxu0
    %v2932 = vadd.f32 %v2891, %v2931
    %2933 = vmatmul.f32.gmra.mxu0 %v1187
    %v2934 = vpop.f32.mrf.mxu0
    %v2935 = vadd.f32 %v2894, %v2934
    %2936 = vmatmul.f32.gmra.mxu0 %v1191
    %v2937 = vpop.f32.mrf.mxu0
    %v2938 = vadd.f32 %v2897, %v2937
    %2939 = vmatmul.f32.gmra.mxu0 %v1195
    %v2940 = vpop.f32.mrf.mxu0
    %v2941 = vadd.f32 %v2900, %v2940
    %2942 = vmatmul.f32.gmra.mxu0 %v1199
    %v2943 = vpop.f32.mrf.mxu0
    %v2944 = vadd.f32 %v2903, %v2943
    %2945 = vmatmul.f32.gmra.mxu0 %v1203
    %v2946 = vpop.f32.mrf.mxu0
    %v2947 = vadd.f32 %v2906, %v2946
    %2948 = vmatmul.f32.gmra.mxu0 %v1207
    %v2949 = vpop.f32.mrf.mxu0
    %v2950 = vadd.f32 %v2909, %v2949
    %2951 = vdwg.mxu0
    %2952 = vmatpush.msra.mxu0 %v1593
    %2953 = vmatpush.msra.mxu0 %v1585
    %2954 = vmatpush.msra.mxu0 %v1577
    %2955 = vmatpush.msra.mxu0 %v1569
    %2956 = vmatpush.msra.mxu0 %v1561
    %2957 = vmatpush.msra.mxu0 %v1553
    %2958 = vmatpush.msra.mxu0 %v1545
    %2959 = vmatpush.msra.mxu0 %v1537
    %2960 = vmatpush.msra.mxu0 %v1529
    %2961 = vmatpush.msra.mxu0 %v1521
    %2962 = vmatpush.msra.mxu0 %v1513
    %2963 = vmatpush.msra.mxu0 %v1505
    %2964 = vmatpush.msra.mxu0 %v1497
    %2965 = vmatpush.msra.mxu0 %v1489
    %2966 = vmatpush.msra.mxu0 %v1481
    %2967 = vmatpush.msra.mxu0 %v1473
    %2968 = vmatmul.f32.gmra.mxu0 %v1180
    %v2969 = vpop.f32.mrf.mxu0
    %v2970 = vadd.f32 %v2929, %v2969
    %2971 = vmatmul.f32.gmra.mxu0 %v1184
    %v2972 = vpop.f32.mrf.mxu0
    %v2973 = vadd.f32 %v2932, %v2972
    %2974 = vmatmul.f32.gmra.mxu0 %v1188
    %v2975 = vpop.f32.mrf.mxu0
    %v2976 = vadd.f32 %v2935, %v2975
    %2977 = vmatmul.f32.gmra.mxu0 %v1192
    %v2978 = vpop.f32.mrf.mxu0
    %v2979 = vadd.f32 %v2938, %v2978
    %2980 = vmatmul.f32.gmra.mxu0 %v1196
    %v2981 = vpop.f32.mrf.mxu0
    %v2982 = vadd.f32 %v2941, %v2981
    %2983 = vmatmul.f32.gmra.mxu0 %v1200
    %v2984 = vpop.f32.mrf.mxu0
    %v2985 = vadd.f32 %v2944, %v2984
    %2986 = vmatmul.f32.gmra.mxu0 %v1204
    %v2987 = vpop.f32.mrf.mxu0
    %v2988 = vadd.f32 %v2947, %v2987
    %2989 = vmatmul.f32.gmra.mxu0 %v1208
    %v2990 = vpop.f32.mrf.mxu0
    %v2991 = vadd.f32 %v2950, %v2990
    %2992 = vdwg.mxu0
    %2993 = vmatpush.msra.mxu0 %v1721
    %2994 = vmatpush.msra.mxu0 %v1713
    %2995 = vmatpush.msra.mxu0 %v1705
    %2996 = vmatpush.msra.mxu0 %v1697
    %2997 = vmatpush.msra.mxu0 %v1689
    %2998 = vmatpush.msra.mxu0 %v1681
    %2999 = vmatpush.msra.mxu0 %v1673
    %3000 = vmatpush.msra.mxu0 %v1665
    %3001 = vmatpush.msra.mxu0 %v1657
    %3002 = vmatpush.msra.mxu0 %v1649
    %3003 = vmatpush.msra.mxu0 %v1641
    %3004 = vmatpush.msra.mxu0 %v1633
    %3005 = vmatpush.msra.mxu0 %v1625
    %3006 = vmatpush.msra.mxu0 %v1617
    %3007 = vmatpush.msra.mxu0 %v1609
    %3008 = vmatpush.msra.mxu0 %v1601
    %3009 = vmatmul.f32.gmra.mxu0 %v1181
    %v3010 = vpop.f32.mrf.mxu0
    %v3011 = vadd.f32 %v2970, %v3010
    %3012 = vmatmul.f32.gmra.mxu0 %v1185
    %v3013 = vpop.f32.mrf.mxu0
    %v3014 = vadd.f32 %v2973, %v3013
    %3015 = vmatmul.f32.gmra.mxu0 %v1189
    %v3016 = vpop.f32.mrf.mxu0
    %v3017 = vadd.f32 %v2976, %v3016
    %3018 = vmatmul.f32.gmra.mxu0 %v1193
    %v3019 = vpop.f32.mrf.mxu0
    %v3020 = vadd.f32 %v2979, %v3019
    %3021 = vmatmul.f32.gmra.mxu0 %v1197
    %v3022 = vpop.f32.mrf.mxu0
    %v3023 = vadd.f32 %v2982, %v3022
    %3024 = vmatmul.f32.gmra.mxu0 %v1201
    %v3025 = vpop.f32.mrf.mxu0
    %v3026 = vadd.f32 %v2985, %v3025
    %3027 = vmatmul.f32.gmra.mxu0 %v1205
    %v3028 = vpop.f32.mrf.mxu0
    %v3029 = vadd.f32 %v2988, %v3028
    %3030 = vmatmul.f32.gmra.mxu0 %v1209
    %v3031 = vpop.f32.mrf.mxu0
    %v3032 = vadd.f32 %v2991, %v3031
    %3033 = vdwg.mxu0
    %v3034 = vadd.f32 %v1863, %v1866
    %v3035 = vadd.f32 %v3034, %v1869
    %v3036 = vadd.f32 %v3035, %v1872
    %v3037 = vadd.f32 %v3036, %v1875
    %v3038 = vadd.f32 %v3037, %v1878
    %v3039 = vadd.f32 %v3038, %v1881
    %v3040 = vadd.f32 %v3039, %v1884
    %v3041 = vrot.slane %v3040, 4
    %v3042 = vadd.f32 %v3040, %v3041
    %v3043 = vrot.slane %v3042, 2
    %v3044 = vadd.f32 %v3042, %v3043
    %v3045 = vrot.slane %v3044, 1
    %v3046 = vadd.f32 %v3044, %v3045
    %v3047 = vadd.f32 %v2027, %v2030
    %v3048 = vadd.f32 %v3047, %v2033
    %v3049 = vadd.f32 %v3048, %v2036
    %v3050 = vadd.f32 %v3049, %v2039
    %v3051 = vadd.f32 %v3050, %v2042
    %v3052 = vadd.f32 %v3051, %v2045
    %v3053 = vadd.f32 %v3052, %v2048
    %v3054 = vrot.slane %v3053, 4
    %v3055 = vadd.f32 %v3053, %v3054
    %v3056 = vrot.slane %v3055, 2
    %v3057 = vadd.f32 %v3055, %v3056
    %v3058 = vrot.slane %v3057, 1
    %v3059 = vadd.f32 %v3057, %v3058
    %v3060 = vadd.f32 %v2191, %v2194
    %v3061 = vadd.f32 %v3060, %v2197
    %v3062 = vadd.f32 %v3061, %v2200
    %v3063 = vadd.f32 %v3062, %v2203
    %v3064 = vadd.f32 %v3063, %v2206
    %v3065 = vadd.f32 %v3064, %v2209
    %v3066 = vadd.f32 %v3065, %v2212
    %v3067 = vrot.slane %v3066, 4
    %v3068 = vadd.f32 %v3066, %v3067
    %v3069 = vrot.slane %v3068, 2
    %v3070 = vadd.f32 %v3068, %v3069
    %v3071 = vrot.slane %v3070, 1
    %v3072 = vadd.f32 %v3070, %v3071
    %v3073 = vadd.f32 %v2355, %v2358
    %v3074 = vadd.f32 %v3073, %v2361
    %v3075 = vadd.f32 %v3074, %v2364
    %v3076 = vadd.f32 %v3075, %v2367
    %v3077 = vadd.f32 %v3076, %v2370
    %v3078 = vadd.f32 %v3077, %v2373
    %v3079 = vadd.f32 %v3078, %v2376
    %v3080 = vrot.slane %v3079, 4
    %v3081 = vadd.f32 %v3079, %v3080
    %v3082 = vrot.slane %v3081, 2
    %v3083 = vadd.f32 %v3081, %v3082
    %v3084 = vrot.slane %v3083, 1
    %v3085 = vadd.f32 %v3083, %v3084
    %v3086 = vadd.f32 %v2519, %v2522
    %v3087 = vadd.f32 %v3086, %v2525
    %v3088 = vadd.f32 %v3087, %v2528
    %v3089 = vadd.f32 %v3088, %v2531
    %v3090 = vadd.f32 %v3089, %v2534
    %v3091 = vadd.f32 %v3090, %v2537
    %v3092 = vadd.f32 %v3091, %v2540
    %v3093 = vrot.slane %v3092, 4
    %v3094 = vadd.f32 %v3092, %v3093
    %v3095 = vrot.slane %v3094, 2
    %v3096 = vadd.f32 %v3094, %v3095
    %v3097 = vrot.slane %v3096, 1
    %v3098 = vadd.f32 %v3096, %v3097
    %v3099 = vadd.f32 %v2683, %v2686
    %v3100 = vadd.f32 %v3099, %v2689
    %v3101 = vadd.f32 %v3100, %v2692
    %v3102 = vadd.f32 %v3101, %v2695
    %v3103 = vadd.f32 %v3102, %v2698
    %v3104 = vadd.f32 %v3103, %v2701
    %v3105 = vadd.f32 %v3104, %v2704
    %v3106 = vrot.slane %v3105, 4
    %v3107 = vadd.f32 %v3105, %v3106
    %v3108 = vrot.slane %v3107, 2
    %v3109 = vadd.f32 %v3107, %v3108
    %v3110 = vrot.slane %v3109, 1
    %v3111 = vadd.f32 %v3109, %v3110
    %v3112 = vadd.f32 %v2847, %v2850
    %v3113 = vadd.f32 %v3112, %v2853
    %v3114 = vadd.f32 %v3113, %v2856
    %v3115 = vadd.f32 %v3114, %v2859
    %v3116 = vadd.f32 %v3115, %v2862
    %v3117 = vadd.f32 %v3116, %v2865
    %v3118 = vadd.f32 %v3117, %v2868
    %v3119 = vrot.slane %v3118, 4
    %v3120 = vadd.f32 %v3118, %v3119
    %v3121 = vrot.slane %v3120, 2
    %v3122 = vadd.f32 %v3120, %v3121
    %v3123 = vrot.slane %v3122, 1
    %v3124 = vadd.f32 %v3122, %v3123
    %v3125 = vadd.f32 %v3011, %v3014
    %v3126 = vadd.f32 %v3125, %v3017
    %v3127 = vadd.f32 %v3126, %v3020
    %v3128 = vadd.f32 %v3127, %v3023
    %v3129 = vadd.f32 %v3128, %v3026
    %v3130 = vadd.f32 %v3129, %v3029
    %v3131 = vadd.f32 %v3130, %v3032
    %v3132 = vrot.slane %v3131, 4
    %v3133 = vadd.f32 %v3131, %v3132
    %v3134 = vrot.slane %v3133, 2
    %v3135 = vadd.f32 %v3133, %v3134
    %v3136 = vrot.slane %v3135, 1
    %v3137 = vadd.f32 %v3135, %v3136
    %v3138 = vmul.f32 %v3046, 0.015625
    %v3139 = vmul.f32 %v3059, 0.015625
    %v3140 = vmul.f32 %v3072, 0.015625
    %v3141 = vmul.f32 %v3085, 0.015625
    %v3142 = vmul.f32 %v3098, 0.015625
    %v3143 = vmul.f32 %v3111, 0.015625
    %v3144 = vmul.f32 %v3124, 0.015625
    %v3145 = vmul.f32 %v3137, 0.015625
    %v3146 = vmul.f32 %v1863, %v1863
    %v3147 = vmul.f32 %v2027, %v2027
    %v3148 = vmul.f32 %v2191, %v2191
    %v3149 = vmul.f32 %v2355, %v2355
    %v3150 = vmul.f32 %v2519, %v2519
    %v3151 = vmul.f32 %v2683, %v2683
    %v3152 = vmul.f32 %v2847, %v2847
    %v3153 = vmul.f32 %v3011, %v3011
    %v3154 = vmul.f32 %v1866, %v1866
    %v3155 = vmul.f32 %v2030, %v2030
    %v3156 = vmul.f32 %v2194, %v2194
    %v3157 = vmul.f32 %v2358, %v2358
    %v3158 = vmul.f32 %v2522, %v2522
    %v3159 = vmul.f32 %v2686, %v2686
    %v3160 = vmul.f32 %v2850, %v2850
    %v3161 = vmul.f32 %v3014, %v3014
    %v3162 = vmul.f32 %v1869, %v1869
    %v3163 = vmul.f32 %v2033, %v2033
    %v3164 = vmul.f32 %v2197, %v2197
    %v3165 = vmul.f32 %v2361, %v2361
    %v3166 = vmul.f32 %v2525, %v2525
    %v3167 = vmul.f32 %v2689, %v2689
    %v3168 = vmul.f32 %v2853, %v2853
    %v3169 = vmul.f32 %v3017, %v3017
    %v3170 = vmul.f32 %v1872, %v1872
    %v3171 = vmul.f32 %v2036, %v2036
    %v3172 = vmul.f32 %v2200, %v2200
    %v3173 = vmul.f32 %v2364, %v2364
    %v3174 = vmul.f32 %v2528, %v2528
    %v3175 = vmul.f32 %v2692, %v2692
    %v3176 = vmul.f32 %v2856, %v2856
    %v3177 = vmul.f32 %v3020, %v3020
    %v3178 = vmul.f32 %v1875, %v1875
    %v3179 = vmul.f32 %v2039, %v2039
    %v3180 = vmul.f32 %v2203, %v2203
    %v3181 = vmul.f32 %v2367, %v2367
    %v3182 = vmul.f32 %v2531, %v2531
    %v3183 = vmul.f32 %v2695, %v2695
    %v3184 = vmul.f32 %v2859, %v2859
    %v3185 = vmul.f32 %v3023, %v3023
    %v3186 = vmul.f32 %v1878, %v1878
    %v3187 = vmul.f32 %v2042, %v2042
    %v3188 = vmul.f32 %v2206, %v2206
    %v3189 = vmul.f32 %v2370, %v2370
    %v3190 = vmul.f32 %v2534, %v2534
    %v3191 = vmul.f32 %v2698, %v2698
    %v3192 = vmul.f32 %v2862, %v2862
    %v3193 = vmul.f32 %v3026, %v3026
    %v3194 = vmul.f32 %v1881, %v1881
    %v3195 = vmul.f32 %v2045, %v2045
    %v3196 = vmul.f32 %v2209, %v2209
    %v3197 = vmul.f32 %v2373, %v2373
    %v3198 = vmul.f32 %v2537, %v2537
    %v3199 = vmul.f32 %v2701, %v2701
    %v3200 = vmul.f32 %v2865, %v2865
    %v3201 = vmul.f32 %v3029, %v3029
    %v3202 = vmul.f32 %v1884, %v1884
    %v3203 = vmul.f32 %v2048, %v2048
    %v3204 = vmul.f32 %v2212, %v2212
    %v3205 = vmul.f32 %v2376, %v2376
    %v3206 = vmul.f32 %v2540, %v2540
    %v3207 = vmul.f32 %v2704, %v2704
    %v3208 = vmul.f32 %v2868, %v2868
    %v3209 = vmul.f32 %v3032, %v3032
    %v3210 = vadd.f32 %v3146, %v3154
    %v3211 = vadd.f32 %v3210, %v3162
    %v3212 = vadd.f32 %v3211, %v3170
    %v3213 = vadd.f32 %v3212, %v3178
    %v3214 = vadd.f32 %v3213, %v3186
    %v3215 = vadd.f32 %v3214, %v3194
    %v3216 = vadd.f32 %v3215, %v3202
    %v3217 = vrot.slane %v3216, 4
    %v3218 = vadd.f32 %v3216, %v3217
    %v3219 = vrot.slane %v3218, 2
    %v3220 = vadd.f32 %v3218, %v3219
    %v3221 = vrot.slane %v3220, 1
    %v3222 = vadd.f32 %v3220, %v3221
    %v3223 = vadd.f32 %v3147, %v3155
    %v3224 = vadd.f32 %v3223, %v3163
    %v3225 = vadd.f32 %v3224, %v3171
    %v3226 = vadd.f32 %v3225, %v3179
    %v3227 = vadd.f32 %v3226, %v3187
    %v3228 = vadd.f32 %v3227, %v3195
    %v3229 = vadd.f32 %v3228, %v3203
    %v3230 = vrot.slane %v3229, 4
    %v3231 = vadd.f32 %v3229, %v3230
    %v3232 = vrot.slane %v3231, 2
    %v3233 = vadd.f32 %v3231, %v3232
    %v3234 = vrot.slane %v3233, 1
    %v3235 = vadd.f32 %v3233, %v3234
    %v3236 = vadd.f32 %v3148, %v3156
    %v3237 = vadd.f32 %v3236, %v3164
    %v3238 = vadd.f32 %v3237, %v3172
    %v3239 = vadd.f32 %v3238, %v3180
    %v3240 = vadd.f32 %v3239, %v3188
    %v3241 = vadd.f32 %v3240, %v3196
    %v3242 = vadd.f32 %v3241, %v3204
    %v3243 = vrot.slane %v3242, 4
    %v3244 = vadd.f32 %v3242, %v3243
    %v3245 = vrot.slane %v3244, 2
    %v3246 = vadd.f32 %v3244, %v3245
    %v3247 = vrot.slane %v3246, 1
    %v3248 = vadd.f32 %v3246, %v3247
    %v3249 = vadd.f32 %v3149, %v3157
    %v3250 = vadd.f32 %v3249, %v3165
    %v3251 = vadd.f32 %v3250, %v3173
    %v3252 = vadd.f32 %v3251, %v3181
    %v3253 = vadd.f32 %v3252, %v3189
    %v3254 = vadd.f32 %v3253, %v3197
    %v3255 = vadd.f32 %v3254, %v3205
    %v3256 = vrot.slane %v3255, 4
    %v3257 = vadd.f32 %v3255, %v3256
    %v3258 = vrot.slane %v3257, 2
    %v3259 = vadd.f32 %v3257, %v3258
    %v3260 = vrot.slane %v3259, 1
    %v3261 = vadd.f32 %v3259, %v3260
    %v3262 = vadd.f32 %v3150, %v3158
    %v3263 = vadd.f32 %v3262, %v3166
    %v3264 = vadd.f32 %v3263, %v3174
    %v3265 = vadd.f32 %v3264, %v3182
    %v3266 = vadd.f32 %v3265, %v3190
    %v3267 = vadd.f32 %v3266, %v3198
    %v3268 = vadd.f32 %v3267, %v3206
    %v3269 = vrot.slane %v3268, 4
    %v3270 = vadd.f32 %v3268, %v3269
    %v3271 = vrot.slane %v3270, 2
    %v3272 = vadd.f32 %v3270, %v3271
    %v3273 = vrot.slane %v3272, 1
    %v3274 = vadd.f32 %v3272, %v3273
    %v3275 = vadd.f32 %v3151, %v3159
    %v3276 = vadd.f32 %v3275, %v3167
    %v3277 = vadd.f32 %v3276, %v3175
    %v3278 = vadd.f32 %v3277, %v3183
    %v3279 = vadd.f32 %v3278, %v3191
    %v3280 = vadd.f32 %v3279, %v3199
    %v3281 = vadd.f32 %v3280, %v3207
    %v3282 = vrot.slane %v3281, 4
    %v3283 = vadd.f32 %v3281, %v3282
    %v3284 = vrot.slane %v3283, 2
    %v3285 = vadd.f32 %v3283, %v3284
    %v3286 = vrot.slane %v3285, 1
    %v3287 = vadd.f32 %v3285, %v3286
    %v3288 = vadd.f32 %v3152, %v3160
    %v3289 = vadd.f32 %v3288, %v3168
    %v3290 = vadd.f32 %v3289, %v3176
    %v3291 = vadd.f32 %v3290, %v3184
    %v3292 = vadd.f32 %v3291, %v3192
    %v3293 = vadd.f32 %v3292, %v3200
    %v3294 = vadd.f32 %v3293, %v3208
    %v3295 = vrot.slane %v3294, 4
    %v3296 = vadd.f32 %v3294, %v3295
    %v3297 = vrot.slane %v3296, 2
    %v3298 = vadd.f32 %v3296, %v3297
    %v3299 = vrot.slane %v3298, 1
    %v3300 = vadd.f32 %v3298, %v3299
    %v3301 = vadd.f32 %v3153, %v3161
    %v3302 = vadd.f32 %v3301, %v3169
    %v3303 = vadd.f32 %v3302, %v3177
    %v3304 = vadd.f32 %v3303, %v3185
    %v3305 = vadd.f32 %v3304, %v3193
    %v3306 = vadd.f32 %v3305, %v3201
    %v3307 = vadd.f32 %v3306, %v3209
    %v3308 = vrot.slane %v3307, 4
    %v3309 = vadd.f32 %v3307, %v3308
    %v3310 = vrot.slane %v3309, 2
    %v3311 = vadd.f32 %v3309, %v3310
    %v3312 = vrot.slane %v3311, 1
    %v3313 = vadd.f32 %v3311, %v3312
    %v3314 = vmul.f32 %v3222, 0.015625
    %v3315 = vmul.f32 %v3235, 0.015625
    %v3316 = vmul.f32 %v3248, 0.015625
    %v3317 = vmul.f32 %v3261, 0.015625
    %v3318 = vmul.f32 %v3274, 0.015625
    %v3319 = vmul.f32 %v3287, 0.015625
    %v3320 = vmul.f32 %v3300, 0.015625
    %v3321 = vmul.f32 %v3313, 0.015625
    %v3322 = vmul.f32 %v3138, %v3138
    %v3323 = vmul.f32 %v3139, %v3139
    %v3324 = vmul.f32 %v3140, %v3140
    %v3325 = vmul.f32 %v3141, %v3141
    %v3326 = vmul.f32 %v3142, %v3142
    %v3327 = vmul.f32 %v3143, %v3143
    %v3328 = vmul.f32 %v3144, %v3144
    %v3329 = vmul.f32 %v3145, %v3145
    %v3330 = vsub.f32 %v3314, %v3322
    %v3331 = vsub.f32 %v3315, %v3323
    %v3332 = vsub.f32 %v3316, %v3324
    %v3333 = vsub.f32 %v3317, %v3325
    %v3334 = vsub.f32 %v3318, %v3326
    %v3335 = vsub.f32 %v3319, %v3327
    %v3336 = vsub.f32 %v3320, %v3328
    %v3337 = vsub.f32 %v3321, %v3329
    %v3338 = vld [vmem:[#allocation18] sm:$0xff]
    %v3339 = vadd.f32 %v3330, 1e-05
    %v3340 = vadd.f32 %v3331, 1e-05
    %v3341 = vadd.f32 %v3332, 1e-05
    %v3342 = vadd.f32 %v3333, 1e-05
    %v3343 = vadd.f32 %v3334, 1e-05
    %v3344 = vadd.f32 %v3335, 1e-05
    %v3345 = vadd.f32 %v3336, 1e-05
    %v3346 = vadd.f32 %v3337, 1e-05
    %v3347 = vrsqrt.pop %v3339
    %v3348 = vmul.f32 %v3347, %v3339
    %v3349 = vmul.f32 %v3348, %v3347
    %v3350 = vmul.f32 0.5, %v3349
    %v3351 = vsub.f32 1.5, %v3350
    %v3352 = vmul.f32 %v3347, %v3351
    %vm3353 = vweird.f32 %v3339
    %vm3354 = vweird.f32 %v3347
    %vm3355 = vmor %vm3353, %vm3354
    %v3356 = vsel %vm3355, %v3347, %v3352
    %v3357 = vrsqrt.pop %v3340
    %v3358 = vmul.f32 %v3357, %v3340
    %v3359 = vmul.f32 %v3358, %v3357
    %v3360 = vmul.f32 0.5, %v3359
    %v3361 = vsub.f32 1.5, %v3360
    %v3362 = vmul.f32 %v3357, %v3361
    %vm3363 = vweird.f32 %v3340
    %vm3364 = vweird.f32 %v3357
    %vm3365 = vmor %vm3363, %vm3364
    %v3366 = vsel %vm3365, %v3357, %v3362
    %v3367 = vrsqrt.pop %v3341
    %v3368 = vmul.f32 %v3367, %v3341
    %v3369 = vmul.f32 %v3368, %v3367
    %v3370 = vmul.f32 0.5, %v3369
    %v3371 = vsub.f32 1.5, %v3370
    %v3372 = vmul.f32 %v3367, %v3371
    %vm3373 = vweird.f32 %v3341
    %vm3374 = vweird.f32 %v3367
    %vm3375 = vmor %vm3373, %vm3374
    %v3376 = vsel %vm3375, %v3367, %v3372
    %v3377 = vrsqrt.pop %v3342
    %v3378 = vmul.f32 %v3377, %v3342
    %v3379 = vmul.f32 %v3378, %v3377
    %v3380 = vmul.f32 0.5, %v3379
    %v3381 = vsub.f32 1.5, %v3380
    %v3382 = vmul.f32 %v3377, %v3381
    %vm3383 = vweird.f32 %v3342
    %vm3384 = vweird.f32 %v3377
    %vm3385 = vmor %vm3383, %vm3384
    %v3386 = vsel %vm3385, %v3377, %v3382
    %v3387 = vrsqrt.pop %v3343
    %v3388 = vmul.f32 %v3387, %v3343
    %v3389 = vmul.f32 %v3388, %v3387
    %v3390 = vmul.f32 0.5, %v3389
    %v3391 = vsub.f32 1.5, %v3390
    %v3392 = vmul.f32 %v3387, %v3391
    %vm3393 = vweird.f32 %v3343
    %vm3394 = vweird.f32 %v3387
    %vm3395 = vmor %vm3393, %vm3394
    %v3396 = vsel %vm3395, %v3387, %v3392
    %v3397 = vrsqrt.pop %v3344
    %v3398 = vmul.f32 %v3397, %v3344
    %v3399 = vmul.f32 %v3398, %v3397
    %v3400 = vmul.f32 0.5, %v3399
    %v3401 = vsub.f32 1.5, %v3400
    %v3402 = vmul.f32 %v3397, %v3401
    %vm3403 = vweird.f32 %v3344
    %vm3404 = vweird.f32 %v3397
    %vm3405 = vmor %vm3403, %vm3404
    %v3406 = vsel %vm3405, %v3397, %v3402
    %v3407 = vrsqrt.pop %v3345
    %v3408 = vmul.f32 %v3407, %v3345
    %v3409 = vmul.f32 %v3408, %v3407
    %v3410 = vmul.f32 0.5, %v3409
    %v3411 = vsub.f32 1.5, %v3410
    %v3412 = vmul.f32 %v3407, %v3411
    %vm3413 = vweird.f32 %v3345
    %vm3414 = vweird.f32 %v3407
    %vm3415 = vmor %vm3413, %vm3414
    %v3416 = vsel %vm3415, %v3407, %v3412
    %v3417 = vrsqrt.pop %v3346
    %v3418 = vmul.f32 %v3417, %v3346
    %v3419 = vmul.f32 %v3418, %v3417
    %v3420 = vmul.f32 0.5, %v3419
    %v3421 = vsub.f32 1.5, %v3420
    %v3422 = vmul.f32 %v3417, %v3421
    %vm3423 = vweird.f32 %v3346
    %vm3424 = vweird.f32 %v3417
    %vm3425 = vmor %vm3423, %vm3424
    %v3426 = vsel %vm3425, %v3417, %v3422
    %v3435 = vrot.slane %v3366, 7
    %v3436 = vrot.slane %v3376, 6
    %v3437 = vrot.slane %v3386, 5
    %v3438 = vrot.slane %v3396, 4
    %v3439 = vrot.slane %v3406, 3
    %v3440 = vrot.slane %v3416, 2
    %v3441 = vrot.slane %v3426, 1
    %v3442 = vsel %vm1010, %v3356, %v3435
    %v3443 = vsel %vm1012, %v3436, %v3437
    %v3444 = vsel %vm1014, %v3442, %v3443
    %vm3445 = vcmask 1044484
    %v3446 = vsel %vm3445, %v3438, %v3439
    %vm3447 = vcmask 1046534
    %v3448 = vsel %vm3447, %v3440, %v3441
    %vm3449 = vcmask 1045508
    %v3450 = vsel %vm3449, %v3446, %v3448
    %vm3451 = vcmask 1043456
    %v3452 = vsel %vm3451, %v3444, %v3450
    %v3454 = vmul.f32 %v3338, %v3452
    %v3455 = vld [vmem:[#allocation19] sm:$0xff]
    %v3464 = vrot.slane %v3139, 7
    %v3465 = vrot.slane %v3140, 6
    %v3466 = vrot.slane %v3141, 5
    %v3467 = vrot.slane %v3142, 4
    %v3468 = vrot.slane %v3143, 3
    %v3469 = vrot.slane %v3144, 2
    %v3470 = vrot.slane %v3145, 1
    %v3471 = vsel %vm1010, %v3138, %v3464
    %v3472 = vsel %vm1012, %v3465, %v3466
    %v3473 = vsel %vm1014, %v3471, %v3472
    %v3474 = vsel %vm3445, %v3467, %v3468
    %v3475 = vsel %vm3447, %v3469, %v3470
    %v3476 = vsel %vm3449, %v3474, %v3475
    %v3477 = vsel %vm3451, %v3473, %v3476
    %v3479 = vmul.f32 %v3454, %v3477
    %v3480 = vsub.f32 %v3455, %v3479
    %v3482 = vperm.slane %v3454, 0
    %v3483 = vperm.slane %v3454, 1
    %v3484 = vperm.slane %v3454, 2
    %v3485 = vperm.slane %v3454, 3
    %v3486 = vperm.slane %v3454, 4
    %v3487 = vperm.slane %v3454, 5
    %v3488 = vperm.slane %v3454, 6
    %v3489 = vperm.slane %v3454, 7
    %v3498 = vmul.f32 %v3482, %v1863
    %v3499 = vmul.f32 %v3483, %v2027
    %v3500 = vmul.f32 %v3484, %v2191
    %v3501 = vmul.f32 %v3485, %v2355
    %v3502 = vmul.f32 %v3486, %v2519
    %v3503 = vmul.f32 %v3487, %v2683
    %v3504 = vmul.f32 %v3488, %v2847
    %v3505 = vmul.f32 %v3489, %v3011
    %v3506 = vmul.f32 %v3482, %v1866
    %v3507 = vmul.f32 %v3483, %v2030
    %v3508 = vmul.f32 %v3484, %v2194
    %v3509 = vmul.f32 %v3485, %v2358
    %v3510 = vmul.f32 %v3486, %v2522
    %v3511 = vmul.f32 %v3487, %v2686
    %v3512 = vmul.f32 %v3488, %v2850
    %v3513 = vmul.f32 %v3489, %v3014
    %v3514 = vmul.f32 %v3482, %v1869
    %v3515 = vmul.f32 %v3483, %v2033
    %v3516 = vmul.f32 %v3484, %v2197
    %v3517 = vmul.f32 %v3485, %v2361
    %v3518 = vmul.f32 %v3486, %v2525
    %v3519 = vmul.f32 %v3487, %v2689
    %v3520 = vmul.f32 %v3488, %v2853
    %v3521 = vmul.f32 %v3489, %v3017
    %v3522 = vmul.f32 %v3482, %v1872
    %v3523 = vmul.f32 %v3483, %v2036
    %v3524 = vmul.f32 %v3484, %v2200
    %v3525 = vmul.f32 %v3485, %v2364
    %v3526 = vmul.f32 %v3486, %v2528
    %v3527 = vmul.f32 %v3487, %v2692
    %v3528 = vmul.f32 %v3488, %v2856
    %v3529 = vmul.f32 %v3489, %v3020
    %v3530 = vmul.f32 %v3482, %v1875
    %v3531 = vmul.f32 %v3483, %v2039
    %v3532 = vmul.f32 %v3484, %v2203
    %v3533 = vmul.f32 %v3485, %v2367
    %v3534 = vmul.f32 %v3486, %v2531
    %v3535 = vmul.f32 %v3487, %v2695
    %v3536 = vmul.f32 %v3488, %v2859
    %v3537 = vmul.f32 %v3489, %v3023
    %v3538 = vmul.f32 %v3482, %v1878
    %v3539 = vmul.f32 %v3483, %v2042
    %v3540 = vmul.f32 %v3484, %v2206
    %v3541 = vmul.f32 %v3485, %v2370
    %v3542 = vmul.f32 %v3486, %v2534
    %v3543 = vmul.f32 %v3487, %v2698
    %v3544 = vmul.f32 %v3488, %v2862
    %v3545 = vmul.f32 %v3489, %v3026
    %v3546 = vmul.f32 %v3482, %v1881
    %v3547 = vmul.f32 %v3483, %v2045
    %v3548 = vmul.f32 %v3484, %v2209
    %v3549 = vmul.f32 %v3485, %v2373
    %v3550 = vmul.f32 %v3486, %v2537
    %v3551 = vmul.f32 %v3487, %v2701
    %v3552 = vmul.f32 %v3488, %v2865
    %v3553 = vmul.f32 %v3489, %v3029
    %v3554 = vmul.f32 %v3482, %v1884
    %v3555 = vmul.f32 %v3483, %v2048
    %v3556 = vmul.f32 %v3484, %v2212
    %v3557 = vmul.f32 %v3485, %v2376
    %v3558 = vmul.f32 %v3486, %v2540
    %v3559 = vmul.f32 %v3487, %v2704
    %v3560 = vmul.f32 %v3488, %v2868
    %v3561 = vmul.f32 %v3489, %v3032
    %v3563 = vperm.slane %v3480, 0
    %v3564 = vperm.slane %v3480, 1
    %v3565 = vperm.slane %v3480, 2
    %v3566 = vperm.slane %v3480, 3
    %v3567 = vperm.slane %v3480, 4
    %v3568 = vperm.slane %v3480, 5
    %v3569 = vperm.slane %v3480, 6
    %v3570 = vperm.slane %v3480, 7
    %v3579 = vadd.f32 %v3498, %v3563
    %v3580 = vadd.f32 %v3499, %v3564
    %v3581 = vadd.f32 %v3500, %v3565
    %v3582 = vadd.f32 %v3501, %v3566
    %v3583 = vadd.f32 %v3502, %v3567
    %v3584 = vadd.f32 %v3503, %v3568
    %v3585 = vadd.f32 %v3504, %v3569
    %v3586 = vadd.f32 %v3505, %v3570
    %v3587 = vadd.f32 %v3506, %v3563
    %v3588 = vadd.f32 %v3507, %v3564
    %v3589 = vadd.f32 %v3508, %v3565
    %v3590 = vadd.f32 %v3509, %v3566
    %v3591 = vadd.f32 %v3510, %v3567
    %v3592 = vadd.f32 %v3511, %v3568
    %v3593 = vadd.f32 %v3512, %v3569
    %v3594 = vadd.f32 %v3513, %v3570
    %v3595 = vadd.f32 %v3514, %v3563
    %v3596 = vadd.f32 %v3515, %v3564
    %v3597 = vadd.f32 %v3516, %v3565
    %v3598 = vadd.f32 %v3517, %v3566
    %v3599 = vadd.f32 %v3518, %v3567
    %v3600 = vadd.f32 %v3519, %v3568
    %v3601 = vadd.f32 %v3520, %v3569
    %v3602 = vadd.f32 %v3521, %v3570
    %v3603 = vadd.f32 %v3522, %v3563
    %v3604 = vadd.f32 %v3523, %v3564
    %v3605 = vadd.f32 %v3524, %v3565
    %v3606 = vadd.f32 %v3525, %v3566
    %v3607 = vadd.f32 %v3526, %v3567
    %v3608 = vadd.f32 %v3527, %v3568
    %v3609 = vadd.f32 %v3528, %v3569
    %v3610 = vadd.f32 %v3529, %v3570
    %v3611 = vadd.f32 %v3530, %v3563
    %v3612 = vadd.f32 %v3531, %v3564
    %v3613 = vadd.f32 %v3532, %v3565
    %v3614 = vadd.f32 %v3533, %v3566
    %v3615 = vadd.f32 %v3534, %v3567
    %v3616 = vadd.f32 %v3535, %v3568
    %v3617 = vadd.f32 %v3536, %v3569
    %v3618 = vadd.f32 %v3537, %v3570
    %v3619 = vadd.f32 %v3538, %v3563
    %v3620 = vadd.f32 %v3539, %v3564
    %v3621 = vadd.f32 %v3540, %v3565
    %v3622 = vadd.f32 %v3541, %v3566
    %v3623 = vadd.f32 %v3542, %v3567
    %v3624 = vadd.f32 %v3543, %v3568
    %v3625 = vadd.f32 %v3544, %v3569
    %v3626 = vadd.f32 %v3545, %v3570
    %v3627 = vadd.f32 %v3546, %v3563
    %v3628 = vadd.f32 %v3547, %v3564
    %v3629 = vadd.f32 %v3548, %v3565
    %v3630 = vadd.f32 %v3549, %v3566
    %v3631 = vadd.f32 %v3550, %v3567
    %v3632 = vadd.f32 %v3551, %v3568
    %v3633 = vadd.f32 %v3552, %v3569
    %v3634 = vadd.f32 %v3553, %v3570
    %v3635 = vadd.f32 %v3554, %v3563
    %v3636 = vadd.f32 %v3555, %v3564
    %v3637 = vadd.f32 %v3556, %v3565
    %v3638 = vadd.f32 %v3557, %v3566
    %v3639 = vadd.f32 %v3558, %v3567
    %v3640 = vadd.f32 %v3559, %v3568
    %v3641 = vadd.f32 %v3560, %v3569
    %v3642 = vadd.f32 %v3561, %v3570
    %vm3643 = vcmp.gt.f32.partialorder %v3579, 0.0
    %vm3644 = vcmp.gt.f32.partialorder %v3580, 0.0
    %vm3645 = vcmp.gt.f32.partialorder %v3581, 0.0
    %vm3646 = vcmp.gt.f32.partialorder %v3582, 0.0
    %vm3647 = vcmp.gt.f32.partialorder %v3583, 0.0
    %vm3648 = vcmp.gt.f32.partialorder %v3584, 0.0
    %vm3649 = vcmp.gt.f32.partialorder %v3585, 0.0
    %vm3650 = vcmp.gt.f32.partialorder %v3586, 0.0
    %vm3651 = vcmp.gt.f32.partialorder %v3587, 0.0
    %vm3652 = vcmp.gt.f32.partialorder %v3588, 0.0
    %vm3653 = vcmp.gt.f32.partialorder %v3589, 0.0
    %vm3654 = vcmp.gt.f32.partialorder %v3590, 0.0
    %vm3655 = vcmp.gt.f32.partialorder %v3591, 0.0
    %vm3656 = vcmp.gt.f32.partialorder %v3592, 0.0
    %vm3657 = vcmp.gt.f32.partialorder %v3593, 0.0
    %vm3658 = vcmp.gt.f32.partialorder %v3594, 0.0
    %vm3659 = vcmp.gt.f32.partialorder %v3595, 0.0
    %vm3660 = vcmp.gt.f32.partialorder %v3596, 0.0
    %vm3661 = vcmp.gt.f32.partialorder %v3597, 0.0
    %vm3662 = vcmp.gt.f32.partialorder %v3598, 0.0
    %vm3663 = vcmp.gt.f32.partialorder %v3599, 0.0
    %vm3664 = vcmp.gt.f32.partialorder %v3600, 0.0
    %vm3665 = vcmp.gt.f32.partialorder %v3601, 0.0
    %vm3666 = vcmp.gt.f32.partialorder %v3602, 0.0
    %vm3667 = vcmp.gt.f32.partialorder %v3603, 0.0
    %vm3668 = vcmp.gt.f32.partialorder %v3604, 0.0
    %vm3669 = vcmp.gt.f32.partialorder %v3605, 0.0
    %vm3670 = vcmp.gt.f32.partialorder %v3606, 0.0
    %vm3671 = vcmp.gt.f32.partialorder %v3607, 0.0
    %vm3672 = vcmp.gt.f32.partialorder %v3608, 0.0
    %vm3673 = vcmp.gt.f32.partialorder %v3609, 0.0
    %vm3674 = vcmp.gt.f32.partialorder %v3610, 0.0
    %vm3675 = vcmp.gt.f32.partialorder %v3611, 0.0
    %vm3676 = vcmp.gt.f32.partialorder %v3612, 0.0
    %vm3677 = vcmp.gt.f32.partialorder %v3613, 0.0
    %vm3678 = vcmp.gt.f32.partialorder %v3614, 0.0
    %vm3679 = vcmp.gt.f32.partialorder %v3615, 0.0
    %vm3680 = vcmp.gt.f32.partialorder %v3616, 0.0
    %vm3681 = vcmp.gt.f32.partialorder %v3617, 0.0
    %vm3682 = vcmp.gt.f32.partialorder %v3618, 0.0
    %vm3683 = vcmp.gt.f32.partialorder %v3619, 0.0
    %vm3684 = vcmp.gt.f32.partialorder %v3620, 0.0
    %vm3685 = vcmp.gt.f32.partialorder %v3621, 0.0
    %vm3686 = vcmp.gt.f32.partialorder %v3622, 0.0
    %vm3687 = vcmp.gt.f32.partialorder %v3623, 0.0
    %vm3688 = vcmp.gt.f32.partialorder %v3624, 0.0
    %vm3689 = vcmp.gt.f32.partialorder %v3625, 0.0
    %vm3690 = vcmp.gt.f32.partialorder %v3626, 0.0
    %vm3691 = vcmp.gt.f32.partialorder %v3627, 0.0
    %vm3692 = vcmp.gt.f32.partialorder %v3628, 0.0
    %vm3693 = vcmp.gt.f32.partialorder %v3629, 0.0
    %vm3694 = vcmp.gt.f32.partialorder %v3630, 0.0
    %vm3695 = vcmp.gt.f32.partialorder %v3631, 0.0
    %vm3696 = vcmp.gt.f32.partialorder %v3632, 0.0
    %vm3697 = vcmp.gt.f32.partialorder %v3633, 0.0
    %vm3698 = vcmp.gt.f32.partialorder %v3634, 0.0
    %vm3699 = vcmp.gt.f32.partialorder %v3635, 0.0
    %vm3700 = vcmp.gt.f32.partialorder %v3636, 0.0
    %vm3701 = vcmp.gt.f32.partialorder %v3637, 0.0
    %vm3702 = vcmp.gt.f32.partialorder %v3638, 0.0
    %vm3703 = vcmp.gt.f32.partialorder %v3639, 0.0
    %vm3704 = vcmp.gt.f32.partialorder %v3640, 0.0
    %vm3705 = vcmp.gt.f32.partialorder %v3641, 0.0
    %vm3706 = vcmp.gt.f32.partialorder %v3642, 0.0
    %v3707 = vmul.f32 %v3579, 0.01
    %v3708 = vmul.f32 %v3580, 0.01
    %v3709 = vmul.f32 %v3581, 0.01
    %v3710 = vmul.f32 %v3582, 0.01
    %v3711 = vmul.f32 %v3583, 0.01
    %v3712 = vmul.f32 %v3584, 0.01
    %v3713 = vmul.f32 %v3585, 0.01
    %v3714 = vmul.f32 %v3586, 0.01
    %v3715 = vmul.f32 %v3587, 0.01
    %v3716 = vmul.f32 %v3588, 0.01
    %v3717 = vmul.f32 %v3589, 0.01
    %v3718 = vmul.f32 %v3590, 0.01
    %v3719 = vmul.f32 %v3591, 0.01
    %v3720 = vmul.f32 %v3592, 0.01
    %v3721 = vmul.f32 %v3593, 0.01
    %v3722 = vmul.f32 %v3594, 0.01
    %v3723 = vmul.f32 %v3595, 0.01
    %v3724 = vmul.f32 %v3596, 0.01
    %v3725 = vmul.f32 %v3597, 0.01
    %v3726 = vmul.f32 %v3598, 0.01
    %v3727 = vmul.f32 %v3599, 0.01
    %v3728 = vmul.f32 %v3600, 0.01
    %v3729 = vmul.f32 %v3601, 0.01
    %v3730 = vmul.f32 %v3602, 0.01
    %v3731 = vmul.f32 %v3603, 0.01
    %v3732 = vmul.f32 %v3604, 0.01
    %v3733 = vmul.f32 %v3605, 0.01
    %v3734 = vmul.f32 %v3606, 0.01
    %v3735 = vmul.f32 %v3607, 0.01
    %v3736 = vmul.f32 %v3608, 0.01
    %v3737 = vmul.f32 %v3609, 0.01
    %v3738 = vmul.f32 %v3610, 0.01
    %v3739 = vmul.f32 %v3611, 0.01
    %v3740 = vmul.f32 %v3612, 0.01
    %v3741 = vmul.f32 %v3613, 0.01
    %v3742 = vmul.f32 %v3614, 0.01
    %v3743 = vmul.f32 %v3615, 0.01
    %v3744 = vmul.f32 %v3616, 0.01
    %v3745 = vmul.f32 %v3617, 0.01
    %v3746 = vmul.f32 %v3618, 0.01
    %v3747 = vmul.f32 %v3619, 0.01
    %v3748 = vmul.f32 %v3620, 0.01
    %v3749 = vmul.f32 %v3621, 0.01
    %v3750 = vmul.f32 %v3622, 0.01
    %v3751 = vmul.f32 %v3623, 0.01
    %v3752 = vmul.f32 %v3624, 0.01
    %v3753 = vmul.f32 %v3625, 0.01
    %v3754 = vmul.f32 %v3626, 0.01
    %v3755 = vmul.f32 %v3627, 0.01
    %v3756 = vmul.f32 %v3628, 0.01
    %v3757 = vmul.f32 %v3629, 0.01
    %v3758 = vmul.f32 %v3630, 0.01
    %v3759 = vmul.f32 %v3631, 0.01
    %v3760 = vmul.f32 %v3632, 0.01
    %v3761 = vmul.f32 %v3633, 0.01
    %v3762 = vmul.f32 %v3634, 0.01
    %v3763 = vmul.f32 %v3635, 0.01
    %v3764 = vmul.f32 %v3636, 0.01
    %v3765 = vmul.f32 %v3637, 0.01
    %v3766 = vmul.f32 %v3638, 0.01
    %v3767 = vmul.f32 %v3639, 0.01
    %v3768 = vmul.f32 %v3640, 0.01
    %v3769 = vmul.f32 %v3641, 0.01
    %v3770 = vmul.f32 %v3642, 0.01
    %v3771 = vsel %vm3643, %v3579, %v3707
    %v3772 = vsel %vm3644, %v3580, %v3708
    %v3773 = vsel %vm3645, %v3581, %v3709
    %v3774 = vsel %vm3646, %v3582, %v3710
    %v3775 = vsel %vm3647, %v3583, %v3711
    %v3776 = vsel %vm3648, %v3584, %v3712
    %v3777 = vsel %vm3649, %v3585, %v3713
    %v3778 = vsel %vm3650, %v3586, %v3714
    %v3779 = vsel %vm3651, %v3587, %v3715
    %v3780 = vsel %vm3652, %v3588, %v3716
    %v3781 = vsel %vm3653, %v3589, %v3717
    %v3782 = vsel %vm3654, %v3590, %v3718
    %v3783 = vsel %vm3655, %v3591, %v3719
    %v3784 = vsel %vm3656, %v3592, %v3720
    %v3785 = vsel %vm3657, %v3593, %v3721
    %v3786 = vsel %vm3658, %v3594, %v3722
    %v3787 = vsel %vm3659, %v3595, %v3723
    %v3788 = vsel %vm3660, %v3596, %v3724
    %v3789 = vsel %vm3661, %v3597, %v3725
    %v3790 = vsel %vm3662, %v3598, %v3726
    %v3791 = vsel %vm3663, %v3599, %v3727
    %v3792 = vsel %vm3664, %v3600, %v3728
    %v3793 = vsel %vm3665, %v3601, %v3729
    %v3794 = vsel %vm3666, %v3602, %v3730
    %v3795 = vsel %vm3667, %v3603, %v3731
    %v3796 = vsel %vm3668, %v3604, %v3732
    %v3797 = vsel %vm3669, %v3605, %v3733
    %v3798 = vsel %vm3670, %v3606, %v3734
    %v3799 = vsel %vm3671, %v3607, %v3735
    %v3800 = vsel %vm3672, %v3608, %v3736
    %v3801 = vsel %vm3673, %v3609, %v3737
    %v3802 = vsel %vm3674, %v3610, %v3738
    %v3803 = vsel %vm3675, %v3611, %v3739
    %v3804 = vsel %vm3676, %v3612, %v3740
    %v3805 = vsel %vm3677, %v3613, %v3741
    %v3806 = vsel %vm3678, %v3614, %v3742
    %v3807 = vsel %vm3679, %v3615, %v3743
    %v3808 = vsel %vm3680, %v3616, %v3744
    %v3809 = vsel %vm3681, %v3617, %v3745
    %v3810 = vsel %vm3682, %v3618, %v3746
    %v3811 = vsel %vm3683, %v3619, %v3747
    %v3812 = vsel %vm3684, %v3620, %v3748
    %v3813 = vsel %vm3685, %v3621, %v3749
    %v3814 = vsel %vm3686, %v3622, %v3750
    %v3815 = vsel %vm3687, %v3623, %v3751
    %v3816 = vsel %vm3688, %v3624, %v3752
    %v3817 = vsel %vm3689, %v3625, %v3753
    %v3818 = vsel %vm3690, %v3626, %v3754
    %v3819 = vsel %vm3691, %v3627, %v3755
    %v3820 = vsel %vm3692, %v3628, %v3756
    %v3821 = vsel %vm3693, %v3629, %v3757
    %v3822 = vsel %vm3694, %v3630, %v3758
    %v3823 = vsel %vm3695, %v3631, %v3759
    %v3824 = vsel %vm3696, %v3632, %v3760
    %v3825 = vsel %vm3697, %v3633, %v3761
    %v3826 = vsel %vm3698, %v3634, %v3762
    %v3827 = vsel %vm3699, %v3635, %v3763
    %v3828 = vsel %vm3700, %v3636, %v3764
    %v3829 = vsel %vm3701, %v3637, %v3765
    %v3830 = vsel %vm3702, %v3638, %v3766
    %v3831 = vsel %vm3703, %v3639, %v3767
    %v3832 = vsel %vm3704, %v3640, %v3768
    %v3833 = vsel %vm3705, %v3641, %v3769
    %v3834 = vsel %vm3706, %v3642, %v3770
    %v3835 = vmax.f32 %v3771, %v3779
    %v3836 = vrot.slane %v3835, 4
    %v3837 = vmax.f32 %v3835, %v3836
    %v3838 = vrot.slane %v3837, 2
    %v3839 = vmax.f32 %v3837, %v3838
    %v3840 = vrot.slane %v3839, 1
    %v3841 = vmax.f32 %v3839, %v3840
    %v3842 = vmax.f32 %v3772, %v3780
    %v3843 = vrot.slane %v3842, 4
    %v3844 = vmax.f32 %v3842, %v3843
    %v3845 = vrot.slane %v3844, 2
    %v3846 = vmax.f32 %v3844, %v3845
    %v3847 = vrot.slane %v3846, 1
    %v3848 = vmax.f32 %v3846, %v3847
    %v3849 = vmax.f32 %v3773, %v3781
    %v3850 = vrot.slane %v3849, 4
    %v3851 = vmax.f32 %v3849, %v3850
    %v3852 = vrot.slane %v3851, 2
    %v3853 = vmax.f32 %v3851, %v3852
    %v3854 = vrot.slane %v3853, 1
    %v3855 = vmax.f32 %v3853, %v3854
    %v3856 = vmax.f32 %v3774, %v3782
    %v3857 = vrot.slane %v3856, 4
    %v3858 = vmax.f32 %v3856, %v3857
    %v3859 = vrot.slane %v3858, 2
    %v3860 = vmax.f32 %v3858, %v3859
    %v3861 = vrot.slane %v3860, 1
    %v3862 = vmax.f32 %v3860, %v3861
    %v3863 = vmax.f32 %v3775, %v3783
    %v3864 = vrot.slane %v3863, 4
    %v3865 = vmax.f32 %v3863, %v3864
    %v3866 = vrot.slane %v3865, 2
    %v3867 = vmax.f32 %v3865, %v3866
    %v3868 = vrot.slane %v3867, 1
    %v3869 = vmax.f32 %v3867, %v3868
    %v3870 = vmax.f32 %v3776, %v3784
    %v3871 = vrot.slane %v3870, 4
    %v3872 = vmax.f32 %v3870, %v3871
    %v3873 = vrot.slane %v3872, 2
    %v3874 = vmax.f32 %v3872, %v3873
    %v3875 = vrot.slane %v3874, 1
    %v3876 = vmax.f32 %v3874, %v3875
    %v3877 = vmax.f32 %v3777, %v3785
    %v3878 = vrot.slane %v3877, 4
    %v3879 = vmax.f32 %v3877, %v3878
    %v3880 = vrot.slane %v3879, 2
    %v3881 = vmax.f32 %v3879, %v3880
    %v3882 = vrot.slane %v3881, 1
    %v3883 = vmax.f32 %v3881, %v3882
    %v3884 = vmax.f32 %v3778, %v3786
    %v3885 = vrot.slane %v3884, 4
    %v3886 = vmax.f32 %v3884, %v3885
    %v3887 = vrot.slane %v3886, 2
    %v3888 = vmax.f32 %v3886, %v3887
    %v3889 = vrot.slane %v3888, 1
    %v3890 = vmax.f32 %v3888, %v3889
    %v3891 = vmax.f32 %v3787, %v3795
    %v3892 = vrot.slane %v3891, 4
    %v3893 = vmax.f32 %v3891, %v3892
    %v3894 = vrot.slane %v3893, 2
    %v3895 = vmax.f32 %v3893, %v3894
    %v3896 = vrot.slane %v3895, 1
    %v3897 = vmax.f32 %v3895, %v3896
    %v3898 = vmax.f32 %v3788, %v3796
    %v3899 = vrot.slane %v3898, 4
    %v3900 = vmax.f32 %v3898, %v3899
    %v3901 = vrot.slane %v3900, 2
    %v3902 = vmax.f32 %v3900, %v3901
    %v3903 = vrot.slane %v3902, 1
    %v3904 = vmax.f32 %v3902, %v3903
    %v3905 = vmax.f32 %v3789, %v3797
    %v3906 = vrot.slane %v3905, 4
    %v3907 = vmax.f32 %v3905, %v3906
    %v3908 = vrot.slane %v3907, 2
    %v3909 = vmax.f32 %v3907, %v3908
    %v3910 = vrot.slane %v3909, 1
    %v3911 = vmax.f32 %v3909, %v3910
    %v3912 = vmax.f32 %v3790, %v3798
    %v3913 = vrot.slane %v3912, 4
    %v3914 = vmax.f32 %v3912, %v3913
    %v3915 = vrot.slane %v3914, 2
    %v3916 = vmax.f32 %v3914, %v3915
    %v3917 = vrot.slane %v3916, 1
    %v3918 = vmax.f32 %v3916, %v3917
    %v3919 = vmax.f32 %v3791, %v3799
    %v3920 = vrot.slane %v3919, 4
    %v3921 = vmax.f32 %v3919, %v3920
    %v3922 = vrot.slane %v3921, 2
    %v3923 = vmax.f32 %v3921, %v3922
    %v3924 = vrot.slane %v3923, 1
    %v3925 = vmax.f32 %v3923, %v3924
    %v3926 = vmax.f32 %v3792, %v3800
    %v3927 = vrot.slane %v3926, 4
    %v3928 = vmax.f32 %v3926, %v3927
    %v3929 = vrot.slane %v3928, 2
    %v3930 = vmax.f32 %v3928, %v3929
    %v3931 = vrot.slane %v3930, 1
    %v3932 = vmax.f32 %v3930, %v3931
    %v3933 = vmax.f32 %v3793, %v3801
    %v3934 = vrot.slane %v3933, 4
    %v3935 = vmax.f32 %v3933, %v3934
    %v3936 = vrot.slane %v3935, 2
    %v3937 = vmax.f32 %v3935, %v3936
    %v3938 = vrot.slane %v3937, 1
    %v3939 = vmax.f32 %v3937, %v3938
    %v3940 = vmax.f32 %v3794, %v3802
    %v3941 = vrot.slane %v3940, 4
    %v3942 = vmax.f32 %v3940, %v3941
    %v3943 = vrot.slane %v3942, 2
    %v3944 = vmax.f32 %v3942, %v3943
    %v3945 = vrot.slane %v3944, 1
    %v3946 = vmax.f32 %v3944, %v3945
    %v3947 = vmax.f32 %v3803, %v3811
    %v3948 = vrot.slane %v3947, 4
    %v3949 = vmax.f32 %v3947, %v3948
    %v3950 = vrot.slane %v3949, 2
    %v3951 = vmax.f32 %v3949, %v3950
    %v3952 = vrot.slane %v3951, 1
    %v3953 = vmax.f32 %v3951, %v3952
    %v3954 = vmax.f32 %v3804, %v3812
    %v3955 = vrot.slane %v3954, 4
    %v3956 = vmax.f32 %v3954, %v3955
    %v3957 = vrot.slane %v3956, 2
    %v3958 = vmax.f32 %v3956, %v3957
    %v3959 = vrot.slane %v3958, 1
    %v3960 = vmax.f32 %v3958, %v3959
    %v3961 = vmax.f32 %v3805, %v3813
    %v3962 = vrot.slane %v3961, 4
    %v3963 = vmax.f32 %v3961, %v3962
    %v3964 = vrot.slane %v3963, 2
    %v3965 = vmax.f32 %v3963, %v3964
    %v3966 = vrot.slane %v3965, 1
    %v3967 = vmax.f32 %v3965, %v3966
    %v3968 = vmax.f32 %v3806, %v3814
    %v3969 = vrot.slane %v3968, 4
    %v3970 = vmax.f32 %v3968, %v3969
    %v3971 = vrot.slane %v3970, 2
    %v3972 = vmax.f32 %v3970, %v3971
    %v3973 = vrot.slane %v3972, 1
    %v3974 = vmax.f32 %v3972, %v3973
    %v3975 = vmax.f32 %v3807, %v3815
    %v3976 = vrot.slane %v3975, 4
    %v3977 = vmax.f32 %v3975, %v3976
    %v3978 = vrot.slane %v3977, 2
    %v3979 = vmax.f32 %v3977, %v3978
    %v3980 = vrot.slane %v3979, 1
    %v3981 = vmax.f32 %v3979, %v3980
    %v3982 = vmax.f32 %v3808, %v3816
    %v3983 = vrot.slane %v3982, 4
    %v3984 = vmax.f32 %v3982, %v3983
    %v3985 = vrot.slane %v3984, 2
    %v3986 = vmax.f32 %v3984, %v3985
    %v3987 = vrot.slane %v3986, 1
    %v3988 = vmax.f32 %v3986, %v3987
    %v3989 = vmax.f32 %v3809, %v3817
    %v3990 = vrot.slane %v3989, 4
    %v3991 = vmax.f32 %v3989, %v3990
    %v3992 = vrot.slane %v3991, 2
    %v3993 = vmax.f32 %v3991, %v3992
    %v3994 = vrot.slane %v3993, 1
    %v3995 = vmax.f32 %v3993, %v3994
    %v3996 = vmax.f32 %v3810, %v3818
    %v3997 = vrot.slane %v3996, 4
    %v3998 = vmax.f32 %v3996, %v3997
    %v3999 = vrot.slane %v3998, 2
    %v4000 = vmax.f32 %v3998, %v3999
    %v4001 = vrot.slane %v4000, 1
    %v4002 = vmax.f32 %v4000, %v4001
    %v4003 = vmax.f32 %v3819, %v3827
    %v4004 = vrot.slane %v4003, 4
    %v4005 = vmax.f32 %v4003, %v4004
    %v4006 = vrot.slane %v4005, 2
    %v4007 = vmax.f32 %v4005, %v4006
    %v4008 = vrot.slane %v4007, 1
    %v4009 = vmax.f32 %v4007, %v4008
    %v4010 = vmax.f32 %v3820, %v3828
    %v4011 = vrot.slane %v4010, 4
    %v4012 = vmax.f32 %v4010, %v4011
    %v4013 = vrot.slane %v4012, 2
    %v4014 = vmax.f32 %v4012, %v4013
    %v4015 = vrot.slane %v4014, 1
    %v4016 = vmax.f32 %v4014, %v4015
    %v4017 = vmax.f32 %v3821, %v3829
    %v4018 = vrot.slane %v4017, 4
    %v4019 = vmax.f32 %v4017, %v4018
    %v4020 = vrot.slane %v4019, 2
    %v4021 = vmax.f32 %v4019, %v4020
    %v4022 = vrot.slane %v4021, 1
    %v4023 = vmax.f32 %v4021, %v4022
    %v4024 = vmax.f32 %v3822, %v3830
    %v4025 = vrot.slane %v4024, 4
    %v4026 = vmax.f32 %v4024, %v4025
    %v4027 = vrot.slane %v4026, 2
    %v4028 = vmax.f32 %v4026, %v4027
    %v4029 = vrot.slane %v4028, 1
    %v4030 = vmax.f32 %v4028, %v4029
    %v4031 = vmax.f32 %v3823, %v3831
    %v4032 = vrot.slane %v4031, 4
    %v4033 = vmax.f32 %v4031, %v4032
    %v4034 = vrot.slane %v4033, 2
    %v4035 = vmax.f32 %v4033, %v4034
    %v4036 = vrot.slane %v4035, 1
    %v4037 = vmax.f32 %v4035, %v4036
    %v4038 = vmax.f32 %v3824, %v3832
    %v4039 = vrot.slane %v4038, 4
    %v4040 = vmax.f32 %v4038, %v4039
    %v4041 = vrot.slane %v4040, 2
    %v4042 = vmax.f32 %v4040, %v4041
    %v4043 = vrot.slane %v4042, 1
    %v4044 = vmax.f32 %v4042, %v4043
    %v4045 = vmax.f32 %v3825, %v3833
    %v4046 = vrot.slane %v4045, 4
    %v4047 = vmax.f32 %v4045, %v4046
    %v4048 = vrot.slane %v4047, 2
    %v4049 = vmax.f32 %v4047, %v4048
    %v4050 = vrot.slane %v4049, 1
    %v4051 = vmax.f32 %v4049, %v4050
    %v4052 = vmax.f32 %v3826, %v3834
    %v4053 = vrot.slane %v4052, 4
    %v4054 = vmax.f32 %v4052, %v4053
    %v4055 = vrot.slane %v4054, 2
    %v4056 = vmax.f32 %v4054, %v4055
    %v4057 = vrot.slane %v4056, 1
    %v4058 = vmax.f32 %v4056, %v4057
    %v4091 = vrot.slane %v3848, 4
    %v4092 = vrot.slane %v3862, 4
    %v4093 = vrot.slane %v3876, 4
    %v4094 = vrot.slane %v3890, 4
    %v4095 = vrot.slane %v3904, 4
    %v4096 = vrot.slane %v3918, 4
    %v4097 = vrot.slane %v3932, 4
    %v4098 = vrot.slane %v3946, 4
    %v4099 = vrot.slane %v3960, 4
    %v4100 = vrot.slane %v3974, 4
    %v4101 = vrot.slane %v3988, 4
    %v4102 = vrot.slane %v4002, 4
    %v4103 = vrot.slane %v4016, 4
    %v4104 = vrot.slane %v4030, 4
    %v4105 = vrot.slane %v4044, 4
    %v4106 = vrot.slane %v4058, 4
    %v4107 = vsel %vm3451, %v3841, %v4091
    %v4108 = vsel %vm3451, %v3855, %v4092
    %v4109 = vsel %vm3451, %v3869, %v4093
    %v4110 = vsel %vm3451, %v3883, %v4094
    %v4111 = vsel %vm3451, %v3897, %v4095
    %v4112 = vsel %vm3451, %v3911, %v4096
    %v4113 = vsel %vm3451, %v3925, %v4097
    %v4114 = vsel %vm3451, %v3939, %v4098
    %v4115 = vsel %vm3451, %v3953, %v4099
    %v4116 = vsel %vm3451, %v3967, %v4100
    %v4117 = vsel %vm3451, %v3981, %v4101
    %v4118 = vsel %vm3451, %v3995, %v4102
    %v4119 = vsel %vm3451, %v4009, %v4103
    %v4120 = vsel %vm3451, %v4023, %v4104
    %v4121 = vsel %vm3451, %v4037, %v4105
    %v4122 = vsel %vm3451, %v4051, %v4106
    %v4123 = vrot.slane %v4111, 7
    %vm4124 = vcmask 1041409
    %v4125 = vsel %vm4124, %v4123, %v4107
    %vm4126 = vcmask 1045509
    %v4127 = vsel %vm4126, %v4123, %v4125
    %v4128 = vrot.slane %v4115, 6
    %v4129 = vsel %vm1012, %v4128, %v4127
    %v4130 = vsel %vm3447, %v4128, %v4129
    %v4131 = vrot.slane %v4119, 5
    %vm4132 = vcmask 1043459
    %v4133 = vsel %vm4132, %v4131, %v4130
    %vm4134 = vcmask 1047559
    %v4135 = vsel %vm4134, %v4131, %v4133
    %v4136 = vrot.slane %v4112, 7
    %v4137 = vsel %vm4124, %v4136, %v4108
    %v4138 = vsel %vm4126, %v4136, %v4137
    %v4139 = vrot.slane %v4116, 6
    %v4140 = vsel %vm1012, %v4139, %v4138
    %v4141 = vsel %vm3447, %v4139, %v4140
    %v4142 = vrot.slane %v4120, 5
    %v4143 = vsel %vm4132, %v4142, %v4141
    %v4144 = vsel %vm4134, %v4142, %v4143
    %v4145 = vrot.slane %v4113, 7
    %v4146 = vsel %vm4124, %v4145, %v4109
    %v4147 = vsel %vm4126, %v4145, %v4146
    %v4148 = vrot.slane %v4117, 6
    %v4149 = vsel %vm1012, %v4148, %v4147
    %v4150 = vsel %vm3447, %v4148, %v4149
    %v4151 = vrot.slane %v4121, 5
    %v4152 = vsel %vm4132, %v4151, %v4150
    %v4153 = vsel %vm4134, %v4151, %v4152
    %v4154 = vrot.slane %v4114, 7
    %v4155 = vsel %vm4124, %v4154, %v4110
    %v4156 = vsel %vm4126, %v4154, %v4155
    %v4157 = vrot.slane %v4118, 6
    %v4158 = vsel %vm1012, %v4157, %v4156
    %v4159 = vsel %vm3447, %v4157, %v4158
    %v4160 = vrot.slane %v4122, 5
    %v4161 = vsel %vm4132, %v4160, %v4159
    %v4162 = vsel %vm4134, %v4160, %v4161
    %4167 = vst [vmem:[%s13] sm:$0xff] %v4135
    %4168 = vst [vmem:[%s13 + $0x8] sm:$0xff] %v4144
    %4169 = vst [vmem:[%s13 + $0x10] sm:$0xff] %v4153
    %4170 = vst [vmem:[%s13 + $0x18] sm:$0xff] %v4162
    // Predicated region
    $region102: #{siamese_multi_decoder.2} parent=1 // pred_check
      _
    $region103: #{siamese_multi_decoder.2} parent=1 // pred_check_branch
      %4172 = sbr.rel (0) target = $region105
    $region104: #{siamese_multi_decoder.2} parent=1 // pred_region
      _
    $region105: #{siamese_multi_decoder.2} parent=1 // pred_fallthru
      _
    // Predicated region
    $region106: #{siamese_multi_decoder.2} parent=1 // pred_check
      _
    $region107: #{siamese_multi_decoder.2} parent=1 // pred_check_branch
      %4174 = sbr.rel (0) target = $region109
    $region108: #{siamese_multi_decoder.2} parent=1 // pred_region
      _
    $region109: #{siamese_multi_decoder.2} parent=1 // pred_fallthru
      _
    %4175 = vsyncpa [#allocation3], 1
    %4176 = vsyncpa [#allocation5], 1
    %4177 = vsyncpa [#allocation8], 1
    %4178 = vsyncpa [#allocation11], 1
    %4179 = vsyncpa [#allocation14], 1
    %4180 = vsyncpa [#allocation17], 1
    %4181 = vsyncpa [#allocation20], 1

// kernel: siamese_multi_decoder.3
$region0: #{siamese_multi_decoder.3}
  #allocation0 [shape = 'u32[]', space=smem, size = 0x4, offset = 0x4, fixed_abs, tag = 'smem constant byte address 0x4 - core index']
  #allocation1 [shape = 'u32[72,128]{1,0:T(1,128)}', space=vmem, size = 0x9000, scoped, tag = 'internal scratch']
  %s0 = inlined_call_operand.vmem [shape: f32[2,2048], index: 0, kind: input, shape index: {}]
  %s1 = inlined_call_operand.hbm [shape: f32[5,2048,512], index: 1, kind: input, shape index: {}]
  %s2 = inlined_call_operand.vmem [shape: f32[5,1,512], index: 2, kind: input, shape index: {}]
  %s3 = inlined_call_operand.vmem [shape: f32[5,512,64], index: 3, kind: input, shape index: {}]
  %s4 = inlined_call_operand.vmem [shape: f32[5,1,64], index: 4, kind: input, shape index: {}]
  %s5 = inlined_call_operand.vmem [shape: f32[5,1,64], index: 5, kind: input, shape index: {}]
  %s6 = inlined_call_operand.vmem [shape: f32[5,1,1], index: 6, kind: input, shape index: {}]
  %s7 = inlined_call_operand.vmem [shape: f32[2,640], index: 7, kind: output, shape index: {}]
  %s8 = sld [smem:[#allocation0]]
  $region65: #{siamese_multi_decoder.3} parent=0
    _
  %s10 = ssub.s32 1, %s8
  %s11 = scalar_select 0, %s10, %s8
  $region1: #{siamese_multi_decoder.3} parent=0
    #allocation2 [shape = 'u8[8388608]{0}', space=vmem, size = 0x800000, scoped, tag = 'input window, operand 1']
    #allocation3 [shape = 's32[2]{0}', space=sflag, size = 0x8, scoped, tag = 'scoped memory for siamese_multi_decoder.3']
    %12 = vsyncpa [#allocation3], 0
    %s13 = scalar_lea.sflag [#allocation3], 1
    %14 = vsyncpa %s13, 0
    loop: start=0, step=1, limit=7
    $region2: #{siamese_multi_decoder.3} parent=1 // loop_pre_header
      _
    $region3: #{siamese_multi_decoder.3} parent=1 // loop_header
      %s16 = sphi 0, %s20
      %p17 = scmp.ge.s32.totalorder %s16, 7
      %s24 = sphi 0, %s24
      %s26 = sphi 0, %s24
      %s27 = sphi 0, %s26
      %s41 = sphi 0, %s27
      %s47 = sphi 0, %s49
      %s50 = sphi 0, %s47
      %s51 = sphi 0, %s50
      %s67 = sphi 0, %s51
      %s73 = sphi 0, %s75
      %s76 = sphi 0, %s73
      %s77 = sphi 0, %s76
      %s93 = sphi 0, %s77
      %s99 = sphi 0, %s101
      %s102 = sphi 0, %s99
      %s103 = sphi 0, %s102
      %s119 = sphi 0, %s103
      %s125 = sphi 0, %s127
      %s128 = sphi 0, %s125
      %s129 = sphi 0, %s128
      %s145 = sphi 0, %s129
      %s151 = sphi 0, %s153
      %s154 = sphi 0, %s151
      %s155 = sphi 0, %s154
      %s171 = sphi 0, %s155
      %s177 = sphi 0, %s179
      %s180 = sphi 0, %s177
      %s181 = sphi 0, %s180
      %s197 = sphi 0, %s181
      %s203 = sphi 0, %s205
      %s206 = sphi 0, %s203
      %s207 = sphi 0, %s206
      %s223 = sphi 0, %s207
    $region4: #{siamese_multi_decoder.3} parent=1 // loop_header_branch
      %19 = sbr.rel (%p17) target = $region8
    $region5: #{siamese_multi_decoder.3} parent=1 // loop_body
      %s21 = ssub.s32 %s16, 1
      %s22 = ssub.s32 %s16, 2
      %s23 = sadd.s32 %s16, 1
      %s25 = sadd.s32 %s24, 1
      %p28 = scmp.eq.s32.totalorder %s16, 4
      %p29 = scmp.ne.s32.totalorder %s24, %s26
      %p30 = scmp.eq.s32.totalorder %s16, 0
      %p31 = por %p29, %p30
      %p32 = scmp.ne.s32.totalorder %s24, %s26
      %p33 = scmp.eq.s32.totalorder %s21, 4
      %p34 = por %p32, %p33
      %p35 = scmp.ne.s32.totalorder %s26, %s27
      %p36 = scmp.eq.s32.totalorder %s21, 0
      %p37 = por %p35, %p36
      %p38 = scmp.ne.s32.totalorder %s26, %s27
      %p39 = scmp.eq.s32.totalorder %s22, 4
      %p40 = por %p38, %p39
      %p42 = scmp.ne.s32.totalorder %s27, %s41
      %p43 = scmp.eq.s32.totalorder %s22, 0
      %p44 = por %p42, %p43
      %s45 = ssub.s32 %s16, %s23
      %p46 = scmp.eq.s32.totalorder %s45, 0
      %s48 = sadd.s32 %s47, 1
      %s49 = scalar_select %p46, %s47, %s48
      %p52 = pneg %p46
      %p53 = scmp.eq.s32.totalorder %s16, 4
      %p54 = por %p52, %p53
      %p55 = scmp.ne.s32.totalorder %s47, %s50
      %p56 = scmp.eq.s32.totalorder %s16, 0
      %p57 = por %p55, %p56
      %p58 = scmp.ne.s32.totalorder %s47, %s50
      %p59 = scmp.eq.s32.totalorder %s21, 4
      %p60 = por %p58, %p59
      %p61 = scmp.ne.s32.totalorder %s50, %s51
      %p62 = scmp.eq.s32.totalorder %s21, 0
      %p63 = por %p61, %p62
      %p64 = scmp.ne.s32.totalorder %s50, %s51
      %p65 = scmp.eq.s32.totalorder %s22, 4
      %p66 = por %p64, %p65
      %p68 = scmp.ne.s32.totalorder %s51, %s67
      %p69 = scmp.eq.s32.totalorder %s22, 0
      %p70 = por %p68, %p69
      %s71 = ssub.s32 %s16, %s23
      %p72 = scmp.eq.s32.totalorder %s71, 0
      %s74 = sadd.s32 %s73, 1
      %s75 = scalar_select %p72, %s73, %s74
      %p78 = pneg %p72
      %p79 = scmp.eq.s32.totalorder %s16, 4
      %p80 = por %p78, %p79
      %p81 = scmp.ne.s32.totalorder %s73, %s76
      %p82 = scmp.eq.s32.totalorder %s16, 0
      %p83 = por %p81, %p82
      %p84 = scmp.ne.s32.totalorder %s73, %s76
      %p85 = scmp.eq.s32.totalorder %s21, 4
      %p86 = por %p84, %p85
      %p87 = scmp.ne.s32.totalorder %s76, %s77
      %p88 = scmp.eq.s32.totalorder %s21, 0
      %p89 = por %p87, %p88
      %p90 = scmp.ne.s32.totalorder %s76, %s77
      %p91 = scmp.eq.s32.totalorder %s22, 4
      %p92 = por %p90, %p91
      %p94 = scmp.ne.s32.totalorder %s77, %s93
      %p95 = scmp.eq.s32.totalorder %s22, 0
      %p96 = por %p94, %p95
      %s97 = ssub.s32 %s16, %s23
      %p98 = scmp.eq.s32.totalorder %s97, 0
      %s100 = sadd.s32 %s99, 1
      %s101 = scalar_select %p98, %s99, %s100
      %p104 = pneg %p98
      %p105 = scmp.eq.s32.totalorder %s16, 4
      %p106 = por %p104, %p105
      %p107 = scmp.ne.s32.totalorder %s99, %s102
      %p108 = scmp.eq.s32.totalorder %s16, 0
      %p109 = por %p107, %p108
      %p110 = scmp.ne.s32.totalorder %s99, %s102
      %p111 = scmp.eq.s32.totalorder %s21, 4
      %p112 = por %p110, %p111
      %p113 = scmp.ne.s32.totalorder %s102, %s103
      %p114 = scmp.eq.s32.totalorder %s21, 0
      %p115 = por %p113, %p114
      %p116 = scmp.ne.s32.totalorder %s102, %s103
      %p117 = scmp.eq.s32.totalorder %s22, 4
      %p118 = por %p116, %p117
      %p120 = scmp.ne.s32.totalorder %s103, %s119
      %p121 = scmp.eq.s32.totalorder %s22, 0
      %p122 = por %p120, %p121
      %s123 = ssub.s32 %s16, %s23
      %p124 = scmp.eq.s32.totalorder %s123, 0
      %s126 = sadd.s32 %s125, 1
      %s127 = scalar_select %p124, %s125, %s126
      %p130 = pneg %p124
      %p131 = scmp.eq.s32.totalorder %s16, 4
      %p132 = por %p130, %p131
      %p133 = scmp.ne.s32.totalorder %s125, %s128
      %p134 = scmp.eq.s32.totalorder %s16, 0
      %p135 = por %p133, %p134
      %p136 = scmp.ne.s32.totalorder %s125, %s128
      %p137 = scmp.eq.s32.totalorder %s21, 4
      %p138 = por %p136, %p137
      %p139 = scmp.ne.s32.totalorder %s128, %s129
      %p140 = scmp.eq.s32.totalorder %s21, 0
      %p141 = por %p139, %p140
      %p142 = scmp.ne.s32.totalorder %s128, %s129
      %p143 = scmp.eq.s32.totalorder %s22, 4
      %p144 = por %p142, %p143
      %p146 = scmp.ne.s32.totalorder %s129, %s145
      %p147 = scmp.eq.s32.totalorder %s22, 0
      %p148 = por %p146, %p147
      %s149 = ssub.s32 %s16, %s23
      %p150 = scmp.eq.s32.totalorder %s149, 0
      %s152 = sadd.s32 %s151, 1
      %s153 = scalar_select %p150, %s151, %s152
      %p156 = pneg %p150
      %p157 = scmp.eq.s32.totalorder %s16, 4
      %p158 = por %p156, %p157
      %p159 = scmp.ne.s32.totalorder %s151, %s154
      %p160 = scmp.eq.s32.totalorder %s16, 0
      %p161 = por %p159, %p160
      %p162 = scmp.ne.s32.totalorder %s151, %s154
      %p163 = scmp.eq.s32.totalorder %s21, 4
      %p164 = por %p162, %p163
      %p165 = scmp.ne.s32.totalorder %s154, %s155
      %p166 = scmp.eq.s32.totalorder %s21, 0
      %p167 = por %p165, %p166
      %p168 = scmp.ne.s32.totalorder %s154, %s155
      %p169 = scmp.eq.s32.totalorder %s22, 4
      %p170 = por %p168, %p169
      %p172 = scmp.ne.s32.totalorder %s155, %s171
      %p173 = scmp.eq.s32.totalorder %s22, 0
      %p174 = por %p172, %p173
      %s175 = ssub.s32 %s16, %s23
      %p176 = scmp.eq.s32.totalorder %s175, 0
      %s178 = sadd.s32 %s177, 1
      %s179 = scalar_select %p176, %s177, %s178
      %p182 = pneg %p176
      %p183 = scmp.eq.s32.totalorder %s16, 4
      %p184 = por %p182, %p183
      %p185 = scmp.ne.s32.totalorder %s177, %s180
      %p186 = scmp.eq.s32.totalorder %s16, 0
      %p187 = por %p185, %p186
      %p188 = scmp.ne.s32.totalorder %s177, %s180
      %p189 = scmp.eq.s32.totalorder %s21, 4
      %p190 = por %p188, %p189
      %p191 = scmp.ne.s32.totalorder %s180, %s181
      %p192 = scmp.eq.s32.totalorder %s21, 0
      %p193 = por %p191, %p192
      %p194 = scmp.ne.s32.totalorder %s180, %s181
      %p195 = scmp.eq.s32.totalorder %s22, 4
      %p196 = por %p194, %p195
      %p198 = scmp.ne.s32.totalorder %s181, %s197
      %p199 = scmp.eq.s32.totalorder %s22, 0
      %p200 = por %p198, %p199
      %s201 = ssub.s32 %s16, %s23
      %p202 = scmp.eq.s32.totalorder %s201, 0
      %s204 = sadd.s32 %s203, 1
      %s205 = scalar_select %p202, %s203, %s204
      %p208 = pneg %p202
      %p209 = scmp.eq.s32.totalorder %s16, 4
      %p210 = por %p208, %p209
      %p211 = scmp.ne.s32.totalorder %s203, %s206
      %p212 = scmp.eq.s32.totalorder %s16, 0
      %p213 = por %p211, %p212
      %p214 = scmp.ne.s32.totalorder %s203, %s206
      %p215 = scmp.eq.s32.totalorder %s21, 4
      %p216 = por %p214, %p215
      %p217 = scmp.ne.s32.totalorder %s206, %s207
      %p218 = scmp.eq.s32.totalorder %s21, 0
      %p219 = por %p217, %p218
      %p220 = scmp.ne.s32.totalorder %s206, %s207
      %p221 = scmp.eq.s32.totalorder %s22, 4
      %p222 = por %p220, %p221
      %p224 = scmp.ne.s32.totalorder %s207, %s223
      %p225 = scmp.eq.s32.totalorder %s22, 0
      %p226 = por %p224, %p225
      %p227 = scmp.le.s32.totalorder 1, %s16
      %p228 = scmp.lt.s32.totalorder %s16, 6
      %p229 = pnand %p227, %p228
      %p230 = pneg %p229
      // Predicated region
      $region9: #{siamese_multi_decoder.3} parent=5 // pred_check
        _
      $region10: #{siamese_multi_decoder.3} parent=5 // pred_check_branch
        %232 = sbr.rel (%p229) target = $region12
      $region11: #{siamese_multi_decoder.3} parent=5 // pred_region
        %s233 = ssub.s32 %s16, 1
        // Predicated region
        $region13: #{siamese_multi_decoder.3} parent=11 // pred_check
          %p234 = pneg %p37
        $region14: #{siamese_multi_decoder.3} parent=11 // pred_check_branch
          %236 = sbr.rel (%p234) target = $region16
        $region15: #{siamese_multi_decoder.3} parent=11 // pred_region
          _
        $region16: #{siamese_multi_decoder.3} parent=11 // pred_fallthru
          _
      $region12: #{siamese_multi_decoder.3} parent=5 // pred_fallthru
        _
      %p237 = scmp.lt.s32.totalorder %s16, 5
      // Predicated region
      $region17: #{siamese_multi_decoder.3} parent=5 // pred_check
        %p238 = pneg %p237
      $region18: #{siamese_multi_decoder.3} parent=5 // pred_check_branch
        %240 = sbr.rel (%p238) target = $region20
      $region19: #{siamese_multi_decoder.3} parent=5 // pred_region
        // Predicated region
        $region21: #{siamese_multi_decoder.3} parent=19 // pred_check
          %p241 = pneg %p57
        $region22: #{siamese_multi_decoder.3} parent=19 // pred_check_branch
          %243 = sbr.rel (%p241) target = $region24
        $region23: #{siamese_multi_decoder.3} parent=19 // pred_region
          %s244 = sand.u32 %s47, 1
          %s245 = scalar_lea.sflag [#allocation3], %s244
          %s246 = sand.u32 %s47, 1
          %s247 = smul.addr %s246, 8192
          %s248 = scalar_lea.vmem [#allocation2], %s247
          %250 = vsyncadd %s245, 0
          %s251 = smul.addr %s16, 1024
          %s252 = smul.addr %s251, 8
          %s253 = scalar_lea.hbm %s1, %s252
          %s254 = sshll.u32 %s253, 4
          %s255 = int_to_ptr.hbm [resolvable:$true] %s254
          %s256 = sshll.u32 %s248, 4
          %s257 = int_to_ptr.vmem [resolvable:$true] %s256
          %262 = dma.hbm_to_vmem [thread:$0]  %s255, 131072, %s257, %s245, 512, 512, 32
        $region24: #{siamese_multi_decoder.3} parent=19 // pred_fallthru
          _
        // Predicated region
        $region25: #{siamese_multi_decoder.3} parent=19 // pred_check
          %p263 = pneg %p83
        $region26: #{siamese_multi_decoder.3} parent=19 // pred_check_branch
          %265 = sbr.rel (%p263) target = $region28
        $region27: #{siamese_multi_decoder.3} parent=19 // pred_region
          %p266 = scmp.lt.s32.totalorder %s16, 4
          %s267 = scalar_select %p266, %s16, 4
          %s268 = smul.addr %s267, 4
          %s269 = scalar_lea.vmem %s2, %s268
        $region28: #{siamese_multi_decoder.3} parent=19 // pred_fallthru
          _
        // Predicated region
        $region29: #{siamese_multi_decoder.3} parent=19 // pred_check
          %p270 = pneg %p109
        $region30: #{siamese_multi_decoder.3} parent=19 // pred_check_branch
          %272 = sbr.rel (%p270) target = $region32
        $region31: #{siamese_multi_decoder.3} parent=19 // pred_region
          %p273 = scmp.lt.s32.totalorder %s16, 4
          %s274 = scalar_select %p273, %s16, 4
          %s275 = smul.addr %s274, 64
          %s276 = smul.addr %s275, 8
          %s277 = scalar_lea.vmem %s3, %s276
        $region32: #{siamese_multi_decoder.3} parent=19 // pred_fallthru
          _
        // Predicated region
        $region33: #{siamese_multi_decoder.3} parent=19 // pred_check
          %p278 = pneg %p135
        $region34: #{siamese_multi_decoder.3} parent=19 // pred_check_branch
          %280 = sbr.rel (%p278) target = $region36
        $region35: #{siamese_multi_decoder.3} parent=19 // pred_region
          %p281 = scmp.lt.s32.totalorder %s16, 4
          %s282 = scalar_select %p281, %s16, 4
          %s283 = scalar_lea.vmem %s4, %s282
        $region36: #{siamese_multi_decoder.3} parent=19 // pred_fallthru
          _
        // Predicated region
        $region37: #{siamese_multi_decoder.3} parent=19 // pred_check
          %p284 = pneg %p161
        $region38: #{siamese_multi_decoder.3} parent=19 // pred_check_branch
          %286 = sbr.rel (%p284) target = $region40
        $region39: #{siamese_multi_decoder.3} parent=19 // pred_region
          %p287 = scmp.lt.s32.totalorder %s16, 4
          %s288 = scalar_select %p287, %s16, 4
          %s289 = scalar_lea.vmem %s5, %s288
        $region40: #{siamese_multi_decoder.3} parent=19 // pred_fallthru
          _
        // Predicated region
        $region41: #{siamese_multi_decoder.3} parent=19 // pred_check
          %p290 = pneg %p187
        $region42: #{siamese_multi_decoder.3} parent=19 // pred_check_branch
          %292 = sbr.rel (%p290) target = $region44
        $region43: #{siamese_multi_decoder.3} parent=19 // pred_region
          %p293 = scmp.lt.s32.totalorder %s16, 4
          %s294 = scalar_select %p293, %s16, 4
          %s295 = scalar_lea.vmem %s6, %s294
        $region44: #{siamese_multi_decoder.3} parent=19 // pred_fallthru
          _
      $region20: #{siamese_multi_decoder.3} parent=5 // pred_fallthru
        _
      %p296 = scmp.le.s32.totalorder 1, %s16
      %p297 = scmp.lt.s32.totalorder %s16, 6
      %p298 = pnand %p296, %p297
      %p299 = pneg %p298
      // Predicated region
      $region45: #{siamese_multi_decoder.3} parent=5 // pred_check
        _
      $region46: #{siamese_multi_decoder.3} parent=5 // pred_check_branch
        %301 = sbr.rel (%p298) target = $region48
      $region47: #{siamese_multi_decoder.3} parent=5 // pred_region
        %s302 = ssub.s32 %s16, 1
        %s303 = sand.u32 %s50, 1
        %s304 = scalar_lea.sflag [#allocation3], %s303
        %s305 = sand.u32 %s50, 1
        %s306 = smul.addr %s305, 8192
        %s307 = scalar_lea.vmem [#allocation2], %s306
        // Predicated region
        $region49: #{siamese_multi_decoder.3} parent=47 // pred_check
          %p308 = pneg %p63
        $region50: #{siamese_multi_decoder.3} parent=47 // pred_check_branch
          %310 = sbr.rel (%p308) target = $region52
        $region51: #{siamese_multi_decoder.3} parent=47 // pred_region
          %312 = dma.done %s304, 131072
        $region52: #{siamese_multi_decoder.3} parent=47 // pred_fallthru
          _
        %p313 = pneg %p37
        %p314 = pneg %p34
        %s315 = sand.u32 %s50, 1
        %s316 = scalar_lea.sflag [#allocation3], %s315
        %s317 = sand.u32 %s50, 1
        %s318 = smul.addr %s317, 8192
        %s319 = scalar_lea.vmem [#allocation2], %s318
        %p320 = pneg %p63
        %p321 = pneg %p60
        %p322 = scmp.lt.s32.totalorder %s21, 4
        %s323 = scalar_select %p322, %s21, 4
        %s324 = smul.addr %s323, 4
        %s325 = scalar_lea.vmem %s2, %s324
        %p326 = pneg %p89
        %p327 = pneg %p86
        %p328 = scmp.lt.s32.totalorder %s21, 4
        %s329 = scalar_select %p328, %s21, 4
        %s330 = smul.addr %s329, 64
        %s331 = smul.addr %s330, 8
        %s332 = scalar_lea.vmem %s3, %s331
        %p333 = pneg %p115
        %p334 = pneg %p112
        %p335 = scmp.lt.s32.totalorder %s21, 4
        %s336 = scalar_select %p335, %s21, 4
        %s337 = scalar_lea.vmem %s4, %s336
        %p338 = pneg %p141
        %p339 = pneg %p138
        %p340 = scmp.lt.s32.totalorder %s21, 4
        %s341 = scalar_select %p340, %s21, 4
        %s342 = scalar_lea.vmem %s5, %s341
        %p343 = pneg %p167
        %p344 = pneg %p164
        %p345 = scmp.lt.s32.totalorder %s21, 4
        %s346 = scalar_select %p345, %s21, 4
        %s347 = scalar_lea.vmem %s6, %s346
        %p348 = pneg %p193
        %p349 = pneg %p190
        %p350 = pneg %p219
        %p351 = pneg %p216
        %p352 = scmp.lt.s32.totalorder %s21, 4
        %s353 = scalar_select %p352, %s21, 4
        %s354 = smul.addr %s353, 2
        %s355 = scalar_lea.vmem %s7, %s354
        %p356 = scmp.lt.s32.totalorder %s21, 4
        %s357 = scalar_select %p356, %s21, 4
        %s358 = smul.addr %s357, 4
        %s359 = scalar_lea.vmem %s2, %s358
        %p360 = scmp.lt.s32.totalorder %s21, 4
        %s361 = scalar_select %p360, %s21, 4
        %s362 = smul.addr %s361, 64
        %s363 = smul.addr %s362, 8
        %s364 = scalar_lea.vmem %s3, %s363
        %p365 = scmp.lt.s32.totalorder %s21, 4
        %s366 = scalar_select %p365, %s21, 4
        %s367 = scalar_lea.vmem %s4, %s366
        %p368 = scmp.lt.s32.totalorder %s21, 4
        %s369 = scalar_select %p368, %s21, 4
        %s370 = scalar_lea.vmem %s5, %s369
        %p371 = scmp.lt.s32.totalorder %s21, 4
        %s372 = scalar_select %p371, %s21, 4
        %s373 = scalar_lea.vmem %s6, %s372
        %p374 = scmp.lt.s32.totalorder %s21, 4
        %s375 = scalar_select %p374, %s21, 4
        %s376 = smul.addr %s375, 2
        %s377 = scalar_lea.vmem %s7, %s376
        %v378 = vld [vmem:[%s0] sm:$0xff]
        %v379 = vld [vmem:[%s0 + $0x8] sm:$0xff]
        %v380 = vld [vmem:[%s0 + $0x10] sm:$0xff]
        %v381 = vld [vmem:[%s0 + $0x18] sm:$0xff]
        %v382 = vld [vmem:[%s307] sm:$0xff]
        %v383 = vld [vmem:[%s307 + $0x8] sm:$0xff]
        %v384 = vld [vmem:[%s307 + $0x10] sm:$0xff]
        %v385 = vld [vmem:[%s307 + $0x18] sm:$0xff]
        %v386 = vld [vmem:[%s307 + $0x20] sm:$0xff]
        %v387 = vld [vmem:[%s307 + $0x28] sm:$0xff]
        %v388 = vld [vmem:[%s307 + $0x30] sm:$0xff]
        %v389 = vld [vmem:[%s307 + $0x38] sm:$0xff]
        %v390 = vld [vmem:[%s307 + $0x40] sm:$0xff]
        %v391 = vld [vmem:[%s307 + $0x48] sm:$0xff]
        %v392 = vld [vmem:[%s307 + $0x50] sm:$0xff]
        %v393 = vld [vmem:[%s307 + $0x58] sm:$0xff]
        %v394 = vld [vmem:[%s307 + $0x60] sm:$0xff]
        %v395 = vld [vmem:[%s307 + $0x68] sm:$0xff]
        %v396 = vld [vmem:[%s307 + $0x70] sm:$0xff]
        %v397 = vld [vmem:[%s307 + $0x78] sm:$0xff]
        %v398 = vld [vmem:[%s307 + $0x80] sm:$0xff]
        %v399 = vld [vmem:[%s307 + $0x88] sm:$0xff]
        %v400 = vld [vmem:[%s307 + $0x90] sm:$0xff]
        %v401 = vld [vmem:[%s307 + $0x98] sm:$0xff]
        %v402 = vld [vmem:[%s307 + $0xa0] sm:$0xff]
        %v403 = vld [vmem:[%s307 + $0xa8] sm:$0xff]
        %v404 = vld [vmem:[%s307 + $0xb0] sm:$0xff]
        %v405 = vld [vmem:[%s307 + $0xb8] sm:$0xff]
        %v406 = vld [vmem:[%s307 + $0xc0] sm:$0xff]
        %v407 = vld [vmem:[%s307 + $0xc8] sm:$0xff]
        %v408 = vld [vmem:[%s307 + $0xd0] sm:$0xff]
        %v409 = vld [vmem:[%s307 + $0xd8] sm:$0xff]
        %v410 = vld [vmem:[%s307 + $0xe0] sm:$0xff]
        %v411 = vld [vmem:[%s307 + $0xe8] sm:$0xff]
        %v412 = vld [vmem:[%s307 + $0xf0] sm:$0xff]
        %v413 = vld [vmem:[%s307 + $0xf8] sm:$0xff]
        %v414 = vld [vmem:[%s307 + $0x100] sm:$0xff]
        %v415 = vld [vmem:[%s307 + $0x108] sm:$0xff]
        %v416 = vld [vmem:[%s307 + $0x110] sm:$0xff]
        %v417 = vld [vmem:[%s307 + $0x118] sm:$0xff]
        %v418 = vld [vmem:[%s307 + $0x120] sm:$0xff]
        %v419 = vld [vmem:[%s307 + $0x128] sm:$0xff]
        %v420 = vld [vmem:[%s307 + $0x130] sm:$0xff]
        %v421 = vld [vmem:[%s307 + $0x138] sm:$0xff]
        %v422 = vld [vmem:[%s307 + $0x140] sm:$0xff]
        %v423 = vld [vmem:[%s307 + $0x148] sm:$0xff]
        %v424 = vld [vmem:[%s307 + $0x150] sm:$0xff]
        %v425 = vld [vmem:[%s307 + $0x158] sm:$0xff]
        %v426 = vld [vmem:[%s307 + $0x160] sm:$0xff]
        %v427 = vld [vmem:[%s307 + $0x168] sm:$0xff]
        %v428 = vld [vmem:[%s307 + $0x170] sm:$0xff]
        %v429 = vld [vmem:[%s307 + $0x178] sm:$0xff]
        %v430 = vld [vmem:[%s307 + $0x180] sm:$0xff]
        %v431 = vld [vmem:[%s307 + $0x188] sm:$0xff]
        %v432 = vld [vmem:[%s307 + $0x190] sm:$0xff]
        %v433 = vld [vmem:[%s307 + $0x198] sm:$0xff]
        %v434 = vld [vmem:[%s307 + $0x1a0] sm:$0xff]
        %v435 = vld [vmem:[%s307 + $0x1a8] sm:$0xff]
        %v436 = vld [vmem:[%s307 + $0x1b0] sm:$0xff]
        %v437 = vld [vmem:[%s307 + $0x1b8] sm:$0xff]
        %v438 = vld [vmem:[%s307 + $0x1c0] sm:$0xff]
        %v439 = vld [vmem:[%s307 + $0x1c8] sm:$0xff]
        %v440 = vld [vmem:[%s307 + $0x1d0] sm:$0xff]
        %v441 = vld [vmem:[%s307 + $0x1d8] sm:$0xff]
        %v442 = vld [vmem:[%s307 + $0x1e0] sm:$0xff]
        %v443 = vld [vmem:[%s307 + $0x1e8] sm:$0xff]
        %v444 = vld [vmem:[%s307 + $0x1f0] sm:$0xff]
        %v445 = vld [vmem:[%s307 + $0x1f8] sm:$0xff]
        %v446 = vld [vmem:[%s307 + $0x200] sm:$0xff]
        %v447 = vld [vmem:[%s307 + $0x208] sm:$0xff]
        %v448 = vld [vmem:[%s307 + $0x210] sm:$0xff]
        %v449 = vld [vmem:[%s307 + $0x218] sm:$0xff]
        %v450 = vld [vmem:[%s307 + $0x220] sm:$0xff]
        %v451 = vld [vmem:[%s307 + $0x228] sm:$0xff]
        %v452 = vld [vmem:[%s307 + $0x230] sm:$0xff]
        %v453 = vld [vmem:[%s307 + $0x238] sm:$0xff]
        %v454 = vld [vmem:[%s307 + $0x240] sm:$0xff]
        %v455 = vld [vmem:[%s307 + $0x248] sm:$0xff]
        %v456 = vld [vmem:[%s307 + $0x250] sm:$0xff]
        %v457 = vld [vmem:[%s307 + $0x258] sm:$0xff]
        %v458 = vld [vmem:[%s307 + $0x260] sm:$0xff]
        %v459 = vld [vmem:[%s307 + $0x268] sm:$0xff]
        %v460 = vld [vmem:[%s307 + $0x270] sm:$0xff]
        %v461 = vld [vmem:[%s307 + $0x278] sm:$0xff]
        %v462 = vld [vmem:[%s307 + $0x280] sm:$0xff]
        %v463 = vld [vmem:[%s307 + $0x288] sm:$0xff]
        %v464 = vld [vmem:[%s307 + $0x290] sm:$0xff]
        %v465 = vld [vmem:[%s307 + $0x298] sm:$0xff]
        %v466 = vld [vmem:[%s307 + $0x2a0] sm:$0xff]
        %v467 = vld [vmem:[%s307 + $0x2a8] sm:$0xff]
        %v468 = vld [vmem:[%s307 + $0x2b0] sm:$0xff]
        %v469 = vld [vmem:[%s307 + $0x2b8] sm:$0xff]
        %v470 = vld [vmem:[%s307 + $0x2c0] sm:$0xff]
        %v471 = vld [vmem:[%s307 + $0x2c8] sm:$0xff]
        %v472 = vld [vmem:[%s307 + $0x2d0] sm:$0xff]
        %v473 = vld [vmem:[%s307 + $0x2d8] sm:$0xff]
        %v474 = vld [vmem:[%s307 + $0x2e0] sm:$0xff]
        %v475 = vld [vmem:[%s307 + $0x2e8] sm:$0xff]
        %v476 = vld [vmem:[%s307 + $0x2f0] sm:$0xff]
        %v477 = vld [vmem:[%s307 + $0x2f8] sm:$0xff]
        %v478 = vld [vmem:[%s307 + $0x300] sm:$0xff]
        %v479 = vld [vmem:[%s307 + $0x308] sm:$0xff]
        %v480 = vld [vmem:[%s307 + $0x310] sm:$0xff]
        %v481 = vld [vmem:[%s307 + $0x318] sm:$0xff]
        %v482 = vld [vmem:[%s307 + $0x320] sm:$0xff]
        %v483 = vld [vmem:[%s307 + $0x328] sm:$0xff]
        %v484 = vld [vmem:[%s307 + $0x330] sm:$0xff]
        %v485 = vld [vmem:[%s307 + $0x338] sm:$0xff]
        %v486 = vld [vmem:[%s307 + $0x340] sm:$0xff]
        %v487 = vld [vmem:[%s307 + $0x348] sm:$0xff]
        %v488 = vld [vmem:[%s307 + $0x350] sm:$0xff]
        %v489 = vld [vmem:[%s307 + $0x358] sm:$0xff]
        %v490 = vld [vmem:[%s307 + $0x360] sm:$0xff]
        %v491 = vld [vmem:[%s307 + $0x368] sm:$0xff]
        %v492 = vld [vmem:[%s307 + $0x370] sm:$0xff]
        %v493 = vld [vmem:[%s307 + $0x378] sm:$0xff]
        %v494 = vld [vmem:[%s307 + $0x380] sm:$0xff]
        %v495 = vld [vmem:[%s307 + $0x388] sm:$0xff]
        %v496 = vld [vmem:[%s307 + $0x390] sm:$0xff]
        %v497 = vld [vmem:[%s307 + $0x398] sm:$0xff]
        %v498 = vld [vmem:[%s307 + $0x3a0] sm:$0xff]
        %v499 = vld [vmem:[%s307 + $0x3a8] sm:$0xff]
        %v500 = vld [vmem:[%s307 + $0x3b0] sm:$0xff]
        %v501 = vld [vmem:[%s307 + $0x3b8] sm:$0xff]
        %v502 = vld [vmem:[%s307 + $0x3c0] sm:$0xff]
        %v503 = vld [vmem:[%s307 + $0x3c8] sm:$0xff]
        %v504 = vld [vmem:[%s307 + $0x3d0] sm:$0xff]
        %v505 = vld [vmem:[%s307 + $0x3d8] sm:$0xff]
        %v506 = vld [vmem:[%s307 + $0x3e0] sm:$0xff]
        %v507 = vld [vmem:[%s307 + $0x3e8] sm:$0xff]
        %v508 = vld [vmem:[%s307 + $0x3f0] sm:$0xff]
        %v509 = vld [vmem:[%s307 + $0x3f8] sm:$0xff]
        %v510 = vld [vmem:[%s307 + $0x400] sm:$0xff]
        %v511 = vld [vmem:[%s307 + $0x408] sm:$0xff]
        %v512 = vld [vmem:[%s307 + $0x410] sm:$0xff]
        %v513 = vld [vmem:[%s307 + $0x418] sm:$0xff]
        %v514 = vld [vmem:[%s307 + $0x420] sm:$0xff]
        %v515 = vld [vmem:[%s307 + $0x428] sm:$0xff]
        %v516 = vld [vmem:[%s307 + $0x430] sm:$0xff]
        %v517 = vld [vmem:[%s307 + $0x438] sm:$0xff]
        %v518 = vld [vmem:[%s307 + $0x440] sm:$0xff]
        %v519 = vld [vmem:[%s307 + $0x448] sm:$0xff]
        %v520 = vld [vmem:[%s307 + $0x450] sm:$0xff]
        %v521 = vld [vmem:[%s307 + $0x458] sm:$0xff]
        %v522 = vld [vmem:[%s307 + $0x460] sm:$0xff]
        %v523 = vld [vmem:[%s307 + $0x468] sm:$0xff]
        %v524 = vld [vmem:[%s307 + $0x470] sm:$0xff]
        %v525 = vld [vmem:[%s307 + $0x478] sm:$0xff]
        %v526 = vld [vmem:[%s307 + $0x480] sm:$0xff]
        %v527 = vld [vmem:[%s307 + $0x488] sm:$0xff]
        %v528 = vld [vmem:[%s307 + $0x490] sm:$0xff]
        %v529 = vld [vmem:[%s307 + $0x498] sm:$0xff]
        %v530 = vld [vmem:[%s307 + $0x4a0] sm:$0xff]
        %v531 = vld [vmem:[%s307 + $0x4a8] sm:$0xff]
        %v532 = vld [vmem:[%s307 + $0x4b0] sm:$0xff]
        %v533 = vld [vmem:[%s307 + $0x4b8] sm:$0xff]
        %v534 = vld [vmem:[%s307 + $0x4c0] sm:$0xff]
        %v535 = vld [vmem:[%s307 + $0x4c8] sm:$0xff]
        %v536 = vld [vmem:[%s307 + $0x4d0] sm:$0xff]
        %v537 = vld [vmem:[%s307 + $0x4d8] sm:$0xff]
        %v538 = vld [vmem:[%s307 + $0x4e0] sm:$0xff]
        %v539 = vld [vmem:[%s307 + $0x4e8] sm:$0xff]
        %v540 = vld [vmem:[%s307 + $0x4f0] sm:$0xff]
        %v541 = vld [vmem:[%s307 + $0x4f8] sm:$0xff]
        %v542 = vld [vmem:[%s307 + $0x500] sm:$0xff]
        %v543 = vld [vmem:[%s307 + $0x508] sm:$0xff]
        %v544 = vld [vmem:[%s307 + $0x510] sm:$0xff]
        %v545 = vld [vmem:[%s307 + $0x518] sm:$0xff]
        %v546 = vld [vmem:[%s307 + $0x520] sm:$0xff]
        %v547 = vld [vmem:[%s307 + $0x528] sm:$0xff]
        %v548 = vld [vmem:[%s307 + $0x530] sm:$0xff]
        %v549 = vld [vmem:[%s307 + $0x538] sm:$0xff]
        %v550 = vld [vmem:[%s307 + $0x540] sm:$0xff]
        %v551 = vld [vmem:[%s307 + $0x548] sm:$0xff]
        %v552 = vld [vmem:[%s307 + $0x550] sm:$0xff]
        %v553 = vld [vmem:[%s307 + $0x558] sm:$0xff]
        %v554 = vld [vmem:[%s307 + $0x560] sm:$0xff]
        %v555 = vld [vmem:[%s307 + $0x568] sm:$0xff]
        %v556 = vld [vmem:[%s307 + $0x570] sm:$0xff]
        %v557 = vld [vmem:[%s307 + $0x578] sm:$0xff]
        %v558 = vld [vmem:[%s307 + $0x580] sm:$0xff]
        %v559 = vld [vmem:[%s307 + $0x588] sm:$0xff]
        %v560 = vld [vmem:[%s307 + $0x590] sm:$0xff]
        %v561 = vld [vmem:[%s307 + $0x598] sm:$0xff]
        %v562 = vld [vmem:[%s307 + $0x5a0] sm:$0xff]
        %v563 = vld [vmem:[%s307 + $0x5a8] sm:$0xff]
        %v564 = vld [vmem:[%s307 + $0x5b0] sm:$0xff]
        %v565 = vld [vmem:[%s307 + $0x5b8] sm:$0xff]
        %v566 = vld [vmem:[%s307 + $0x5c0] sm:$0xff]
        %v567 = vld [vmem:[%s307 + $0x5c8] sm:$0xff]
        %v568 = vld [vmem:[%s307 + $0x5d0] sm:$0xff]
        %v569 = vld [vmem:[%s307 + $0x5d8] sm:$0xff]
        %v570 = vld [vmem:[%s307 + $0x5e0] sm:$0xff]
        %v571 = vld [vmem:[%s307 + $0x5e8] sm:$0xff]
        %v572 = vld [vmem:[%s307 + $0x5f0] sm:$0xff]
        %v573 = vld [vmem:[%s307 + $0x5f8] sm:$0xff]
        %v574 = vld [vmem:[%s307 + $0x600] sm:$0xff]
        %v575 = vld [vmem:[%s307 + $0x608] sm:$0xff]
        %v576 = vld [vmem:[%s307 + $0x610] sm:$0xff]
        %v577 = vld [vmem:[%s307 + $0x618] sm:$0xff]
        %v578 = vld [vmem:[%s307 + $0x620] sm:$0xff]
        %v579 = vld [vmem:[%s307 + $0x628] sm:$0xff]
        %v580 = vld [vmem:[%s307 + $0x630] sm:$0xff]
        %v581 = vld [vmem:[%s307 + $0x638] sm:$0xff]
        %v582 = vld [vmem:[%s307 + $0x640] sm:$0xff]
        %v583 = vld [vmem:[%s307 + $0x648] sm:$0xff]
        %v584 = vld [vmem:[%s307 + $0x650] sm:$0xff]
        %v585 = vld [vmem:[%s307 + $0x658] sm:$0xff]
        %v586 = vld [vmem:[%s307 + $0x660] sm:$0xff]
        %v587 = vld [vmem:[%s307 + $0x668] sm:$0xff]
        %v588 = vld [vmem:[%s307 + $0x670] sm:$0xff]
        %v589 = vld [vmem:[%s307 + $0x678] sm:$0xff]
        %v590 = vld [vmem:[%s307 + $0x680] sm:$0xff]
        %v591 = vld [vmem:[%s307 + $0x688] sm:$0xff]
        %v592 = vld [vmem:[%s307 + $0x690] sm:$0xff]
        %v593 = vld [vmem:[%s307 + $0x698] sm:$0xff]
        %v594 = vld [vmem:[%s307 + $0x6a0] sm:$0xff]
        %v595 = vld [vmem:[%s307 + $0x6a8] sm:$0xff]
        %v596 = vld [vmem:[%s307 + $0x6b0] sm:$0xff]
        %v597 = vld [vmem:[%s307 + $0x6b8] sm:$0xff]
        %v598 = vld [vmem:[%s307 + $0x6c0] sm:$0xff]
        %v599 = vld [vmem:[%s307 + $0x6c8] sm:$0xff]
        %v600 = vld [vmem:[%s307 + $0x6d0] sm:$0xff]
        %v601 = vld [vmem:[%s307 + $0x6d8] sm:$0xff]
        %v602 = vld [vmem:[%s307 + $0x6e0] sm:$0xff]
        %v603 = vld [vmem:[%s307 + $0x6e8] sm:$0xff]
        %v604 = vld [vmem:[%s307 + $0x6f0] sm:$0xff]
        %v605 = vld [vmem:[%s307 + $0x6f8] sm:$0xff]
        %v606 = vld [vmem:[%s307 + $0x700] sm:$0xff]
        %v607 = vld [vmem:[%s307 + $0x708] sm:$0xff]
        %v608 = vld [vmem:[%s307 + $0x710] sm:$0xff]
        %v609 = vld [vmem:[%s307 + $0x718] sm:$0xff]
        %v610 = vld [vmem:[%s307 + $0x720] sm:$0xff]
        %v611 = vld [vmem:[%s307 + $0x728] sm:$0xff]
        %v612 = vld [vmem:[%s307 + $0x730] sm:$0xff]
        %v613 = vld [vmem:[%s307 + $0x738] sm:$0xff]
        %v614 = vld [vmem:[%s307 + $0x740] sm:$0xff]
        %v615 = vld [vmem:[%s307 + $0x748] sm:$0xff]
        %v616 = vld [vmem:[%s307 + $0x750] sm:$0xff]
        %v617 = vld [vmem:[%s307 + $0x758] sm:$0xff]
        %v618 = vld [vmem:[%s307 + $0x760] sm:$0xff]
        %v619 = vld [vmem:[%s307 + $0x768] sm:$0xff]
        %v620 = vld [vmem:[%s307 + $0x770] sm:$0xff]
        %v621 = vld [vmem:[%s307 + $0x778] sm:$0xff]
        %v622 = vld [vmem:[%s307 + $0x780] sm:$0xff]
        %v623 = vld [vmem:[%s307 + $0x788] sm:$0xff]
        %v624 = vld [vmem:[%s307 + $0x790] sm:$0xff]
        %v625 = vld [vmem:[%s307 + $0x798] sm:$0xff]
        %v626 = vld [vmem:[%s307 + $0x7a0] sm:$0xff]
        %v627 = vld [vmem:[%s307 + $0x7a8] sm:$0xff]
        %v628 = vld [vmem:[%s307 + $0x7b0] sm:$0xff]
        %v629 = vld [vmem:[%s307 + $0x7b8] sm:$0xff]
        %v630 = vld [vmem:[%s307 + $0x7c0] sm:$0xff]
        %v631 = vld [vmem:[%s307 + $0x7c8] sm:$0xff]
        %v632 = vld [vmem:[%s307 + $0x7d0] sm:$0xff]
        %v633 = vld [vmem:[%s307 + $0x7d8] sm:$0xff]
        %v634 = vld [vmem:[%s307 + $0x7e0] sm:$0xff]
        %v635 = vld [vmem:[%s307 + $0x7e8] sm:$0xff]
        %v636 = vld [vmem:[%s307 + $0x7f0] sm:$0xff]
        %v637 = vld [vmem:[%s307 + $0x7f8] sm:$0xff]
        %v638 = vld [vmem:[%s307 + $0x800] sm:$0xff]
        %v639 = vld [vmem:[%s307 + $0x808] sm:$0xff]
        %v640 = vld [vmem:[%s307 + $0x810] sm:$0xff]
        %v641 = vld [vmem:[%s307 + $0x818] sm:$0xff]
        %v642 = vld [vmem:[%s307 + $0x820] sm:$0xff]
        %v643 = vld [vmem:[%s307 + $0x828] sm:$0xff]
        %v644 = vld [vmem:[%s307 + $0x830] sm:$0xff]
        %v645 = vld [vmem:[%s307 + $0x838] sm:$0xff]
        %v646 = vld [vmem:[%s307 + $0x840] sm:$0xff]
        %v647 = vld [vmem:[%s307 + $0x848] sm:$0xff]
        %v648 = vld [vmem:[%s307 + $0x850] sm:$0xff]
        %v649 = vld [vmem:[%s307 + $0x858] sm:$0xff]
        %v650 = vld [vmem:[%s307 + $0x860] sm:$0xff]
        %v651 = vld [vmem:[%s307 + $0x868] sm:$0xff]
        %v652 = vld [vmem:[%s307 + $0x870] sm:$0xff]
        %v653 = vld [vmem:[%s307 + $0x878] sm:$0xff]
        %v654 = vld [vmem:[%s307 + $0x880] sm:$0xff]
        %v655 = vld [vmem:[%s307 + $0x888] sm:$0xff]
        %v656 = vld [vmem:[%s307 + $0x890] sm:$0xff]
        %v657 = vld [vmem:[%s307 + $0x898] sm:$0xff]
        %v658 = vld [vmem:[%s307 + $0x8a0] sm:$0xff]
        %v659 = vld [vmem:[%s307 + $0x8a8] sm:$0xff]
        %v660 = vld [vmem:[%s307 + $0x8b0] sm:$0xff]
        %v661 = vld [vmem:[%s307 + $0x8b8] sm:$0xff]
        %v662 = vld [vmem:[%s307 + $0x8c0] sm:$0xff]
        %v663 = vld [vmem:[%s307 + $0x8c8] sm:$0xff]
        %v664 = vld [vmem:[%s307 + $0x8d0] sm:$0xff]
        %v665 = vld [vmem:[%s307 + $0x8d8] sm:$0xff]
        %v666 = vld [vmem:[%s307 + $0x8e0] sm:$0xff]
        %v667 = vld [vmem:[%s307 + $0x8e8] sm:$0xff]
        %v668 = vld [vmem:[%s307 + $0x8f0] sm:$0xff]
        %v669 = vld [vmem:[%s307 + $0x8f8] sm:$0xff]
        %v670 = vld [vmem:[%s307 + $0x900] sm:$0xff]
        %v671 = vld [vmem:[%s307 + $0x908] sm:$0xff]
        %v672 = vld [vmem:[%s307 + $0x910] sm:$0xff]
        %v673 = vld [vmem:[%s307 + $0x918] sm:$0xff]
        %v674 = vld [vmem:[%s307 + $0x920] sm:$0xff]
        %v675 = vld [vmem:[%s307 + $0x928] sm:$0xff]
        %v676 = vld [vmem:[%s307 + $0x930] sm:$0xff]
        %v677 = vld [vmem:[%s307 + $0x938] sm:$0xff]
        %v678 = vld [vmem:[%s307 + $0x940] sm:$0xff]
        %v679 = vld [vmem:[%s307 + $0x948] sm:$0xff]
        %v680 = vld [vmem:[%s307 + $0x950] sm:$0xff]
        %v681 = vld [vmem:[%s307 + $0x958] sm:$0xff]
        %v682 = vld [vmem:[%s307 + $0x960] sm:$0xff]
        %v683 = vld [vmem:[%s307 + $0x968] sm:$0xff]
        %v684 = vld [vmem:[%s307 + $0x970] sm:$0xff]
        %v685 = vld [vmem:[%s307 + $0x978] sm:$0xff]
        %v686 = vld [vmem:[%s307 + $0x980] sm:$0xff]
        %v687 = vld [vmem:[%s307 + $0x988] sm:$0xff]
        %v688 = vld [vmem:[%s307 + $0x990] sm:$0xff]
        %v689 = vld [vmem:[%s307 + $0x998] sm:$0xff]
        %v690 = vld [vmem:[%s307 + $0x9a0] sm:$0xff]
        %v691 = vld [vmem:[%s307 + $0x9a8] sm:$0xff]
        %v692 = vld [vmem:[%s307 + $0x9b0] sm:$0xff]
        %v693 = vld [vmem:[%s307 + $0x9b8] sm:$0xff]
        %v694 = vld [vmem:[%s307 + $0x9c0] sm:$0xff]
        %v695 = vld [vmem:[%s307 + $0x9c8] sm:$0xff]
        %v696 = vld [vmem:[%s307 + $0x9d0] sm:$0xff]
        %v697 = vld [vmem:[%s307 + $0x9d8] sm:$0xff]
        %v698 = vld [vmem:[%s307 + $0x9e0] sm:$0xff]
        %v699 = vld [vmem:[%s307 + $0x9e8] sm:$0xff]
        %v700 = vld [vmem:[%s307 + $0x9f0] sm:$0xff]
        %v701 = vld [vmem:[%s307 + $0x9f8] sm:$0xff]
        %v702 = vld [vmem:[%s307 + $0xa00] sm:$0xff]
        %v703 = vld [vmem:[%s307 + $0xa08] sm:$0xff]
        %v704 = vld [vmem:[%s307 + $0xa10] sm:$0xff]
        %v705 = vld [vmem:[%s307 + $0xa18] sm:$0xff]
        %v706 = vld [vmem:[%s307 + $0xa20] sm:$0xff]
        %v707 = vld [vmem:[%s307 + $0xa28] sm:$0xff]
        %v708 = vld [vmem:[%s307 + $0xa30] sm:$0xff]
        %v709 = vld [vmem:[%s307 + $0xa38] sm:$0xff]
        %v710 = vld [vmem:[%s307 + $0xa40] sm:$0xff]
        %v711 = vld [vmem:[%s307 + $0xa48] sm:$0xff]
        %v712 = vld [vmem:[%s307 + $0xa50] sm:$0xff]
        %v713 = vld [vmem:[%s307 + $0xa58] sm:$0xff]
        %v714 = vld [vmem:[%s307 + $0xa60] sm:$0xff]
        %v715 = vld [vmem:[%s307 + $0xa68] sm:$0xff]
        %v716 = vld [vmem:[%s307 + $0xa70] sm:$0xff]
        %v717 = vld [vmem:[%s307 + $0xa78] sm:$0xff]
        %v718 = vld [vmem:[%s307 + $0xa80] sm:$0xff]
        %v719 = vld [vmem:[%s307 + $0xa88] sm:$0xff]
        %v720 = vld [vmem:[%s307 + $0xa90] sm:$0xff]
        %v721 = vld [vmem:[%s307 + $0xa98] sm:$0xff]
        %v722 = vld [vmem:[%s307 + $0xaa0] sm:$0xff]
        %v723 = vld [vmem:[%s307 + $0xaa8] sm:$0xff]
        %v724 = vld [vmem:[%s307 + $0xab0] sm:$0xff]
        %v725 = vld [vmem:[%s307 + $0xab8] sm:$0xff]
        %v726 = vld [vmem:[%s307 + $0xac0] sm:$0xff]
        %v727 = vld [vmem:[%s307 + $0xac8] sm:$0xff]
        %v728 = vld [vmem:[%s307 + $0xad0] sm:$0xff]
        %v729 = vld [vmem:[%s307 + $0xad8] sm:$0xff]
        %v730 = vld [vmem:[%s307 + $0xae0] sm:$0xff]
        %v731 = vld [vmem:[%s307 + $0xae8] sm:$0xff]
        %v732 = vld [vmem:[%s307 + $0xaf0] sm:$0xff]
        %v733 = vld [vmem:[%s307 + $0xaf8] sm:$0xff]
        %v734 = vld [vmem:[%s307 + $0xb00] sm:$0xff]
        %v735 = vld [vmem:[%s307 + $0xb08] sm:$0xff]
        %v736 = vld [vmem:[%s307 + $0xb10] sm:$0xff]
        %v737 = vld [vmem:[%s307 + $0xb18] sm:$0xff]
        %v738 = vld [vmem:[%s307 + $0xb20] sm:$0xff]
        %v739 = vld [vmem:[%s307 + $0xb28] sm:$0xff]
        %v740 = vld [vmem:[%s307 + $0xb30] sm:$0xff]
        %v741 = vld [vmem:[%s307 + $0xb38] sm:$0xff]
        %v742 = vld [vmem:[%s307 + $0xb40] sm:$0xff]
        %v743 = vld [vmem:[%s307 + $0xb48] sm:$0xff]
        %v744 = vld [vmem:[%s307 + $0xb50] sm:$0xff]
        %v745 = vld [vmem:[%s307 + $0xb58] sm:$0xff]
        %v746 = vld [vmem:[%s307 + $0xb60] sm:$0xff]
        %v747 = vld [vmem:[%s307 + $0xb68] sm:$0xff]
        %v748 = vld [vmem:[%s307 + $0xb70] sm:$0xff]
        %v749 = vld [vmem:[%s307 + $0xb78] sm:$0xff]
        %v750 = vld [vmem:[%s307 + $0xb80] sm:$0xff]
        %v751 = vld [vmem:[%s307 + $0xb88] sm:$0xff]
        %v752 = vld [vmem:[%s307 + $0xb90] sm:$0xff]
        %v753 = vld [vmem:[%s307 + $0xb98] sm:$0xff]
        %v754 = vld [vmem:[%s307 + $0xba0] sm:$0xff]
        %v755 = vld [vmem:[%s307 + $0xba8] sm:$0xff]
        %v756 = vld [vmem:[%s307 + $0xbb0] sm:$0xff]
        %v757 = vld [vmem:[%s307 + $0xbb8] sm:$0xff]
        %v758 = vld [vmem:[%s307 + $0xbc0] sm:$0xff]
        %v759 = vld [vmem:[%s307 + $0xbc8] sm:$0xff]
        %v760 = vld [vmem:[%s307 + $0xbd0] sm:$0xff]
        %v761 = vld [vmem:[%s307 + $0xbd8] sm:$0xff]
        %v762 = vld [vmem:[%s307 + $0xbe0] sm:$0xff]
        %v763 = vld [vmem:[%s307 + $0xbe8] sm:$0xff]
        %v764 = vld [vmem:[%s307 + $0xbf0] sm:$0xff]
        %v765 = vld [vmem:[%s307 + $0xbf8] sm:$0xff]
        %v766 = vld [vmem:[%s307 + $0xc00] sm:$0xff]
        %v767 = vld [vmem:[%s307 + $0xc08] sm:$0xff]
        %v768 = vld [vmem:[%s307 + $0xc10] sm:$0xff]
        %v769 = vld [vmem:[%s307 + $0xc18] sm:$0xff]
        %v770 = vld [vmem:[%s307 + $0xc20] sm:$0xff]
        %v771 = vld [vmem:[%s307 + $0xc28] sm:$0xff]
        %v772 = vld [vmem:[%s307 + $0xc30] sm:$0xff]
        %v773 = vld [vmem:[%s307 + $0xc38] sm:$0xff]
        %v774 = vld [vmem:[%s307 + $0xc40] sm:$0xff]
        %v775 = vld [vmem:[%s307 + $0xc48] sm:$0xff]
        %v776 = vld [vmem:[%s307 + $0xc50] sm:$0xff]
        %v777 = vld [vmem:[%s307 + $0xc58] sm:$0xff]
        %v778 = vld [vmem:[%s307 + $0xc60] sm:$0xff]
        %v779 = vld [vmem:[%s307 + $0xc68] sm:$0xff]
        %v780 = vld [vmem:[%s307 + $0xc70] sm:$0xff]
        %v781 = vld [vmem:[%s307 + $0xc78] sm:$0xff]
        %v782 = vld [vmem:[%s307 + $0xc80] sm:$0xff]
        %v783 = vld [vmem:[%s307 + $0xc88] sm:$0xff]
        %v784 = vld [vmem:[%s307 + $0xc90] sm:$0xff]
        %v785 = vld [vmem:[%s307 + $0xc98] sm:$0xff]
        %v786 = vld [vmem:[%s307 + $0xca0] sm:$0xff]
        %v787 = vld [vmem:[%s307 + $0xca8] sm:$0xff]
        %v788 = vld [vmem:[%s307 + $0xcb0] sm:$0xff]
        %v789 = vld [vmem:[%s307 + $0xcb8] sm:$0xff]
        %v790 = vld [vmem:[%s307 + $0xcc0] sm:$0xff]
        %v791 = vld [vmem:[%s307 + $0xcc8] sm:$0xff]
        %v792 = vld [vmem:[%s307 + $0xcd0] sm:$0xff]
        %v793 = vld [vmem:[%s307 + $0xcd8] sm:$0xff]
        %v794 = vld [vmem:[%s307 + $0xce0] sm:$0xff]
        %v795 = vld [vmem:[%s307 + $0xce8] sm:$0xff]
        %v796 = vld [vmem:[%s307 + $0xcf0] sm:$0xff]
        %v797 = vld [vmem:[%s307 + $0xcf8] sm:$0xff]
        %v798 = vld [vmem:[%s307 + $0xd00] sm:$0xff]
        %v799 = vld [vmem:[%s307 + $0xd08] sm:$0xff]
        %v800 = vld [vmem:[%s307 + $0xd10] sm:$0xff]
        %v801 = vld [vmem:[%s307 + $0xd18] sm:$0xff]
        %v802 = vld [vmem:[%s307 + $0xd20] sm:$0xff]
        %v803 = vld [vmem:[%s307 + $0xd28] sm:$0xff]
        %v804 = vld [vmem:[%s307 + $0xd30] sm:$0xff]
        %v805 = vld [vmem:[%s307 + $0xd38] sm:$0xff]
        %v806 = vld [vmem:[%s307 + $0xd40] sm:$0xff]
        %v807 = vld [vmem:[%s307 + $0xd48] sm:$0xff]
        %v808 = vld [vmem:[%s307 + $0xd50] sm:$0xff]
        %v809 = vld [vmem:[%s307 + $0xd58] sm:$0xff]
        %v810 = vld [vmem:[%s307 + $0xd60] sm:$0xff]
        %v811 = vld [vmem:[%s307 + $0xd68] sm:$0xff]
        %v812 = vld [vmem:[%s307 + $0xd70] sm:$0xff]
        %v813 = vld [vmem:[%s307 + $0xd78] sm:$0xff]
        %v814 = vld [vmem:[%s307 + $0xd80] sm:$0xff]
        %v815 = vld [vmem:[%s307 + $0xd88] sm:$0xff]
        %v816 = vld [vmem:[%s307 + $0xd90] sm:$0xff]
        %v817 = vld [vmem:[%s307 + $0xd98] sm:$0xff]
        %v818 = vld [vmem:[%s307 + $0xda0] sm:$0xff]
        %v819 = vld [vmem:[%s307 + $0xda8] sm:$0xff]
        %v820 = vld [vmem:[%s307 + $0xdb0] sm:$0xff]
        %v821 = vld [vmem:[%s307 + $0xdb8] sm:$0xff]
        %v822 = vld [vmem:[%s307 + $0xdc0] sm:$0xff]
        %v823 = vld [vmem:[%s307 + $0xdc8] sm:$0xff]
        %v824 = vld [vmem:[%s307 + $0xdd0] sm:$0xff]
        %v825 = vld [vmem:[%s307 + $0xdd8] sm:$0xff]
        %v826 = vld [vmem:[%s307 + $0xde0] sm:$0xff]
        %v827 = vld [vmem:[%s307 + $0xde8] sm:$0xff]
        %v828 = vld [vmem:[%s307 + $0xdf0] sm:$0xff]
        %v829 = vld [vmem:[%s307 + $0xdf8] sm:$0xff]
        %v830 = vld [vmem:[%s307 + $0xe00] sm:$0xff]
        %v831 = vld [vmem:[%s307 + $0xe08] sm:$0xff]
        %v832 = vld [vmem:[%s307 + $0xe10] sm:$0xff]
        %v833 = vld [vmem:[%s307 + $0xe18] sm:$0xff]
        %v834 = vld [vmem:[%s307 + $0xe20] sm:$0xff]
        %v835 = vld [vmem:[%s307 + $0xe28] sm:$0xff]
        %v836 = vld [vmem:[%s307 + $0xe30] sm:$0xff]
        %v837 = vld [vmem:[%s307 + $0xe38] sm:$0xff]
        %v838 = vld [vmem:[%s307 + $0xe40] sm:$0xff]
        %v839 = vld [vmem:[%s307 + $0xe48] sm:$0xff]
        %v840 = vld [vmem:[%s307 + $0xe50] sm:$0xff]
        %v841 = vld [vmem:[%s307 + $0xe58] sm:$0xff]
        %v842 = vld [vmem:[%s307 + $0xe60] sm:$0xff]
        %v843 = vld [vmem:[%s307 + $0xe68] sm:$0xff]
        %v844 = vld [vmem:[%s307 + $0xe70] sm:$0xff]
        %v845 = vld [vmem:[%s307 + $0xe78] sm:$0xff]
        %v846 = vld [vmem:[%s307 + $0xe80] sm:$0xff]
        %v847 = vld [vmem:[%s307 + $0xe88] sm:$0xff]
        %v848 = vld [vmem:[%s307 + $0xe90] sm:$0xff]
        %v849 = vld [vmem:[%s307 + $0xe98] sm:$0xff]
        %v850 = vld [vmem:[%s307 + $0xea0] sm:$0xff]
        %v851 = vld [vmem:[%s307 + $0xea8] sm:$0xff]
        %v852 = vld [vmem:[%s307 + $0xeb0] sm:$0xff]
        %v853 = vld [vmem:[%s307 + $0xeb8] sm:$0xff]
        %v854 = vld [vmem:[%s307 + $0xec0] sm:$0xff]
        %v855 = vld [vmem:[%s307 + $0xec8] sm:$0xff]
        %v856 = vld [vmem:[%s307 + $0xed0] sm:$0xff]
        %v857 = vld [vmem:[%s307 + $0xed8] sm:$0xff]
        %v858 = vld [vmem:[%s307 + $0xee0] sm:$0xff]
        %v859 = vld [vmem:[%s307 + $0xee8] sm:$0xff]
        %v860 = vld [vmem:[%s307 + $0xef0] sm:$0xff]
        %v861 = vld [vmem:[%s307 + $0xef8] sm:$0xff]
        %v862 = vld [vmem:[%s307 + $0xf00] sm:$0xff]
        %v863 = vld [vmem:[%s307 + $0xf08] sm:$0xff]
        %v864 = vld [vmem:[%s307 + $0xf10] sm:$0xff]
        %v865 = vld [vmem:[%s307 + $0xf18] sm:$0xff]
        %v866 = vld [vmem:[%s307 + $0xf20] sm:$0xff]
        %v867 = vld [vmem:[%s307 + $0xf28] sm:$0xff]
        %v868 = vld [vmem:[%s307 + $0xf30] sm:$0xff]
        %v869 = vld [vmem:[%s307 + $0xf38] sm:$0xff]
        %v870 = vld [vmem:[%s307 + $0xf40] sm:$0xff]
        %v871 = vld [vmem:[%s307 + $0xf48] sm:$0xff]
        %v872 = vld [vmem:[%s307 + $0xf50] sm:$0xff]
        %v873 = vld [vmem:[%s307 + $0xf58] sm:$0xff]
        %v874 = vld [vmem:[%s307 + $0xf60] sm:$0xff]
        %v875 = vld [vmem:[%s307 + $0xf68] sm:$0xff]
        %v876 = vld [vmem:[%s307 + $0xf70] sm:$0xff]
        %v877 = vld [vmem:[%s307 + $0xf78] sm:$0xff]
        %v878 = vld [vmem:[%s307 + $0xf80] sm:$0xff]
        %v879 = vld [vmem:[%s307 + $0xf88] sm:$0xff]
        %v880 = vld [vmem:[%s307 + $0xf90] sm:$0xff]
        %v881 = vld [vmem:[%s307 + $0xf98] sm:$0xff]
        %v882 = vld [vmem:[%s307 + $0xfa0] sm:$0xff]
        %v883 = vld [vmem:[%s307 + $0xfa8] sm:$0xff]
        %v884 = vld [vmem:[%s307 + $0xfb0] sm:$0xff]
        %v885 = vld [vmem:[%s307 + $0xfb8] sm:$0xff]
        %v886 = vld [vmem:[%s307 + $0xfc0] sm:$0xff]
        %v887 = vld [vmem:[%s307 + $0xfc8] sm:$0xff]
        %v888 = vld [vmem:[%s307 + $0xfd0] sm:$0xff]
        %v889 = vld [vmem:[%s307 + $0xfd8] sm:$0xff]
        %v890 = vld [vmem:[%s307 + $0xfe0] sm:$0xff]
        %v891 = vld [vmem:[%s307 + $0xfe8] sm:$0xff]
        %v892 = vld [vmem:[%s307 + $0xff0] sm:$0xff]
        %v893 = vld [vmem:[%s307 + $0xff8] sm:$0xff]
        %v894 = vld [vmem:[%s307 + $0x1000] sm:$0xff]
        %v895 = vld [vmem:[%s307 + $0x1008] sm:$0xff]
        %v896 = vld [vmem:[%s307 + $0x1010] sm:$0xff]
        %v897 = vld [vmem:[%s307 + $0x1018] sm:$0xff]
        %v898 = vld [vmem:[%s307 + $0x1020] sm:$0xff]
        %v899 = vld [vmem:[%s307 + $0x1028] sm:$0xff]
        %v900 = vld [vmem:[%s307 + $0x1030] sm:$0xff]
        %v901 = vld [vmem:[%s307 + $0x1038] sm:$0xff]
        %v902 = vld [vmem:[%s307 + $0x1040] sm:$0xff]
        %v903 = vld [vmem:[%s307 + $0x1048] sm:$0xff]
        %v904 = vld [vmem:[%s307 + $0x1050] sm:$0xff]
        %v905 = vld [vmem:[%s307 + $0x1058] sm:$0xff]
        %v906 = vld [vmem:[%s307 + $0x1060] sm:$0xff]
        %v907 = vld [vmem:[%s307 + $0x1068] sm:$0xff]
        %v908 = vld [vmem:[%s307 + $0x1070] sm:$0xff]
        %v909 = vld [vmem:[%s307 + $0x1078] sm:$0xff]
        %v910 = vld [vmem:[%s307 + $0x1080] sm:$0xff]
        %v911 = vld [vmem:[%s307 + $0x1088] sm:$0xff]
        %v912 = vld [vmem:[%s307 + $0x1090] sm:$0xff]
        %v913 = vld [vmem:[%s307 + $0x1098] sm:$0xff]
        %v914 = vld [vmem:[%s307 + $0x10a0] sm:$0xff]
        %v915 = vld [vmem:[%s307 + $0x10a8] sm:$0xff]
        %v916 = vld [vmem:[%s307 + $0x10b0] sm:$0xff]
        %v917 = vld [vmem:[%s307 + $0x10b8] sm:$0xff]
        %v918 = vld [vmem:[%s307 + $0x10c0] sm:$0xff]
        %v919 = vld [vmem:[%s307 + $0x10c8] sm:$0xff]
        %v920 = vld [vmem:[%s307 + $0x10d0] sm:$0xff]
        %v921 = vld [vmem:[%s307 + $0x10d8] sm:$0xff]
        %v922 = vld [vmem:[%s307 + $0x10e0] sm:$0xff]
        %v923 = vld [vmem:[%s307 + $0x10e8] sm:$0xff]
        %v924 = vld [vmem:[%s307 + $0x10f0] sm:$0xff]
        %v925 = vld [vmem:[%s307 + $0x10f8] sm:$0xff]
        %v926 = vld [vmem:[%s307 + $0x1100] sm:$0xff]
        %v927 = vld [vmem:[%s307 + $0x1108] sm:$0xff]
        %v928 = vld [vmem:[%s307 + $0x1110] sm:$0xff]
        %v929 = vld [vmem:[%s307 + $0x1118] sm:$0xff]
        %v930 = vld [vmem:[%s307 + $0x1120] sm:$0xff]
        %v931 = vld [vmem:[%s307 + $0x1128] sm:$0xff]
        %v932 = vld [vmem:[%s307 + $0x1130] sm:$0xff]
        %v933 = vld [vmem:[%s307 + $0x1138] sm:$0xff]
        %v934 = vld [vmem:[%s307 + $0x1140] sm:$0xff]
        %v935 = vld [vmem:[%s307 + $0x1148] sm:$0xff]
        %v936 = vld [vmem:[%s307 + $0x1150] sm:$0xff]
        %v937 = vld [vmem:[%s307 + $0x1158] sm:$0xff]
        %v938 = vld [vmem:[%s307 + $0x1160] sm:$0xff]
        %v939 = vld [vmem:[%s307 + $0x1168] sm:$0xff]
        %v940 = vld [vmem:[%s307 + $0x1170] sm:$0xff]
        %v941 = vld [vmem:[%s307 + $0x1178] sm:$0xff]
        %v942 = vld [vmem:[%s307 + $0x1180] sm:$0xff]
        %v943 = vld [vmem:[%s307 + $0x1188] sm:$0xff]
        %v944 = vld [vmem:[%s307 + $0x1190] sm:$0xff]
        %v945 = vld [vmem:[%s307 + $0x1198] sm:$0xff]
        %v946 = vld [vmem:[%s307 + $0x11a0] sm:$0xff]
        %v947 = vld [vmem:[%s307 + $0x11a8] sm:$0xff]
        %v948 = vld [vmem:[%s307 + $0x11b0] sm:$0xff]
        %v949 = vld [vmem:[%s307 + $0x11b8] sm:$0xff]
        %v950 = vld [vmem:[%s307 + $0x11c0] sm:$0xff]
        %v951 = vld [vmem:[%s307 + $0x11c8] sm:$0xff]
        %v952 = vld [vmem:[%s307 + $0x11d0] sm:$0xff]
        %v953 = vld [vmem:[%s307 + $0x11d8] sm:$0xff]
        %v954 = vld [vmem:[%s307 + $0x11e0] sm:$0xff]
        %v955 = vld [vmem:[%s307 + $0x11e8] sm:$0xff]
        %v956 = vld [vmem:[%s307 + $0x11f0] sm:$0xff]
        %v957 = vld [vmem:[%s307 + $0x11f8] sm:$0xff]
        %v958 = vld [vmem:[%s307 + $0x1200] sm:$0xff]
        %v959 = vld [vmem:[%s307 + $0x1208] sm:$0xff]
        %v960 = vld [vmem:[%s307 + $0x1210] sm:$0xff]
        %v961 = vld [vmem:[%s307 + $0x1218] sm:$0xff]
        %v962 = vld [vmem:[%s307 + $0x1220] sm:$0xff]
        %v963 = vld [vmem:[%s307 + $0x1228] sm:$0xff]
        %v964 = vld [vmem:[%s307 + $0x1230] sm:$0xff]
        %v965 = vld [vmem:[%s307 + $0x1238] sm:$0xff]
        %v966 = vld [vmem:[%s307 + $0x1240] sm:$0xff]
        %v967 = vld [vmem:[%s307 + $0x1248] sm:$0xff]
        %v968 = vld [vmem:[%s307 + $0x1250] sm:$0xff]
        %v969 = vld [vmem:[%s307 + $0x1258] sm:$0xff]
        %v970 = vld [vmem:[%s307 + $0x1260] sm:$0xff]
        %v971 = vld [vmem:[%s307 + $0x1268] sm:$0xff]
        %v972 = vld [vmem:[%s307 + $0x1270] sm:$0xff]
        %v973 = vld [vmem:[%s307 + $0x1278] sm:$0xff]
        %v974 = vld [vmem:[%s307 + $0x1280] sm:$0xff]
        %v975 = vld [vmem:[%s307 + $0x1288] sm:$0xff]
        %v976 = vld [vmem:[%s307 + $0x1290] sm:$0xff]
        %v977 = vld [vmem:[%s307 + $0x1298] sm:$0xff]
        %v978 = vld [vmem:[%s307 + $0x12a0] sm:$0xff]
        %v979 = vld [vmem:[%s307 + $0x12a8] sm:$0xff]
        %v980 = vld [vmem:[%s307 + $0x12b0] sm:$0xff]
        %v981 = vld [vmem:[%s307 + $0x12b8] sm:$0xff]
        %v982 = vld [vmem:[%s307 + $0x12c0] sm:$0xff]
        %v983 = vld [vmem:[%s307 + $0x12c8] sm:$0xff]
        %v984 = vld [vmem:[%s307 + $0x12d0] sm:$0xff]
        %v985 = vld [vmem:[%s307 + $0x12d8] sm:$0xff]
        %v986 = vld [vmem:[%s307 + $0x12e0] sm:$0xff]
        %v987 = vld [vmem:[%s307 + $0x12e8] sm:$0xff]
        %v988 = vld [vmem:[%s307 + $0x12f0] sm:$0xff]
        %v989 = vld [vmem:[%s307 + $0x12f8] sm:$0xff]
        %v990 = vld [vmem:[%s307 + $0x1300] sm:$0xff]
        %v991 = vld [vmem:[%s307 + $0x1308] sm:$0xff]
        %v992 = vld [vmem:[%s307 + $0x1310] sm:$0xff]
        %v993 = vld [vmem:[%s307 + $0x1318] sm:$0xff]
        %v994 = vld [vmem:[%s307 + $0x1320] sm:$0xff]
        %v995 = vld [vmem:[%s307 + $0x1328] sm:$0xff]
        %v996 = vld [vmem:[%s307 + $0x1330] sm:$0xff]
        %v997 = vld [vmem:[%s307 + $0x1338] sm:$0xff]
        %v998 = vld [vmem:[%s307 + $0x1340] sm:$0xff]
        %v999 = vld [vmem:[%s307 + $0x1348] sm:$0xff]
        %v1000 = vld [vmem:[%s307 + $0x1350] sm:$0xff]
        %v1001 = vld [vmem:[%s307 + $0x1358] sm:$0xff]
        %v1002 = vld [vmem:[%s307 + $0x1360] sm:$0xff]
        %v1003 = vld [vmem:[%s307 + $0x1368] sm:$0xff]
        %v1004 = vld [vmem:[%s307 + $0x1370] sm:$0xff]
        %v1005 = vld [vmem:[%s307 + $0x1378] sm:$0xff]
        %v1006 = vld [vmem:[%s307 + $0x1380] sm:$0xff]
        %v1007 = vld [vmem:[%s307 + $0x1388] sm:$0xff]
        %v1008 = vld [vmem:[%s307 + $0x1390] sm:$0xff]
        %v1009 = vld [vmem:[%s307 + $0x1398] sm:$0xff]
        %v1010 = vld [vmem:[%s307 + $0x13a0] sm:$0xff]
        %v1011 = vld [vmem:[%s307 + $0x13a8] sm:$0xff]
        %v1012 = vld [vmem:[%s307 + $0x13b0] sm:$0xff]
        %v1013 = vld [vmem:[%s307 + $0x13b8] sm:$0xff]
        %v1014 = vld [vmem:[%s307 + $0x13c0] sm:$0xff]
        %v1015 = vld [vmem:[%s307 + $0x13c8] sm:$0xff]
        %v1016 = vld [vmem:[%s307 + $0x13d0] sm:$0xff]
        %v1017 = vld [vmem:[%s307 + $0x13d8] sm:$0xff]
        %v1018 = vld [vmem:[%s307 + $0x13e0] sm:$0xff]
        %v1019 = vld [vmem:[%s307 + $0x13e8] sm:$0xff]
        %v1020 = vld [vmem:[%s307 + $0x13f0] sm:$0xff]
        %v1021 = vld [vmem:[%s307 + $0x13f8] sm:$0xff]
        %v1022 = vld [vmem:[%s307 + $0x1400] sm:$0xff]
        %v1023 = vld [vmem:[%s307 + $0x1408] sm:$0xff]
        %v1024 = vld [vmem:[%s307 + $0x1410] sm:$0xff]
        %v1025 = vld [vmem:[%s307 + $0x1418] sm:$0xff]
        %v1026 = vld [vmem:[%s307 + $0x1420] sm:$0xff]
        %v1027 = vld [vmem:[%s307 + $0x1428] sm:$0xff]
        %v1028 = vld [vmem:[%s307 + $0x1430] sm:$0xff]
        %v1029 = vld [vmem:[%s307 + $0x1438] sm:$0xff]
        %v1030 = vld [vmem:[%s307 + $0x1440] sm:$0xff]
        %v1031 = vld [vmem:[%s307 + $0x1448] sm:$0xff]
        %v1032 = vld [vmem:[%s307 + $0x1450] sm:$0xff]
        %v1033 = vld [vmem:[%s307 + $0x1458] sm:$0xff]
        %v1034 = vld [vmem:[%s307 + $0x1460] sm:$0xff]
        %v1035 = vld [vmem:[%s307 + $0x1468] sm:$0xff]
        %v1036 = vld [vmem:[%s307 + $0x1470] sm:$0xff]
        %v1037 = vld [vmem:[%s307 + $0x1478] sm:$0xff]
        %v1038 = vld [vmem:[%s307 + $0x1480] sm:$0xff]
        %v1039 = vld [vmem:[%s307 + $0x1488] sm:$0xff]
        %v1040 = vld [vmem:[%s307 + $0x1490] sm:$0xff]
        %v1041 = vld [vmem:[%s307 + $0x1498] sm:$0xff]
        %v1042 = vld [vmem:[%s307 + $0x14a0] sm:$0xff]
        %v1043 = vld [vmem:[%s307 + $0x14a8] sm:$0xff]
        %v1044 = vld [vmem:[%s307 + $0x14b0] sm:$0xff]
        %v1045 = vld [vmem:[%s307 + $0x14b8] sm:$0xff]
        %v1046 = vld [vmem:[%s307 + $0x14c0] sm:$0xff]
        %v1047 = vld [vmem:[%s307 + $0x14c8] sm:$0xff]
        %v1048 = vld [vmem:[%s307 + $0x14d0] sm:$0xff]
        %v1049 = vld [vmem:[%s307 + $0x14d8] sm:$0xff]
        %v1050 = vld [vmem:[%s307 + $0x14e0] sm:$0xff]
        %v1051 = vld [vmem:[%s307 + $0x14e8] sm:$0xff]
        %v1052 = vld [vmem:[%s307 + $0x14f0] sm:$0xff]
        %v1053 = vld [vmem:[%s307 + $0x14f8] sm:$0xff]
        %v1054 = vld [vmem:[%s307 + $0x1500] sm:$0xff]
        %v1055 = vld [vmem:[%s307 + $0x1508] sm:$0xff]
        %v1056 = vld [vmem:[%s307 + $0x1510] sm:$0xff]
        %v1057 = vld [vmem:[%s307 + $0x1518] sm:$0xff]
        %v1058 = vld [vmem:[%s307 + $0x1520] sm:$0xff]
        %v1059 = vld [vmem:[%s307 + $0x1528] sm:$0xff]
        %v1060 = vld [vmem:[%s307 + $0x1530] sm:$0xff]
        %v1061 = vld [vmem:[%s307 + $0x1538] sm:$0xff]
        %v1062 = vld [vmem:[%s307 + $0x1540] sm:$0xff]
        %v1063 = vld [vmem:[%s307 + $0x1548] sm:$0xff]
        %v1064 = vld [vmem:[%s307 + $0x1550] sm:$0xff]
        %v1065 = vld [vmem:[%s307 + $0x1558] sm:$0xff]
        %v1066 = vld [vmem:[%s307 + $0x1560] sm:$0xff]
        %v1067 = vld [vmem:[%s307 + $0x1568] sm:$0xff]
        %v1068 = vld [vmem:[%s307 + $0x1570] sm:$0xff]
        %v1069 = vld [vmem:[%s307 + $0x1578] sm:$0xff]
        %v1070 = vld [vmem:[%s307 + $0x1580] sm:$0xff]
        %v1071 = vld [vmem:[%s307 + $0x1588] sm:$0xff]
        %v1072 = vld [vmem:[%s307 + $0x1590] sm:$0xff]
        %v1073 = vld [vmem:[%s307 + $0x1598] sm:$0xff]
        %v1074 = vld [vmem:[%s307 + $0x15a0] sm:$0xff]
        %v1075 = vld [vmem:[%s307 + $0x15a8] sm:$0xff]
        %v1076 = vld [vmem:[%s307 + $0x15b0] sm:$0xff]
        %v1077 = vld [vmem:[%s307 + $0x15b8] sm:$0xff]
        %v1078 = vld [vmem:[%s307 + $0x15c0] sm:$0xff]
        %v1079 = vld [vmem:[%s307 + $0x15c8] sm:$0xff]
        %v1080 = vld [vmem:[%s307 + $0x15d0] sm:$0xff]
        %v1081 = vld [vmem:[%s307 + $0x15d8] sm:$0xff]
        %v1082 = vld [vmem:[%s307 + $0x15e0] sm:$0xff]
        %v1083 = vld [vmem:[%s307 + $0x15e8] sm:$0xff]
        %v1084 = vld [vmem:[%s307 + $0x15f0] sm:$0xff]
        %v1085 = vld [vmem:[%s307 + $0x15f8] sm:$0xff]
        %v1086 = vld [vmem:[%s307 + $0x1600] sm:$0xff]
        %v1087 = vld [vmem:[%s307 + $0x1608] sm:$0xff]
        %v1088 = vld [vmem:[%s307 + $0x1610] sm:$0xff]
        %v1089 = vld [vmem:[%s307 + $0x1618] sm:$0xff]
        %v1090 = vld [vmem:[%s307 + $0x1620] sm:$0xff]
        %v1091 = vld [vmem:[%s307 + $0x1628] sm:$0xff]
        %v1092 = vld [vmem:[%s307 + $0x1630] sm:$0xff]
        %v1093 = vld [vmem:[%s307 + $0x1638] sm:$0xff]
        %v1094 = vld [vmem:[%s307 + $0x1640] sm:$0xff]
        %v1095 = vld [vmem:[%s307 + $0x1648] sm:$0xff]
        %v1096 = vld [vmem:[%s307 + $0x1650] sm:$0xff]
        %v1097 = vld [vmem:[%s307 + $0x1658] sm:$0xff]
        %v1098 = vld [vmem:[%s307 + $0x1660] sm:$0xff]
        %v1099 = vld [vmem:[%s307 + $0x1668] sm:$0xff]
        %v1100 = vld [vmem:[%s307 + $0x1670] sm:$0xff]
        %v1101 = vld [vmem:[%s307 + $0x1678] sm:$0xff]
        %v1102 = vld [vmem:[%s307 + $0x1680] sm:$0xff]
        %v1103 = vld [vmem:[%s307 + $0x1688] sm:$0xff]
        %v1104 = vld [vmem:[%s307 + $0x1690] sm:$0xff]
        %v1105 = vld [vmem:[%s307 + $0x1698] sm:$0xff]
        %v1106 = vld [vmem:[%s307 + $0x16a0] sm:$0xff]
        %v1107 = vld [vmem:[%s307 + $0x16a8] sm:$0xff]
        %v1108 = vld [vmem:[%s307 + $0x16b0] sm:$0xff]
        %v1109 = vld [vmem:[%s307 + $0x16b8] sm:$0xff]
        %v1110 = vld [vmem:[%s307 + $0x16c0] sm:$0xff]
        %v1111 = vld [vmem:[%s307 + $0x16c8] sm:$0xff]
        %v1112 = vld [vmem:[%s307 + $0x16d0] sm:$0xff]
        %v1113 = vld [vmem:[%s307 + $0x16d8] sm:$0xff]
        %v1114 = vld [vmem:[%s307 + $0x16e0] sm:$0xff]
        %v1115 = vld [vmem:[%s307 + $0x16e8] sm:$0xff]
        %v1116 = vld [vmem:[%s307 + $0x16f0] sm:$0xff]
        %v1117 = vld [vmem:[%s307 + $0x16f8] sm:$0xff]
        %v1118 = vld [vmem:[%s307 + $0x1700] sm:$0xff]
        %v1119 = vld [vmem:[%s307 + $0x1708] sm:$0xff]
        %v1120 = vld [vmem:[%s307 + $0x1710] sm:$0xff]
        %v1121 = vld [vmem:[%s307 + $0x1718] sm:$0xff]
        %v1122 = vld [vmem:[%s307 + $0x1720] sm:$0xff]
        %v1123 = vld [vmem:[%s307 + $0x1728] sm:$0xff]
        %v1124 = vld [vmem:[%s307 + $0x1730] sm:$0xff]
        %v1125 = vld [vmem:[%s307 + $0x1738] sm:$0xff]
        %v1126 = vld [vmem:[%s307 + $0x1740] sm:$0xff]
        %v1127 = vld [vmem:[%s307 + $0x1748] sm:$0xff]
        %v1128 = vld [vmem:[%s307 + $0x1750] sm:$0xff]
        %v1129 = vld [vmem:[%s307 + $0x1758] sm:$0xff]
        %v1130 = vld [vmem:[%s307 + $0x1760] sm:$0xff]
        %v1131 = vld [vmem:[%s307 + $0x1768] sm:$0xff]
        %v1132 = vld [vmem:[%s307 + $0x1770] sm:$0xff]
        %v1133 = vld [vmem:[%s307 + $0x1778] sm:$0xff]
        %v1134 = vld [vmem:[%s307 + $0x1780] sm:$0xff]
        %v1135 = vld [vmem:[%s307 + $0x1788] sm:$0xff]
        %v1136 = vld [vmem:[%s307 + $0x1790] sm:$0xff]
        %v1137 = vld [vmem:[%s307 + $0x1798] sm:$0xff]
        %v1138 = vld [vmem:[%s307 + $0x17a0] sm:$0xff]
        %v1139 = vld [vmem:[%s307 + $0x17a8] sm:$0xff]
        %v1140 = vld [vmem:[%s307 + $0x17b0] sm:$0xff]
        %v1141 = vld [vmem:[%s307 + $0x17b8] sm:$0xff]
        %v1142 = vld [vmem:[%s307 + $0x17c0] sm:$0xff]
        %v1143 = vld [vmem:[%s307 + $0x17c8] sm:$0xff]
        %v1144 = vld [vmem:[%s307 + $0x17d0] sm:$0xff]
        %v1145 = vld [vmem:[%s307 + $0x17d8] sm:$0xff]
        %v1146 = vld [vmem:[%s307 + $0x17e0] sm:$0xff]
        %v1147 = vld [vmem:[%s307 + $0x17e8] sm:$0xff]
        %v1148 = vld [vmem:[%s307 + $0x17f0] sm:$0xff]
        %v1149 = vld [vmem:[%s307 + $0x17f8] sm:$0xff]
        %v1150 = vld [vmem:[%s307 + $0x1800] sm:$0xff]
        %v1151 = vld [vmem:[%s307 + $0x1808] sm:$0xff]
        %v1152 = vld [vmem:[%s307 + $0x1810] sm:$0xff]
        %v1153 = vld [vmem:[%s307 + $0x1818] sm:$0xff]
        %v1154 = vld [vmem:[%s307 + $0x1820] sm:$0xff]
        %v1155 = vld [vmem:[%s307 + $0x1828] sm:$0xff]
        %v1156 = vld [vmem:[%s307 + $0x1830] sm:$0xff]
        %v1157 = vld [vmem:[%s307 + $0x1838] sm:$0xff]
        %v1158 = vld [vmem:[%s307 + $0x1840] sm:$0xff]
        %v1159 = vld [vmem:[%s307 + $0x1848] sm:$0xff]
        %v1160 = vld [vmem:[%s307 + $0x1850] sm:$0xff]
        %v1161 = vld [vmem:[%s307 + $0x1858] sm:$0xff]
        %v1162 = vld [vmem:[%s307 + $0x1860] sm:$0xff]
        %v1163 = vld [vmem:[%s307 + $0x1868] sm:$0xff]
        %v1164 = vld [vmem:[%s307 + $0x1870] sm:$0xff]
        %v1165 = vld [vmem:[%s307 + $0x1878] sm:$0xff]
        %v1166 = vld [vmem:[%s307 + $0x1880] sm:$0xff]
        %v1167 = vld [vmem:[%s307 + $0x1888] sm:$0xff]
        %v1168 = vld [vmem:[%s307 + $0x1890] sm:$0xff]
        %v1169 = vld [vmem:[%s307 + $0x1898] sm:$0xff]
        %v1170 = vld [vmem:[%s307 + $0x18a0] sm:$0xff]
        %v1171 = vld [vmem:[%s307 + $0x18a8] sm:$0xff]
        %v1172 = vld [vmem:[%s307 + $0x18b0] sm:$0xff]
        %v1173 = vld [vmem:[%s307 + $0x18b8] sm:$0xff]
        %v1174 = vld [vmem:[%s307 + $0x18c0] sm:$0xff]
        %v1175 = vld [vmem:[%s307 + $0x18c8] sm:$0xff]
        %v1176 = vld [vmem:[%s307 + $0x18d0] sm:$0xff]
        %v1177 = vld [vmem:[%s307 + $0x18d8] sm:$0xff]
        %v1178 = vld [vmem:[%s307 + $0x18e0] sm:$0xff]
        %v1179 = vld [vmem:[%s307 + $0x18e8] sm:$0xff]
        %v1180 = vld [vmem:[%s307 + $0x18f0] sm:$0xff]
        %v1181 = vld [vmem:[%s307 + $0x18f8] sm:$0xff]
        %v1182 = vld [vmem:[%s307 + $0x1900] sm:$0xff]
        %v1183 = vld [vmem:[%s307 + $0x1908] sm:$0xff]
        %v1184 = vld [vmem:[%s307 + $0x1910] sm:$0xff]
        %v1185 = vld [vmem:[%s307 + $0x1918] sm:$0xff]
        %v1186 = vld [vmem:[%s307 + $0x1920] sm:$0xff]
        %v1187 = vld [vmem:[%s307 + $0x1928] sm:$0xff]
        %v1188 = vld [vmem:[%s307 + $0x1930] sm:$0xff]
        %v1189 = vld [vmem:[%s307 + $0x1938] sm:$0xff]
        %v1190 = vld [vmem:[%s307 + $0x1940] sm:$0xff]
        %v1191 = vld [vmem:[%s307 + $0x1948] sm:$0xff]
        %v1192 = vld [vmem:[%s307 + $0x1950] sm:$0xff]
        %v1193 = vld [vmem:[%s307 + $0x1958] sm:$0xff]
        %v1194 = vld [vmem:[%s307 + $0x1960] sm:$0xff]
        %v1195 = vld [vmem:[%s307 + $0x1968] sm:$0xff]
        %v1196 = vld [vmem:[%s307 + $0x1970] sm:$0xff]
        %v1197 = vld [vmem:[%s307 + $0x1978] sm:$0xff]
        %v1198 = vld [vmem:[%s307 + $0x1980] sm:$0xff]
        %v1199 = vld [vmem:[%s307 + $0x1988] sm:$0xff]
        %v1200 = vld [vmem:[%s307 + $0x1990] sm:$0xff]
        %v1201 = vld [vmem:[%s307 + $0x1998] sm:$0xff]
        %v1202 = vld [vmem:[%s307 + $0x19a0] sm:$0xff]
        %v1203 = vld [vmem:[%s307 + $0x19a8] sm:$0xff]
        %v1204 = vld [vmem:[%s307 + $0x19b0] sm:$0xff]
        %v1205 = vld [vmem:[%s307 + $0x19b8] sm:$0xff]
        %v1206 = vld [vmem:[%s307 + $0x19c0] sm:$0xff]
        %v1207 = vld [vmem:[%s307 + $0x19c8] sm:$0xff]
        %v1208 = vld [vmem:[%s307 + $0x19d0] sm:$0xff]
        %v1209 = vld [vmem:[%s307 + $0x19d8] sm:$0xff]
        %v1210 = vld [vmem:[%s307 + $0x19e0] sm:$0xff]
        %v1211 = vld [vmem:[%s307 + $0x19e8] sm:$0xff]
        %v1212 = vld [vmem:[%s307 + $0x19f0] sm:$0xff]
        %v1213 = vld [vmem:[%s307 + $0x19f8] sm:$0xff]
        %v1214 = vld [vmem:[%s307 + $0x1a00] sm:$0xff]
        %v1215 = vld [vmem:[%s307 + $0x1a08] sm:$0xff]
        %v1216 = vld [vmem:[%s307 + $0x1a10] sm:$0xff]
        %v1217 = vld [vmem:[%s307 + $0x1a18] sm:$0xff]
        %v1218 = vld [vmem:[%s307 + $0x1a20] sm:$0xff]
        %v1219 = vld [vmem:[%s307 + $0x1a28] sm:$0xff]
        %v1220 = vld [vmem:[%s307 + $0x1a30] sm:$0xff]
        %v1221 = vld [vmem:[%s307 + $0x1a38] sm:$0xff]
        %v1222 = vld [vmem:[%s307 + $0x1a40] sm:$0xff]
        %v1223 = vld [vmem:[%s307 + $0x1a48] sm:$0xff]
        %v1224 = vld [vmem:[%s307 + $0x1a50] sm:$0xff]
        %v1225 = vld [vmem:[%s307 + $0x1a58] sm:$0xff]
        %v1226 = vld [vmem:[%s307 + $0x1a60] sm:$0xff]
        %v1227 = vld [vmem:[%s307 + $0x1a68] sm:$0xff]
        %v1228 = vld [vmem:[%s307 + $0x1a70] sm:$0xff]
        %v1229 = vld [vmem:[%s307 + $0x1a78] sm:$0xff]
        %v1230 = vld [vmem:[%s307 + $0x1a80] sm:$0xff]
        %v1231 = vld [vmem:[%s307 + $0x1a88] sm:$0xff]
        %v1232 = vld [vmem:[%s307 + $0x1a90] sm:$0xff]
        %v1233 = vld [vmem:[%s307 + $0x1a98] sm:$0xff]
        %v1234 = vld [vmem:[%s307 + $0x1aa0] sm:$0xff]
        %v1235 = vld [vmem:[%s307 + $0x1aa8] sm:$0xff]
        %v1236 = vld [vmem:[%s307 + $0x1ab0] sm:$0xff]
        %v1237 = vld [vmem:[%s307 + $0x1ab8] sm:$0xff]
        %v1238 = vld [vmem:[%s307 + $0x1ac0] sm:$0xff]
        %v1239 = vld [vmem:[%s307 + $0x1ac8] sm:$0xff]
        %v1240 = vld [vmem:[%s307 + $0x1ad0] sm:$0xff]
        %v1241 = vld [vmem:[%s307 + $0x1ad8] sm:$0xff]
        %v1242 = vld [vmem:[%s307 + $0x1ae0] sm:$0xff]
        %v1243 = vld [vmem:[%s307 + $0x1ae8] sm:$0xff]
        %v1244 = vld [vmem:[%s307 + $0x1af0] sm:$0xff]
        %v1245 = vld [vmem:[%s307 + $0x1af8] sm:$0xff]
        %v1246 = vld [vmem:[%s307 + $0x1b00] sm:$0xff]
        %v1247 = vld [vmem:[%s307 + $0x1b08] sm:$0xff]
        %v1248 = vld [vmem:[%s307 + $0x1b10] sm:$0xff]
        %v1249 = vld [vmem:[%s307 + $0x1b18] sm:$0xff]
        %v1250 = vld [vmem:[%s307 + $0x1b20] sm:$0xff]
        %v1251 = vld [vmem:[%s307 + $0x1b28] sm:$0xff]
        %v1252 = vld [vmem:[%s307 + $0x1b30] sm:$0xff]
        %v1253 = vld [vmem:[%s307 + $0x1b38] sm:$0xff]
        %v1254 = vld [vmem:[%s307 + $0x1b40] sm:$0xff]
        %v1255 = vld [vmem:[%s307 + $0x1b48] sm:$0xff]
        %v1256 = vld [vmem:[%s307 + $0x1b50] sm:$0xff]
        %v1257 = vld [vmem:[%s307 + $0x1b58] sm:$0xff]
        %v1258 = vld [vmem:[%s307 + $0x1b60] sm:$0xff]
        %v1259 = vld [vmem:[%s307 + $0x1b68] sm:$0xff]
        %v1260 = vld [vmem:[%s307 + $0x1b70] sm:$0xff]
        %v1261 = vld [vmem:[%s307 + $0x1b78] sm:$0xff]
        %v1262 = vld [vmem:[%s307 + $0x1b80] sm:$0xff]
        %v1263 = vld [vmem:[%s307 + $0x1b88] sm:$0xff]
        %v1264 = vld [vmem:[%s307 + $0x1b90] sm:$0xff]
        %v1265 = vld [vmem:[%s307 + $0x1b98] sm:$0xff]
        %v1266 = vld [vmem:[%s307 + $0x1ba0] sm:$0xff]
        %v1267 = vld [vmem:[%s307 + $0x1ba8] sm:$0xff]
        %v1268 = vld [vmem:[%s307 + $0x1bb0] sm:$0xff]
        %v1269 = vld [vmem:[%s307 + $0x1bb8] sm:$0xff]
        %v1270 = vld [vmem:[%s307 + $0x1bc0] sm:$0xff]
        %v1271 = vld [vmem:[%s307 + $0x1bc8] sm:$0xff]
        %v1272 = vld [vmem:[%s307 + $0x1bd0] sm:$0xff]
        %v1273 = vld [vmem:[%s307 + $0x1bd8] sm:$0xff]
        %v1274 = vld [vmem:[%s307 + $0x1be0] sm:$0xff]
        %v1275 = vld [vmem:[%s307 + $0x1be8] sm:$0xff]
        %v1276 = vld [vmem:[%s307 + $0x1bf0] sm:$0xff]
        %v1277 = vld [vmem:[%s307 + $0x1bf8] sm:$0xff]
        %v1278 = vld [vmem:[%s307 + $0x1c00] sm:$0xff]
        %v1279 = vld [vmem:[%s307 + $0x1c08] sm:$0xff]
        %v1280 = vld [vmem:[%s307 + $0x1c10] sm:$0xff]
        %v1281 = vld [vmem:[%s307 + $0x1c18] sm:$0xff]
        %v1282 = vld [vmem:[%s307 + $0x1c20] sm:$0xff]
        %v1283 = vld [vmem:[%s307 + $0x1c28] sm:$0xff]
        %v1284 = vld [vmem:[%s307 + $0x1c30] sm:$0xff]
        %v1285 = vld [vmem:[%s307 + $0x1c38] sm:$0xff]
        %v1286 = vld [vmem:[%s307 + $0x1c40] sm:$0xff]
        %v1287 = vld [vmem:[%s307 + $0x1c48] sm:$0xff]
        %v1288 = vld [vmem:[%s307 + $0x1c50] sm:$0xff]
        %v1289 = vld [vmem:[%s307 + $0x1c58] sm:$0xff]
        %v1290 = vld [vmem:[%s307 + $0x1c60] sm:$0xff]
        %v1291 = vld [vmem:[%s307 + $0x1c68] sm:$0xff]
        %v1292 = vld [vmem:[%s307 + $0x1c70] sm:$0xff]
        %v1293 = vld [vmem:[%s307 + $0x1c78] sm:$0xff]
        %v1294 = vld [vmem:[%s307 + $0x1c80] sm:$0xff]
        %v1295 = vld [vmem:[%s307 + $0x1c88] sm:$0xff]
        %v1296 = vld [vmem:[%s307 + $0x1c90] sm:$0xff]
        %v1297 = vld [vmem:[%s307 + $0x1c98] sm:$0xff]
        %v1298 = vld [vmem:[%s307 + $0x1ca0] sm:$0xff]
        %v1299 = vld [vmem:[%s307 + $0x1ca8] sm:$0xff]
        %v1300 = vld [vmem:[%s307 + $0x1cb0] sm:$0xff]
        %v1301 = vld [vmem:[%s307 + $0x1cb8] sm:$0xff]
        %v1302 = vld [vmem:[%s307 + $0x1cc0] sm:$0xff]
        %v1303 = vld [vmem:[%s307 + $0x1cc8] sm:$0xff]
        %v1304 = vld [vmem:[%s307 + $0x1cd0] sm:$0xff]
        %v1305 = vld [vmem:[%s307 + $0x1cd8] sm:$0xff]
        %v1306 = vld [vmem:[%s307 + $0x1ce0] sm:$0xff]
        %v1307 = vld [vmem:[%s307 + $0x1ce8] sm:$0xff]
        %v1308 = vld [vmem:[%s307 + $0x1cf0] sm:$0xff]
        %v1309 = vld [vmem:[%s307 + $0x1cf8] sm:$0xff]
        %v1310 = vld [vmem:[%s307 + $0x1d00] sm:$0xff]
        %v1311 = vld [vmem:[%s307 + $0x1d08] sm:$0xff]
        %v1312 = vld [vmem:[%s307 + $0x1d10] sm:$0xff]
        %v1313 = vld [vmem:[%s307 + $0x1d18] sm:$0xff]
        %v1314 = vld [vmem:[%s307 + $0x1d20] sm:$0xff]
        %v1315 = vld [vmem:[%s307 + $0x1d28] sm:$0xff]
        %v1316 = vld [vmem:[%s307 + $0x1d30] sm:$0xff]
        %v1317 = vld [vmem:[%s307 + $0x1d38] sm:$0xff]
        %v1318 = vld [vmem:[%s307 + $0x1d40] sm:$0xff]
        %v1319 = vld [vmem:[%s307 + $0x1d48] sm:$0xff]
        %v1320 = vld [vmem:[%s307 + $0x1d50] sm:$0xff]
        %v1321 = vld [vmem:[%s307 + $0x1d58] sm:$0xff]
        %v1322 = vld [vmem:[%s307 + $0x1d60] sm:$0xff]
        %v1323 = vld [vmem:[%s307 + $0x1d68] sm:$0xff]
        %v1324 = vld [vmem:[%s307 + $0x1d70] sm:$0xff]
        %v1325 = vld [vmem:[%s307 + $0x1d78] sm:$0xff]
        %v1326 = vld [vmem:[%s307 + $0x1d80] sm:$0xff]
        %v1327 = vld [vmem:[%s307 + $0x1d88] sm:$0xff]
        %v1328 = vld [vmem:[%s307 + $0x1d90] sm:$0xff]
        %v1329 = vld [vmem:[%s307 + $0x1d98] sm:$0xff]
        %v1330 = vld [vmem:[%s307 + $0x1da0] sm:$0xff]
        %v1331 = vld [vmem:[%s307 + $0x1da8] sm:$0xff]
        %v1332 = vld [vmem:[%s307 + $0x1db0] sm:$0xff]
        %v1333 = vld [vmem:[%s307 + $0x1db8] sm:$0xff]
        %v1334 = vld [vmem:[%s307 + $0x1dc0] sm:$0xff]
        %v1335 = vld [vmem:[%s307 + $0x1dc8] sm:$0xff]
        %v1336 = vld [vmem:[%s307 + $0x1dd0] sm:$0xff]
        %v1337 = vld [vmem:[%s307 + $0x1dd8] sm:$0xff]
        %v1338 = vld [vmem:[%s307 + $0x1de0] sm:$0xff]
        %v1339 = vld [vmem:[%s307 + $0x1de8] sm:$0xff]
        %v1340 = vld [vmem:[%s307 + $0x1df0] sm:$0xff]
        %v1341 = vld [vmem:[%s307 + $0x1df8] sm:$0xff]
        %v1342 = vld [vmem:[%s307 + $0x1e00] sm:$0xff]
        %v1343 = vld [vmem:[%s307 + $0x1e08] sm:$0xff]
        %v1344 = vld [vmem:[%s307 + $0x1e10] sm:$0xff]
        %v1345 = vld [vmem:[%s307 + $0x1e18] sm:$0xff]
        %v1346 = vld [vmem:[%s307 + $0x1e20] sm:$0xff]
        %v1347 = vld [vmem:[%s307 + $0x1e28] sm:$0xff]
        %v1348 = vld [vmem:[%s307 + $0x1e30] sm:$0xff]
        %v1349 = vld [vmem:[%s307 + $0x1e38] sm:$0xff]
        %v1350 = vld [vmem:[%s307 + $0x1e40] sm:$0xff]
        %v1351 = vld [vmem:[%s307 + $0x1e48] sm:$0xff]
        %v1352 = vld [vmem:[%s307 + $0x1e50] sm:$0xff]
        %v1353 = vld [vmem:[%s307 + $0x1e58] sm:$0xff]
        %v1354 = vld [vmem:[%s307 + $0x1e60] sm:$0xff]
        %v1355 = vld [vmem:[%s307 + $0x1e68] sm:$0xff]
        %v1356 = vld [vmem:[%s307 + $0x1e70] sm:$0xff]
        %v1357 = vld [vmem:[%s307 + $0x1e78] sm:$0xff]
        %v1358 = vld [vmem:[%s307 + $0x1e80] sm:$0xff]
        %v1359 = vld [vmem:[%s307 + $0x1e88] sm:$0xff]
        %v1360 = vld [vmem:[%s307 + $0x1e90] sm:$0xff]
        %v1361 = vld [vmem:[%s307 + $0x1e98] sm:$0xff]
        %v1362 = vld [vmem:[%s307 + $0x1ea0] sm:$0xff]
        %v1363 = vld [vmem:[%s307 + $0x1ea8] sm:$0xff]
        %v1364 = vld [vmem:[%s307 + $0x1eb0] sm:$0xff]
        %v1365 = vld [vmem:[%s307 + $0x1eb8] sm:$0xff]
        %v1366 = vld [vmem:[%s307 + $0x1ec0] sm:$0xff]
        %v1367 = vld [vmem:[%s307 + $0x1ec8] sm:$0xff]
        %v1368 = vld [vmem:[%s307 + $0x1ed0] sm:$0xff]
        %v1369 = vld [vmem:[%s307 + $0x1ed8] sm:$0xff]
        %v1370 = vld [vmem:[%s307 + $0x1ee0] sm:$0xff]
        %v1371 = vld [vmem:[%s307 + $0x1ee8] sm:$0xff]
        %v1372 = vld [vmem:[%s307 + $0x1ef0] sm:$0xff]
        %v1373 = vld [vmem:[%s307 + $0x1ef8] sm:$0xff]
        %v1374 = vld [vmem:[%s307 + $0x1f00] sm:$0xff]
        %v1375 = vld [vmem:[%s307 + $0x1f08] sm:$0xff]
        %v1376 = vld [vmem:[%s307 + $0x1f10] sm:$0xff]
        %v1377 = vld [vmem:[%s307 + $0x1f18] sm:$0xff]
        %v1378 = vld [vmem:[%s307 + $0x1f20] sm:$0xff]
        %v1379 = vld [vmem:[%s307 + $0x1f28] sm:$0xff]
        %v1380 = vld [vmem:[%s307 + $0x1f30] sm:$0xff]
        %v1381 = vld [vmem:[%s307 + $0x1f38] sm:$0xff]
        %v1382 = vld [vmem:[%s307 + $0x1f40] sm:$0xff]
        %v1383 = vld [vmem:[%s307 + $0x1f48] sm:$0xff]
        %v1384 = vld [vmem:[%s307 + $0x1f50] sm:$0xff]
        %v1385 = vld [vmem:[%s307 + $0x1f58] sm:$0xff]
        %v1386 = vld [vmem:[%s307 + $0x1f60] sm:$0xff]
        %v1387 = vld [vmem:[%s307 + $0x1f68] sm:$0xff]
        %v1388 = vld [vmem:[%s307 + $0x1f70] sm:$0xff]
        %v1389 = vld [vmem:[%s307 + $0x1f78] sm:$0xff]
        %v1390 = vld [vmem:[%s307 + $0x1f80] sm:$0xff]
        %v1391 = vld [vmem:[%s307 + $0x1f88] sm:$0xff]
        %v1392 = vld [vmem:[%s307 + $0x1f90] sm:$0xff]
        %v1393 = vld [vmem:[%s307 + $0x1f98] sm:$0xff]
        %v1394 = vld [vmem:[%s307 + $0x1fa0] sm:$0xff]
        %v1395 = vld [vmem:[%s307 + $0x1fa8] sm:$0xff]
        %v1396 = vld [vmem:[%s307 + $0x1fb0] sm:$0xff]
        %v1397 = vld [vmem:[%s307 + $0x1fb8] sm:$0xff]
        %v1398 = vld [vmem:[%s307 + $0x1fc0] sm:$0xff]
        %v1399 = vld [vmem:[%s307 + $0x1fc8] sm:$0xff]
        %v1400 = vld [vmem:[%s307 + $0x1fd0] sm:$0xff]
        %v1401 = vld [vmem:[%s307 + $0x1fd8] sm:$0xff]
        %v1402 = vld [vmem:[%s307 + $0x1fe0] sm:$0xff]
        %v1403 = vld [vmem:[%s307 + $0x1fe8] sm:$0xff]
        %v1404 = vld [vmem:[%s307 + $0x1ff0] sm:$0xff]
        %v1405 = vld [vmem:[%s307 + $0x1ff8] sm:$0xff]
        %v1406 = vld [vmem:[%s359] sm:$0xf]
        %v1408 = vperm.slane %v1406, 0
        %v1409 = vperm.slane %v1406, 1
        %v1410 = vperm.slane %v1406, 2
        %v1411 = vperm.slane %v1406, 3
        %1420 = vst [vmem:[#allocation1] ss:$4 sm:$0xff] %v378
        %s1421 = scalar_lea.vmem [#allocation1], 32
        %1422 = vst [vmem:[%s1421] ss:$4 sm:$0xff] %v379
        %v1423 = vld.sshfl [vmem:[#allocation1] sm:$0xff pattern:$0x73625140]
        %v1424 = vld.sshfl [vmem:[#allocation1 + $0x8] sm:$0xff pattern:$0x73625140]
        %v1425 = vld.sshfl [vmem:[#allocation1 + $0x10] sm:$0xff pattern:$0x73625140]
        %v1426 = vld.sshfl [vmem:[#allocation1 + $0x18] sm:$0xff pattern:$0x73625140]
        %v1427 = vld.sshfl [vmem:[#allocation1 + $0x20] sm:$0xff pattern:$0x73625140]
        %v1428 = vld.sshfl [vmem:[#allocation1 + $0x28] sm:$0xff pattern:$0x73625140]
        %v1429 = vld.sshfl [vmem:[#allocation1 + $0x30] sm:$0xff pattern:$0x73625140]
        %v1430 = vld.sshfl [vmem:[#allocation1 + $0x38] sm:$0xff pattern:$0x73625140]
        %1431 = vst [vmem:[#allocation1] ss:$4 sm:$0xff] %v380
        %1432 = vst [vmem:[%s1421] ss:$4 sm:$0xff] %v381
        %v1433 = vld.sshfl [vmem:[#allocation1] sm:$0xff pattern:$0x73625140]
        %v1434 = vld.sshfl [vmem:[#allocation1 + $0x8] sm:$0xff pattern:$0x73625140]
        %v1435 = vld.sshfl [vmem:[#allocation1 + $0x10] sm:$0xff pattern:$0x73625140]
        %v1436 = vld.sshfl [vmem:[#allocation1 + $0x18] sm:$0xff pattern:$0x73625140]
        %v1437 = vld.sshfl [vmem:[#allocation1 + $0x20] sm:$0xff pattern:$0x73625140]
        %v1438 = vld.sshfl [vmem:[#allocation1 + $0x28] sm:$0xff pattern:$0x73625140]
        %v1439 = vld.sshfl [vmem:[#allocation1 + $0x30] sm:$0xff pattern:$0x73625140]
        %v1440 = vld.sshfl [vmem:[#allocation1 + $0x38] sm:$0xff pattern:$0x73625140]
        %1457 = vmatpush.msra.mxu0 %v442
        %1458 = vmatpush.msra.mxu0 %v438
        %1459 = vmatpush.msra.mxu0 %v434
        %1460 = vmatpush.msra.mxu0 %v430
        %1461 = vmatpush.msra.mxu0 %v426
        %1462 = vmatpush.msra.mxu0 %v422
        %1463 = vmatpush.msra.mxu0 %v418
        %1464 = vmatpush.msra.mxu0 %v414
        %1465 = vmatpush.msra.mxu0 %v410
        %1466 = vmatpush.msra.mxu0 %v406
        %1467 = vmatpush.msra.mxu0 %v402
        %1468 = vmatpush.msra.mxu0 %v398
        %1469 = vmatpush.msra.mxu0 %v394
        %1470 = vmatpush.msra.mxu0 %v390
        %1471 = vmatpush.msra.mxu0 %v386
        %1472 = vmatpush.msra.mxu0 %v382
        %1473 = vmatmul.f32.gmra.mxu0 %v1423
        %v1474 = vpop.f32.mrf.mxu0
        %v1475 = vadd.f32 %v1408, %v1474
        %1476 = vdwg.mxu0
        %1477 = vmatpush.msra.mxu0 %v506
        %1478 = vmatpush.msra.mxu0 %v502
        %1479 = vmatpush.msra.mxu0 %v498
        %1480 = vmatpush.msra.mxu0 %v494
        %1481 = vmatpush.msra.mxu0 %v490
        %1482 = vmatpush.msra.mxu0 %v486
        %1483 = vmatpush.msra.mxu0 %v482
        %1484 = vmatpush.msra.mxu0 %v478
        %1485 = vmatpush.msra.mxu0 %v474
        %1486 = vmatpush.msra.mxu0 %v470
        %1487 = vmatpush.msra.mxu0 %v466
        %1488 = vmatpush.msra.mxu0 %v462
        %1489 = vmatpush.msra.mxu0 %v458
        %1490 = vmatpush.msra.mxu0 %v454
        %1491 = vmatpush.msra.mxu0 %v450
        %1492 = vmatpush.msra.mxu0 %v446
        %1493 = vmatmul.f32.gmra.mxu0 %v1424
        %v1494 = vpop.f32.mrf.mxu0
        %v1495 = vadd.f32 %v1475, %v1494
        %1496 = vdwg.mxu0
        %1497 = vmatpush.msra.mxu0 %v570
        %1498 = vmatpush.msra.mxu0 %v566
        %1499 = vmatpush.msra.mxu0 %v562
        %1500 = vmatpush.msra.mxu0 %v558
        %1501 = vmatpush.msra.mxu0 %v554
        %1502 = vmatpush.msra.mxu0 %v550
        %1503 = vmatpush.msra.mxu0 %v546
        %1504 = vmatpush.msra.mxu0 %v542
        %1505 = vmatpush.msra.mxu0 %v538
        %1506 = vmatpush.msra.mxu0 %v534
        %1507 = vmatpush.msra.mxu0 %v530
        %1508 = vmatpush.msra.mxu0 %v526
        %1509 = vmatpush.msra.mxu0 %v522
        %1510 = vmatpush.msra.mxu0 %v518
        %1511 = vmatpush.msra.mxu0 %v514
        %1512 = vmatpush.msra.mxu0 %v510
        %1513 = vmatmul.f32.gmra.mxu0 %v1425
        %v1514 = vpop.f32.mrf.mxu0
        %v1515 = vadd.f32 %v1495, %v1514
        %1516 = vdwg.mxu0
        %1517 = vmatpush.msra.mxu0 %v634
        %1518 = vmatpush.msra.mxu0 %v630
        %1519 = vmatpush.msra.mxu0 %v626
        %1520 = vmatpush.msra.mxu0 %v622
        %1521 = vmatpush.msra.mxu0 %v618
        %1522 = vmatpush.msra.mxu0 %v614
        %1523 = vmatpush.msra.mxu0 %v610
        %1524 = vmatpush.msra.mxu0 %v606
        %1525 = vmatpush.msra.mxu0 %v602
        %1526 = vmatpush.msra.mxu0 %v598
        %1527 = vmatpush.msra.mxu0 %v594
        %1528 = vmatpush.msra.mxu0 %v590
        %1529 = vmatpush.msra.mxu0 %v586
        %1530 = vmatpush.msra.mxu0 %v582
        %1531 = vmatpush.msra.mxu0 %v578
        %1532 = vmatpush.msra.mxu0 %v574
        %1533 = vmatmul.f32.gmra.mxu0 %v1426
        %v1534 = vpop.f32.mrf.mxu0
        %v1535 = vadd.f32 %v1515, %v1534
        %1536 = vdwg.mxu0
        %1537 = vmatpush.msra.mxu0 %v698
        %1538 = vmatpush.msra.mxu0 %v694
        %1539 = vmatpush.msra.mxu0 %v690
        %1540 = vmatpush.msra.mxu0 %v686
        %1541 = vmatpush.msra.mxu0 %v682
        %1542 = vmatpush.msra.mxu0 %v678
        %1543 = vmatpush.msra.mxu0 %v674
        %1544 = vmatpush.msra.mxu0 %v670
        %1545 = vmatpush.msra.mxu0 %v666
        %1546 = vmatpush.msra.mxu0 %v662
        %1547 = vmatpush.msra.mxu0 %v658
        %1548 = vmatpush.msra.mxu0 %v654
        %1549 = vmatpush.msra.mxu0 %v650
        %1550 = vmatpush.msra.mxu0 %v646
        %1551 = vmatpush.msra.mxu0 %v642
        %1552 = vmatpush.msra.mxu0 %v638
        %1553 = vmatmul.f32.gmra.mxu0 %v1427
        %v1554 = vpop.f32.mrf.mxu0
        %v1555 = vadd.f32 %v1535, %v1554
        %1556 = vdwg.mxu0
        %1557 = vmatpush.msra.mxu0 %v762
        %1558 = vmatpush.msra.mxu0 %v758
        %1559 = vmatpush.msra.mxu0 %v754
        %1560 = vmatpush.msra.mxu0 %v750
        %1561 = vmatpush.msra.mxu0 %v746
        %1562 = vmatpush.msra.mxu0 %v742
        %1563 = vmatpush.msra.mxu0 %v738
        %1564 = vmatpush.msra.mxu0 %v734
        %1565 = vmatpush.msra.mxu0 %v730
        %1566 = vmatpush.msra.mxu0 %v726
        %1567 = vmatpush.msra.mxu0 %v722
        %1568 = vmatpush.msra.mxu0 %v718
        %1569 = vmatpush.msra.mxu0 %v714
        %1570 = vmatpush.msra.mxu0 %v710
        %1571 = vmatpush.msra.mxu0 %v706
        %1572 = vmatpush.msra.mxu0 %v702
        %1573 = vmatmul.f32.gmra.mxu0 %v1428
        %v1574 = vpop.f32.mrf.mxu0
        %v1575 = vadd.f32 %v1555, %v1574
        %1576 = vdwg.mxu0
        %1577 = vmatpush.msra.mxu0 %v826
        %1578 = vmatpush.msra.mxu0 %v822
        %1579 = vmatpush.msra.mxu0 %v818
        %1580 = vmatpush.msra.mxu0 %v814
        %1581 = vmatpush.msra.mxu0 %v810
        %1582 = vmatpush.msra.mxu0 %v806
        %1583 = vmatpush.msra.mxu0 %v802
        %1584 = vmatpush.msra.mxu0 %v798
        %1585 = vmatpush.msra.mxu0 %v794
        %1586 = vmatpush.msra.mxu0 %v790
        %1587 = vmatpush.msra.mxu0 %v786
        %1588 = vmatpush.msra.mxu0 %v782
        %1589 = vmatpush.msra.mxu0 %v778
        %1590 = vmatpush.msra.mxu0 %v774
        %1591 = vmatpush.msra.mxu0 %v770
        %1592 = vmatpush.msra.mxu0 %v766
        %1593 = vmatmul.f32.gmra.mxu0 %v1429
        %v1594 = vpop.f32.mrf.mxu0
        %v1595 = vadd.f32 %v1575, %v1594
        %1596 = vdwg.mxu0
        %1597 = vmatpush.msra.mxu0 %v890
        %1598 = vmatpush.msra.mxu0 %v886
        %1599 = vmatpush.msra.mxu0 %v882
        %1600 = vmatpush.msra.mxu0 %v878
        %1601 = vmatpush.msra.mxu0 %v874
        %1602 = vmatpush.msra.mxu0 %v870
        %1603 = vmatpush.msra.mxu0 %v866
        %1604 = vmatpush.msra.mxu0 %v862
        %1605 = vmatpush.msra.mxu0 %v858
        %1606 = vmatpush.msra.mxu0 %v854
        %1607 = vmatpush.msra.mxu0 %v850
        %1608 = vmatpush.msra.mxu0 %v846
        %1609 = vmatpush.msra.mxu0 %v842
        %1610 = vmatpush.msra.mxu0 %v838
        %1611 = vmatpush.msra.mxu0 %v834
        %1612 = vmatpush.msra.mxu0 %v830
        %1613 = vmatmul.f32.gmra.mxu0 %v1430
        %v1614 = vpop.f32.mrf.mxu0
        %v1615 = vadd.f32 %v1595, %v1614
        %1616 = vdwg.mxu0
        %1617 = vmatpush.msra.mxu0 %v954
        %1618 = vmatpush.msra.mxu0 %v950
        %1619 = vmatpush.msra.mxu0 %v946
        %1620 = vmatpush.msra.mxu0 %v942
        %1621 = vmatpush.msra.mxu0 %v938
        %1622 = vmatpush.msra.mxu0 %v934
        %1623 = vmatpush.msra.mxu0 %v930
        %1624 = vmatpush.msra.mxu0 %v926
        %1625 = vmatpush.msra.mxu0 %v922
        %1626 = vmatpush.msra.mxu0 %v918
        %1627 = vmatpush.msra.mxu0 %v914
        %1628 = vmatpush.msra.mxu0 %v910
        %1629 = vmatpush.msra.mxu0 %v906
        %1630 = vmatpush.msra.mxu0 %v902
        %1631 = vmatpush.msra.mxu0 %v898
        %1632 = vmatpush.msra.mxu0 %v894
        %1633 = vmatmul.f32.gmra.mxu0 %v1433
        %v1634 = vpop.f32.mrf.mxu0
        %v1635 = vadd.f32 %v1615, %v1634
        %1636 = vdwg.mxu0
        %1637 = vmatpush.msra.mxu0 %v1018
        %1638 = vmatpush.msra.mxu0 %v1014
        %1639 = vmatpush.msra.mxu0 %v1010
        %1640 = vmatpush.msra.mxu0 %v1006
        %1641 = vmatpush.msra.mxu0 %v1002
        %1642 = vmatpush.msra.mxu0 %v998
        %1643 = vmatpush.msra.mxu0 %v994
        %1644 = vmatpush.msra.mxu0 %v990
        %1645 = vmatpush.msra.mxu0 %v986
        %1646 = vmatpush.msra.mxu0 %v982
        %1647 = vmatpush.msra.mxu0 %v978
        %1648 = vmatpush.msra.mxu0 %v974
        %1649 = vmatpush.msra.mxu0 %v970
        %1650 = vmatpush.msra.mxu0 %v966
        %1651 = vmatpush.msra.mxu0 %v962
        %1652 = vmatpush.msra.mxu0 %v958
        %1653 = vmatmul.f32.gmra.mxu0 %v1434
        %v1654 = vpop.f32.mrf.mxu0
        %v1655 = vadd.f32 %v1635, %v1654
        %1656 = vdwg.mxu0
        %1657 = vmatpush.msra.mxu0 %v1082
        %1658 = vmatpush.msra.mxu0 %v1078
        %1659 = vmatpush.msra.mxu0 %v1074
        %1660 = vmatpush.msra.mxu0 %v1070
        %1661 = vmatpush.msra.mxu0 %v1066
        %1662 = vmatpush.msra.mxu0 %v1062
        %1663 = vmatpush.msra.mxu0 %v1058
        %1664 = vmatpush.msra.mxu0 %v1054
        %1665 = vmatpush.msra.mxu0 %v1050
        %1666 = vmatpush.msra.mxu0 %v1046
        %1667 = vmatpush.msra.mxu0 %v1042
        %1668 = vmatpush.msra.mxu0 %v1038
        %1669 = vmatpush.msra.mxu0 %v1034
        %1670 = vmatpush.msra.mxu0 %v1030
        %1671 = vmatpush.msra.mxu0 %v1026
        %1672 = vmatpush.msra.mxu0 %v1022
        %1673 = vmatmul.f32.gmra.mxu0 %v1435
        %v1674 = vpop.f32.mrf.mxu0
        %v1675 = vadd.f32 %v1655, %v1674
        %1676 = vdwg.mxu0
        %1677 = vmatpush.msra.mxu0 %v1146
        %1678 = vmatpush.msra.mxu0 %v1142
        %1679 = vmatpush.msra.mxu0 %v1138
        %1680 = vmatpush.msra.mxu0 %v1134
        %1681 = vmatpush.msra.mxu0 %v1130
        %1682 = vmatpush.msra.mxu0 %v1126
        %1683 = vmatpush.msra.mxu0 %v1122
        %1684 = vmatpush.msra.mxu0 %v1118
        %1685 = vmatpush.msra.mxu0 %v1114
        %1686 = vmatpush.msra.mxu0 %v1110
        %1687 = vmatpush.msra.mxu0 %v1106
        %1688 = vmatpush.msra.mxu0 %v1102
        %1689 = vmatpush.msra.mxu0 %v1098
        %1690 = vmatpush.msra.mxu0 %v1094
        %1691 = vmatpush.msra.mxu0 %v1090
        %1692 = vmatpush.msra.mxu0 %v1086
        %1693 = vmatmul.f32.gmra.mxu0 %v1436
        %v1694 = vpop.f32.mrf.mxu0
        %v1695 = vadd.f32 %v1675, %v1694
        %1696 = vdwg.mxu0
        %1697 = vmatpush.msra.mxu0 %v1210
        %1698 = vmatpush.msra.mxu0 %v1206
        %1699 = vmatpush.msra.mxu0 %v1202
        %1700 = vmatpush.msra.mxu0 %v1198
        %1701 = vmatpush.msra.mxu0 %v1194
        %1702 = vmatpush.msra.mxu0 %v1190
        %1703 = vmatpush.msra.mxu0 %v1186
        %1704 = vmatpush.msra.mxu0 %v1182
        %1705 = vmatpush.msra.mxu0 %v1178
        %1706 = vmatpush.msra.mxu0 %v1174
        %1707 = vmatpush.msra.mxu0 %v1170
        %1708 = vmatpush.msra.mxu0 %v1166
        %1709 = vmatpush.msra.mxu0 %v1162
        %1710 = vmatpush.msra.mxu0 %v1158
        %1711 = vmatpush.msra.mxu0 %v1154
        %1712 = vmatpush.msra.mxu0 %v1150
        %1713 = vmatmul.f32.gmra.mxu0 %v1437
        %v1714 = vpop.f32.mrf.mxu0
        %v1715 = vadd.f32 %v1695, %v1714
        %1716 = vdwg.mxu0
        %1717 = vmatpush.msra.mxu0 %v1274
        %1718 = vmatpush.msra.mxu0 %v1270
        %1719 = vmatpush.msra.mxu0 %v1266
        %1720 = vmatpush.msra.mxu0 %v1262
        %1721 = vmatpush.msra.mxu0 %v1258
        %1722 = vmatpush.msra.mxu0 %v1254
        %1723 = vmatpush.msra.mxu0 %v1250
        %1724 = vmatpush.msra.mxu0 %v1246
        %1725 = vmatpush.msra.mxu0 %v1242
        %1726 = vmatpush.msra.mxu0 %v1238
        %1727 = vmatpush.msra.mxu0 %v1234
        %1728 = vmatpush.msra.mxu0 %v1230
        %1729 = vmatpush.msra.mxu0 %v1226
        %1730 = vmatpush.msra.mxu0 %v1222
        %1731 = vmatpush.msra.mxu0 %v1218
        %1732 = vmatpush.msra.mxu0 %v1214
        %1733 = vmatmul.f32.gmra.mxu0 %v1438
        %v1734 = vpop.f32.mrf.mxu0
        %v1735 = vadd.f32 %v1715, %v1734
        %1736 = vdwg.mxu0
        %1737 = vmatpush.msra.mxu0 %v1338
        %1738 = vmatpush.msra.mxu0 %v1334
        %1739 = vmatpush.msra.mxu0 %v1330
        %1740 = vmatpush.msra.mxu0 %v1326
        %1741 = vmatpush.msra.mxu0 %v1322
        %1742 = vmatpush.msra.mxu0 %v1318
        %1743 = vmatpush.msra.mxu0 %v1314
        %1744 = vmatpush.msra.mxu0 %v1310
        %1745 = vmatpush.msra.mxu0 %v1306
        %1746 = vmatpush.msra.mxu0 %v1302
        %1747 = vmatpush.msra.mxu0 %v1298
        %1748 = vmatpush.msra.mxu0 %v1294
        %1749 = vmatpush.msra.mxu0 %v1290
        %1750 = vmatpush.msra.mxu0 %v1286
        %1751 = vmatpush.msra.mxu0 %v1282
        %1752 = vmatpush.msra.mxu0 %v1278
        %1753 = vmatmul.f32.gmra.mxu0 %v1439
        %v1754 = vpop.f32.mrf.mxu0
        %v1755 = vadd.f32 %v1735, %v1754
        %1756 = vdwg.mxu0
        %1757 = vmatpush.msra.mxu0 %v1402
        %1758 = vmatpush.msra.mxu0 %v1398
        %1759 = vmatpush.msra.mxu0 %v1394
        %1760 = vmatpush.msra.mxu0 %v1390
        %1761 = vmatpush.msra.mxu0 %v1386
        %1762 = vmatpush.msra.mxu0 %v1382
        %1763 = vmatpush.msra.mxu0 %v1378
        %1764 = vmatpush.msra.mxu0 %v1374
        %1765 = vmatpush.msra.mxu0 %v1370
        %1766 = vmatpush.msra.mxu0 %v1366
        %1767 = vmatpush.msra.mxu0 %v1362
        %1768 = vmatpush.msra.mxu0 %v1358
        %1769 = vmatpush.msra.mxu0 %v1354
        %1770 = vmatpush.msra.mxu0 %v1350
        %1771 = vmatpush.msra.mxu0 %v1346
        %1772 = vmatpush.msra.mxu0 %v1342
        %1773 = vmatmul.f32.gmra.mxu0 %v1440
        %v1774 = vpop.f32.mrf.mxu0
        %v1775 = vadd.f32 %v1755, %v1774
        %1776 = vdwg.mxu0
        %1777 = vmatpush.msra.mxu0 %v443
        %1778 = vmatpush.msra.mxu0 %v439
        %1779 = vmatpush.msra.mxu0 %v435
        %1780 = vmatpush.msra.mxu0 %v431
        %1781 = vmatpush.msra.mxu0 %v427
        %1782 = vmatpush.msra.mxu0 %v423
        %1783 = vmatpush.msra.mxu0 %v419
        %1784 = vmatpush.msra.mxu0 %v415
        %1785 = vmatpush.msra.mxu0 %v411
        %1786 = vmatpush.msra.mxu0 %v407
        %1787 = vmatpush.msra.mxu0 %v403
        %1788 = vmatpush.msra.mxu0 %v399
        %1789 = vmatpush.msra.mxu0 %v395
        %1790 = vmatpush.msra.mxu0 %v391
        %1791 = vmatpush.msra.mxu0 %v387
        %1792 = vmatpush.msra.mxu0 %v383
        %1793 = vmatmul.f32.gmra.mxu0 %v1423
        %v1794 = vpop.f32.mrf.mxu0
        %v1795 = vadd.f32 %v1409, %v1794
        %1796 = vdwg.mxu0
        %1797 = vmatpush.msra.mxu0 %v507
        %1798 = vmatpush.msra.mxu0 %v503
        %1799 = vmatpush.msra.mxu0 %v499
        %1800 = vmatpush.msra.mxu0 %v495
        %1801 = vmatpush.msra.mxu0 %v491
        %1802 = vmatpush.msra.mxu0 %v487
        %1803 = vmatpush.msra.mxu0 %v483
        %1804 = vmatpush.msra.mxu0 %v479
        %1805 = vmatpush.msra.mxu0 %v475
        %1806 = vmatpush.msra.mxu0 %v471
        %1807 = vmatpush.msra.mxu0 %v467
        %1808 = vmatpush.msra.mxu0 %v463
        %1809 = vmatpush.msra.mxu0 %v459
        %1810 = vmatpush.msra.mxu0 %v455
        %1811 = vmatpush.msra.mxu0 %v451
        %1812 = vmatpush.msra.mxu0 %v447
        %1813 = vmatmul.f32.gmra.mxu0 %v1424
        %v1814 = vpop.f32.mrf.mxu0
        %v1815 = vadd.f32 %v1795, %v1814
        %1816 = vdwg.mxu0
        %1817 = vmatpush.msra.mxu0 %v571
        %1818 = vmatpush.msra.mxu0 %v567
        %1819 = vmatpush.msra.mxu0 %v563
        %1820 = vmatpush.msra.mxu0 %v559
        %1821 = vmatpush.msra.mxu0 %v555
        %1822 = vmatpush.msra.mxu0 %v551
        %1823 = vmatpush.msra.mxu0 %v547
        %1824 = vmatpush.msra.mxu0 %v543
        %1825 = vmatpush.msra.mxu0 %v539
        %1826 = vmatpush.msra.mxu0 %v535
        %1827 = vmatpush.msra.mxu0 %v531
        %1828 = vmatpush.msra.mxu0 %v527
        %1829 = vmatpush.msra.mxu0 %v523
        %1830 = vmatpush.msra.mxu0 %v519
        %1831 = vmatpush.msra.mxu0 %v515
        %1832 = vmatpush.msra.mxu0 %v511
        %1833 = vmatmul.f32.gmra.mxu0 %v1425
        %v1834 = vpop.f32.mrf.mxu0
        %v1835 = vadd.f32 %v1815, %v1834
        %1836 = vdwg.mxu0
        %1837 = vmatpush.msra.mxu0 %v635
        %1838 = vmatpush.msra.mxu0 %v631
        %1839 = vmatpush.msra.mxu0 %v627
        %1840 = vmatpush.msra.mxu0 %v623
        %1841 = vmatpush.msra.mxu0 %v619
        %1842 = vmatpush.msra.mxu0 %v615
        %1843 = vmatpush.msra.mxu0 %v611
        %1844 = vmatpush.msra.mxu0 %v607
        %1845 = vmatpush.msra.mxu0 %v603
        %1846 = vmatpush.msra.mxu0 %v599
        %1847 = vmatpush.msra.mxu0 %v595
        %1848 = vmatpush.msra.mxu0 %v591
        %1849 = vmatpush.msra.mxu0 %v587
        %1850 = vmatpush.msra.mxu0 %v583
        %1851 = vmatpush.msra.mxu0 %v579
        %1852 = vmatpush.msra.mxu0 %v575
        %1853 = vmatmul.f32.gmra.mxu0 %v1426
        %v1854 = vpop.f32.mrf.mxu0
        %v1855 = vadd.f32 %v1835, %v1854
        %1856 = vdwg.mxu0
        %1857 = vmatpush.msra.mxu0 %v699
        %1858 = vmatpush.msra.mxu0 %v695
        %1859 = vmatpush.msra.mxu0 %v691
        %1860 = vmatpush.msra.mxu0 %v687
        %1861 = vmatpush.msra.mxu0 %v683
        %1862 = vmatpush.msra.mxu0 %v679
        %1863 = vmatpush.msra.mxu0 %v675
        %1864 = vmatpush.msra.mxu0 %v671
        %1865 = vmatpush.msra.mxu0 %v667
        %1866 = vmatpush.msra.mxu0 %v663
        %1867 = vmatpush.msra.mxu0 %v659
        %1868 = vmatpush.msra.mxu0 %v655
        %1869 = vmatpush.msra.mxu0 %v651
        %1870 = vmatpush.msra.mxu0 %v647
        %1871 = vmatpush.msra.mxu0 %v643
        %1872 = vmatpush.msra.mxu0 %v639
        %1873 = vmatmul.f32.gmra.mxu0 %v1427
        %v1874 = vpop.f32.mrf.mxu0
        %v1875 = vadd.f32 %v1855, %v1874
        %1876 = vdwg.mxu0
        %1877 = vmatpush.msra.mxu0 %v763
        %1878 = vmatpush.msra.mxu0 %v759
        %1879 = vmatpush.msra.mxu0 %v755
        %1880 = vmatpush.msra.mxu0 %v751
        %1881 = vmatpush.msra.mxu0 %v747
        %1882 = vmatpush.msra.mxu0 %v743
        %1883 = vmatpush.msra.mxu0 %v739
        %1884 = vmatpush.msra.mxu0 %v735
        %1885 = vmatpush.msra.mxu0 %v731
        %1886 = vmatpush.msra.mxu0 %v727
        %1887 = vmatpush.msra.mxu0 %v723
        %1888 = vmatpush.msra.mxu0 %v719
        %1889 = vmatpush.msra.mxu0 %v715
        %1890 = vmatpush.msra.mxu0 %v711
        %1891 = vmatpush.msra.mxu0 %v707
        %1892 = vmatpush.msra.mxu0 %v703
        %1893 = vmatmul.f32.gmra.mxu0 %v1428
        %v1894 = vpop.f32.mrf.mxu0
        %v1895 = vadd.f32 %v1875, %v1894
        %1896 = vdwg.mxu0
        %1897 = vmatpush.msra.mxu0 %v827
        %1898 = vmatpush.msra.mxu0 %v823
        %1899 = vmatpush.msra.mxu0 %v819
        %1900 = vmatpush.msra.mxu0 %v815
        %1901 = vmatpush.msra.mxu0 %v811
        %1902 = vmatpush.msra.mxu0 %v807
        %1903 = vmatpush.msra.mxu0 %v803
        %1904 = vmatpush.msra.mxu0 %v799
        %1905 = vmatpush.msra.mxu0 %v795
        %1906 = vmatpush.msra.mxu0 %v791
        %1907 = vmatpush.msra.mxu0 %v787
        %1908 = vmatpush.msra.mxu0 %v783
        %1909 = vmatpush.msra.mxu0 %v779
        %1910 = vmatpush.msra.mxu0 %v775
        %1911 = vmatpush.msra.mxu0 %v771
        %1912 = vmatpush.msra.mxu0 %v767
        %1913 = vmatmul.f32.gmra.mxu0 %v1429
        %v1914 = vpop.f32.mrf.mxu0
        %v1915 = vadd.f32 %v1895, %v1914
        %1916 = vdwg.mxu0
        %1917 = vmatpush.msra.mxu0 %v891
        %1918 = vmatpush.msra.mxu0 %v887
        %1919 = vmatpush.msra.mxu0 %v883
        %1920 = vmatpush.msra.mxu0 %v879
        %1921 = vmatpush.msra.mxu0 %v875
        %1922 = vmatpush.msra.mxu0 %v871
        %1923 = vmatpush.msra.mxu0 %v867
        %1924 = vmatpush.msra.mxu0 %v863
        %1925 = vmatpush.msra.mxu0 %v859
        %1926 = vmatpush.msra.mxu0 %v855
        %1927 = vmatpush.msra.mxu0 %v851
        %1928 = vmatpush.msra.mxu0 %v847
        %1929 = vmatpush.msra.mxu0 %v843
        %1930 = vmatpush.msra.mxu0 %v839
        %1931 = vmatpush.msra.mxu0 %v835
        %1932 = vmatpush.msra.mxu0 %v831
        %1933 = vmatmul.f32.gmra.mxu0 %v1430
        %v1934 = vpop.f32.mrf.mxu0
        %v1935 = vadd.f32 %v1915, %v1934
        %1936 = vdwg.mxu0
        %1937 = vmatpush.msra.mxu0 %v955
        %1938 = vmatpush.msra.mxu0 %v951
        %1939 = vmatpush.msra.mxu0 %v947
        %1940 = vmatpush.msra.mxu0 %v943
        %1941 = vmatpush.msra.mxu0 %v939
        %1942 = vmatpush.msra.mxu0 %v935
        %1943 = vmatpush.msra.mxu0 %v931
        %1944 = vmatpush.msra.mxu0 %v927
        %1945 = vmatpush.msra.mxu0 %v923
        %1946 = vmatpush.msra.mxu0 %v919
        %1947 = vmatpush.msra.mxu0 %v915
        %1948 = vmatpush.msra.mxu0 %v911
        %1949 = vmatpush.msra.mxu0 %v907
        %1950 = vmatpush.msra.mxu0 %v903
        %1951 = vmatpush.msra.mxu0 %v899
        %1952 = vmatpush.msra.mxu0 %v895
        %1953 = vmatmul.f32.gmra.mxu0 %v1433
        %v1954 = vpop.f32.mrf.mxu0
        %v1955 = vadd.f32 %v1935, %v1954
        %1956 = vdwg.mxu0
        %1957 = vmatpush.msra.mxu0 %v1019
        %1958 = vmatpush.msra.mxu0 %v1015
        %1959 = vmatpush.msra.mxu0 %v1011
        %1960 = vmatpush.msra.mxu0 %v1007
        %1961 = vmatpush.msra.mxu0 %v1003
        %1962 = vmatpush.msra.mxu0 %v999
        %1963 = vmatpush.msra.mxu0 %v995
        %1964 = vmatpush.msra.mxu0 %v991
        %1965 = vmatpush.msra.mxu0 %v987
        %1966 = vmatpush.msra.mxu0 %v983
        %1967 = vmatpush.msra.mxu0 %v979
        %1968 = vmatpush.msra.mxu0 %v975
        %1969 = vmatpush.msra.mxu0 %v971
        %1970 = vmatpush.msra.mxu0 %v967
        %1971 = vmatpush.msra.mxu0 %v963
        %1972 = vmatpush.msra.mxu0 %v959
        %1973 = vmatmul.f32.gmra.mxu0 %v1434
        %v1974 = vpop.f32.mrf.mxu0
        %v1975 = vadd.f32 %v1955, %v1974
        %1976 = vdwg.mxu0
        %1977 = vmatpush.msra.mxu0 %v1083
        %1978 = vmatpush.msra.mxu0 %v1079
        %1979 = vmatpush.msra.mxu0 %v1075
        %1980 = vmatpush.msra.mxu0 %v1071
        %1981 = vmatpush.msra.mxu0 %v1067
        %1982 = vmatpush.msra.mxu0 %v1063
        %1983 = vmatpush.msra.mxu0 %v1059
        %1984 = vmatpush.msra.mxu0 %v1055
        %1985 = vmatpush.msra.mxu0 %v1051
        %1986 = vmatpush.msra.mxu0 %v1047
        %1987 = vmatpush.msra.mxu0 %v1043
        %1988 = vmatpush.msra.mxu0 %v1039
        %1989 = vmatpush.msra.mxu0 %v1035
        %1990 = vmatpush.msra.mxu0 %v1031
        %1991 = vmatpush.msra.mxu0 %v1027
        %1992 = vmatpush.msra.mxu0 %v1023
        %1993 = vmatmul.f32.gmra.mxu0 %v1435
        %v1994 = vpop.f32.mrf.mxu0
        %v1995 = vadd.f32 %v1975, %v1994
        %1996 = vdwg.mxu0
        %1997 = vmatpush.msra.mxu0 %v1147
        %1998 = vmatpush.msra.mxu0 %v1143
        %1999 = vmatpush.msra.mxu0 %v1139
        %2000 = vmatpush.msra.mxu0 %v1135
        %2001 = vmatpush.msra.mxu0 %v1131
        %2002 = vmatpush.msra.mxu0 %v1127
        %2003 = vmatpush.msra.mxu0 %v1123
        %2004 = vmatpush.msra.mxu0 %v1119
        %2005 = vmatpush.msra.mxu0 %v1115
        %2006 = vmatpush.msra.mxu0 %v1111
        %2007 = vmatpush.msra.mxu0 %v1107
        %2008 = vmatpush.msra.mxu0 %v1103
        %2009 = vmatpush.msra.mxu0 %v1099
        %2010 = vmatpush.msra.mxu0 %v1095
        %2011 = vmatpush.msra.mxu0 %v1091
        %2012 = vmatpush.msra.mxu0 %v1087
        %2013 = vmatmul.f32.gmra.mxu0 %v1436
        %v2014 = vpop.f32.mrf.mxu0
        %v2015 = vadd.f32 %v1995, %v2014
        %2016 = vdwg.mxu0
        %2017 = vmatpush.msra.mxu0 %v1211
        %2018 = vmatpush.msra.mxu0 %v1207
        %2019 = vmatpush.msra.mxu0 %v1203
        %2020 = vmatpush.msra.mxu0 %v1199
        %2021 = vmatpush.msra.mxu0 %v1195
        %2022 = vmatpush.msra.mxu0 %v1191
        %2023 = vmatpush.msra.mxu0 %v1187
        %2024 = vmatpush.msra.mxu0 %v1183
        %2025 = vmatpush.msra.mxu0 %v1179
        %2026 = vmatpush.msra.mxu0 %v1175
        %2027 = vmatpush.msra.mxu0 %v1171
        %2028 = vmatpush.msra.mxu0 %v1167
        %2029 = vmatpush.msra.mxu0 %v1163
        %2030 = vmatpush.msra.mxu0 %v1159
        %2031 = vmatpush.msra.mxu0 %v1155
        %2032 = vmatpush.msra.mxu0 %v1151
        %2033 = vmatmul.f32.gmra.mxu0 %v1437
        %v2034 = vpop.f32.mrf.mxu0
        %v2035 = vadd.f32 %v2015, %v2034
        %2036 = vdwg.mxu0
        %2037 = vmatpush.msra.mxu0 %v1275
        %2038 = vmatpush.msra.mxu0 %v1271
        %2039 = vmatpush.msra.mxu0 %v1267
        %2040 = vmatpush.msra.mxu0 %v1263
        %2041 = vmatpush.msra.mxu0 %v1259
        %2042 = vmatpush.msra.mxu0 %v1255
        %2043 = vmatpush.msra.mxu0 %v1251
        %2044 = vmatpush.msra.mxu0 %v1247
        %2045 = vmatpush.msra.mxu0 %v1243
        %2046 = vmatpush.msra.mxu0 %v1239
        %2047 = vmatpush.msra.mxu0 %v1235
        %2048 = vmatpush.msra.mxu0 %v1231
        %2049 = vmatpush.msra.mxu0 %v1227
        %2050 = vmatpush.msra.mxu0 %v1223
        %2051 = vmatpush.msra.mxu0 %v1219
        %2052 = vmatpush.msra.mxu0 %v1215
        %2053 = vmatmul.f32.gmra.mxu0 %v1438
        %v2054 = vpop.f32.mrf.mxu0
        %v2055 = vadd.f32 %v2035, %v2054
        %2056 = vdwg.mxu0
        %2057 = vmatpush.msra.mxu0 %v1339
        %2058 = vmatpush.msra.mxu0 %v1335
        %2059 = vmatpush.msra.mxu0 %v1331
        %2060 = vmatpush.msra.mxu0 %v1327
        %2061 = vmatpush.msra.mxu0 %v1323
        %2062 = vmatpush.msra.mxu0 %v1319
        %2063 = vmatpush.msra.mxu0 %v1315
        %2064 = vmatpush.msra.mxu0 %v1311
        %2065 = vmatpush.msra.mxu0 %v1307
        %2066 = vmatpush.msra.mxu0 %v1303
        %2067 = vmatpush.msra.mxu0 %v1299
        %2068 = vmatpush.msra.mxu0 %v1295
        %2069 = vmatpush.msra.mxu0 %v1291
        %2070 = vmatpush.msra.mxu0 %v1287
        %2071 = vmatpush.msra.mxu0 %v1283
        %2072 = vmatpush.msra.mxu0 %v1279
        %2073 = vmatmul.f32.gmra.mxu0 %v1439
        %v2074 = vpop.f32.mrf.mxu0
        %v2075 = vadd.f32 %v2055, %v2074
        %2076 = vdwg.mxu0
        %2077 = vmatpush.msra.mxu0 %v1403
        %2078 = vmatpush.msra.mxu0 %v1399
        %2079 = vmatpush.msra.mxu0 %v1395
        %2080 = vmatpush.msra.mxu0 %v1391
        %2081 = vmatpush.msra.mxu0 %v1387
        %2082 = vmatpush.msra.mxu0 %v1383
        %2083 = vmatpush.msra.mxu0 %v1379
        %2084 = vmatpush.msra.mxu0 %v1375
        %2085 = vmatpush.msra.mxu0 %v1371
        %2086 = vmatpush.msra.mxu0 %v1367
        %2087 = vmatpush.msra.mxu0 %v1363
        %2088 = vmatpush.msra.mxu0 %v1359
        %2089 = vmatpush.msra.mxu0 %v1355
        %2090 = vmatpush.msra.mxu0 %v1351
        %2091 = vmatpush.msra.mxu0 %v1347
        %2092 = vmatpush.msra.mxu0 %v1343
        %2093 = vmatmul.f32.gmra.mxu0 %v1440
        %v2094 = vpop.f32.mrf.mxu0
        %v2095 = vadd.f32 %v2075, %v2094
        %2096 = vdwg.mxu0
        %2097 = vmatpush.msra.mxu0 %v444
        %2098 = vmatpush.msra.mxu0 %v440
        %2099 = vmatpush.msra.mxu0 %v436
        %2100 = vmatpush.msra.mxu0 %v432
        %2101 = vmatpush.msra.mxu0 %v428
        %2102 = vmatpush.msra.mxu0 %v424
        %2103 = vmatpush.msra.mxu0 %v420
        %2104 = vmatpush.msra.mxu0 %v416
        %2105 = vmatpush.msra.mxu0 %v412
        %2106 = vmatpush.msra.mxu0 %v408
        %2107 = vmatpush.msra.mxu0 %v404
        %2108 = vmatpush.msra.mxu0 %v400
        %2109 = vmatpush.msra.mxu0 %v396
        %2110 = vmatpush.msra.mxu0 %v392
        %2111 = vmatpush.msra.mxu0 %v388
        %2112 = vmatpush.msra.mxu0 %v384
        %2113 = vmatmul.f32.gmra.mxu0 %v1423
        %v2114 = vpop.f32.mrf.mxu0
        %v2115 = vadd.f32 %v1410, %v2114
        %2116 = vdwg.mxu0
        %2117 = vmatpush.msra.mxu0 %v508
        %2118 = vmatpush.msra.mxu0 %v504
        %2119 = vmatpush.msra.mxu0 %v500
        %2120 = vmatpush.msra.mxu0 %v496
        %2121 = vmatpush.msra.mxu0 %v492
        %2122 = vmatpush.msra.mxu0 %v488
        %2123 = vmatpush.msra.mxu0 %v484
        %2124 = vmatpush.msra.mxu0 %v480
        %2125 = vmatpush.msra.mxu0 %v476
        %2126 = vmatpush.msra.mxu0 %v472
        %2127 = vmatpush.msra.mxu0 %v468
        %2128 = vmatpush.msra.mxu0 %v464
        %2129 = vmatpush.msra.mxu0 %v460
        %2130 = vmatpush.msra.mxu0 %v456
        %2131 = vmatpush.msra.mxu0 %v452
        %2132 = vmatpush.msra.mxu0 %v448
        %2133 = vmatmul.f32.gmra.mxu0 %v1424
        %v2134 = vpop.f32.mrf.mxu0
        %v2135 = vadd.f32 %v2115, %v2134
        %2136 = vdwg.mxu0
        %2137 = vmatpush.msra.mxu0 %v572
        %2138 = vmatpush.msra.mxu0 %v568
        %2139 = vmatpush.msra.mxu0 %v564
        %2140 = vmatpush.msra.mxu0 %v560
        %2141 = vmatpush.msra.mxu0 %v556
        %2142 = vmatpush.msra.mxu0 %v552
        %2143 = vmatpush.msra.mxu0 %v548
        %2144 = vmatpush.msra.mxu0 %v544
        %2145 = vmatpush.msra.mxu0 %v540
        %2146 = vmatpush.msra.mxu0 %v536
        %2147 = vmatpush.msra.mxu0 %v532
        %2148 = vmatpush.msra.mxu0 %v528
        %2149 = vmatpush.msra.mxu0 %v524
        %2150 = vmatpush.msra.mxu0 %v520
        %2151 = vmatpush.msra.mxu0 %v516
        %2152 = vmatpush.msra.mxu0 %v512
        %2153 = vmatmul.f32.gmra.mxu0 %v1425
        %v2154 = vpop.f32.mrf.mxu0
        %v2155 = vadd.f32 %v2135, %v2154
        %2156 = vdwg.mxu0
        %2157 = vmatpush.msra.mxu0 %v636
        %2158 = vmatpush.msra.mxu0 %v632
        %2159 = vmatpush.msra.mxu0 %v628
        %2160 = vmatpush.msra.mxu0 %v624
        %2161 = vmatpush.msra.mxu0 %v620
        %2162 = vmatpush.msra.mxu0 %v616
        %2163 = vmatpush.msra.mxu0 %v612
        %2164 = vmatpush.msra.mxu0 %v608
        %2165 = vmatpush.msra.mxu0 %v604
        %2166 = vmatpush.msra.mxu0 %v600
        %2167 = vmatpush.msra.mxu0 %v596
        %2168 = vmatpush.msra.mxu0 %v592
        %2169 = vmatpush.msra.mxu0 %v588
        %2170 = vmatpush.msra.mxu0 %v584
        %2171 = vmatpush.msra.mxu0 %v580
        %2172 = vmatpush.msra.mxu0 %v576
        %2173 = vmatmul.f32.gmra.mxu0 %v1426
        %v2174 = vpop.f32.mrf.mxu0
        %v2175 = vadd.f32 %v2155, %v2174
        %2176 = vdwg.mxu0
        %2177 = vmatpush.msra.mxu0 %v700
        %2178 = vmatpush.msra.mxu0 %v696
        %2179 = vmatpush.msra.mxu0 %v692
        %2180 = vmatpush.msra.mxu0 %v688
        %2181 = vmatpush.msra.mxu0 %v684
        %2182 = vmatpush.msra.mxu0 %v680
        %2183 = vmatpush.msra.mxu0 %v676
        %2184 = vmatpush.msra.mxu0 %v672
        %2185 = vmatpush.msra.mxu0 %v668
        %2186 = vmatpush.msra.mxu0 %v664
        %2187 = vmatpush.msra.mxu0 %v660
        %2188 = vmatpush.msra.mxu0 %v656
        %2189 = vmatpush.msra.mxu0 %v652
        %2190 = vmatpush.msra.mxu0 %v648
        %2191 = vmatpush.msra.mxu0 %v644
        %2192 = vmatpush.msra.mxu0 %v640
        %2193 = vmatmul.f32.gmra.mxu0 %v1427
        %v2194 = vpop.f32.mrf.mxu0
        %v2195 = vadd.f32 %v2175, %v2194
        %2196 = vdwg.mxu0
        %2197 = vmatpush.msra.mxu0 %v764
        %2198 = vmatpush.msra.mxu0 %v760
        %2199 = vmatpush.msra.mxu0 %v756
        %2200 = vmatpush.msra.mxu0 %v752
        %2201 = vmatpush.msra.mxu0 %v748
        %2202 = vmatpush.msra.mxu0 %v744
        %2203 = vmatpush.msra.mxu0 %v740
        %2204 = vmatpush.msra.mxu0 %v736
        %2205 = vmatpush.msra.mxu0 %v732
        %2206 = vmatpush.msra.mxu0 %v728
        %2207 = vmatpush.msra.mxu0 %v724
        %2208 = vmatpush.msra.mxu0 %v720
        %2209 = vmatpush.msra.mxu0 %v716
        %2210 = vmatpush.msra.mxu0 %v712
        %2211 = vmatpush.msra.mxu0 %v708
        %2212 = vmatpush.msra.mxu0 %v704
        %2213 = vmatmul.f32.gmra.mxu0 %v1428
        %v2214 = vpop.f32.mrf.mxu0
        %v2215 = vadd.f32 %v2195, %v2214
        %2216 = vdwg.mxu0
        %2217 = vmatpush.msra.mxu0 %v828
        %2218 = vmatpush.msra.mxu0 %v824
        %2219 = vmatpush.msra.mxu0 %v820
        %2220 = vmatpush.msra.mxu0 %v816
        %2221 = vmatpush.msra.mxu0 %v812
        %2222 = vmatpush.msra.mxu0 %v808
        %2223 = vmatpush.msra.mxu0 %v804
        %2224 = vmatpush.msra.mxu0 %v800
        %2225 = vmatpush.msra.mxu0 %v796
        %2226 = vmatpush.msra.mxu0 %v792
        %2227 = vmatpush.msra.mxu0 %v788
        %2228 = vmatpush.msra.mxu0 %v784
        %2229 = vmatpush.msra.mxu0 %v780
        %2230 = vmatpush.msra.mxu0 %v776
        %2231 = vmatpush.msra.mxu0 %v772
        %2232 = vmatpush.msra.mxu0 %v768
        %2233 = vmatmul.f32.gmra.mxu0 %v1429
        %v2234 = vpop.f32.mrf.mxu0
        %v2235 = vadd.f32 %v2215, %v2234
        %2236 = vdwg.mxu0
        %2237 = vmatpush.msra.mxu0 %v892
        %2238 = vmatpush.msra.mxu0 %v888
        %2239 = vmatpush.msra.mxu0 %v884
        %2240 = vmatpush.msra.mxu0 %v880
        %2241 = vmatpush.msra.mxu0 %v876
        %2242 = vmatpush.msra.mxu0 %v872
        %2243 = vmatpush.msra.mxu0 %v868
        %2244 = vmatpush.msra.mxu0 %v864
        %2245 = vmatpush.msra.mxu0 %v860
        %2246 = vmatpush.msra.mxu0 %v856
        %2247 = vmatpush.msra.mxu0 %v852
        %2248 = vmatpush.msra.mxu0 %v848
        %2249 = vmatpush.msra.mxu0 %v844
        %2250 = vmatpush.msra.mxu0 %v840
        %2251 = vmatpush.msra.mxu0 %v836
        %2252 = vmatpush.msra.mxu0 %v832
        %2253 = vmatmul.f32.gmra.mxu0 %v1430
        %v2254 = vpop.f32.mrf.mxu0
        %v2255 = vadd.f32 %v2235, %v2254
        %2256 = vdwg.mxu0
        %2257 = vmatpush.msra.mxu0 %v956
        %2258 = vmatpush.msra.mxu0 %v952
        %2259 = vmatpush.msra.mxu0 %v948
        %2260 = vmatpush.msra.mxu0 %v944
        %2261 = vmatpush.msra.mxu0 %v940
        %2262 = vmatpush.msra.mxu0 %v936
        %2263 = vmatpush.msra.mxu0 %v932
        %2264 = vmatpush.msra.mxu0 %v928
        %2265 = vmatpush.msra.mxu0 %v924
        %2266 = vmatpush.msra.mxu0 %v920
        %2267 = vmatpush.msra.mxu0 %v916
        %2268 = vmatpush.msra.mxu0 %v912
        %2269 = vmatpush.msra.mxu0 %v908
        %2270 = vmatpush.msra.mxu0 %v904
        %2271 = vmatpush.msra.mxu0 %v900
        %2272 = vmatpush.msra.mxu0 %v896
        %2273 = vmatmul.f32.gmra.mxu0 %v1433
        %v2274 = vpop.f32.mrf.mxu0
        %v2275 = vadd.f32 %v2255, %v2274
        %2276 = vdwg.mxu0
        %2277 = vmatpush.msra.mxu0 %v1020
        %2278 = vmatpush.msra.mxu0 %v1016
        %2279 = vmatpush.msra.mxu0 %v1012
        %2280 = vmatpush.msra.mxu0 %v1008
        %2281 = vmatpush.msra.mxu0 %v1004
        %2282 = vmatpush.msra.mxu0 %v1000
        %2283 = vmatpush.msra.mxu0 %v996
        %2284 = vmatpush.msra.mxu0 %v992
        %2285 = vmatpush.msra.mxu0 %v988
        %2286 = vmatpush.msra.mxu0 %v984
        %2287 = vmatpush.msra.mxu0 %v980
        %2288 = vmatpush.msra.mxu0 %v976
        %2289 = vmatpush.msra.mxu0 %v972
        %2290 = vmatpush.msra.mxu0 %v968
        %2291 = vmatpush.msra.mxu0 %v964
        %2292 = vmatpush.msra.mxu0 %v960
        %2293 = vmatmul.f32.gmra.mxu0 %v1434
        %v2294 = vpop.f32.mrf.mxu0
        %v2295 = vadd.f32 %v2275, %v2294
        %2296 = vdwg.mxu0
        %2297 = vmatpush.msra.mxu0 %v1084
        %2298 = vmatpush.msra.mxu0 %v1080
        %2299 = vmatpush.msra.mxu0 %v1076
        %2300 = vmatpush.msra.mxu0 %v1072
        %2301 = vmatpush.msra.mxu0 %v1068
        %2302 = vmatpush.msra.mxu0 %v1064
        %2303 = vmatpush.msra.mxu0 %v1060
        %2304 = vmatpush.msra.mxu0 %v1056
        %2305 = vmatpush.msra.mxu0 %v1052
        %2306 = vmatpush.msra.mxu0 %v1048
        %2307 = vmatpush.msra.mxu0 %v1044
        %2308 = vmatpush.msra.mxu0 %v1040
        %2309 = vmatpush.msra.mxu0 %v1036
        %2310 = vmatpush.msra.mxu0 %v1032
        %2311 = vmatpush.msra.mxu0 %v1028
        %2312 = vmatpush.msra.mxu0 %v1024
        %2313 = vmatmul.f32.gmra.mxu0 %v1435
        %v2314 = vpop.f32.mrf.mxu0
        %v2315 = vadd.f32 %v2295, %v2314
        %2316 = vdwg.mxu0
        %2317 = vmatpush.msra.mxu0 %v1148
        %2318 = vmatpush.msra.mxu0 %v1144
        %2319 = vmatpush.msra.mxu0 %v1140
        %2320 = vmatpush.msra.mxu0 %v1136
        %2321 = vmatpush.msra.mxu0 %v1132
        %2322 = vmatpush.msra.mxu0 %v1128
        %2323 = vmatpush.msra.mxu0 %v1124
        %2324 = vmatpush.msra.mxu0 %v1120
        %2325 = vmatpush.msra.mxu0 %v1116
        %2326 = vmatpush.msra.mxu0 %v1112
        %2327 = vmatpush.msra.mxu0 %v1108
        %2328 = vmatpush.msra.mxu0 %v1104
        %2329 = vmatpush.msra.mxu0 %v1100
        %2330 = vmatpush.msra.mxu0 %v1096
        %2331 = vmatpush.msra.mxu0 %v1092
        %2332 = vmatpush.msra.mxu0 %v1088
        %2333 = vmatmul.f32.gmra.mxu0 %v1436
        %v2334 = vpop.f32.mrf.mxu0
        %v2335 = vadd.f32 %v2315, %v2334
        %2336 = vdwg.mxu0
        %2337 = vmatpush.msra.mxu0 %v1212
        %2338 = vmatpush.msra.mxu0 %v1208
        %2339 = vmatpush.msra.mxu0 %v1204
        %2340 = vmatpush.msra.mxu0 %v1200
        %2341 = vmatpush.msra.mxu0 %v1196
        %2342 = vmatpush.msra.mxu0 %v1192
        %2343 = vmatpush.msra.mxu0 %v1188
        %2344 = vmatpush.msra.mxu0 %v1184
        %2345 = vmatpush.msra.mxu0 %v1180
        %2346 = vmatpush.msra.mxu0 %v1176
        %2347 = vmatpush.msra.mxu0 %v1172
        %2348 = vmatpush.msra.mxu0 %v1168
        %2349 = vmatpush.msra.mxu0 %v1164
        %2350 = vmatpush.msra.mxu0 %v1160
        %2351 = vmatpush.msra.mxu0 %v1156
        %2352 = vmatpush.msra.mxu0 %v1152
        %2353 = vmatmul.f32.gmra.mxu0 %v1437
        %v2354 = vpop.f32.mrf.mxu0
        %v2355 = vadd.f32 %v2335, %v2354
        %2356 = vdwg.mxu0
        %2357 = vmatpush.msra.mxu0 %v1276
        %2358 = vmatpush.msra.mxu0 %v1272
        %2359 = vmatpush.msra.mxu0 %v1268
        %2360 = vmatpush.msra.mxu0 %v1264
        %2361 = vmatpush.msra.mxu0 %v1260
        %2362 = vmatpush.msra.mxu0 %v1256
        %2363 = vmatpush.msra.mxu0 %v1252
        %2364 = vmatpush.msra.mxu0 %v1248
        %2365 = vmatpush.msra.mxu0 %v1244
        %2366 = vmatpush.msra.mxu0 %v1240
        %2367 = vmatpush.msra.mxu0 %v1236
        %2368 = vmatpush.msra.mxu0 %v1232
        %2369 = vmatpush.msra.mxu0 %v1228
        %2370 = vmatpush.msra.mxu0 %v1224
        %2371 = vmatpush.msra.mxu0 %v1220
        %2372 = vmatpush.msra.mxu0 %v1216
        %2373 = vmatmul.f32.gmra.mxu0 %v1438
        %v2374 = vpop.f32.mrf.mxu0
        %v2375 = vadd.f32 %v2355, %v2374
        %2376 = vdwg.mxu0
        %2377 = vmatpush.msra.mxu0 %v1340
        %2378 = vmatpush.msra.mxu0 %v1336
        %2379 = vmatpush.msra.mxu0 %v1332
        %2380 = vmatpush.msra.mxu0 %v1328
        %2381 = vmatpush.msra.mxu0 %v1324
        %2382 = vmatpush.msra.mxu0 %v1320
        %2383 = vmatpush.msra.mxu0 %v1316
        %2384 = vmatpush.msra.mxu0 %v1312
        %2385 = vmatpush.msra.mxu0 %v1308
        %2386 = vmatpush.msra.mxu0 %v1304
        %2387 = vmatpush.msra.mxu0 %v1300
        %2388 = vmatpush.msra.mxu0 %v1296
        %2389 = vmatpush.msra.mxu0 %v1292
        %2390 = vmatpush.msra.mxu0 %v1288
        %2391 = vmatpush.msra.mxu0 %v1284
        %2392 = vmatpush.msra.mxu0 %v1280
        %2393 = vmatmul.f32.gmra.mxu0 %v1439
        %v2394 = vpop.f32.mrf.mxu0
        %v2395 = vadd.f32 %v2375, %v2394
        %2396 = vdwg.mxu0
        %2397 = vmatpush.msra.mxu0 %v1404
        %2398 = vmatpush.msra.mxu0 %v1400
        %2399 = vmatpush.msra.mxu0 %v1396
        %2400 = vmatpush.msra.mxu0 %v1392
        %2401 = vmatpush.msra.mxu0 %v1388
        %2402 = vmatpush.msra.mxu0 %v1384
        %2403 = vmatpush.msra.mxu0 %v1380
        %2404 = vmatpush.msra.mxu0 %v1376
        %2405 = vmatpush.msra.mxu0 %v1372
        %2406 = vmatpush.msra.mxu0 %v1368
        %2407 = vmatpush.msra.mxu0 %v1364
        %2408 = vmatpush.msra.mxu0 %v1360
        %2409 = vmatpush.msra.mxu0 %v1356
        %2410 = vmatpush.msra.mxu0 %v1352
        %2411 = vmatpush.msra.mxu0 %v1348
        %2412 = vmatpush.msra.mxu0 %v1344
        %2413 = vmatmul.f32.gmra.mxu0 %v1440
        %v2414 = vpop.f32.mrf.mxu0
        %v2415 = vadd.f32 %v2395, %v2414
        %2416 = vdwg.mxu0
        %2417 = vmatpush.msra.mxu0 %v445
        %2418 = vmatpush.msra.mxu0 %v441
        %2419 = vmatpush.msra.mxu0 %v437
        %2420 = vmatpush.msra.mxu0 %v433
        %2421 = vmatpush.msra.mxu0 %v429
        %2422 = vmatpush.msra.mxu0 %v425
        %2423 = vmatpush.msra.mxu0 %v421
        %2424 = vmatpush.msra.mxu0 %v417
        %2425 = vmatpush.msra.mxu0 %v413
        %2426 = vmatpush.msra.mxu0 %v409
        %2427 = vmatpush.msra.mxu0 %v405
        %2428 = vmatpush.msra.mxu0 %v401
        %2429 = vmatpush.msra.mxu0 %v397
        %2430 = vmatpush.msra.mxu0 %v393
        %2431 = vmatpush.msra.mxu0 %v389
        %2432 = vmatpush.msra.mxu0 %v385
        %2433 = vmatmul.f32.gmra.mxu0 %v1423
        %v2434 = vpop.f32.mrf.mxu0
        %v2435 = vadd.f32 %v1411, %v2434
        %2436 = vdwg.mxu0
        %2437 = vmatpush.msra.mxu0 %v509
        %2438 = vmatpush.msra.mxu0 %v505
        %2439 = vmatpush.msra.mxu0 %v501
        %2440 = vmatpush.msra.mxu0 %v497
        %2441 = vmatpush.msra.mxu0 %v493
        %2442 = vmatpush.msra.mxu0 %v489
        %2443 = vmatpush.msra.mxu0 %v485
        %2444 = vmatpush.msra.mxu0 %v481
        %2445 = vmatpush.msra.mxu0 %v477
        %2446 = vmatpush.msra.mxu0 %v473
        %2447 = vmatpush.msra.mxu0 %v469
        %2448 = vmatpush.msra.mxu0 %v465
        %2449 = vmatpush.msra.mxu0 %v461
        %2450 = vmatpush.msra.mxu0 %v457
        %2451 = vmatpush.msra.mxu0 %v453
        %2452 = vmatpush.msra.mxu0 %v449
        %2453 = vmatmul.f32.gmra.mxu0 %v1424
        %v2454 = vpop.f32.mrf.mxu0
        %v2455 = vadd.f32 %v2435, %v2454
        %2456 = vdwg.mxu0
        %2457 = vmatpush.msra.mxu0 %v573
        %2458 = vmatpush.msra.mxu0 %v569
        %2459 = vmatpush.msra.mxu0 %v565
        %2460 = vmatpush.msra.mxu0 %v561
        %2461 = vmatpush.msra.mxu0 %v557
        %2462 = vmatpush.msra.mxu0 %v553
        %2463 = vmatpush.msra.mxu0 %v549
        %2464 = vmatpush.msra.mxu0 %v545
        %2465 = vmatpush.msra.mxu0 %v541
        %2466 = vmatpush.msra.mxu0 %v537
        %2467 = vmatpush.msra.mxu0 %v533
        %2468 = vmatpush.msra.mxu0 %v529
        %2469 = vmatpush.msra.mxu0 %v525
        %2470 = vmatpush.msra.mxu0 %v521
        %2471 = vmatpush.msra.mxu0 %v517
        %2472 = vmatpush.msra.mxu0 %v513
        %2473 = vmatmul.f32.gmra.mxu0 %v1425
        %v2474 = vpop.f32.mrf.mxu0
        %v2475 = vadd.f32 %v2455, %v2474
        %2476 = vdwg.mxu0
        %2477 = vmatpush.msra.mxu0 %v637
        %2478 = vmatpush.msra.mxu0 %v633
        %2479 = vmatpush.msra.mxu0 %v629
        %2480 = vmatpush.msra.mxu0 %v625
        %2481 = vmatpush.msra.mxu0 %v621
        %2482 = vmatpush.msra.mxu0 %v617
        %2483 = vmatpush.msra.mxu0 %v613
        %2484 = vmatpush.msra.mxu0 %v609
        %2485 = vmatpush.msra.mxu0 %v605
        %2486 = vmatpush.msra.mxu0 %v601
        %2487 = vmatpush.msra.mxu0 %v597
        %2488 = vmatpush.msra.mxu0 %v593
        %2489 = vmatpush.msra.mxu0 %v589
        %2490 = vmatpush.msra.mxu0 %v585
        %2491 = vmatpush.msra.mxu0 %v581
        %2492 = vmatpush.msra.mxu0 %v577
        %2493 = vmatmul.f32.gmra.mxu0 %v1426
        %v2494 = vpop.f32.mrf.mxu0
        %v2495 = vadd.f32 %v2475, %v2494
        %2496 = vdwg.mxu0
        %2497 = vmatpush.msra.mxu0 %v701
        %2498 = vmatpush.msra.mxu0 %v697
        %2499 = vmatpush.msra.mxu0 %v693
        %2500 = vmatpush.msra.mxu0 %v689
        %2501 = vmatpush.msra.mxu0 %v685
        %2502 = vmatpush.msra.mxu0 %v681
        %2503 = vmatpush.msra.mxu0 %v677
        %2504 = vmatpush.msra.mxu0 %v673
        %2505 = vmatpush.msra.mxu0 %v669
        %2506 = vmatpush.msra.mxu0 %v665
        %2507 = vmatpush.msra.mxu0 %v661
        %2508 = vmatpush.msra.mxu0 %v657
        %2509 = vmatpush.msra.mxu0 %v653
        %2510 = vmatpush.msra.mxu0 %v649
        %2511 = vmatpush.msra.mxu0 %v645
        %2512 = vmatpush.msra.mxu0 %v641
        %2513 = vmatmul.f32.gmra.mxu0 %v1427
        %v2514 = vpop.f32.mrf.mxu0
        %v2515 = vadd.f32 %v2495, %v2514
        %2516 = vdwg.mxu0
        %2517 = vmatpush.msra.mxu0 %v765
        %2518 = vmatpush.msra.mxu0 %v761
        %2519 = vmatpush.msra.mxu0 %v757
        %2520 = vmatpush.msra.mxu0 %v753
        %2521 = vmatpush.msra.mxu0 %v749
        %2522 = vmatpush.msra.mxu0 %v745
        %2523 = vmatpush.msra.mxu0 %v741
        %2524 = vmatpush.msra.mxu0 %v737
        %2525 = vmatpush.msra.mxu0 %v733
        %2526 = vmatpush.msra.mxu0 %v729
        %2527 = vmatpush.msra.mxu0 %v725
        %2528 = vmatpush.msra.mxu0 %v721
        %2529 = vmatpush.msra.mxu0 %v717
        %2530 = vmatpush.msra.mxu0 %v713
        %2531 = vmatpush.msra.mxu0 %v709
        %2532 = vmatpush.msra.mxu0 %v705
        %2533 = vmatmul.f32.gmra.mxu0 %v1428
        %v2534 = vpop.f32.mrf.mxu0
        %v2535 = vadd.f32 %v2515, %v2534
        %2536 = vdwg.mxu0
        %2537 = vmatpush.msra.mxu0 %v829
        %2538 = vmatpush.msra.mxu0 %v825
        %2539 = vmatpush.msra.mxu0 %v821
        %2540 = vmatpush.msra.mxu0 %v817
        %2541 = vmatpush.msra.mxu0 %v813
        %2542 = vmatpush.msra.mxu0 %v809
        %2543 = vmatpush.msra.mxu0 %v805
        %2544 = vmatpush.msra.mxu0 %v801
        %2545 = vmatpush.msra.mxu0 %v797
        %2546 = vmatpush.msra.mxu0 %v793
        %2547 = vmatpush.msra.mxu0 %v789
        %2548 = vmatpush.msra.mxu0 %v785
        %2549 = vmatpush.msra.mxu0 %v781
        %2550 = vmatpush.msra.mxu0 %v777
        %2551 = vmatpush.msra.mxu0 %v773
        %2552 = vmatpush.msra.mxu0 %v769
        %2553 = vmatmul.f32.gmra.mxu0 %v1429
        %v2554 = vpop.f32.mrf.mxu0
        %v2555 = vadd.f32 %v2535, %v2554
        %2556 = vdwg.mxu0
        %2557 = vmatpush.msra.mxu0 %v893
        %2558 = vmatpush.msra.mxu0 %v889
        %2559 = vmatpush.msra.mxu0 %v885
        %2560 = vmatpush.msra.mxu0 %v881
        %2561 = vmatpush.msra.mxu0 %v877
        %2562 = vmatpush.msra.mxu0 %v873
        %2563 = vmatpush.msra.mxu0 %v869
        %2564 = vmatpush.msra.mxu0 %v865
        %2565 = vmatpush.msra.mxu0 %v861
        %2566 = vmatpush.msra.mxu0 %v857
        %2567 = vmatpush.msra.mxu0 %v853
        %2568 = vmatpush.msra.mxu0 %v849
        %2569 = vmatpush.msra.mxu0 %v845
        %2570 = vmatpush.msra.mxu0 %v841
        %2571 = vmatpush.msra.mxu0 %v837
        %2572 = vmatpush.msra.mxu0 %v833
        %2573 = vmatmul.f32.gmra.mxu0 %v1430
        %v2574 = vpop.f32.mrf.mxu0
        %v2575 = vadd.f32 %v2555, %v2574
        %2576 = vdwg.mxu0
        %2577 = vmatpush.msra.mxu0 %v957
        %2578 = vmatpush.msra.mxu0 %v953
        %2579 = vmatpush.msra.mxu0 %v949
        %2580 = vmatpush.msra.mxu0 %v945
        %2581 = vmatpush.msra.mxu0 %v941
        %2582 = vmatpush.msra.mxu0 %v937
        %2583 = vmatpush.msra.mxu0 %v933
        %2584 = vmatpush.msra.mxu0 %v929
        %2585 = vmatpush.msra.mxu0 %v925
        %2586 = vmatpush.msra.mxu0 %v921
        %2587 = vmatpush.msra.mxu0 %v917
        %2588 = vmatpush.msra.mxu0 %v913
        %2589 = vmatpush.msra.mxu0 %v909
        %2590 = vmatpush.msra.mxu0 %v905
        %2591 = vmatpush.msra.mxu0 %v901
        %2592 = vmatpush.msra.mxu0 %v897
        %2593 = vmatmul.f32.gmra.mxu0 %v1433
        %v2594 = vpop.f32.mrf.mxu0
        %v2595 = vadd.f32 %v2575, %v2594
        %2596 = vdwg.mxu0
        %2597 = vmatpush.msra.mxu0 %v1021
        %2598 = vmatpush.msra.mxu0 %v1017
        %2599 = vmatpush.msra.mxu0 %v1013
        %2600 = vmatpush.msra.mxu0 %v1009
        %2601 = vmatpush.msra.mxu0 %v1005
        %2602 = vmatpush.msra.mxu0 %v1001
        %2603 = vmatpush.msra.mxu0 %v997
        %2604 = vmatpush.msra.mxu0 %v993
        %2605 = vmatpush.msra.mxu0 %v989
        %2606 = vmatpush.msra.mxu0 %v985
        %2607 = vmatpush.msra.mxu0 %v981
        %2608 = vmatpush.msra.mxu0 %v977
        %2609 = vmatpush.msra.mxu0 %v973
        %2610 = vmatpush.msra.mxu0 %v969
        %2611 = vmatpush.msra.mxu0 %v965
        %2612 = vmatpush.msra.mxu0 %v961
        %2613 = vmatmul.f32.gmra.mxu0 %v1434
        %v2614 = vpop.f32.mrf.mxu0
        %v2615 = vadd.f32 %v2595, %v2614
        %2616 = vdwg.mxu0
        %2617 = vmatpush.msra.mxu0 %v1085
        %2618 = vmatpush.msra.mxu0 %v1081
        %2619 = vmatpush.msra.mxu0 %v1077
        %2620 = vmatpush.msra.mxu0 %v1073
        %2621 = vmatpush.msra.mxu0 %v1069
        %2622 = vmatpush.msra.mxu0 %v1065
        %2623 = vmatpush.msra.mxu0 %v1061
        %2624 = vmatpush.msra.mxu0 %v1057
        %2625 = vmatpush.msra.mxu0 %v1053
        %2626 = vmatpush.msra.mxu0 %v1049
        %2627 = vmatpush.msra.mxu0 %v1045
        %2628 = vmatpush.msra.mxu0 %v1041
        %2629 = vmatpush.msra.mxu0 %v1037
        %2630 = vmatpush.msra.mxu0 %v1033
        %2631 = vmatpush.msra.mxu0 %v1029
        %2632 = vmatpush.msra.mxu0 %v1025
        %2633 = vmatmul.f32.gmra.mxu0 %v1435
        %v2634 = vpop.f32.mrf.mxu0
        %v2635 = vadd.f32 %v2615, %v2634
        %2636 = vdwg.mxu0
        %2637 = vmatpush.msra.mxu0 %v1149
        %2638 = vmatpush.msra.mxu0 %v1145
        %2639 = vmatpush.msra.mxu0 %v1141
        %2640 = vmatpush.msra.mxu0 %v1137
        %2641 = vmatpush.msra.mxu0 %v1133
        %2642 = vmatpush.msra.mxu0 %v1129
        %2643 = vmatpush.msra.mxu0 %v1125
        %2644 = vmatpush.msra.mxu0 %v1121
        %2645 = vmatpush.msra.mxu0 %v1117
        %2646 = vmatpush.msra.mxu0 %v1113
        %2647 = vmatpush.msra.mxu0 %v1109
        %2648 = vmatpush.msra.mxu0 %v1105
        %2649 = vmatpush.msra.mxu0 %v1101
        %2650 = vmatpush.msra.mxu0 %v1097
        %2651 = vmatpush.msra.mxu0 %v1093
        %2652 = vmatpush.msra.mxu0 %v1089
        %2653 = vmatmul.f32.gmra.mxu0 %v1436
        %v2654 = vpop.f32.mrf.mxu0
        %v2655 = vadd.f32 %v2635, %v2654
        %2656 = vdwg.mxu0
        %2657 = vmatpush.msra.mxu0 %v1213
        %2658 = vmatpush.msra.mxu0 %v1209
        %2659 = vmatpush.msra.mxu0 %v1205
        %2660 = vmatpush.msra.mxu0 %v1201
        %2661 = vmatpush.msra.mxu0 %v1197
        %2662 = vmatpush.msra.mxu0 %v1193
        %2663 = vmatpush.msra.mxu0 %v1189
        %2664 = vmatpush.msra.mxu0 %v1185
        %2665 = vmatpush.msra.mxu0 %v1181
        %2666 = vmatpush.msra.mxu0 %v1177
        %2667 = vmatpush.msra.mxu0 %v1173
        %2668 = vmatpush.msra.mxu0 %v1169
        %2669 = vmatpush.msra.mxu0 %v1165
        %2670 = vmatpush.msra.mxu0 %v1161
        %2671 = vmatpush.msra.mxu0 %v1157
        %2672 = vmatpush.msra.mxu0 %v1153
        %2673 = vmatmul.f32.gmra.mxu0 %v1437
        %v2674 = vpop.f32.mrf.mxu0
        %v2675 = vadd.f32 %v2655, %v2674
        %2676 = vdwg.mxu0
        %2677 = vmatpush.msra.mxu0 %v1277
        %2678 = vmatpush.msra.mxu0 %v1273
        %2679 = vmatpush.msra.mxu0 %v1269
        %2680 = vmatpush.msra.mxu0 %v1265
        %2681 = vmatpush.msra.mxu0 %v1261
        %2682 = vmatpush.msra.mxu0 %v1257
        %2683 = vmatpush.msra.mxu0 %v1253
        %2684 = vmatpush.msra.mxu0 %v1249
        %2685 = vmatpush.msra.mxu0 %v1245
        %2686 = vmatpush.msra.mxu0 %v1241
        %2687 = vmatpush.msra.mxu0 %v1237
        %2688 = vmatpush.msra.mxu0 %v1233
        %2689 = vmatpush.msra.mxu0 %v1229
        %2690 = vmatpush.msra.mxu0 %v1225
        %2691 = vmatpush.msra.mxu0 %v1221
        %2692 = vmatpush.msra.mxu0 %v1217
        %2693 = vmatmul.f32.gmra.mxu0 %v1438
        %v2694 = vpop.f32.mrf.mxu0
        %v2695 = vadd.f32 %v2675, %v2694
        %2696 = vdwg.mxu0
        %2697 = vmatpush.msra.mxu0 %v1341
        %2698 = vmatpush.msra.mxu0 %v1337
        %2699 = vmatpush.msra.mxu0 %v1333
        %2700 = vmatpush.msra.mxu0 %v1329
        %2701 = vmatpush.msra.mxu0 %v1325
        %2702 = vmatpush.msra.mxu0 %v1321
        %2703 = vmatpush.msra.mxu0 %v1317
        %2704 = vmatpush.msra.mxu0 %v1313
        %2705 = vmatpush.msra.mxu0 %v1309
        %2706 = vmatpush.msra.mxu0 %v1305
        %2707 = vmatpush.msra.mxu0 %v1301
        %2708 = vmatpush.msra.mxu0 %v1297
        %2709 = vmatpush.msra.mxu0 %v1293
        %2710 = vmatpush.msra.mxu0 %v1289
        %2711 = vmatpush.msra.mxu0 %v1285
        %2712 = vmatpush.msra.mxu0 %v1281
        %2713 = vmatmul.f32.gmra.mxu0 %v1439
        %v2714 = vpop.f32.mrf.mxu0
        %v2715 = vadd.f32 %v2695, %v2714
        %2716 = vdwg.mxu0
        %2717 = vmatpush.msra.mxu0 %v1405
        %2718 = vmatpush.msra.mxu0 %v1401
        %2719 = vmatpush.msra.mxu0 %v1397
        %2720 = vmatpush.msra.mxu0 %v1393
        %2721 = vmatpush.msra.mxu0 %v1389
        %2722 = vmatpush.msra.mxu0 %v1385
        %2723 = vmatpush.msra.mxu0 %v1381
        %2724 = vmatpush.msra.mxu0 %v1377
        %2725 = vmatpush.msra.mxu0 %v1373
        %2726 = vmatpush.msra.mxu0 %v1369
        %2727 = vmatpush.msra.mxu0 %v1365
        %2728 = vmatpush.msra.mxu0 %v1361
        %2729 = vmatpush.msra.mxu0 %v1357
        %2730 = vmatpush.msra.mxu0 %v1353
        %2731 = vmatpush.msra.mxu0 %v1349
        %2732 = vmatpush.msra.mxu0 %v1345
        %2733 = vmatmul.f32.gmra.mxu0 %v1440
        %v2734 = vpop.f32.mrf.mxu0
        %v2735 = vadd.f32 %v2715, %v2734
        %2736 = vdwg.mxu0
        %vm2737 = vcmp.gt.f32.partialorder %v1775, 0.0
        %vm2738 = vcmp.gt.f32.partialorder %v2095, 0.0
        %vm2739 = vcmp.gt.f32.partialorder %v2415, 0.0
        %vm2740 = vcmp.gt.f32.partialorder %v2735, 0.0
        %v2741 = vmul.f32 %v1775, 0.01
        %v2742 = vmul.f32 %v2095, 0.01
        %v2743 = vmul.f32 %v2415, 0.01
        %v2744 = vmul.f32 %v2735, 0.01
        %v2745 = vsel %vm2737, %v1775, %v2741
        %v2746 = vsel %vm2738, %v2095, %v2742
        %v2747 = vsel %vm2739, %v2415, %v2743
        %v2748 = vsel %vm2740, %v2735, %v2744
        %v2749 = vld [vmem:[%s364] sm:$0xff]
        %v2750 = vld [vmem:[%s364 + $0x8] sm:$0xff]
        %v2751 = vld [vmem:[%s364 + $0x10] sm:$0xff]
        %v2752 = vld [vmem:[%s364 + $0x18] sm:$0xff]
        %v2753 = vld [vmem:[%s364 + $0x20] sm:$0xff]
        %v2754 = vld [vmem:[%s364 + $0x28] sm:$0xff]
        %v2755 = vld [vmem:[%s364 + $0x30] sm:$0xff]
        %v2756 = vld [vmem:[%s364 + $0x38] sm:$0xff]
        %v2757 = vld [vmem:[%s364 + $0x40] sm:$0xff]
        %v2758 = vld [vmem:[%s364 + $0x48] sm:$0xff]
        %v2759 = vld [vmem:[%s364 + $0x50] sm:$0xff]
        %v2760 = vld [vmem:[%s364 + $0x58] sm:$0xff]
        %v2761 = vld [vmem:[%s364 + $0x60] sm:$0xff]
        %v2762 = vld [vmem:[%s364 + $0x68] sm:$0xff]
        %v2763 = vld [vmem:[%s364 + $0x70] sm:$0xff]
        %v2764 = vld [vmem:[%s364 + $0x78] sm:$0xff]
        %v2765 = vld [vmem:[%s364 + $0x80] sm:$0xff]
        %v2766 = vld [vmem:[%s364 + $0x88] sm:$0xff]
        %v2767 = vld [vmem:[%s364 + $0x90] sm:$0xff]
        %v2768 = vld [vmem:[%s364 + $0x98] sm:$0xff]
        %v2769 = vld [vmem:[%s364 + $0xa0] sm:$0xff]
        %v2770 = vld [vmem:[%s364 + $0xa8] sm:$0xff]
        %v2771 = vld [vmem:[%s364 + $0xb0] sm:$0xff]
        %v2772 = vld [vmem:[%s364 + $0xb8] sm:$0xff]
        %v2773 = vld [vmem:[%s364 + $0xc0] sm:$0xff]
        %v2774 = vld [vmem:[%s364 + $0xc8] sm:$0xff]
        %v2775 = vld [vmem:[%s364 + $0xd0] sm:$0xff]
        %v2776 = vld [vmem:[%s364 + $0xd8] sm:$0xff]
        %v2777 = vld [vmem:[%s364 + $0xe0] sm:$0xff]
        %v2778 = vld [vmem:[%s364 + $0xe8] sm:$0xff]
        %v2779 = vld [vmem:[%s364 + $0xf0] sm:$0xff]
        %v2780 = vld [vmem:[%s364 + $0xf8] sm:$0xff]
        %v2781 = vld [vmem:[%s364 + $0x100] sm:$0xff]
        %v2782 = vld [vmem:[%s364 + $0x108] sm:$0xff]
        %v2783 = vld [vmem:[%s364 + $0x110] sm:$0xff]
        %v2784 = vld [vmem:[%s364 + $0x118] sm:$0xff]
        %v2785 = vld [vmem:[%s364 + $0x120] sm:$0xff]
        %v2786 = vld [vmem:[%s364 + $0x128] sm:$0xff]
        %v2787 = vld [vmem:[%s364 + $0x130] sm:$0xff]
        %v2788 = vld [vmem:[%s364 + $0x138] sm:$0xff]
        %v2789 = vld [vmem:[%s364 + $0x140] sm:$0xff]
        %v2790 = vld [vmem:[%s364 + $0x148] sm:$0xff]
        %v2791 = vld [vmem:[%s364 + $0x150] sm:$0xff]
        %v2792 = vld [vmem:[%s364 + $0x158] sm:$0xff]
        %v2793 = vld [vmem:[%s364 + $0x160] sm:$0xff]
        %v2794 = vld [vmem:[%s364 + $0x168] sm:$0xff]
        %v2795 = vld [vmem:[%s364 + $0x170] sm:$0xff]
        %v2796 = vld [vmem:[%s364 + $0x178] sm:$0xff]
        %v2797 = vld [vmem:[%s364 + $0x180] sm:$0xff]
        %v2798 = vld [vmem:[%s364 + $0x188] sm:$0xff]
        %v2799 = vld [vmem:[%s364 + $0x190] sm:$0xff]
        %v2800 = vld [vmem:[%s364 + $0x198] sm:$0xff]
        %v2801 = vld [vmem:[%s364 + $0x1a0] sm:$0xff]
        %v2802 = vld [vmem:[%s364 + $0x1a8] sm:$0xff]
        %v2803 = vld [vmem:[%s364 + $0x1b0] sm:$0xff]
        %v2804 = vld [vmem:[%s364 + $0x1b8] sm:$0xff]
        %v2805 = vld [vmem:[%s364 + $0x1c0] sm:$0xff]
        %v2806 = vld [vmem:[%s364 + $0x1c8] sm:$0xff]
        %v2807 = vld [vmem:[%s364 + $0x1d0] sm:$0xff]
        %v2808 = vld [vmem:[%s364 + $0x1d8] sm:$0xff]
        %v2809 = vld [vmem:[%s364 + $0x1e0] sm:$0xff]
        %v2810 = vld [vmem:[%s364 + $0x1e8] sm:$0xff]
        %v2811 = vld [vmem:[%s364 + $0x1f0] sm:$0xff]
        %v2812 = vld [vmem:[%s364 + $0x1f8] sm:$0xff]
        %v2813 = vld [vmem:[%s367] sm:$0x1]
        %v2815 = vperm.slane %v2813, 0
        %2817 = vmatpush.msra.mxu0 %v2764
        %2818 = vmatpush.msra.mxu0 %v2763
        %2819 = vmatpush.msra.mxu0 %v2762
        %2820 = vmatpush.msra.mxu0 %v2761
        %2821 = vmatpush.msra.mxu0 %v2760
        %2822 = vmatpush.msra.mxu0 %v2759
        %2823 = vmatpush.msra.mxu0 %v2758
        %2824 = vmatpush.msra.mxu0 %v2757
        %2825 = vmatpush.msra.mxu0 %v2756
        %2826 = vmatpush.msra.mxu0 %v2755
        %2827 = vmatpush.msra.mxu0 %v2754
        %2828 = vmatpush.msra.mxu0 %v2753
        %2829 = vmatpush.msra.mxu0 %v2752
        %2830 = vmatpush.msra.mxu0 %v2751
        %2831 = vmatpush.msra.mxu0 %v2750
        %2832 = vmatpush.msra.mxu0 %v2749
        %2833 = vmatmul.f32.gmra.mxu0 %v2745
        %v2834 = vpop.f32.mrf.mxu0
        %v2835 = vadd.f32 %v2815, %v2834
        %2836 = vdwg.mxu0
        %2837 = vmatpush.msra.mxu0 %v2780
        %2838 = vmatpush.msra.mxu0 %v2779
        %2839 = vmatpush.msra.mxu0 %v2778
        %2840 = vmatpush.msra.mxu0 %v2777
        %2841 = vmatpush.msra.mxu0 %v2776
        %2842 = vmatpush.msra.mxu0 %v2775
        %2843 = vmatpush.msra.mxu0 %v2774
        %2844 = vmatpush.msra.mxu0 %v2773
        %2845 = vmatpush.msra.mxu0 %v2772
        %2846 = vmatpush.msra.mxu0 %v2771
        %2847 = vmatpush.msra.mxu0 %v2770
        %2848 = vmatpush.msra.mxu0 %v2769
        %2849 = vmatpush.msra.mxu0 %v2768
        %2850 = vmatpush.msra.mxu0 %v2767
        %2851 = vmatpush.msra.mxu0 %v2766
        %2852 = vmatpush.msra.mxu0 %v2765
        %2853 = vmatmul.f32.gmra.mxu0 %v2746
        %v2854 = vpop.f32.mrf.mxu0
        %v2855 = vadd.f32 %v2835, %v2854
        %2856 = vdwg.mxu0
        %2857 = vmatpush.msra.mxu0 %v2796
        %2858 = vmatpush.msra.mxu0 %v2795
        %2859 = vmatpush.msra.mxu0 %v2794
        %2860 = vmatpush.msra.mxu0 %v2793
        %2861 = vmatpush.msra.mxu0 %v2792
        %2862 = vmatpush.msra.mxu0 %v2791
        %2863 = vmatpush.msra.mxu0 %v2790
        %2864 = vmatpush.msra.mxu0 %v2789
        %2865 = vmatpush.msra.mxu0 %v2788
        %2866 = vmatpush.msra.mxu0 %v2787
        %2867 = vmatpush.msra.mxu0 %v2786
        %2868 = vmatpush.msra.mxu0 %v2785
        %2869 = vmatpush.msra.mxu0 %v2784
        %2870 = vmatpush.msra.mxu0 %v2783
        %2871 = vmatpush.msra.mxu0 %v2782
        %2872 = vmatpush.msra.mxu0 %v2781
        %2873 = vmatmul.f32.gmra.mxu0 %v2747
        %v2874 = vpop.f32.mrf.mxu0
        %v2875 = vadd.f32 %v2855, %v2874
        %2876 = vdwg.mxu0
        %2877 = vmatpush.msra.mxu0 %v2812
        %2878 = vmatpush.msra.mxu0 %v2811
        %2879 = vmatpush.msra.mxu0 %v2810
        %2880 = vmatpush.msra.mxu0 %v2809
        %2881 = vmatpush.msra.mxu0 %v2808
        %2882 = vmatpush.msra.mxu0 %v2807
        %2883 = vmatpush.msra.mxu0 %v2806
        %2884 = vmatpush.msra.mxu0 %v2805
        %2885 = vmatpush.msra.mxu0 %v2804
        %2886 = vmatpush.msra.mxu0 %v2803
        %2887 = vmatpush.msra.mxu0 %v2802
        %2888 = vmatpush.msra.mxu0 %v2801
        %2889 = vmatpush.msra.mxu0 %v2800
        %2890 = vmatpush.msra.mxu0 %v2799
        %2891 = vmatpush.msra.mxu0 %v2798
        %2892 = vmatpush.msra.mxu0 %v2797
        %2893 = vmatmul.f32.gmra.mxu0 %v2748
        %v2894 = vpop.f32.mrf.mxu0
        %v2895 = vadd.f32 %v2875, %v2894
        %2896 = vdwg.mxu0
        %vm2897 = vcmp.gt.f32.partialorder %v2895, 0.0
        %v2898 = vmul.f32 %v2895, 0.01
        %v2899 = vsel %vm2897, %v2895, %v2898
        %v2900 = vld [vmem:[%s370] sm:$0x1]
        %v2902 = vperm.slane %v2900, 0
        %v2904 = vmul.f32 %v2899, %v2902
        %vm2905 = vcmask 517120
        %v2906 = vsel %vm2905, %v2904, 0.0
        %2907 = vadd.xlane.f32.xlu0 %v2906
        %v2908 = vpop.xlane.xlu0 %2907
        %v2909 = vld [vmem:[%s373] sm:$0x1]
        %v2911 = vperm.slane %v2909, 0
        %v2913 = vadd.f32 %v2908, %v2911
        %2915 = vset.pattern.permute.xlu0 0
        %2916 = vperm.xlu0 %2915, %v2913
        %v2917 = vpop.permute.xlu0 %2916
        %2919 = vst [vmem:[%s377] sm:$0x3] %v2917
        %p2920 = scmp.lt.s32.totalorder %s21, 4
        %s2921 = scalar_select %p2920, %s21, 4
        %s2922 = smul.addr %s2921, 2
        %s2923 = scalar_lea.vmem %s7, %s2922
        // Predicated region
        $region53: #{siamese_multi_decoder.3} parent=47 // pred_check
          %p2924 = pneg %p216
        $region54: #{siamese_multi_decoder.3} parent=47 // pred_check_branch
          %2926 = sbr.rel (%p2924) target = $region56
        $region55: #{siamese_multi_decoder.3} parent=47 // pred_region
          _
        $region56: #{siamese_multi_decoder.3} parent=47 // pred_fallthru
          _
      $region48: #{siamese_multi_decoder.3} parent=5 // pred_fallthru
        _
      %p2927 = scmp.le.s32.totalorder 2, %s16
      // Predicated region
      $region57: #{siamese_multi_decoder.3} parent=5 // pred_check
        %p2928 = pneg %p2927
      $region58: #{siamese_multi_decoder.3} parent=5 // pred_check_branch
        %2930 = sbr.rel (%p2928) target = $region60
      $region59: #{siamese_multi_decoder.3} parent=5 // pred_region
        %s2931 = ssub.s32 %s16, 2
        // Predicated region
        $region61: #{siamese_multi_decoder.3} parent=59 // pred_check
          %p2932 = pneg %p222
        $region62: #{siamese_multi_decoder.3} parent=59 // pred_check_branch
          %2934 = sbr.rel (%p2932) target = $region64
        $region63: #{siamese_multi_decoder.3} parent=59 // pred_region
          %p2935 = scmp.lt.s32.totalorder %s22, 4
          %s2936 = scalar_select %p2935, %s22, 4
          %s2937 = smul.addr %s2936, 2
          %s2938 = scalar_lea.vmem %s7, %s2937
        $region64: #{siamese_multi_decoder.3} parent=59 // pred_fallthru
          _
      $region60: #{siamese_multi_decoder.3} parent=5 // pred_fallthru
        _
    $region6: #{siamese_multi_decoder.3} parent=1 // loop_footer
      %s20 = sadd.s32 1, %s16
    $region7: #{siamese_multi_decoder.3} parent=1 // loop_footer_branch
      %15 = sbr.rel target = $region3
    $region8: #{siamese_multi_decoder.3} parent=1 // loop_exit
      _
    %2939 = vsyncpa [#allocation3], 1
    %s2940 = scalar_lea.sflag [#allocation3], 1
    %2941 = vsyncpa %s2940, 1

</llo_original>
